<compile_context>
chip_gen: v7x
topology: tpu7x:2x2x1
jax: 0.10.0
libtpu: 0.0.40
codegen_flags: <defaults>
</compile_context>

<pallas_src>
import functools

import jax
import jax.numpy as jnp
from jax.experimental import pallas as pl
from jax.experimental.pallas import tpu as pltpu

_NEG_INF = -1e30


def _resident_spec(shape):
    """Whole-array VMEM block, resident (same block index) across the grid."""
    nd = len(shape)
    return pl.BlockSpec(shape, lambda i, nd=nd: (0,) * nd)


# ------------------------------ fused kernel ---------------------------------
def _dualgraph_kernel(x_ref, mask_ref, pool_ref, inc_ref, dinv_ref, binv_ref,
                      gw1_ref, att1_ref, gb1_ref,
                      gw2_ref, att2_ref, gb2_ref,
                      hw1_ref, hb1_ref, hw2_ref, hb2_ref,
                      text_ref, img_ref,
                      w1t_ref, w1i_ref, w1d_ref, w1h_ref, cb1_ref,
                      cw2_ref, cb2_ref,
                      out_ref,
                      pooled_sc, hb_sc, heads_sc, *, heads, f_head):
    branch = pl.program_id(0)

    def masked_softmax_rows(e, mask_add):
        e = jnp.where(e > 0.0, e, 0.2 * e)                 # LeakyReLU(0.2)
        e = e + mask_add                                   # -1e30 on non-edges
        e = e - jnp.max(e, axis=1, keepdims=True)
        p = jnp.exp(e)                                     # underflows to 0 off-edge
        # guard: every row has a self-loop, but never divide by 0 anyway
        denom = jnp.maximum(jnp.sum(p, axis=1, keepdims=True), 1e-20)
        return p * pl.reciprocal(denom, approx=True)

    # ------------- GAT branch: conv1 -> ELU -> conv2 -> mean pool -------------
    @pl.when(branch == 0)
    def _():
        mask_add = mask_ref[...].astype(jnp.float32)       # cast once, reused 9x
        h = jnp.dot(x_ref[...], gw1_ref[...],
                    preferred_element_type=jnp.float32)    # (N, H*F)
        hb = h.astype(jnp.bfloat16)
        hb_sc[...] = hb
        # src+dst attention logits for ALL heads in ONE MXU matmul
        logits = jnp.dot(hb, att1_ref[...],
                         preferred_element_type=jnp.float32)   # (N, 2H)
        a_src_t = logits[:, :heads].T                      # (H, N): ONE hoisted transpose
        a_dst = logits[:, heads:]                          # (N, H)

        for k in range(heads):                             # static unroll; per-head
            lo, hi = k * f_head, (k + 1) * f_head          # temporaries die at the
            e = a_dst[:, k:k + 1] + a_src_t[k:k + 1, :]    # scratch store below.
            attn = masked_softmax_rows(e, mask_add)
            o_k = jnp.dot(attn.astype(jnp.bfloat16), hb_sc[:, lo:hi],
                          preferred_element_type=jnp.float32) + gb1_ref[:, lo:hi]
            # ELU(alpha=1); clamp exp argument (never exp a large positive)
            o_k = jnp.where(o_k > 0.0, o_k, jnp.exp(jnp.minimum(o_k, 0.0)) - 1.0)
            heads_sc[:, lo:hi] = o_k.astype(jnp.bfloat16)

        # conv2 input transform: single long-K matmul over all heads
        h2 = jnp.dot(heads_sc[...], gw2_ref[...],
                     preferred_element_type=jnp.float32)   # (N, C)
        h2b = h2.astype(jnp.bfloat16)
        logits2 = jnp.dot(h2b, att2_ref[...],
                          preferred_element_type=jnp.float32)  # (N, 2) = [src, dst]
        e2 = logits2[:, 1:2] + logits2[:, 0:1].T
        attn2 = masked_softmax_rows(e2, mask_add)
        g_out = jnp.dot(attn2.astype(jnp.bfloat16), h2b,
                        preferred_element_type=jnp.float32) + gb2_ref[...]
        # to_dense_batch(...).mean(dim=1) as a pooling matmul
        pooled_sc[0] = jnp.dot(pool_ref[...], g_out.astype(jnp.bfloat16),
                               preferred_element_type=jnp.float32)

    # --------- Hypergraph branch: conv1 -> ReLU -> conv2 -> mean pool ---------
    @pl.when(branch == 1)
    def _():
        inc_b = inc_ref[...]                               # (N, M) incidence, bf16
        d_inv = dinv_ref[...]                              # (N, 1) exact, host-computed
        b_inv = binv_ref[...]                              # (M, 1) exact, host-computed

        def hconv(feat_b, w_ref, b_ref):                   # D^-1 H B^-1 H^T (X W) + b
            xw = jnp.dot(feat_b, w_ref[...],
                         preferred_element_type=jnp.float32)          # (N, F)
            ef = jax.lax.dot_general(                      # H^T @ xw, no inc_t copy
                inc_b, xw.astype(jnp.bfloat16),
                dimension_numbers=(((0,), (0,)), ((), ())),
                preferred_element_type=jnp.float32)                   # (M, F)
            nf = jnp.dot(inc_b, (b_inv * ef).astype(jnp.bfloat16),
                         preferred_element_type=jnp.float32)          # (N, F)
            return d_inv * nf + b_ref[...]

        n1 = jnp.maximum(hconv(x_ref[...], hw1_ref, hb1_ref), 0.0)    # ReLU
        n2 = hconv(n1.astype(jnp.bfloat16), hw2_ref, hb2_ref)
        pooled_sc[1] = jnp.dot(pool_ref[...], n2.astype(jnp.bfloat16),
                               preferred_element_type=jnp.float32)

    # --------------- classifier head (concat-free) + sigmoids -----------------
    @pl.when(branch == 2)
    def _():
        dgf = pooled_sc[0].astype(jnp.bfloat16)            # (B, C) GAT branch
        hgf = pooled_sc[1].astype(jnp.bfloat16)            # (B, C) hypergraph branch
        # Linear(1280->512) as 4 partial matmuls against row-slices of W1
        h1 = (jnp.dot(text_ref[...], w1t_ref[...], preferred_element_type=jnp.float32)
              + jnp.dot(img_ref[...], w1i_ref[...], preferred_element_type=jnp.float32)
              + jnp.dot(dgf, w1d_ref[...], preferred_element_type=jnp.float32)
              + jnp.dot(hgf, w1h_ref[...], preferred_element_type=jnp.float32)
              + cb1_ref[...])
        h2 = jnp.dot(h1.astype(jnp.bfloat16), cw2_ref[...],
                     preferred_element_type=jnp.float32) + cb2_ref[...]
        s = 1.0 / (1.0 + jnp.exp(-h2))            # classifier's nn.Sigmoid
        out_ref[...] = 1.0 / (1.0 + jnp.exp(-s))  # extra sigmoid in DualGraph.forward


# ------------------------- host-side packing helpers --------------------------
def _pack_att_heads(att_src, att_dst):
    """(heads, F) src/dst att vectors -> block-diag (heads*F, 2*heads) bf16.

    Column k holds att_src[k] in rows k*F:(k+1)*F; column heads+k holds att_dst[k].
    One MXU matmul then yields [a_src | a_dst] for all heads.
    """
    heads, f = att_src.shape
    m = jnp.zeros((heads * f, 2 * heads), jnp.float32)
    for k in range(heads):
        m = m.at[k * f:(k + 1) * f, k].set(att_src[k])
        m = m.at[k * f:(k + 1) * f, heads + k].set(att_dst[k])
    return m.astype(jnp.bfloat16)


def _pack_att_single(att_src, att_dst):
    """(1, C) src/dst att vectors -> (C, 2) bf16 [src | dst]."""
    return jnp.concatenate([att_src.T, att_dst.T], axis=1).astype(jnp.bfloat16)


# --------------------------------- wrapper ------------------------------------
def dual_graph_forward(x, mask_add, pool, inc, d_inv, b_inv,
                       gat_w1, gat_as1, gat_ad1, gat_b1,
                       gat_w2, gat_as2, gat_ad2, gat_b2,
                       hg_w1, hg_b1, hg_w2, hg_b2,
                       text_feat, image_feat,
                       cl_w1, cl_b1, cl_w2, cl_b2, *, heads, f_head):
    n = x.shape[0]
    b = pool.shape[0]
    c_out = gat_w2.shape[1]
    num_class = cl_w2.shape[1]
    t_dim, i_dim = text_feat.shape[1], image_feat.shape[1]
    bf16 = jnp.bfloat16

    w1 = cl_w1.astype(bf16)
    w1t = w1[:t_dim]
    w1i = w1[t_dim:t_dim + i_dim]
    w1d = w1[t_dim + i_dim:t_dim + i_dim + c_out]
    w1h = w1[t_dim + i_dim + c_out:]

    args = (x.astype(bf16), mask_add.astype(bf16), pool.astype(bf16),
            inc.astype(bf16), d_inv, b_inv,
            gat_w1.astype(bf16), _pack_att_heads(gat_as1, gat_ad1), gat_b1,
            gat_w2.astype(bf16), _pack_att_single(gat_as2, gat_ad2), gat_b2,
            hg_w1.astype(bf16), hg_b1, hg_w2.astype(bf16), hg_b2,
            text_feat.astype(bf16), image_feat.astype(bf16),
            w1t, w1i, w1d, w1h, cl_b1,
            cl_w2.astype(bf16), cl_b2)

    kernel = functools.partial(_dualgraph_kernel, heads=heads, f_head=f_head)
    return pl.pallas_call(
        kernel,
        out_shape=jax.ShapeDtypeStruct((b, num_class), jnp.float32),
        grid=(3,),
        in_specs=[_resident_spec(a.shape) for a in args],
        out_specs=_resident_spec((b, num_class)),
        scratch_shapes=[
            pltpu.VMEM((2, b, c_out), jnp.float32),        # pooled branch features
            pltpu.VMEM((n, heads * f_head), bf16),         # conv1 features (hb)
            pltpu.VMEM((n, heads * f_head), bf16),         # ELU'd per-head outputs
        ],
        compiler_params=pltpu.CompilerParams(
            dimension_semantics=("arbitrary",),            # step 2 depends on 0 and 1
            vmem_limit_bytes=32 * 1024 * 1024),
    )(*args)


if __name__ == "__main__":
    B = 2                      # graphs in the batch
    NODES_PER_GRAPH = 8
    N = B * NODES_PER_GRAPH    # total nodes in the batched graph
    M = 4                      # hyperedges (2 per graph)
    C = 128                    # node feature dim (DualGraph uses 128)
    HEADS = 8
    TXT = 512                  # CLIP ViT-B/32 text feature dim
    IMG = 512                  # CLIP ViT-B/32 image feature dim

    key = jax.random.PRNGKey(0)
    ks = jax.random.split(key, 16)

    def init(k, shape, scale=0.05):
        return scale * jax.random.normal(k, shape, dtype=jnp.float32)

    # synthetic stand-ins for CLIP / diffusion-embedding outputs
    x_nodes = init(ks[0], (N, C), 1.0)
    text_feat = init(ks[1], (B, TXT), 1.0)
    image_feat = init(ks[2], (B, IMG), 1.0)

    # GAT params: conv1 (128 -> 128, 8 heads, concat), conv2 (1024 -> 128, 1 head)
    gat_w1 = init(ks[3], (C, HEADS * C))
    gat_as1 = init(ks[4], (HEADS, C))
    gat_ad1 = init(ks[5], (HEADS, C))
    gat_b1 = jnp.zeros((1, HEADS * C), jnp.float32)
    gat_w2 = init(ks[6], (HEADS * C, C))
    gat_as2 = init(ks[7], (1, C))
    gat_ad2 = init(ks[8], (1, C))
    gat_b2 = jnp.zeros((1, C), jnp.float32)

    # HypergraphConv params: 128 -> 128 -> 128
    hg_w1 = init(ks[9], (C, C))
    hg_b1 = jnp.zeros((1, C), jnp.float32)
    hg_w2 = init(ks[10], (C, C))
    hg_b2 = jnp.zeros((1, C), jnp.float32)

    # classifier params: 1280 -> 512 -> 2
    cl_w1 = init(ks[11], (TXT + IMG + C + C, 512))
    cl_b1 = jnp.zeros((1, 512), jnp.float32)
    cl_w2 = init(ks[12], (512, 2))
    cl_b2 = jnp.zeros((1, 2), jnp.float32)

    # directed graph: per-graph chain + one skip edge; adj[dst, src] = 1
    adj = jnp.zeros((N, N), jnp.float32)
    for g in range(B):
        base = g * NODES_PER_GRAPH
        for i in range(NODES_PER_GRAPH - 1):
            adj = adj.at[base + i + 1, base + i].set(1.0)
        adj = adj.at[base + 3, base].set(1.0)
    adj = jnp.minimum(adj + jnp.eye(N, dtype=jnp.float32), 1.0)  # add_self_loops
    # hoisted additive attention mask, stored bf16 (halves DMA/VMEM at scale)
    mask_add = jnp.where(adj > 0, 0.0, _NEG_INF).astype(jnp.float32)

    # hypergraph incidence (N, M): two overlapping hyperedges per graph
    inc = jnp.zeros((N, M), jnp.float32)
    for g in range(B):
        base = g * NODES_PER_GRAPH
        for i in range(5):
            inc = inc.at[base + i, 2 * g].set(1.0)
        for i in range(3, NODES_PER_GRAPH):
            inc = inc.at[base + i, 2 * g + 1].set(1.0)

    # exact node / hyperedge degree inverses, precomputed on the host
    deg = jnp.sum(inc, axis=1, keepdims=True)                     # (N, 1)
    d_inv = jnp.where(deg > 0, 1.0 / jnp.maximum(deg, 1e-12), 0.0)
    bdeg = jnp.sum(inc, axis=0).reshape(M, 1)                     # (M, 1)
    b_inv = jnp.where(bdeg > 0, 1.0 / jnp.maximum(bdeg, 1e-12), 0.0)

    # to_dense_batch + mean(dim=1): every graph has NODES_PER_GRAPH nodes
    pool = jnp.zeros((B, N), jnp.float32)
    for g in range(B):
        pool = pool.at[g, g * NODES_PER_GRAPH:(g + 1) * NODES_PER_GRAPH].set(
            1.0 / NODES_PER_GRAPH)

    # ---- forward pass (eval mode: all F.dropout calls are identity) ----
    logits = dual_graph_forward(
        x_nodes, mask_add, pool, inc, d_inv, b_inv,
        gat_w1, gat_as1, gat_ad1, gat_b1,
        gat_w2, gat_as2, gat_ad2, gat_b2,
        hg_w1, hg_b1, hg_w2, hg_b2,
        text_feat, image_feat,
        cl_w1, cl_b1, cl_w2, cl_b2,
        heads=HEADS, f_head=C)                               # (B, 2)

    jax.block_until_ready(logits)
    assert logits.shape == (B, 2) and logits.dtype == jnp.float32
    assert bool(jnp.all(jnp.isfinite(logits)))
    assert bool(jnp.all((logits > 0.0) & (logits < 1.0)))    # sigmoid(sigmoid(.))
    print("KERNEL_OK")
</pallas_src>

<mosaic_0001>
module attributes {stable_mosaic.version = 11 : i64} {
  func.func @_dualgraph_kernel(%arg0: i32, %arg1: memref<16x128xbf16, #tpu.memory_space<vmem>>, %arg2: memref<16x16xbf16, #tpu.memory_space<vmem>>, %arg3: memref<2x16xbf16, #tpu.memory_space<vmem>>, %arg4: memref<16x4xbf16, #tpu.memory_space<vmem>>, %arg5: memref<16x1xf32, #tpu.memory_space<vmem>>, %arg6: memref<4x1xf32, #tpu.memory_space<vmem>>, %arg7: memref<128x1024xbf16, #tpu.memory_space<vmem>>, %arg8: memref<1024x16xbf16, #tpu.memory_space<vmem>>, %arg9: memref<1x1024xf32, #tpu.memory_space<vmem>>, %arg10: memref<1024x128xbf16, #tpu.memory_space<vmem>>, %arg11: memref<128x2xbf16, #tpu.memory_space<vmem>>, %arg12: memref<1x128xf32, #tpu.memory_space<vmem>>, %arg13: memref<128x128xbf16, #tpu.memory_space<vmem>>, %arg14: memref<1x128xf32, #tpu.memory_space<vmem>>, %arg15: memref<128x128xbf16, #tpu.memory_space<vmem>>, %arg16: memref<1x128xf32, #tpu.memory_space<vmem>>, %arg17: memref<2x512xbf16, #tpu.memory_space<vmem>>, %arg18: memref<2x512xbf16, #tpu.memory_space<vmem>>, %arg19: memref<512x512xbf16, #tpu.memory_space<vmem>>, %arg20: memref<512x512xbf16, #tpu.memory_space<vmem>>, %arg21: memref<128x512xbf16, #tpu.memory_space<vmem>>, %arg22: memref<128x512xbf16, #tpu.memory_space<vmem>>, %arg23: memref<1x512xf32, #tpu.memory_space<vmem>>, %arg24: memref<512x2xbf16, #tpu.memory_space<vmem>>, %arg25: memref<1x2xf32, #tpu.memory_space<vmem>>, %arg26: memref<2x2xf32, #tpu.memory_space<vmem>>, %arg27: memref<2x2x128xf32, #tpu.memory_space<vmem>>, %arg28: memref<16x1024xbf16, #tpu.memory_space<vmem>>, %arg29: memref<16x1024xbf16, #tpu.memory_space<vmem>>) attributes {dimension_semantics = [#tpu.dimension_semantics<arbitrary>], iteration_bounds = array<i64: 3>, scalar_prefetch = 0 : i64, scratch_operands = 3 : i64, tpu.core_type = #tpu.core_type<tc>, window_params = [{pipeline_mode = #tpu.pipeline_mode<synchronous>, transform_indices = @transform_0, window_bounds = array<i64: 16, 128>}, {pipeline_mode = #tpu.pipeline_mode<synchronous>, transform_indices = @transform_1, window_bounds = array<i64: 16, 16>}, {pipeline_mode = #tpu.pipeline_mode<synchronous>, transform_indices = @transform_2, window_bounds = array<i64: 2, 16>}, {pipeline_mode = #tpu.pipeline_mode<synchronous>, transform_indices = @transform_3, window_bounds = array<i64: 16, 4>}, {pipeline_mode = #tpu.pipeline_mode<synchronous>, transform_indices = @transform_4, window_bounds = array<i64: 16, 1>}, {pipeline_mode = #tpu.pipeline_mode<synchronous>, transform_indices = @transform_5, window_bounds = array<i64: 4, 1>}, {pipeline_mode = #tpu.pipeline_mode<synchronous>, transform_indices = @transform_6, window_bounds = array<i64: 128, 1024>}, {pipeline_mode = #tpu.pipeline_mode<synchronous>, transform_indices = @transform_7, window_bounds = array<i64: 1024, 16>}, {pipeline_mode = #tpu.pipeline_mode<synchronous>, transform_indices = @transform_8, window_bounds = array<i64: 1, 1024>}, {pipeline_mode = #tpu.pipeline_mode<synchronous>, transform_indices = @transform_9, window_bounds = array<i64: 1024, 128>}, {pipeline_mode = #tpu.pipeline_mode<synchronous>, transform_indices = @transform_10, window_bounds = array<i64: 128, 2>}, {pipeline_mode = #tpu.pipeline_mode<synchronous>, transform_indices = @transform_11, window_bounds = array<i64: 1, 128>}, {pipeline_mode = #tpu.pipeline_mode<synchronous>, transform_indices = @transform_12, window_bounds = array<i64: 128, 128>}, {pipeline_mode = #tpu.pipeline_mode<synchronous>, transform_indices = @transform_13, window_bounds = array<i64: 1, 128>}, {pipeline_mode = #tpu.pipeline_mode<synchronous>, transform_indices = @transform_14, window_bounds = array<i64: 128, 128>}, {pipeline_mode = #tpu.pipeline_mode<synchronous>, transform_indices = @transform_15, window_bounds = array<i64: 1, 128>}, {pipeline_mode = #tpu.pipeline_mode<synchronous>, transform_indices = @transform_16, window_bounds = array<i64: 2, 512>}, {pipeline_mode = #tpu.pipeline_mode<synchronous>, transform_indices = @transform_17, window_bounds = array<i64: 2, 512>}, {pipeline_mode = #tpu.pipeline_mode<synchronous>, transform_indices = @transform_18, window_bounds = array<i64: 512, 512>}, {pipeline_mode = #tpu.pipeline_mode<synchronous>, transform_indices = @transform_19, window_bounds = array<i64: 512, 512>}, {pipeline_mode = #tpu.pipeline_mode<synchronous>, transform_indices = @transform_20, window_bounds = array<i64: 128, 512>}, {pipeline_mode = #tpu.pipeline_mode<synchronous>, transform_indices = @transform_21, window_bounds = array<i64: 128, 512>}, {pipeline_mode = #tpu.pipeline_mode<synchronous>, transform_indices = @transform_22, window_bounds = array<i64: 1, 512>}, {pipeline_mode = #tpu.pipeline_mode<synchronous>, transform_indices = @transform_23, window_bounds = array<i64: 512, 2>}, {pipeline_mode = #tpu.pipeline_mode<synchronous>, transform_indices = @transform_24, window_bounds = array<i64: 1, 2>}, {pipeline_mode = #tpu.pipeline_mode<synchronous>, transform_indices = @transform_25, window_bounds = array<i64: 2, 2>}]} {
    %c0_i32 = arith.constant 0 : i32
    %0 = arith.cmpi eq, %arg0, %c0_i32 : i32
    %1 = arith.extui %0 : i1 to i32
    %c0_i32_0 = arith.constant 0 : i32
    %2 = arith.cmpi ne, %1, %c0_i32_0 : i32
    scf.if %2 {
      %c0 = arith.constant 0 : index
      %c0_3 = arith.constant 0 : index
      %9 = vector.load %arg2[%c0, %c0_3] : memref<16x16xbf16, #tpu.memory_space<vmem>>, vector<16x16xbf16>
      %10 = arith.extf %9 : vector<16x16xbf16> to vector<16x16xf32>
      %c0_4 = arith.constant 0 : index
      %c0_5 = arith.constant 0 : index
      %11 = vector.load %arg1[%c0_4, %c0_5] : memref<16x128xbf16, #tpu.memory_space<vmem>>, vector<16x128xbf16>
      %c0_6 = arith.constant 0 : index
      %c0_7 = arith.constant 0 : index
      %12 = vector.load %arg7[%c0_6, %c0_7] : memref<128x1024xbf16, #tpu.memory_space<vmem>>, vector<128x1024xbf16>
      %cst = arith.constant dense<0.000000e+00> : vector<16x1024xf32>
      %13 = tpu.matmul %11, %12, %cst {dimension_numbers = #tpu.dot_dimension_numbers<[1], [0], [0], [1], [0, 0, 1, 1], [], []>} : vector<16x128xbf16>, vector<128x1024xbf16>, vector<16x1024xf32> -> vector<16x1024xf32>
      %14 = arith.truncf %13 : vector<16x1024xf32> to vector<16x1024xbf16>
      %c0_8 = arith.constant 0 : index
      %c0_9 = arith.constant 0 : index
      %15 = vector.load %arg28[%c0_8, %c0_9] : memref<16x1024xbf16, #tpu.memory_space<vmem>>, vector<16x1024xbf16>
      tpu.vector_store %arg28[%c0_8, %c0_9], %14 {strides = array<i32>} : memref<16x1024xbf16, #tpu.memory_space<vmem>>, vector<16x1024xbf16>,
      %c0_10 = arith.constant 0 : index
      %c0_11 = arith.constant 0 : index
      %16 = vector.load %arg8[%c0_10, %c0_11] : memref<1024x16xbf16, #tpu.memory_space<vmem>>, vector<1024x16xbf16>
      %cst_12 = arith.constant dense<0.000000e+00> : vector<16x16xf32>
      %17 = tpu.matmul %14, %16, %cst_12 {dimension_numbers = #tpu.dot_dimension_numbers<[1], [0], [0], [1], [0, 0, 1, 1], [], []>} : vector<16x1024xbf16>, vector<1024x16xbf16>, vector<16x16xf32> -> vector<16x16xf32>
      %18 = vector.extract_strided_slice %17 {offsets = [0, 0], sizes = [16, 8], strides = [1, 1]} : vector<16x16xf32> to vector<16x8xf32>
      %19 = tpu.transpose %18, [1, 0] : vector<16x8xf32> -> vector<8x16xf32>
      %20 = vector.extract_strided_slice %17 {offsets = [0, 8], sizes = [16, 8], strides = [1, 1]} : vector<16x16xf32> to vector<16x8xf32>
      %21 = vector.extract_strided_slice %20 {offsets = [0, 0], sizes = [16, 1], strides = [1, 1]} : vector<16x8xf32> to vector<16x1xf32>
      %22 = vector.extract_strided_slice %19 {offsets = [0, 0], sizes = [1, 16], strides = [1, 1]} : vector<8x16xf32> to vector<1x16xf32>
      %23 = vector.broadcast %21 : vector<16x1xf32> to vector<16x16xf32>
      %24 = vector.broadcast %22 : vector<1x16xf32> to vector<16x16xf32>
      %25 = arith.addf %23, %24 : vector<16x16xf32>
      %cst_13 = arith.constant 0.000000e+00 : f32
      %26 = vector.broadcast %cst_13 : f32 to vector<16x16xf32>
      %27 = arith.cmpf ogt, %25, %26 : vector<16x16xf32>
      %cst_14 = arith.constant 2.000000e-01 : f32
      %28 = vector.broadcast %cst_14 : f32 to vector<16x16xf32>
      %29 = arith.mulf %28, %25 : vector<16x16xf32>
      %30 = arith.select %27, %25, %29 : vector<16x16xi1>, vector<16x16xf32>
      %31 = arith.addf %30, %10 : vector<16x16xf32>
      %cst_15 = arith.constant dense<0xFF800000> : vector<16xf32>
      %32 = vector.multi_reduction <maximumf>, %31, %cst_15 [1] : vector<16x16xf32> to vector<16xf32>
      %33 = vector.shape_cast %32 : vector<16xf32> to vector<16x1xf32>
      %34 = vector.broadcast %33 : vector<16x1xf32> to vector<16x16xf32>
      %35 = arith.subf %31, %34 : vector<16x16xf32>
      %36 = math.exp %35 : vector<16x16xf32>
      %cst_16 = arith.constant dense<0.000000e+00> : vector<16xf32>
      %37 = vector.multi_reduction <add>, %36, %cst_16 [1] : vector<16x16xf32> to vector<16xf32>
      %38 = vector.shape_cast %37 : vector<16xf32> to vector<16x1xf32>
      %cst_17 = arith.constant 9.99999968E-21 : f32
      %39 = vector.broadcast %cst_17 : f32 to vector<16x1xf32>
      %40 = arith.maximumf %38, %39 : vector<16x1xf32>
      %41 = tpu.reciprocal %40 {approx = true} : vector<16x1xf32> -> vector<16x1xf32>
      %42 = vector.broadcast %41 : vector<16x1xf32> to vector<16x16xf32>
      %43 = arith.mulf %36, %42 : vector<16x16xf32>
      %44 = arith.truncf %43 : vector<16x16xf32> to vector<16x16xbf16>
      %c0_18 = arith.constant 0 : index
      %c0_19 = arith.constant 0 : index
      %45 = vector.load %arg28[%c0_18, %c0_19] : memref<16x1024xbf16, #tpu.memory_space<vmem>>, vector<16x128xbf16>
      %cst_20 = arith.constant dense<0.000000e+00> : vector<16x128xf32>
      %46 = tpu.matmul %44, %45, %cst_20 {dimension_numbers = #tpu.dot_dimension_numbers<[1], [0], [0], [1], [0, 0, 1, 1], [], []>} : vector<16x16xbf16>, vector<16x128xbf16>, vector<16x128xf32> -> vector<16x128xf32>
      %c0_21 = arith.constant 0 : index
      %c0_22 = arith.constant 0 : index
      %47 = vector.load %arg9[%c0_21, %c0_22] : memref<1x1024xf32, #tpu.memory_space<vmem>>, vector<1x128xf32>
      %48 = vector.broadcast %47 : vector<1x128xf32> to vector<16x128xf32>
      %49 = arith.addf %46, %48 : vector<16x128xf32>
      %cst_23 = arith.constant 0.000000e+00 : f32
      %50 = vector.broadcast %cst_23 : f32 to vector<16x128xf32>
      %51 = arith.cmpf ogt, %49, %50 : vector<16x128xf32>
      %cst_24 = arith.constant 0.000000e+00 : f32
      %52 = vector.broadcast %cst_24 : f32 to vector<16x128xf32>
      %53 = arith.minimumf %49, %52 : vector<16x128xf32>
      %54 = math.exp %53 : vector<16x128xf32>
      %cst_25 = arith.constant 1.000000e+00 : f32
      %55 = vector.broadcast %cst_25 : f32 to vector<16x128xf32>
      %56 = arith.subf %54, %55 : vector<16x128xf32>
      %57 = arith.select %51, %49, %56 : vector<16x128xi1>, vector<16x128xf32>
      %58 = arith.truncf %57 : vector<16x128xf32> to vector<16x128xbf16>
      %c0_26 = arith.constant 0 : index
      %c0_27 = arith.constant 0 : index
      %59 = vector.load %arg29[%c0_26, %c0_27] : memref<16x1024xbf16, #tpu.memory_space<vmem>>, vector<16x128xbf16>
      tpu.vector_store %arg29[%c0_26, %c0_27], %58 {strides = array<i32>} : memref<16x1024xbf16, #tpu.memory_space<vmem>>, vector<16x128xbf16>,
      %60 = vector.extract_strided_slice %20 {offsets = [0, 1], sizes = [16, 1], strides = [1, 1]} : vector<16x8xf32> to vector<16x1xf32>
      %61 = vector.extract_strided_slice %19 {offsets = [1, 0], sizes = [1, 16], strides = [1, 1]} : vector<8x16xf32> to vector<1x16xf32>
      %62 = vector.broadcast %60 : vector<16x1xf32> to vector<16x16xf32>
      %63 = vector.broadcast %61 : vector<1x16xf32> to vector<16x16xf32>
      %64 = arith.addf %62, %63 : vector<16x16xf32>
      %cst_28 = arith.constant 0.000000e+00 : f32
      %65 = vector.broadcast %cst_28 : f32 to vector<16x16xf32>
      %66 = arith.cmpf ogt, %64, %65 : vector<16x16xf32>
      %cst_29 = arith.constant 2.000000e-01 : f32
      %67 = vector.broadcast %cst_29 : f32 to vector<16x16xf32>
      %68 = arith.mulf %67, %64 : vector<16x16xf32>
      %69 = arith.select %66, %64, %68 : vector<16x16xi1>, vector<16x16xf32>
      %70 = arith.addf %69, %10 : vector<16x16xf32>
      %cst_30 = arith.constant dense<0xFF800000> : vector<16xf32>
      %71 = vector.multi_reduction <maximumf>, %70, %cst_30 [1] : vector<16x16xf32> to vector<16xf32>
      %72 = vector.shape_cast %71 : vector<16xf32> to vector<16x1xf32>
      %73 = vector.broadcast %72 : vector<16x1xf32> to vector<16x16xf32>
      %74 = arith.subf %70, %73 : vector<16x16xf32>
      %75 = math.exp %74 : vector<16x16xf32>
      %cst_31 = arith.constant dense<0.000000e+00> : vector<16xf32>
      %76 = vector.multi_reduction <add>, %75, %cst_31 [1] : vector<16x16xf32> to vector<16xf32>
      %77 = vector.shape_cast %76 : vector<16xf32> to vector<16x1xf32>
      %cst_32 = arith.constant 9.99999968E-21 : f32
      %78 = vector.broadcast %cst_32 : f32 to vector<16x1xf32>
      %79 = arith.maximumf %77, %78 : vector<16x1xf32>
      %80 = tpu.reciprocal %79 {approx = true} : vector<16x1xf32> -> vector<16x1xf32>
      %81 = vector.broadcast %80 : vector<16x1xf32> to vector<16x16xf32>
      %82 = arith.mulf %75, %81 : vector<16x16xf32>
      %83 = arith.truncf %82 : vector<16x16xf32> to vector<16x16xbf16>
      %c0_33 = arith.constant 0 : index
      %c128 = arith.constant 128 : index
      %84 = vector.load %arg28[%c0_33, %c128] : memref<16x1024xbf16, #tpu.memory_space<vmem>>, vector<16x128xbf16>
      %cst_34 = arith.constant dense<0.000000e+00> : vector<16x128xf32>
      %85 = tpu.matmul %83, %84, %cst_34 {dimension_numbers = #tpu.dot_dimension_numbers<[1], [0], [0], [1], [0, 0, 1, 1], [], []>} : vector<16x16xbf16>, vector<16x128xbf16>, vector<16x128xf32> -> vector<16x128xf32>
      %c0_35 = arith.constant 0 : index
      %c128_36 = arith.constant 128 : index
      %86 = vector.load %arg9[%c0_35, %c128_36] : memref<1x1024xf32, #tpu.memory_space<vmem>>, vector<1x128xf32>
      %87 = vector.broadcast %86 : vector<1x128xf32> to vector<16x128xf32>
      %88 = arith.addf %85, %87 : vector<16x128xf32>
      %cst_37 = arith.constant 0.000000e+00 : f32
      %89 = vector.broadcast %cst_37 : f32 to vector<16x128xf32>
      %90 = arith.cmpf ogt, %88, %89 : vector<16x128xf32>
      %cst_38 = arith.constant 0.000000e+00 : f32
      %91 = vector.broadcast %cst_38 : f32 to vector<16x128xf32>
      %92 = arith.minimumf %88, %91 : vector<16x128xf32>
      %93 = math.exp %92 : vector<16x128xf32>
      %cst_39 = arith.constant 1.000000e+00 : f32
      %94 = vector.broadcast %cst_39 : f32 to vector<16x128xf32>
      %95 = arith.subf %93, %94 : vector<16x128xf32>
      %96 = arith.select %90, %88, %95 : vector<16x128xi1>, vector<16x128xf32>
      %97 = arith.truncf %96 : vector<16x128xf32> to vector<16x128xbf16>
      %c0_40 = arith.constant 0 : index
      %c128_41 = arith.constant 128 : index
      %98 = vector.load %arg29[%c0_40, %c128_41] : memref<16x1024xbf16, #tpu.memory_space<vmem>>, vector<16x128xbf16>
      tpu.vector_store %arg29[%c0_40, %c128_41], %97 {strides = array<i32>} : memref<16x1024xbf16, #tpu.memory_space<vmem>>, vector<16x128xbf16>,
      %99 = vector.extract_strided_slice %20 {offsets = [0, 2], sizes = [16, 1], strides = [1, 1]} : vector<16x8xf32> to vector<16x1xf32>
      %100 = vector.extract_strided_slice %19 {offsets = [2, 0], sizes = [1, 16], strides = [1, 1]} : vector<8x16xf32> to vector<1x16xf32>
      %101 = vector.broadcast %99 : vector<16x1xf32> to vector<16x16xf32>
      %102 = vector.broadcast %100 : vector<1x16xf32> to vector<16x16xf32>
      %103 = arith.addf %101, %102 : vector<16x16xf32>
      %cst_42 = arith.constant 0.000000e+00 : f32
      %104 = vector.broadcast %cst_42 : f32 to vector<16x16xf32>
      %105 = arith.cmpf ogt, %103, %104 : vector<16x16xf32>
      %cst_43 = arith.constant 2.000000e-01 : f32
      %106 = vector.broadcast %cst_43 : f32 to vector<16x16xf32>
      %107 = arith.mulf %106, %103 : vector<16x16xf32>
      %108 = arith.select %105, %103, %107 : vector<16x16xi1>, vector<16x16xf32>
      %109 = arith.addf %108, %10 : vector<16x16xf32>
      %cst_44 = arith.constant dense<0xFF800000> : vector<16xf32>
      %110 = vector.multi_reduction <maximumf>, %109, %cst_44 [1] : vector<16x16xf32> to vector<16xf32>
      %111 = vector.shape_cast %110 : vector<16xf32> to vector<16x1xf32>
      %112 = vector.broadcast %111 : vector<16x1xf32> to vector<16x16xf32>
      %113 = arith.subf %109, %112 : vector<16x16xf32>
      %114 = math.exp %113 : vector<16x16xf32>
      %cst_45 = arith.constant dense<0.000000e+00> : vector<16xf32>
      %115 = vector.multi_reduction <add>, %114, %cst_45 [1] : vector<16x16xf32> to vector<16xf32>
      %116 = vector.shape_cast %115 : vector<16xf32> to vector<16x1xf32>
      %cst_46 = arith.constant 9.99999968E-21 : f32
      %117 = vector.broadcast %cst_46 : f32 to vector<16x1xf32>
      %118 = arith.maximumf %116, %117 : vector<16x1xf32>
      %119 = tpu.reciprocal %118 {approx = true} : vector<16x1xf32> -> vector<16x1xf32>
      %120 = vector.broadcast %119 : vector<16x1xf32> to vector<16x16xf32>
      %121 = arith.mulf %114, %120 : vector<16x16xf32>
      %122 = arith.truncf %121 : vector<16x16xf32> to vector<16x16xbf16>
      %c0_47 = arith.constant 0 : index
      %c256 = arith.constant 256 : index
      %123 = vector.load %arg28[%c0_47, %c256] : memref<16x1024xbf16, #tpu.memory_space<vmem>>, vector<16x128xbf16>
      %cst_48 = arith.constant dense<0.000000e+00> : vector<16x128xf32>
      %124 = tpu.matmul %122, %123, %cst_48 {dimension_numbers = #tpu.dot_dimension_numbers<[1], [0], [0], [1], [0, 0, 1, 1], [], []>} : vector<16x16xbf16>, vector<16x128xbf16>, vector<16x128xf32> -> vector<16x128xf32>
      %c0_49 = arith.constant 0 : index
      %c256_50 = arith.constant 256 : index
      %125 = vector.load %arg9[%c0_49, %c256_50] : memref<1x1024xf32, #tpu.memory_space<vmem>>, vector<1x128xf32>
      %126 = vector.broadcast %125 : vector<1x128xf32> to vector<16x128xf32>
      %127 = arith.addf %124, %126 : vector<16x128xf32>
      %cst_51 = arith.constant 0.000000e+00 : f32
      %128 = vector.broadcast %cst_51 : f32 to vector<16x128xf32>
      %129 = arith.cmpf ogt, %127, %128 : vector<16x128xf32>
      %cst_52 = arith.constant 0.000000e+00 : f32
      %130 = vector.broadcast %cst_52 : f32 to vector<16x128xf32>
      %131 = arith.minimumf %127, %130 : vector<16x128xf32>
      %132 = math.exp %131 : vector<16x128xf32>
      %cst_53 = arith.constant 1.000000e+00 : f32
      %133 = vector.broadcast %cst_53 : f32 to vector<16x128xf32>
      %134 = arith.subf %132, %133 : vector<16x128xf32>
      %135 = arith.select %129, %127, %134 : vector<16x128xi1>, vector<16x128xf32>
      %136 = arith.truncf %135 : vector<16x128xf32> to vector<16x128xbf16>
      %c0_54 = arith.constant 0 : index
      %c256_55 = arith.constant 256 : index
      %137 = vector.load %arg29[%c0_54, %c256_55] : memref<16x1024xbf16, #tpu.memory_space<vmem>>, vector<16x128xbf16>
      tpu.vector_store %arg29[%c0_54, %c256_55], %136 {strides = array<i32>} : memref<16x1024xbf16, #tpu.memory_space<vmem>>, vector<16x128xbf16>,
      %138 = vector.extract_strided_slice %20 {offsets = [0, 3], sizes = [16, 1], strides = [1, 1]} : vector<16x8xf32> to vector<16x1xf32>
      %139 = vector.extract_strided_slice %19 {offsets = [3, 0], sizes = [1, 16], strides = [1, 1]} : vector<8x16xf32> to vector<1x16xf32>
      %140 = vector.broadcast %138 : vector<16x1xf32> to vector<16x16xf32>
      %141 = vector.broadcast %139 : vector<1x16xf32> to vector<16x16xf32>
      %142 = arith.addf %140, %141 : vector<16x16xf32>
      %cst_56 = arith.constant 0.000000e+00 : f32
      %143 = vector.broadcast %cst_56 : f32 to vector<16x16xf32>
      %144 = arith.cmpf ogt, %142, %143 : vector<16x16xf32>
      %cst_57 = arith.constant 2.000000e-01 : f32
      %145 = vector.broadcast %cst_57 : f32 to vector<16x16xf32>
      %146 = arith.mulf %145, %142 : vector<16x16xf32>
      %147 = arith.select %144, %142, %146 : vector<16x16xi1>, vector<16x16xf32>
      %148 = arith.addf %147, %10 : vector<16x16xf32>
      %cst_58 = arith.constant dense<0xFF800000> : vector<16xf32>
      %149 = vector.multi_reduction <maximumf>, %148, %cst_58 [1] : vector<16x16xf32> to vector<16xf32>
      %150 = vector.shape_cast %149 : vector<16xf32> to vector<16x1xf32>
      %151 = vector.broadcast %150 : vector<16x1xf32> to vector<16x16xf32>
      %152 = arith.subf %148, %151 : vector<16x16xf32>
      %153 = math.exp %152 : vector<16x16xf32>
      %cst_59 = arith.constant dense<0.000000e+00> : vector<16xf32>
      %154 = vector.multi_reduction <add>, %153, %cst_59 [1] : vector<16x16xf32> to vector<16xf32>
      %155 = vector.shape_cast %154 : vector<16xf32> to vector<16x1xf32>
      %cst_60 = arith.constant 9.99999968E-21 : f32
      %156 = vector.broadcast %cst_60 : f32 to vector<16x1xf32>
      %157 = arith.maximumf %155, %156 : vector<16x1xf32>
      %158 = tpu.reciprocal %157 {approx = true} : vector<16x1xf32> -> vector<16x1xf32>
      %159 = vector.broadcast %158 : vector<16x1xf32> to vector<16x16xf32>
      %160 = arith.mulf %153, %159 : vector<16x16xf32>
      %161 = arith.truncf %160 : vector<16x16xf32> to vector<16x16xbf16>
      %c0_61 = arith.constant 0 : index
      %c384 = arith.constant 384 : index
      %162 = vector.load %arg28[%c0_61, %c384] : memref<16x1024xbf16, #tpu.memory_space<vmem>>, vector<16x128xbf16>
      %cst_62 = arith.constant dense<0.000000e+00> : vector<16x128xf32>
      %163 = tpu.matmul %161, %162, %cst_62 {dimension_numbers = #tpu.dot_dimension_numbers<[1], [0], [0], [1], [0, 0, 1, 1], [], []>} : vector<16x16xbf16>, vector<16x128xbf16>, vector<16x128xf32> -> vector<16x128xf32>
      %c0_63 = arith.constant 0 : index
      %c384_64 = arith.constant 384 : index
      %164 = vector.load %arg9[%c0_63, %c384_64] : memref<1x1024xf32, #tpu.memory_space<vmem>>, vector<1x128xf32>
      %165 = vector.broadcast %164 : vector<1x128xf32> to vector<16x128xf32>
      %166 = arith.addf %163, %165 : vector<16x128xf32>
      %cst_65 = arith.constant 0.000000e+00 : f32
      %167 = vector.broadcast %cst_65 : f32 to vector<16x128xf32>
      %168 = arith.cmpf ogt, %166, %167 : vector<16x128xf32>
      %cst_66 = arith.constant 0.000000e+00 : f32
      %169 = vector.broadcast %cst_66 : f32 to vector<16x128xf32>
      %170 = arith.minimumf %166, %169 : vector<16x128xf32>
      %171 = math.exp %170 : vector<16x128xf32>
      %cst_67 = arith.constant 1.000000e+00 : f32
      %172 = vector.broadcast %cst_67 : f32 to vector<16x128xf32>
      %173 = arith.subf %171, %172 : vector<16x128xf32>
      %174 = arith.select %168, %166, %173 : vector<16x128xi1>, vector<16x128xf32>
      %175 = arith.truncf %174 : vector<16x128xf32> to vector<16x128xbf16>
      %c0_68 = arith.constant 0 : index
      %c384_69 = arith.constant 384 : index
      %176 = vector.load %arg29[%c0_68, %c384_69] : memref<16x1024xbf16, #tpu.memory_space<vmem>>, vector<16x128xbf16>
      tpu.vector_store %arg29[%c0_68, %c384_69], %175 {strides = array<i32>} : memref<16x1024xbf16, #tpu.memory_space<vmem>>, vector<16x128xbf16>,
      %177 = vector.extract_strided_slice %20 {offsets = [0, 4], sizes = [16, 1], strides = [1, 1]} : vector<16x8xf32> to vector<16x1xf32>
      %178 = vector.extract_strided_slice %19 {offsets = [4, 0], sizes = [1, 16], strides = [1, 1]} : vector<8x16xf32> to vector<1x16xf32>
      %179 = vector.broadcast %177 : vector<16x1xf32> to vector<16x16xf32>
      %180 = vector.broadcast %178 : vector<1x16xf32> to vector<16x16xf32>
      %181 = arith.addf %179, %180 : vector<16x16xf32>
      %cst_70 = arith.constant 0.000000e+00 : f32
      %182 = vector.broadcast %cst_70 : f32 to vector<16x16xf32>
      %183 = arith.cmpf ogt, %181, %182 : vector<16x16xf32>
      %cst_71 = arith.constant 2.000000e-01 : f32
      %184 = vector.broadcast %cst_71 : f32 to vector<16x16xf32>
      %185 = arith.mulf %184, %181 : vector<16x16xf32>
      %186 = arith.select %183, %181, %185 : vector<16x16xi1>, vector<16x16xf32>
      %187 = arith.addf %186, %10 : vector<16x16xf32>
      %cst_72 = arith.constant dense<0xFF800000> : vector<16xf32>
      %188 = vector.multi_reduction <maximumf>, %187, %cst_72 [1] : vector<16x16xf32> to vector<16xf32>
      %189 = vector.shape_cast %188 : vector<16xf32> to vector<16x1xf32>
      %190 = vector.broadcast %189 : vector<16x1xf32> to vector<16x16xf32>
      %191 = arith.subf %187, %190 : vector<16x16xf32>
      %192 = math.exp %191 : vector<16x16xf32>
      %cst_73 = arith.constant dense<0.000000e+00> : vector<16xf32>
      %193 = vector.multi_reduction <add>, %192, %cst_73 [1] : vector<16x16xf32> to vector<16xf32>
      %194 = vector.shape_cast %193 : vector<16xf32> to vector<16x1xf32>
      %cst_74 = arith.constant 9.99999968E-21 : f32
      %195 = vector.broadcast %cst_74 : f32 to vector<16x1xf32>
      %196 = arith.maximumf %194, %195 : vector<16x1xf32>
      %197 = tpu.reciprocal %196 {approx = true} : vector<16x1xf32> -> vector<16x1xf32>
      %198 = vector.broadcast %197 : vector<16x1xf32> to vector<16x16xf32>
      %199 = arith.mulf %192, %198 : vector<16x16xf32>
      %200 = arith.truncf %199 : vector<16x16xf32> to vector<16x16xbf16>
      %c0_75 = arith.constant 0 : index
      %c512 = arith.constant 512 : index
      %201 = vector.load %arg28[%c0_75, %c512] : memref<16x1024xbf16, #tpu.memory_space<vmem>>, vector<16x128xbf16>
      %cst_76 = arith.constant dense<0.000000e+00> : vector<16x128xf32>
      %202 = tpu.matmul %200, %201, %cst_76 {dimension_numbers = #tpu.dot_dimension_numbers<[1], [0], [0], [1], [0, 0, 1, 1], [], []>} : vector<16x16xbf16>, vector<16x128xbf16>, vector<16x128xf32> -> vector<16x128xf32>
      %c0_77 = arith.constant 0 : index
      %c512_78 = arith.constant 512 : index
      %203 = vector.load %arg9[%c0_77, %c512_78] : memref<1x1024xf32, #tpu.memory_space<vmem>>, vector<1x128xf32>
      %204 = vector.broadcast %203 : vector<1x128xf32> to vector<16x128xf32>
      %205 = arith.addf %202, %204 : vector<16x128xf32>
      %cst_79 = arith.constant 0.000000e+00 : f32
      %206 = vector.broadcast %cst_79 : f32 to vector<16x128xf32>
      %207 = arith.cmpf ogt, %205, %206 : vector<16x128xf32>
      %cst_80 = arith.constant 0.000000e+00 : f32
      %208 = vector.broadcast %cst_80 : f32 to vector<16x128xf32>
      %209 = arith.minimumf %205, %208 : vector<16x128xf32>
      %210 = math.exp %209 : vector<16x128xf32>
      %cst_81 = arith.constant 1.000000e+00 : f32
      %211 = vector.broadcast %cst_81 : f32 to vector<16x128xf32>
      %212 = arith.subf %210, %211 : vector<16x128xf32>
      %213 = arith.select %207, %205, %212 : vector<16x128xi1>, vector<16x128xf32>
      %214 = arith.truncf %213 : vector<16x128xf32> to vector<16x128xbf16>
      %c0_82 = arith.constant 0 : index
      %c512_83 = arith.constant 512 : index
      %215 = vector.load %arg29[%c0_82, %c512_83] : memref<16x1024xbf16, #tpu.memory_space<vmem>>, vector<16x128xbf16>
      tpu.vector_store %arg29[%c0_82, %c512_83], %214 {strides = array<i32>} : memref<16x1024xbf16, #tpu.memory_space<vmem>>, vector<16x128xbf16>,
      %216 = vector.extract_strided_slice %20 {offsets = [0, 5], sizes = [16, 1], strides = [1, 1]} : vector<16x8xf32> to vector<16x1xf32>
      %217 = vector.extract_strided_slice %19 {offsets = [5, 0], sizes = [1, 16], strides = [1, 1]} : vector<8x16xf32> to vector<1x16xf32>
      %218 = vector.broadcast %216 : vector<16x1xf32> to vector<16x16xf32>
      %219 = vector.broadcast %217 : vector<1x16xf32> to vector<16x16xf32>
      %220 = arith.addf %218, %219 : vector<16x16xf32>
      %cst_84 = arith.constant 0.000000e+00 : f32
      %221 = vector.broadcast %cst_84 : f32 to vector<16x16xf32>
      %222 = arith.cmpf ogt, %220, %221 : vector<16x16xf32>
      %cst_85 = arith.constant 2.000000e-01 : f32
      %223 = vector.broadcast %cst_85 : f32 to vector<16x16xf32>
      %224 = arith.mulf %223, %220 : vector<16x16xf32>
      %225 = arith.select %222, %220, %224 : vector<16x16xi1>, vector<16x16xf32>
      %226 = arith.addf %225, %10 : vector<16x16xf32>
      %cst_86 = arith.constant dense<0xFF800000> : vector<16xf32>
      %227 = vector.multi_reduction <maximumf>, %226, %cst_86 [1] : vector<16x16xf32> to vector<16xf32>
      %228 = vector.shape_cast %227 : vector<16xf32> to vector<16x1xf32>
      %229 = vector.broadcast %228 : vector<16x1xf32> to vector<16x16xf32>
      %230 = arith.subf %226, %229 : vector<16x16xf32>
      %231 = math.exp %230 : vector<16x16xf32>
      %cst_87 = arith.constant dense<0.000000e+00> : vector<16xf32>
      %232 = vector.multi_reduction <add>, %231, %cst_87 [1] : vector<16x16xf32> to vector<16xf32>
      %233 = vector.shape_cast %232 : vector<16xf32> to vector<16x1xf32>
      %cst_88 = arith.constant 9.99999968E-21 : f32
      %234 = vector.broadcast %cst_88 : f32 to vector<16x1xf32>
      %235 = arith.maximumf %233, %234 : vector<16x1xf32>
      %236 = tpu.reciprocal %235 {approx = true} : vector<16x1xf32> -> vector<16x1xf32>
      %237 = vector.broadcast %236 : vector<16x1xf32> to vector<16x16xf32>
      %238 = arith.mulf %231, %237 : vector<16x16xf32>
      %239 = arith.truncf %238 : vector<16x16xf32> to vector<16x16xbf16>
      %c0_89 = arith.constant 0 : index
      %c640 = arith.constant 640 : index
      %240 = vector.load %arg28[%c0_89, %c640] : memref<16x1024xbf16, #tpu.memory_space<vmem>>, vector<16x128xbf16>
      %cst_90 = arith.constant dense<0.000000e+00> : vector<16x128xf32>
      %241 = tpu.matmul %239, %240, %cst_90 {dimension_numbers = #tpu.dot_dimension_numbers<[1], [0], [0], [1], [0, 0, 1, 1], [], []>} : vector<16x16xbf16>, vector<16x128xbf16>, vector<16x128xf32> -> vector<16x128xf32>
      %c0_91 = arith.constant 0 : index
      %c640_92 = arith.constant 640 : index
      %242 = vector.load %arg9[%c0_91, %c640_92] : memref<1x1024xf32, #tpu.memory_space<vmem>>, vector<1x128xf32>
      %243 = vector.broadcast %242 : vector<1x128xf32> to vector<16x128xf32>
      %244 = arith.addf %241, %243 : vector<16x128xf32>
      %cst_93 = arith.constant 0.000000e+00 : f32
      %245 = vector.broadcast %cst_93 : f32 to vector<16x128xf32>
      %246 = arith.cmpf ogt, %244, %245 : vector<16x128xf32>
      %cst_94 = arith.constant 0.000000e+00 : f32
      %247 = vector.broadcast %cst_94 : f32 to vector<16x128xf32>
      %248 = arith.minimumf %244, %247 : vector<16x128xf32>
      %249 = math.exp %248 : vector<16x128xf32>
      %cst_95 = arith.constant 1.000000e+00 : f32
      %250 = vector.broadcast %cst_95 : f32 to vector<16x128xf32>
      %251 = arith.subf %249, %250 : vector<16x128xf32>
      %252 = arith.select %246, %244, %251 : vector<16x128xi1>, vector<16x128xf32>
      %253 = arith.truncf %252 : vector<16x128xf32> to vector<16x128xbf16>
      %c0_96 = arith.constant 0 : index
      %c640_97 = arith.constant 640 : index
      %254 = vector.load %arg29[%c0_96, %c640_97] : memref<16x1024xbf16, #tpu.memory_space<vmem>>, vector<16x128xbf16>
      tpu.vector_store %arg29[%c0_96, %c640_97], %253 {strides = array<i32>} : memref<16x1024xbf16, #tpu.memory_space<vmem>>, vector<16x128xbf16>,
      %255 = vector.extract_strided_slice %20 {offsets = [0, 6], sizes = [16, 1], strides = [1, 1]} : vector<16x8xf32> to vector<16x1xf32>
      %256 = vector.extract_strided_slice %19 {offsets = [6, 0], sizes = [1, 16], strides = [1, 1]} : vector<8x16xf32> to vector<1x16xf32>
      %257 = vector.broadcast %255 : vector<16x1xf32> to vector<16x16xf32>
      %258 = vector.broadcast %256 : vector<1x16xf32> to vector<16x16xf32>
      %259 = arith.addf %257, %258 : vector<16x16xf32>
      %cst_98 = arith.constant 0.000000e+00 : f32
      %260 = vector.broadcast %cst_98 : f32 to vector<16x16xf32>
      %261 = arith.cmpf ogt, %259, %260 : vector<16x16xf32>
      %cst_99 = arith.constant 2.000000e-01 : f32
      %262 = vector.broadcast %cst_99 : f32 to vector<16x16xf32>
      %263 = arith.mulf %262, %259 : vector<16x16xf32>
      %264 = arith.select %261, %259, %263 : vector<16x16xi1>, vector<16x16xf32>
      %265 = arith.addf %264, %10 : vector<16x16xf32>
      %cst_100 = arith.constant dense<0xFF800000> : vector<16xf32>
      %266 = vector.multi_reduction <maximumf>, %265, %cst_100 [1] : vector<16x16xf32> to vector<16xf32>
      %267 = vector.shape_cast %266 : vector<16xf32> to vector<16x1xf32>
      %268 = vector.broadcast %267 : vector<16x1xf32> to vector<16x16xf32>
      %269 = arith.subf %265, %268 : vector<16x16xf32>
      %270 = math.exp %269 : vector<16x16xf32>
      %cst_101 = arith.constant dense<0.000000e+00> : vector<16xf32>
      %271 = vector.multi_reduction <add>, %270, %cst_101 [1] : vector<16x16xf32> to vector<16xf32>
      %272 = vector.shape_cast %271 : vector<16xf32> to vector<16x1xf32>
      %cst_102 = arith.constant 9.99999968E-21 : f32
      %273 = vector.broadcast %cst_102 : f32 to vector<16x1xf32>
      %274 = arith.maximumf %272, %273 : vector<16x1xf32>
      %275 = tpu.reciprocal %274 {approx = true} : vector<16x1xf32> -> vector<16x1xf32>
      %276 = vector.broadcast %275 : vector<16x1xf32> to vector<16x16xf32>
      %277 = arith.mulf %270, %276 : vector<16x16xf32>
      %278 = arith.truncf %277 : vector<16x16xf32> to vector<16x16xbf16>
      %c0_103 = arith.constant 0 : index
      %c768 = arith.constant 768 : index
      %279 = vector.load %arg28[%c0_103, %c768] : memref<16x1024xbf16, #tpu.memory_space<vmem>>, vector<16x128xbf16>
      %cst_104 = arith.constant dense<0.000000e+00> : vector<16x128xf32>
      %280 = tpu.matmul %278, %279, %cst_104 {dimension_numbers = #tpu.dot_dimension_numbers<[1], [0], [0], [1], [0, 0, 1, 1], [], []>} : vector<16x16xbf16>, vector<16x128xbf16>, vector<16x128xf32> -> vector<16x128xf32>
      %c0_105 = arith.constant 0 : index
      %c768_106 = arith.constant 768 : index
      %281 = vector.load %arg9[%c0_105, %c768_106] : memref<1x1024xf32, #tpu.memory_space<vmem>>, vector<1x128xf32>
      %282 = vector.broadcast %281 : vector<1x128xf32> to vector<16x128xf32>
      %283 = arith.addf %280, %282 : vector<16x128xf32>
      %cst_107 = arith.constant 0.000000e+00 : f32
      %284 = vector.broadcast %cst_107 : f32 to vector<16x128xf32>
      %285 = arith.cmpf ogt, %283, %284 : vector<16x128xf32>
      %cst_108 = arith.constant 0.000000e+00 : f32
      %286 = vector.broadcast %cst_108 : f32 to vector<16x128xf32>
      %287 = arith.minimumf %283, %286 : vector<16x128xf32>
      %288 = math.exp %287 : vector<16x128xf32>
      %cst_109 = arith.constant 1.000000e+00 : f32
      %289 = vector.broadcast %cst_109 : f32 to vector<16x128xf32>
      %290 = arith.subf %288, %289 : vector<16x128xf32>
      %291 = arith.select %285, %283, %290 : vector<16x128xi1>, vector<16x128xf32>
      %292 = arith.truncf %291 : vector<16x128xf32> to vector<16x128xbf16>
      %c0_110 = arith.constant 0 : index
      %c768_111 = arith.constant 768 : index
      %293 = vector.load %arg29[%c0_110, %c768_111] : memref<16x1024xbf16, #tpu.memory_space<vmem>>, vector<16x128xbf16>
      tpu.vector_store %arg29[%c0_110, %c768_111], %292 {strides = array<i32>} : memref<16x1024xbf16, #tpu.memory_space<vmem>>, vector<16x128xbf16>,
      %294 = vector.extract_strided_slice %20 {offsets = [0, 7], sizes = [16, 1], strides = [1, 1]} : vector<16x8xf32> to vector<16x1xf32>
      %295 = vector.extract_strided_slice %19 {offsets = [7, 0], sizes = [1, 16], strides = [1, 1]} : vector<8x16xf32> to vector<1x16xf32>
      %296 = vector.broadcast %294 : vector<16x1xf32> to vector<16x16xf32>
      %297 = vector.broadcast %295 : vector<1x16xf32> to vector<16x16xf32>
      %298 = arith.addf %296, %297 : vector<16x16xf32>
      %cst_112 = arith.constant 0.000000e+00 : f32
      %299 = vector.broadcast %cst_112 : f32 to vector<16x16xf32>
      %300 = arith.cmpf ogt, %298, %299 : vector<16x16xf32>
      %cst_113 = arith.constant 2.000000e-01 : f32
      %301 = vector.broadcast %cst_113 : f32 to vector<16x16xf32>
      %302 = arith.mulf %301, %298 : vector<16x16xf32>
      %303 = arith.select %300, %298, %302 : vector<16x16xi1>, vector<16x16xf32>
      %304 = arith.addf %303, %10 : vector<16x16xf32>
      %cst_114 = arith.constant dense<0xFF800000> : vector<16xf32>
      %305 = vector.multi_reduction <maximumf>, %304, %cst_114 [1] : vector<16x16xf32> to vector<16xf32>
      %306 = vector.shape_cast %305 : vector<16xf32> to vector<16x1xf32>
      %307 = vector.broadcast %306 : vector<16x1xf32> to vector<16x16xf32>
      %308 = arith.subf %304, %307 : vector<16x16xf32>
      %309 = math.exp %308 : vector<16x16xf32>
      %cst_115 = arith.constant dense<0.000000e+00> : vector<16xf32>
      %310 = vector.multi_reduction <add>, %309, %cst_115 [1] : vector<16x16xf32> to vector<16xf32>
      %311 = vector.shape_cast %310 : vector<16xf32> to vector<16x1xf32>
      %cst_116 = arith.constant 9.99999968E-21 : f32
      %312 = vector.broadcast %cst_116 : f32 to vector<16x1xf32>
      %313 = arith.maximumf %311, %312 : vector<16x1xf32>
      %314 = tpu.reciprocal %313 {approx = true} : vector<16x1xf32> -> vector<16x1xf32>
      %315 = vector.broadcast %314 : vector<16x1xf32> to vector<16x16xf32>
      %316 = arith.mulf %309, %315 : vector<16x16xf32>
      %317 = arith.truncf %316 : vector<16x16xf32> to vector<16x16xbf16>
      %c0_117 = arith.constant 0 : index
      %c896 = arith.constant 896 : index
      %318 = vector.load %arg28[%c0_117, %c896] : memref<16x1024xbf16, #tpu.memory_space<vmem>>, vector<16x128xbf16>
      %cst_118 = arith.constant dense<0.000000e+00> : vector<16x128xf32>
      %319 = tpu.matmul %317, %318, %cst_118 {dimension_numbers = #tpu.dot_dimension_numbers<[1], [0], [0], [1], [0, 0, 1, 1], [], []>} : vector<16x16xbf16>, vector<16x128xbf16>, vector<16x128xf32> -> vector<16x128xf32>
      %c0_119 = arith.constant 0 : index
      %c896_120 = arith.constant 896 : index
      %320 = vector.load %arg9[%c0_119, %c896_120] : memref<1x1024xf32, #tpu.memory_space<vmem>>, vector<1x128xf32>
      %321 = vector.broadcast %320 : vector<1x128xf32> to vector<16x128xf32>
      %322 = arith.addf %319, %321 : vector<16x128xf32>
      %cst_121 = arith.constant 0.000000e+00 : f32
      %323 = vector.broadcast %cst_121 : f32 to vector<16x128xf32>
      %324 = arith.cmpf ogt, %322, %323 : vector<16x128xf32>
      %cst_122 = arith.constant 0.000000e+00 : f32
      %325 = vector.broadcast %cst_122 : f32 to vector<16x128xf32>
      %326 = arith.minimumf %322, %325 : vector<16x128xf32>
      %327 = math.exp %326 : vector<16x128xf32>
      %cst_123 = arith.constant 1.000000e+00 : f32
      %328 = vector.broadcast %cst_123 : f32 to vector<16x128xf32>
      %329 = arith.subf %327, %328 : vector<16x128xf32>
      %330 = arith.select %324, %322, %329 : vector<16x128xi1>, vector<16x128xf32>
      %331 = arith.truncf %330 : vector<16x128xf32> to vector<16x128xbf16>
      %c0_124 = arith.constant 0 : index
      %c896_125 = arith.constant 896 : index
      %332 = vector.load %arg29[%c0_124, %c896_125] : memref<16x1024xbf16, #tpu.memory_space<vmem>>, vector<16x128xbf16>
      tpu.vector_store %arg29[%c0_124, %c896_125], %331 {strides = array<i32>} : memref<16x1024xbf16, #tpu.memory_space<vmem>>, vector<16x128xbf16>,
      %c0_126 = arith.constant 0 : index
      %c0_127 = arith.constant 0 : index
      %333 = vector.load %arg29[%c0_126, %c0_127] : memref<16x1024xbf16, #tpu.memory_space<vmem>>, vector<16x1024xbf16>
      %c0_128 = arith.constant 0 : index
      %c0_129 = arith.constant 0 : index
      %334 = vector.load %arg10[%c0_128, %c0_129] : memref<1024x128xbf16, #tpu.memory_space<vmem>>, vector<1024x128xbf16>
      %cst_130 = arith.constant dense<0.000000e+00> : vector<16x128xf32>
      %335 = tpu.matmul %333, %334, %cst_130 {dimension_numbers = #tpu.dot_dimension_numbers<[1], [0], [0], [1], [0, 0, 1, 1], [], []>} : vector<16x1024xbf16>, vector<1024x128xbf16>, vector<16x128xf32> -> vector<16x128xf32>
      %336 = arith.truncf %335 : vector<16x128xf32> to vector<16x128xbf16>
      %c0_131 = arith.constant 0 : index
      %c0_132 = arith.constant 0 : index
      %337 = vector.load %arg11[%c0_131, %c0_132] : memref<128x2xbf16, #tpu.memory_space<vmem>>, vector<128x2xbf16>
      %cst_133 = arith.constant dense<0.000000e+00> : vector<16x2xf32>
      %338 = tpu.matmul %336, %337, %cst_133 {dimension_numbers = #tpu.dot_dimension_numbers<[1], [0], [0], [1], [0, 0, 1, 1], [], []>} : vector<16x128xbf16>, vector<128x2xbf16>, vector<16x2xf32> -> vector<16x2xf32>
      %339 = vector.extract_strided_slice %338 {offsets = [0, 1], sizes = [16, 1], strides = [1, 1]} : vector<16x2xf32> to vector<16x1xf32>
      %340 = vector.extract_strided_slice %338 {offsets = [0, 0], sizes = [16, 1], strides = [1, 1]} : vector<16x2xf32> to vector<16x1xf32>
      %341 = tpu.transpose %340, [1, 0] : vector<16x1xf32> -> vector<1x16xf32>
      %342 = vector.broadcast %339 : vector<16x1xf32> to vector<16x16xf32>
      %343 = vector.broadcast %341 : vector<1x16xf32> to vector<16x16xf32>
      %344 = arith.addf %342, %343 : vector<16x16xf32>
      %cst_134 = arith.constant 0.000000e+00 : f32
      %345 = vector.broadcast %cst_134 : f32 to vector<16x16xf32>
      %346 = arith.cmpf ogt, %344, %345 : vector<16x16xf32>
      %cst_135 = arith.constant 2.000000e-01 : f32
      %347 = vector.broadcast %cst_135 : f32 to vector<16x16xf32>
      %348 = arith.mulf %347, %344 : vector<16x16xf32>
      %349 = arith.select %346, %344, %348 : vector<16x16xi1>, vector<16x16xf32>
      %350 = arith.addf %349, %10 : vector<16x16xf32>
      %cst_136 = arith.constant dense<0xFF800000> : vector<16xf32>
      %351 = vector.multi_reduction <maximumf>, %350, %cst_136 [1] : vector<16x16xf32> to vector<16xf32>
      %352 = vector.shape_cast %351 : vector<16xf32> to vector<16x1xf32>
      %353 = vector.broadcast %352 : vector<16x1xf32> to vector<16x16xf32>
      %354 = arith.subf %350, %353 : vector<16x16xf32>
      %355 = math.exp %354 : vector<16x16xf32>
      %cst_137 = arith.constant dense<0.000000e+00> : vector<16xf32>
      %356 = vector.multi_reduction <add>, %355, %cst_137 [1] : vector<16x16xf32> to vector<16xf32>
      %357 = vector.shape_cast %356 : vector<16xf32> to vector<16x1xf32>
      %cst_138 = arith.constant 9.99999968E-21 : f32
      %358 = vector.broadcast %cst_138 : f32 to vector<16x1xf32>
      %359 = arith.maximumf %357, %358 : vector<16x1xf32>
      %360 = tpu.reciprocal %359 {approx = true} : vector<16x1xf32> -> vector<16x1xf32>
      %361 = vector.broadcast %360 : vector<16x1xf32> to vector<16x16xf32>
      %362 = arith.mulf %355, %361 : vector<16x16xf32>
      %363 = arith.truncf %362 : vector<16x16xf32> to vector<16x16xbf16>
      %cst_139 = arith.constant dense<0.000000e+00> : vector<16x128xf32>
      %364 = tpu.matmul %363, %336, %cst_139 {dimension_numbers = #tpu.dot_dimension_numbers<[1], [0], [0], [1], [0, 0, 1, 1], [], []>} : vector<16x16xbf16>, vector<16x128xbf16>, vector<16x128xf32> -> vector<16x128xf32>
      %c0_140 = arith.constant 0 : index
      %c0_141 = arith.constant 0 : index
      %365 = vector.load %arg12[%c0_140, %c0_141] : memref<1x128xf32, #tpu.memory_space<vmem>>, vector<1x128xf32>
      %366 = vector.broadcast %365 : vector<1x128xf32> to vector<16x128xf32>
      %367 = arith.addf %364, %366 : vector<16x128xf32>
      %c0_142 = arith.constant 0 : index
      %c0_143 = arith.constant 0 : index
      %368 = vector.load %arg3[%c0_142, %c0_143] : memref<2x16xbf16, #tpu.memory_space<vmem>>, vector<2x16xbf16>
      %369 = arith.truncf %367 : vector<16x128xf32> to vector<16x128xbf16>
      %cst_144 = arith.constant dense<0.000000e+00> : vector<2x128xf32>
      %370 = tpu.matmul %368, %369, %cst_144 {dimension_numbers = #tpu.dot_dimension_numbers<[1], [0], [0], [1], [0, 0, 1, 1], [], []>} : vector<2x16xbf16>, vector<16x128xbf16>, vector<2x128xf32> -> vector<2x128xf32>
      %c0_145 = arith.constant 0 : index
      %c0_146 = arith.constant 0 : index
      %c0_147 = arith.constant 0 : index
      %371 = vector.load %arg27[%c0_145, %c0_146, %c0_147] : memref<2x2x128xf32, #tpu.memory_space<vmem>>, vector<1x2x128xf32>
      %372 = vector.shape_cast %371 : vector<1x2x128xf32> to vector<2x128xf32>
      %373 = vector.shape_cast %370 : vector<2x128xf32> to vector<1x2x128xf32>
      tpu.vector_store %arg27[%c0_145, %c0_146, %c0_147], %373 {strides = array<i32>} : memref<2x2x128xf32, #tpu.memory_space<vmem>>, vector<1x2x128xf32>,
    } else {
    }
    %c1_i32 = arith.constant 1 : i32
    %3 = arith.cmpi eq, %arg0, %c1_i32 : i32
    %4 = arith.extui %3 : i1 to i32
    %c0_i32_1 = arith.constant 0 : i32
    %5 = arith.cmpi ne, %4, %c0_i32_1 : i32
    scf.if %5 {
      %c0 = arith.constant 0 : index
      %c0_3 = arith.constant 0 : index
      %9 = vector.load %arg4[%c0, %c0_3] : memref<16x4xbf16, #tpu.memory_space<vmem>>, vector<16x4xbf16>
      %c0_4 = arith.constant 0 : index
      %c0_5 = arith.constant 0 : index
      %10 = vector.load %arg5[%c0_4, %c0_5] : memref<16x1xf32, #tpu.memory_space<vmem>>, vector<16x1xf32>
      %c0_6 = arith.constant 0 : index
      %c0_7 = arith.constant 0 : index
      %11 = vector.load %arg6[%c0_6, %c0_7] : memref<4x1xf32, #tpu.memory_space<vmem>>, vector<4x1xf32>
      %c0_8 = arith.constant 0 : index
      %c0_9 = arith.constant 0 : index
      %12 = vector.load %arg1[%c0_8, %c0_9] : memref<16x128xbf16, #tpu.memory_space<vmem>>, vector<16x128xbf16>
      %c0_10 = arith.constant 0 : index
      %c0_11 = arith.constant 0 : index
      %13 = vector.load %arg13[%c0_10, %c0_11] : memref<128x128xbf16, #tpu.memory_space<vmem>>, vector<128x128xbf16>
      %cst = arith.constant dense<0.000000e+00> : vector<16x128xf32>
      %14 = tpu.matmul %12, %13, %cst {dimension_numbers = #tpu.dot_dimension_numbers<[1], [0], [0], [1], [0, 0, 1, 1], [], []>} : vector<16x128xbf16>, vector<128x128xbf16>, vector<16x128xf32> -> vector<16x128xf32>
      %15 = arith.truncf %14 : vector<16x128xf32> to vector<16x128xbf16>
      %cst_12 = arith.constant dense<0.000000e+00> : vector<4x128xf32>
      %16 = tpu.matmul %9, %15, %cst_12 {dimension_numbers = #tpu.dot_dimension_numbers<[0], [0], [1], [1], [0, 1, 1, 1], [], []>} : vector<16x4xbf16>, vector<16x128xbf16>, vector<4x128xf32> -> vector<4x128xf32>
      %17 = vector.broadcast %11 : vector<4x1xf32> to vector<4x128xf32>
      %18 = arith.mulf %17, %16 : vector<4x128xf32>
      %19 = arith.truncf %18 : vector<4x128xf32> to vector<4x128xbf16>
      %cst_13 = arith.constant dense<0.000000e+00> : vector<16x128xf32>
      %20 = tpu.matmul %9, %19, %cst_13 {dimension_numbers = #tpu.dot_dimension_numbers<[1], [0], [0], [1], [0, 0, 1, 1], [], []>} : vector<16x4xbf16>, vector<4x128xbf16>, vector<16x128xf32> -> vector<16x128xf32>
      %21 = vector.broadcast %10 : vector<16x1xf32> to vector<16x128xf32>
      %22 = arith.mulf %21, %20 : vector<16x128xf32>
      %c0_14 = arith.constant 0 : index
      %c0_15 = arith.constant 0 : index
      %23 = vector.load %arg14[%c0_14, %c0_15] : memref<1x128xf32, #tpu.memory_space<vmem>>, vector<1x128xf32>
      %24 = vector.broadcast %23 : vector<1x128xf32> to vector<16x128xf32>
      %25 = arith.addf %22, %24 : vector<16x128xf32>
      %cst_16 = arith.constant 0.000000e+00 : f32
      %26 = vector.broadcast %cst_16 : f32 to vector<16x128xf32>
      %27 = arith.maximumf %25, %26 : vector<16x128xf32>
      %28 = arith.truncf %27 : vector<16x128xf32> to vector<16x128xbf16>
      %c0_17 = arith.constant 0 : index
      %c0_18 = arith.constant 0 : index
      %29 = vector.load %arg15[%c0_17, %c0_18] : memref<128x128xbf16, #tpu.memory_space<vmem>>, vector<128x128xbf16>
      %cst_19 = arith.constant dense<0.000000e+00> : vector<16x128xf32>
      %30 = tpu.matmul %28, %29, %cst_19 {dimension_numbers = #tpu.dot_dimension_numbers<[1], [0], [0], [1], [0, 0, 1, 1], [], []>} : vector<16x128xbf16>, vector<128x128xbf16>, vector<16x128xf32> -> vector<16x128xf32>
      %31 = arith.truncf %30 : vector<16x128xf32> to vector<16x128xbf16>
      %cst_20 = arith.constant dense<0.000000e+00> : vector<4x128xf32>
      %32 = tpu.matmul %9, %31, %cst_20 {dimension_numbers = #tpu.dot_dimension_numbers<[0], [0], [1], [1], [0, 1, 1, 1], [], []>} : vector<16x4xbf16>, vector<16x128xbf16>, vector<4x128xf32> -> vector<4x128xf32>
      %33 = vector.broadcast %11 : vector<4x1xf32> to vector<4x128xf32>
      %34 = arith.mulf %33, %32 : vector<4x128xf32>
      %35 = arith.truncf %34 : vector<4x128xf32> to vector<4x128xbf16>
      %cst_21 = arith.constant dense<0.000000e+00> : vector<16x128xf32>
      %36 = tpu.matmul %9, %35, %cst_21 {dimension_numbers = #tpu.dot_dimension_numbers<[1], [0], [0], [1], [0, 0, 1, 1], [], []>} : vector<16x4xbf16>, vector<4x128xbf16>, vector<16x128xf32> -> vector<16x128xf32>
      %37 = vector.broadcast %10 : vector<16x1xf32> to vector<16x128xf32>
      %38 = arith.mulf %37, %36 : vector<16x128xf32>
      %c0_22 = arith.constant 0 : index
      %c0_23 = arith.constant 0 : index
      %39 = vector.load %arg16[%c0_22, %c0_23] : memref<1x128xf32, #tpu.memory_space<vmem>>, vector<1x128xf32>
      %40 = vector.broadcast %39 : vector<1x128xf32> to vector<16x128xf32>
      %41 = arith.addf %38, %40 : vector<16x128xf32>
      %c0_24 = arith.constant 0 : index
      %c0_25 = arith.constant 0 : index
      %42 = vector.load %arg3[%c0_24, %c0_25] : memref<2x16xbf16, #tpu.memory_space<vmem>>, vector<2x16xbf16>
      %43 = arith.truncf %41 : vector<16x128xf32> to vector<16x128xbf16>
      %cst_26 = arith.constant dense<0.000000e+00> : vector<2x128xf32>
      %44 = tpu.matmul %42, %43, %cst_26 {dimension_numbers = #tpu.dot_dimension_numbers<[1], [0], [0], [1], [0, 0, 1, 1], [], []>} : vector<2x16xbf16>, vector<16x128xbf16>, vector<2x128xf32> -> vector<2x128xf32>
      %c1 = arith.constant 1 : index
      %c0_27 = arith.constant 0 : index
      %c0_28 = arith.constant 0 : index
      %45 = vector.load %arg27[%c1, %c0_27, %c0_28] : memref<2x2x128xf32, #tpu.memory_space<vmem>>, vector<1x2x128xf32>
      %46 = vector.shape_cast %45 : vector<1x2x128xf32> to vector<2x128xf32>
      %47 = vector.shape_cast %44 : vector<2x128xf32> to vector<1x2x128xf32>
      tpu.vector_store %arg27[%c1, %c0_27, %c0_28], %47 {strides = array<i32>} : memref<2x2x128xf32, #tpu.memory_space<vmem>>, vector<1x2x128xf32>,
    } else {
    }
    %c2_i32 = arith.constant 2 : i32
    %6 = arith.cmpi eq, %arg0, %c2_i32 : i32
    %7 = arith.extui %6 : i1 to i32
    %c0_i32_2 = arith.constant 0 : i32
    %8 = arith.cmpi ne, %7, %c0_i32_2 : i32
    scf.if %8 {
      %c0 = arith.constant 0 : index
      %c0_3 = arith.constant 0 : index
      %c0_4 = arith.constant 0 : index
      %9 = vector.load %arg27[%c0, %c0_3, %c0_4] : memref<2x2x128xf32, #tpu.memory_space<vmem>>, vector<1x2x128xf32>
      %10 = vector.shape_cast %9 : vector<1x2x128xf32> to vector<2x128xf32>
      %11 = arith.truncf %10 : vector<2x128xf32> to vector<2x128xbf16>
      %c1 = arith.constant 1 : index
      %c0_5 = arith.constant 0 : index
      %c0_6 = arith.constant 0 : index
      %12 = vector.load %arg27[%c1, %c0_5, %c0_6] : memref<2x2x128xf32, #tpu.memory_space<vmem>>, vector<1x2x128xf32>
      %13 = vector.shape_cast %12 : vector<1x2x128xf32> to vector<2x128xf32>
      %14 = arith.truncf %13 : vector<2x128xf32> to vector<2x128xbf16>
      %c0_7 = arith.constant 0 : index
      %c0_8 = arith.constant 0 : index
      %15 = vector.load %arg17[%c0_7, %c0_8] : memref<2x512xbf16, #tpu.memory_space<vmem>>, vector<2x512xbf16>
      %c0_9 = arith.constant 0 : index
      %c0_10 = arith.constant 0 : index
      %16 = vector.load %arg19[%c0_9, %c0_10] : memref<512x512xbf16, #tpu.memory_space<vmem>>, vector<512x512xbf16>
      %cst = arith.constant dense<0.000000e+00> : vector<2x512xf32>
      %17 = tpu.matmul %15, %16, %cst {dimension_numbers = #tpu.dot_dimension_numbers<[1], [0], [0], [1], [0, 0, 1, 1], [], []>} : vector<2x512xbf16>, vector<512x512xbf16>, vector<2x512xf32> -> vector<2x512xf32>
      %c0_11 = arith.constant 0 : index
      %c0_12 = arith.constant 0 : index
      %18 = vector.load %arg18[%c0_11, %c0_12] : memref<2x512xbf16, #tpu.memory_space<vmem>>, vector<2x512xbf16>
      %c0_13 = arith.constant 0 : index
      %c0_14 = arith.constant 0 : index
      %19 = vector.load %arg20[%c0_13, %c0_14] : memref<512x512xbf16, #tpu.memory_space<vmem>>, vector<512x512xbf16>
      %cst_15 = arith.constant dense<0.000000e+00> : vector<2x512xf32>
      %20 = tpu.matmul %18, %19, %cst_15 {dimension_numbers = #tpu.dot_dimension_numbers<[1], [0], [0], [1], [0, 0, 1, 1], [], []>} : vector<2x512xbf16>, vector<512x512xbf16>, vector<2x512xf32> -> vector<2x512xf32>
      %21 = arith.addf %17, %20 : vector<2x512xf32>
      %c0_16 = arith.constant 0 : index
      %c0_17 = arith.constant 0 : index
      %22 = vector.load %arg21[%c0_16, %c0_17] : memref<128x512xbf16, #tpu.memory_space<vmem>>, vector<128x512xbf16>
      %cst_18 = arith.constant dense<0.000000e+00> : vector<2x512xf32>
      %23 = tpu.matmul %11, %22, %cst_18 {dimension_numbers = #tpu.dot_dimension_numbers<[1], [0], [0], [1], [0, 0, 1, 1], [], []>} : vector<2x128xbf16>, vector<128x512xbf16>, vector<2x512xf32> -> vector<2x512xf32>
      %24 = arith.addf %21, %23 : vector<2x512xf32>
      %c0_19 = arith.constant 0 : index
      %c0_20 = arith.constant 0 : index
      %25 = vector.load %arg22[%c0_19, %c0_20] : memref<128x512xbf16, #tpu.memory_space<vmem>>, vector<128x512xbf16>
      %cst_21 = arith.constant dense<0.000000e+00> : vector<2x512xf32>
      %26 = tpu.matmul %14, %25, %cst_21 {dimension_numbers = #tpu.dot_dimension_numbers<[1], [0], [0], [1], [0, 0, 1, 1], [], []>} : vector<2x128xbf16>, vector<128x512xbf16>, vector<2x512xf32> -> vector<2x512xf32>
      %27 = arith.addf %24, %26 : vector<2x512xf32>
      %c0_22 = arith.constant 0 : index
      %c0_23 = arith.constant 0 : index
      %28 = vector.load %arg23[%c0_22, %c0_23] : memref<1x512xf32, #tpu.memory_space<vmem>>, vector<1x512xf32>
      %29 = vector.broadcast %28 : vector<1x512xf32> to vector<2x512xf32>
      %30 = arith.addf %27, %29 : vector<2x512xf32>
      %31 = arith.truncf %30 : vector<2x512xf32> to vector<2x512xbf16>
      %c0_24 = arith.constant 0 : index
      %c0_25 = arith.constant 0 : index
      %32 = vector.load %arg24[%c0_24, %c0_25] : memref<512x2xbf16, #tpu.memory_space<vmem>>, vector<512x2xbf16>
      %cst_26 = arith.constant dense<0.000000e+00> : vector<2x2xf32>
      %33 = tpu.matmul %31, %32, %cst_26 {dimension_numbers = #tpu.dot_dimension_numbers<[1], [0], [0], [1], [0, 0, 1, 1], [], []>} : vector<2x512xbf16>, vector<512x2xbf16>, vector<2x2xf32> -> vector<2x2xf32>
      %c0_27 = arith.constant 0 : index
      %c0_28 = arith.constant 0 : index
      %34 = vector.load %arg25[%c0_27, %c0_28] : memref<1x2xf32, #tpu.memory_space<vmem>>, vector<1x2xf32>
      %35 = vector.broadcast %34 : vector<1x2xf32> to vector<2x2xf32>
      %36 = arith.addf %33, %35 : vector<2x2xf32>
      %cst_29 = arith.constant 0.000000e+00 : f32
      %37 = vector.broadcast %cst_29 : f32 to vector<2x2xf32>
      %38 = arith.subf %37, %36 : vector<2x2xf32>
      %39 = math.exp %38 : vector<2x2xf32>
      %cst_30 = arith.constant 1.000000e+00 : f32
      %40 = vector.broadcast %cst_30 : f32 to vector<2x2xf32>
      %41 = arith.addf %40, %39 : vector<2x2xf32>
      %cst_31 = arith.constant 1.000000e+00 : f32
      %42 = vector.broadcast %cst_31 : f32 to vector<2x2xf32>
      %43 = arith.divf %42, %41 : vector<2x2xf32>
      %cst_32 = arith.constant 0.000000e+00 : f32
      %44 = vector.broadcast %cst_32 : f32 to vector<2x2xf32>
      %45 = arith.subf %44, %43 : vector<2x2xf32>
      %46 = math.exp %45 : vector<2x2xf32>
      %cst_33 = arith.constant 1.000000e+00 : f32
      %47 = vector.broadcast %cst_33 : f32 to vector<2x2xf32>
      %48 = arith.addf %47, %46 : vector<2x2xf32>
      %cst_34 = arith.constant 1.000000e+00 : f32
      %49 = vector.broadcast %cst_34 : f32 to vector<2x2xf32>
      %50 = arith.divf %49, %48 : vector<2x2xf32>
      %c0_35 = arith.constant 0 : index
      %c0_36 = arith.constant 0 : index
      %51 = vector.load %arg26[%c0_35, %c0_36] : memref<2x2xf32, #tpu.memory_space<vmem>>, vector<2x2xf32>
      tpu.vector_store %arg26[%c0_35, %c0_36], %50 {strides = array<i32>} : memref<2x2xf32, #tpu.memory_space<vmem>>, vector<2x2xf32>,
    } else {
    }
    return
  }
  func.func @transform_0(%arg0: i32) -> (i32, i32) {
    %c0_i32 = arith.constant 0 : i32
    %c0_i32_0 = arith.constant 0 : i32
    %c0_i32_1 = arith.constant 0 : i32
    return %c0_i32, %c0_i32_0 : i32, i32
  }
  func.func @transform_1(%arg0: i32) -> (i32, i32) {
    %c0_i32 = arith.constant 0 : i32
    %c0_i32_0 = arith.constant 0 : i32
    %c0_i32_1 = arith.constant 0 : i32
    return %c0_i32, %c0_i32_0 : i32, i32
  }
  func.func @transform_2(%arg0: i32) -> (i32, i32) {
    %c0_i32 = arith.constant 0 : i32
    %c0_i32_0 = arith.constant 0 : i32
    %c0_i32_1 = arith.constant 0 : i32
    return %c0_i32, %c0_i32_0 : i32, i32
  }
  func.func @transform_3(%arg0: i32) -> (i32, i32) {
    %c0_i32 = arith.constant 0 : i32
    %c0_i32_0 = arith.constant 0 : i32
    %c0_i32_1 = arith.constant 0 : i32
    return %c0_i32, %c0_i32_0 : i32, i32
  }
  func.func @transform_4(%arg0: i32) -> (i32, i32) {
    %c0_i32 = arith.constant 0 : i32
    %c0_i32_0 = arith.constant 0 : i32
    %c0_i32_1 = arith.constant 0 : i32
    return %c0_i32, %c0_i32_0 : i32, i32
  }
  func.func @transform_5(%arg0: i32) -> (i32, i32) {
    %c0_i32 = arith.constant 0 : i32
    %c0_i32_0 = arith.constant 0 : i32
    %c0_i32_1 = arith.constant 0 : i32
    return %c0_i32, %c0_i32_0 : i32, i32
  }
  func.func @transform_6(%arg0: i32) -> (i32, i32) {
    %c0_i32 = arith.constant 0 : i32
    %c0_i32_0 = arith.constant 0 : i32
    %c0_i32_1 = arith.constant 0 : i32
    return %c0_i32, %c0_i32_0 : i32, i32
  }
  func.func @transform_7(%arg0: i32) -> (i32, i32) {
    %c0_i32 = arith.constant 0 : i32
    %c0_i32_0 = arith.constant 0 : i32
    %c0_i32_1 = arith.constant 0 : i32
    return %c0_i32, %c0_i32_0 : i32, i32
  }
  func.func @transform_8(%arg0: i32) -> (i32, i32) {
    %c0_i32 = arith.constant 0 : i32
    %c0_i32_0 = arith.constant 0 : i32
    %c0_i32_1 = arith.constant 0 : i32
    return %c0_i32, %c0_i32_0 : i32, i32
  }
  func.func @transform_9(%arg0: i32) -> (i32, i32) {
    %c0_i32 = arith.constant 0 : i32
    %c0_i32_0 = arith.constant 0 : i32
    %c0_i32_1 = arith.constant 0 : i32
    return %c0_i32, %c0_i32_0 : i32, i32
  }
  func.func @transform_10(%arg0: i32) -> (i32, i32) {
    %c0_i32 = arith.constant 0 : i32
    %c0_i32_0 = arith.constant 0 : i32
    %c0_i32_1 = arith.constant 0 : i32
    return %c0_i32, %c0_i32_0 : i32, i32
  }
  func.func @transform_11(%arg0: i32) -> (i32, i32) {
    %c0_i32 = arith.constant 0 : i32
    %c0_i32_0 = arith.constant 0 : i32
    %c0_i32_1 = arith.constant 0 : i32
    return %c0_i32, %c0_i32_0 : i32, i32
  }
  func.func @transform_12(%arg0: i32) -> (i32, i32) {
    %c0_i32 = arith.constant 0 : i32
    %c0_i32_0 = arith.constant 0 : i32
    %c0_i32_1 = arith.constant 0 : i32
    return %c0_i32, %c0_i32_0 : i32, i32
  }
  func.func @transform_13(%arg0: i32) -> (i32, i32) {
    %c0_i32 = arith.constant 0 : i32
    %c0_i32_0 = arith.constant 0 : i32
    %c0_i32_1 = arith.constant 0 : i32
    return %c0_i32, %c0_i32_0 : i32, i32
  }
  func.func @transform_14(%arg0: i32) -> (i32, i32) {
    %c0_i32 = arith.constant 0 : i32
    %c0_i32_0 = arith.constant 0 : i32
    %c0_i32_1 = arith.constant 0 : i32
    return %c0_i32, %c0_i32_0 : i32, i32
  }
  func.func @transform_15(%arg0: i32) -> (i32, i32) {
    %c0_i32 = arith.constant 0 : i32
    %c0_i32_0 = arith.constant 0 : i32
    %c0_i32_1 = arith.constant 0 : i32
    return %c0_i32, %c0_i32_0 : i32, i32
  }
  func.func @transform_16(%arg0: i32) -> (i32, i32) {
    %c0_i32 = arith.constant 0 : i32
    %c0_i32_0 = arith.constant 0 : i32
    %c0_i32_1 = arith.constant 0 : i32
    return %c0_i32, %c0_i32_0 : i32, i32
  }
  func.func @transform_17(%arg0: i32) -> (i32, i32) {
    %c0_i32 = arith.constant 0 : i32
    %c0_i32_0 = arith.constant 0 : i32
    %c0_i32_1 = arith.constant 0 : i32
    return %c0_i32, %c0_i32_0 : i32, i32
  }
  func.func @transform_18(%arg0: i32) -> (i32, i32) {
    %c0_i32 = arith.constant 0 : i32
    %c0_i32_0 = arith.constant 0 : i32
    %c0_i32_1 = arith.constant 0 : i32
    return %c0_i32, %c0_i32_0 : i32, i32
  }
  func.func @transform_19(%arg0: i32) -> (i32, i32) {
    %c0_i32 = arith.constant 0 : i32
    %c0_i32_0 = arith.constant 0 : i32
    %c0_i32_1 = arith.constant 0 : i32
    return %c0_i32, %c0_i32_0 : i32, i32
  }
  func.func @transform_20(%arg0: i32) -> (i32, i32) {
    %c0_i32 = arith.constant 0 : i32
    %c0_i32_0 = arith.constant 0 : i32
    %c0_i32_1 = arith.constant 0 : i32
    return %c0_i32, %c0_i32_0 : i32, i32
  }
  func.func @transform_21(%arg0: i32) -> (i32, i32) {
    %c0_i32 = arith.constant 0 : i32
    %c0_i32_0 = arith.constant 0 : i32
    %c0_i32_1 = arith.constant 0 : i32
    return %c0_i32, %c0_i32_0 : i32, i32
  }
  func.func @transform_22(%arg0: i32) -> (i32, i32) {
    %c0_i32 = arith.constant 0 : i32
    %c0_i32_0 = arith.constant 0 : i32
    %c0_i32_1 = arith.constant 0 : i32
    return %c0_i32, %c0_i32_0 : i32, i32
  }
  func.func @transform_23(%arg0: i32) -> (i32, i32) {
    %c0_i32 = arith.constant 0 : i32
    %c0_i32_0 = arith.constant 0 : i32
    %c0_i32_1 = arith.constant 0 : i32
    return %c0_i32, %c0_i32_0 : i32, i32
  }
  func.func @transform_24(%arg0: i32) -> (i32, i32) {
    %c0_i32 = arith.constant 0 : i32
    %c0_i32_0 = arith.constant 0 : i32
    %c0_i32_1 = arith.constant 0 : i32
    return %c0_i32, %c0_i32_0 : i32, i32
  }
  func.func @transform_25(%arg0: i32) -> (i32, i32) {
    %c0_i32 = arith.constant 0 : i32
    %c0_i32_0 = arith.constant 0 : i32
    %c0_i32_1 = arith.constant 0 : i32
    return %c0_i32, %c0_i32_0 : i32, i32
  }
}

</mosaic_0001>

<llo_original>
// kernel: tpu_custom_call.1
$region0: #{tpu_custom_call.1}
  #allocation0 [shape = 'u32[]', space=smem, size = 0x4, offset = 0x4, fixed_abs, tag = 'smem constant byte address 0x4 - core index']
  #allocation1 [shape = 'u32[144,128]{1,0:T(1,128)}', space=vmem, size = 0x12000, scoped, tag = 'internal scratch']
  #allocation2 [shape = 'f32[2,2,128]{2,1,0:T(2,128)}', space=vmem, size = 0x800, scoped, tag = 'scratch operand']
  #allocation3 [shape = 'bf16[16,1024]{1,0:T(16,128)(2,1)}', space=vmem, size = 0x8000, scoped, tag = 'scratch operand']
  #allocation4 [shape = 'bf16[16,1024]{1,0:T(16,128)(2,1)}', space=vmem, size = 0x8000, scoped, tag = 'scratch operand']
  %s0 = inlined_call_operand.vmem [shape: bf16[16,128], index: 0, kind: input, shape index: {}]
  %s1 = inlined_call_operand.vmem [shape: bf16[16,16], index: 1, kind: input, shape index: {}]
  %s2 = inlined_call_operand.vmem [shape: bf16[2,16], index: 2, kind: input, shape index: {}]
  %s3 = inlined_call_operand.vmem [shape: bf16[16,4], index: 3, kind: input, shape index: {}]
  %s4 = inlined_call_operand.vmem [shape: f32[16,1], index: 4, kind: input, shape index: {}]
  %s5 = inlined_call_operand.vmem [shape: f32[4,1], index: 5, kind: input, shape index: {}]
  %s6 = inlined_call_operand.vmem [shape: bf16[128,1024], index: 6, kind: input, shape index: {}]
  %s7 = inlined_call_operand.vmem [shape: bf16[1024,16], index: 7, kind: input, shape index: {}]
  %s8 = inlined_call_operand.vmem [shape: f32[1,1024], index: 8, kind: input, shape index: {}]
  %s9 = inlined_call_operand.hbm [shape: bf16[1024,128], index: 9, kind: input, shape index: {}]
  %s10 = inlined_call_operand.vmem [shape: bf16[128,2], index: 10, kind: input, shape index: {}]
  %s11 = inlined_call_operand.vmem [shape: f32[1,128], index: 11, kind: input, shape index: {}]
  %s12 = inlined_call_operand.vmem [shape: bf16[128,128], index: 12, kind: input, shape index: {}]
  %s13 = inlined_call_operand.vmem [shape: f32[1,128], index: 13, kind: input, shape index: {}]
  %s14 = inlined_call_operand.vmem [shape: bf16[128,128], index: 14, kind: input, shape index: {}]
  %s15 = inlined_call_operand.vmem [shape: f32[1,128], index: 15, kind: input, shape index: {}]
  %s16 = inlined_call_operand.vmem [shape: bf16[2,512], index: 16, kind: input, shape index: {}]
  %s17 = inlined_call_operand.vmem [shape: bf16[2,512], index: 17, kind: input, shape index: {}]
  %s18 = inlined_call_operand.hbm [shape: bf16[512,512], index: 18, kind: input, shape index: {}]
  %s19 = inlined_call_operand.hbm [shape: bf16[512,512], index: 19, kind: input, shape index: {}]
  %s20 = inlined_call_operand.vmem [shape: bf16[128,512], index: 20, kind: input, shape index: {}]
  %s21 = inlined_call_operand.hbm [shape: bf16[128,512], index: 21, kind: input, shape index: {}]
  %s22 = inlined_call_operand.vmem [shape: f32[1,512], index: 22, kind: input, shape index: {}]
  %s23 = inlined_call_operand.vmem [shape: bf16[512,2], index: 23, kind: input, shape index: {}]
  %s24 = inlined_call_operand.vmem [shape: f32[1,2], index: 24, kind: input, shape index: {}]
  %s25 = inlined_call_operand.hbm [shape: f32[2,2], index: 25, kind: output, shape index: {}]
  %s26 = sld [smem:[#allocation0]]
  $region161: #{tpu_custom_call.1} parent=0
    _
  %s28 = ssub.s32 1, %s26
  %s29 = scalar_select 0, %s28, %s26
  $region1: #{tpu_custom_call.1} parent=0
    #allocation5 [shape = 'u8[262144]{0}', space=vmem, size = 0x40000, scoped, tag = 'input window, operand 9, single buffered']
    #allocation6 [shape = 's32[2]{0}', space=sflag, size = 0x8, scoped, tag = 'scoped memory for tpu_custom_call.1']
    #allocation7 [shape = 's32[2]{0}', space=sflag, size = 0x8, scoped, tag = 'scoped memory for tpu_custom_call.1']
    #allocation8 [shape = 'u8[524288]{0}', space=vmem, size = 0x80000, scoped, tag = 'input window, operand 18, single buffered']
    #allocation9 [shape = 's32[1]{0}', space=sflag, size = 0x4, scoped, tag = 'scoped memory for tpu_custom_call.1']
    #allocation10 [shape = 'u8[524288]{0}', space=vmem, size = 0x80000, scoped, tag = 'input window, operand 19, single buffered']
    #allocation11 [shape = 'u8[131072]{0}', space=vmem, size = 0x20000, scoped, tag = 'input window, operand 21, single buffered']
    #allocation12 [shape = 's32[1]{0}', space=sflag, size = 0x4, scoped, tag = 'scoped memory for tpu_custom_call.1']
    #allocation13 [shape = 'u8[1024]{0}', space=vmem, size = 0x400, scoped, tag = 'output window, operand 0, single buffered']
    %30 = vsyncpa [#allocation6], 0
    %31 = vsyncpa [#allocation9], 0
    %32 = vsyncpa [#allocation12], 0
    %33 = vsyncpa [#allocation7], 0
    loop: start=0, step=1, limit=5
    $region2: #{tpu_custom_call.1} parent=1 // loop_pre_header
      _
    $region3: #{tpu_custom_call.1} parent=1 // loop_header
      %s35 = sphi 0, %s39
      %p36 = scmp.ge.s32.totalorder %s35, 5
      %s43 = sphi 0, %s43
      %s45 = sphi 0, %s43
      %s46 = sphi 0, %s45
      %s60 = sphi 0, %s46
      %s64 = sphi 0, %s64
      %s66 = sphi 0, %s64
      %s67 = sphi 0, %s66
      %s81 = sphi 0, %s67
      %s85 = sphi 0, %s85
      %s87 = sphi 0, %s85
      %s88 = sphi 0, %s87
      %s102 = sphi 0, %s88
      %s106 = sphi 0, %s106
      %s108 = sphi 0, %s106
      %s109 = sphi 0, %s108
      %s123 = sphi 0, %s109
      %s127 = sphi 0, %s127
      %s129 = sphi 0, %s127
      %s130 = sphi 0, %s129
      %s144 = sphi 0, %s130
      %s148 = sphi 0, %s148
      %s150 = sphi 0, %s148
      %s151 = sphi 0, %s150
      %s165 = sphi 0, %s151
      %s169 = sphi 0, %s169
      %s171 = sphi 0, %s169
      %s172 = sphi 0, %s171
      %s186 = sphi 0, %s172
      %s190 = sphi 0, %s190
      %s192 = sphi 0, %s190
      %s193 = sphi 0, %s192
      %s207 = sphi 0, %s193
      %s211 = sphi 0, %s211
      %s213 = sphi 0, %s211
      %s214 = sphi 0, %s213
      %s228 = sphi 0, %s214
      %s232 = sphi 0, %s232
      %s234 = sphi 0, %s232
      %s235 = sphi 0, %s234
      %s249 = sphi 0, %s235
      %s253 = sphi 0, %s253
      %s255 = sphi 0, %s253
      %s256 = sphi 0, %s255
      %s270 = sphi 0, %s256
      %s274 = sphi 0, %s274
      %s276 = sphi 0, %s274
      %s277 = sphi 0, %s276
      %s291 = sphi 0, %s277
      %s295 = sphi 0, %s295
      %s297 = sphi 0, %s295
      %s298 = sphi 0, %s297
      %s312 = sphi 0, %s298
      %s316 = sphi 0, %s316
      %s318 = sphi 0, %s316
      %s319 = sphi 0, %s318
      %s333 = sphi 0, %s319
      %s337 = sphi 0, %s337
      %s339 = sphi 0, %s337
      %s340 = sphi 0, %s339
      %s354 = sphi 0, %s340
      %s358 = sphi 0, %s358
      %s360 = sphi 0, %s358
      %s361 = sphi 0, %s360
      %s375 = sphi 0, %s361
      %s379 = sphi 0, %s379
      %s381 = sphi 0, %s379
      %s382 = sphi 0, %s381
      %s396 = sphi 0, %s382
      %s400 = sphi 0, %s400
      %s402 = sphi 0, %s400
      %s403 = sphi 0, %s402
      %s417 = sphi 0, %s403
      %s421 = sphi 0, %s421
      %s423 = sphi 0, %s421
      %s424 = sphi 0, %s423
      %s438 = sphi 0, %s424
      %s442 = sphi 0, %s442
      %s444 = sphi 0, %s442
      %s445 = sphi 0, %s444
      %s459 = sphi 0, %s445
      %s463 = sphi 0, %s463
      %s465 = sphi 0, %s463
      %s466 = sphi 0, %s465
      %s480 = sphi 0, %s466
      %s484 = sphi 0, %s484
      %s486 = sphi 0, %s484
      %s487 = sphi 0, %s486
      %s501 = sphi 0, %s487
      %s505 = sphi 0, %s505
      %s507 = sphi 0, %s505
      %s508 = sphi 0, %s507
      %s522 = sphi 0, %s508
      %s526 = sphi 0, %s526
      %s528 = sphi 0, %s526
      %s529 = sphi 0, %s528
      %s543 = sphi 0, %s529
      %s547 = sphi 0, %s547
      %s549 = sphi 0, %s547
      %s550 = sphi 0, %s549
      %s564 = sphi 0, %s550
      %s568 = sphi 0, %s568
      %s570 = sphi 0, %s568
      %s571 = sphi 0, %s570
      %s585 = sphi 0, %s571
    $region4: #{tpu_custom_call.1} parent=1 // loop_header_branch
      %38 = sbr.rel (%p36) target = $region8
    $region5: #{tpu_custom_call.1} parent=1 // loop_body
      %s40 = ssub.s32 %s35, 1
      %s41 = ssub.s32 %s35, 2
      %s42 = sadd.s32 %s35, 1
      %s44 = sadd.s32 %s43, 1
      %p47 = scmp.eq.s32.totalorder %s35, 2
      %p48 = scmp.ne.s32.totalorder %s43, %s45
      %p49 = scmp.eq.s32.totalorder %s35, 0
      %p50 = por %p48, %p49
      %p51 = scmp.ne.s32.totalorder %s43, %s45
      %p52 = scmp.eq.s32.totalorder %s40, 2
      %p53 = por %p51, %p52
      %p54 = scmp.ne.s32.totalorder %s45, %s46
      %p55 = scmp.eq.s32.totalorder %s40, 0
      %p56 = por %p54, %p55
      %p57 = scmp.ne.s32.totalorder %s45, %s46
      %p58 = scmp.eq.s32.totalorder %s41, 2
      %p59 = por %p57, %p58
      %p61 = scmp.ne.s32.totalorder %s46, %s60
      %p62 = scmp.eq.s32.totalorder %s41, 0
      %p63 = por %p61, %p62
      %s65 = sadd.s32 %s64, 1
      %p68 = scmp.eq.s32.totalorder %s35, 2
      %p69 = scmp.ne.s32.totalorder %s64, %s66
      %p70 = scmp.eq.s32.totalorder %s35, 0
      %p71 = por %p69, %p70
      %p72 = scmp.ne.s32.totalorder %s64, %s66
      %p73 = scmp.eq.s32.totalorder %s40, 2
      %p74 = por %p72, %p73
      %p75 = scmp.ne.s32.totalorder %s66, %s67
      %p76 = scmp.eq.s32.totalorder %s40, 0
      %p77 = por %p75, %p76
      %p78 = scmp.ne.s32.totalorder %s66, %s67
      %p79 = scmp.eq.s32.totalorder %s41, 2
      %p80 = por %p78, %p79
      %p82 = scmp.ne.s32.totalorder %s67, %s81
      %p83 = scmp.eq.s32.totalorder %s41, 0
      %p84 = por %p82, %p83
      %s86 = sadd.s32 %s85, 1
      %p89 = scmp.eq.s32.totalorder %s35, 2
      %p90 = scmp.ne.s32.totalorder %s85, %s87
      %p91 = scmp.eq.s32.totalorder %s35, 0
      %p92 = por %p90, %p91
      %p93 = scmp.ne.s32.totalorder %s85, %s87
      %p94 = scmp.eq.s32.totalorder %s40, 2
      %p95 = por %p93, %p94
      %p96 = scmp.ne.s32.totalorder %s87, %s88
      %p97 = scmp.eq.s32.totalorder %s40, 0
      %p98 = por %p96, %p97
      %p99 = scmp.ne.s32.totalorder %s87, %s88
      %p100 = scmp.eq.s32.totalorder %s41, 2
      %p101 = por %p99, %p100
      %p103 = scmp.ne.s32.totalorder %s88, %s102
      %p104 = scmp.eq.s32.totalorder %s41, 0
      %p105 = por %p103, %p104
      %s107 = sadd.s32 %s106, 1
      %p110 = scmp.eq.s32.totalorder %s35, 2
      %p111 = scmp.ne.s32.totalorder %s106, %s108
      %p112 = scmp.eq.s32.totalorder %s35, 0
      %p113 = por %p111, %p112
      %p114 = scmp.ne.s32.totalorder %s106, %s108
      %p115 = scmp.eq.s32.totalorder %s40, 2
      %p116 = por %p114, %p115
      %p117 = scmp.ne.s32.totalorder %s108, %s109
      %p118 = scmp.eq.s32.totalorder %s40, 0
      %p119 = por %p117, %p118
      %p120 = scmp.ne.s32.totalorder %s108, %s109
      %p121 = scmp.eq.s32.totalorder %s41, 2
      %p122 = por %p120, %p121
      %p124 = scmp.ne.s32.totalorder %s109, %s123
      %p125 = scmp.eq.s32.totalorder %s41, 0
      %p126 = por %p124, %p125
      %s128 = sadd.s32 %s127, 1
      %p131 = scmp.eq.s32.totalorder %s35, 2
      %p132 = scmp.ne.s32.totalorder %s127, %s129
      %p133 = scmp.eq.s32.totalorder %s35, 0
      %p134 = por %p132, %p133
      %p135 = scmp.ne.s32.totalorder %s127, %s129
      %p136 = scmp.eq.s32.totalorder %s40, 2
      %p137 = por %p135, %p136
      %p138 = scmp.ne.s32.totalorder %s129, %s130
      %p139 = scmp.eq.s32.totalorder %s40, 0
      %p140 = por %p138, %p139
      %p141 = scmp.ne.s32.totalorder %s129, %s130
      %p142 = scmp.eq.s32.totalorder %s41, 2
      %p143 = por %p141, %p142
      %p145 = scmp.ne.s32.totalorder %s130, %s144
      %p146 = scmp.eq.s32.totalorder %s41, 0
      %p147 = por %p145, %p146
      %s149 = sadd.s32 %s148, 1
      %p152 = scmp.eq.s32.totalorder %s35, 2
      %p153 = scmp.ne.s32.totalorder %s148, %s150
      %p154 = scmp.eq.s32.totalorder %s35, 0
      %p155 = por %p153, %p154
      %p156 = scmp.ne.s32.totalorder %s148, %s150
      %p157 = scmp.eq.s32.totalorder %s40, 2
      %p158 = por %p156, %p157
      %p159 = scmp.ne.s32.totalorder %s150, %s151
      %p160 = scmp.eq.s32.totalorder %s40, 0
      %p161 = por %p159, %p160
      %p162 = scmp.ne.s32.totalorder %s150, %s151
      %p163 = scmp.eq.s32.totalorder %s41, 2
      %p164 = por %p162, %p163
      %p166 = scmp.ne.s32.totalorder %s151, %s165
      %p167 = scmp.eq.s32.totalorder %s41, 0
      %p168 = por %p166, %p167
      %s170 = sadd.s32 %s169, 1
      %p173 = scmp.eq.s32.totalorder %s35, 2
      %p174 = scmp.ne.s32.totalorder %s169, %s171
      %p175 = scmp.eq.s32.totalorder %s35, 0
      %p176 = por %p174, %p175
      %p177 = scmp.ne.s32.totalorder %s169, %s171
      %p178 = scmp.eq.s32.totalorder %s40, 2
      %p179 = por %p177, %p178
      %p180 = scmp.ne.s32.totalorder %s171, %s172
      %p181 = scmp.eq.s32.totalorder %s40, 0
      %p182 = por %p180, %p181
      %p183 = scmp.ne.s32.totalorder %s171, %s172
      %p184 = scmp.eq.s32.totalorder %s41, 2
      %p185 = por %p183, %p184
      %p187 = scmp.ne.s32.totalorder %s172, %s186
      %p188 = scmp.eq.s32.totalorder %s41, 0
      %p189 = por %p187, %p188
      %s191 = sadd.s32 %s190, 1
      %p194 = scmp.eq.s32.totalorder %s35, 2
      %p195 = scmp.ne.s32.totalorder %s190, %s192
      %p196 = scmp.eq.s32.totalorder %s35, 0
      %p197 = por %p195, %p196
      %p198 = scmp.ne.s32.totalorder %s190, %s192
      %p199 = scmp.eq.s32.totalorder %s40, 2
      %p200 = por %p198, %p199
      %p201 = scmp.ne.s32.totalorder %s192, %s193
      %p202 = scmp.eq.s32.totalorder %s40, 0
      %p203 = por %p201, %p202
      %p204 = scmp.ne.s32.totalorder %s192, %s193
      %p205 = scmp.eq.s32.totalorder %s41, 2
      %p206 = por %p204, %p205
      %p208 = scmp.ne.s32.totalorder %s193, %s207
      %p209 = scmp.eq.s32.totalorder %s41, 0
      %p210 = por %p208, %p209
      %s212 = sadd.s32 %s211, 1
      %p215 = scmp.eq.s32.totalorder %s35, 2
      %p216 = scmp.ne.s32.totalorder %s211, %s213
      %p217 = scmp.eq.s32.totalorder %s35, 0
      %p218 = por %p216, %p217
      %p219 = scmp.ne.s32.totalorder %s211, %s213
      %p220 = scmp.eq.s32.totalorder %s40, 2
      %p221 = por %p219, %p220
      %p222 = scmp.ne.s32.totalorder %s213, %s214
      %p223 = scmp.eq.s32.totalorder %s40, 0
      %p224 = por %p222, %p223
      %p225 = scmp.ne.s32.totalorder %s213, %s214
      %p226 = scmp.eq.s32.totalorder %s41, 2
      %p227 = por %p225, %p226
      %p229 = scmp.ne.s32.totalorder %s214, %s228
      %p230 = scmp.eq.s32.totalorder %s41, 0
      %p231 = por %p229, %p230
      %s233 = sadd.s32 %s232, 1
      %p236 = scmp.eq.s32.totalorder %s35, 2
      %p237 = scmp.ne.s32.totalorder %s232, %s234
      %p238 = scmp.eq.s32.totalorder %s35, 0
      %p239 = por %p237, %p238
      %p240 = scmp.ne.s32.totalorder %s232, %s234
      %p241 = scmp.eq.s32.totalorder %s40, 2
      %p242 = por %p240, %p241
      %p243 = scmp.ne.s32.totalorder %s234, %s235
      %p244 = scmp.eq.s32.totalorder %s40, 0
      %p245 = por %p243, %p244
      %p246 = scmp.ne.s32.totalorder %s234, %s235
      %p247 = scmp.eq.s32.totalorder %s41, 2
      %p248 = por %p246, %p247
      %p250 = scmp.ne.s32.totalorder %s235, %s249
      %p251 = scmp.eq.s32.totalorder %s41, 0
      %p252 = por %p250, %p251
      %s254 = sadd.s32 %s253, 1
      %p257 = scmp.eq.s32.totalorder %s35, 2
      %p258 = scmp.ne.s32.totalorder %s253, %s255
      %p259 = scmp.eq.s32.totalorder %s35, 0
      %p260 = por %p258, %p259
      %p261 = scmp.ne.s32.totalorder %s253, %s255
      %p262 = scmp.eq.s32.totalorder %s40, 2
      %p263 = por %p261, %p262
      %p264 = scmp.ne.s32.totalorder %s255, %s256
      %p265 = scmp.eq.s32.totalorder %s40, 0
      %p266 = por %p264, %p265
      %p267 = scmp.ne.s32.totalorder %s255, %s256
      %p268 = scmp.eq.s32.totalorder %s41, 2
      %p269 = por %p267, %p268
      %p271 = scmp.ne.s32.totalorder %s256, %s270
      %p272 = scmp.eq.s32.totalorder %s41, 0
      %p273 = por %p271, %p272
      %s275 = sadd.s32 %s274, 1
      %p278 = scmp.eq.s32.totalorder %s35, 2
      %p279 = scmp.ne.s32.totalorder %s274, %s276
      %p280 = scmp.eq.s32.totalorder %s35, 0
      %p281 = por %p279, %p280
      %p282 = scmp.ne.s32.totalorder %s274, %s276
      %p283 = scmp.eq.s32.totalorder %s40, 2
      %p284 = por %p282, %p283
      %p285 = scmp.ne.s32.totalorder %s276, %s277
      %p286 = scmp.eq.s32.totalorder %s40, 0
      %p287 = por %p285, %p286
      %p288 = scmp.ne.s32.totalorder %s276, %s277
      %p289 = scmp.eq.s32.totalorder %s41, 2
      %p290 = por %p288, %p289
      %p292 = scmp.ne.s32.totalorder %s277, %s291
      %p293 = scmp.eq.s32.totalorder %s41, 0
      %p294 = por %p292, %p293
      %s296 = sadd.s32 %s295, 1
      %p299 = scmp.eq.s32.totalorder %s35, 2
      %p300 = scmp.ne.s32.totalorder %s295, %s297
      %p301 = scmp.eq.s32.totalorder %s35, 0
      %p302 = por %p300, %p301
      %p303 = scmp.ne.s32.totalorder %s295, %s297
      %p304 = scmp.eq.s32.totalorder %s40, 2
      %p305 = por %p303, %p304
      %p306 = scmp.ne.s32.totalorder %s297, %s298
      %p307 = scmp.eq.s32.totalorder %s40, 0
      %p308 = por %p306, %p307
      %p309 = scmp.ne.s32.totalorder %s297, %s298
      %p310 = scmp.eq.s32.totalorder %s41, 2
      %p311 = por %p309, %p310
      %p313 = scmp.ne.s32.totalorder %s298, %s312
      %p314 = scmp.eq.s32.totalorder %s41, 0
      %p315 = por %p313, %p314
      %s317 = sadd.s32 %s316, 1
      %p320 = scmp.eq.s32.totalorder %s35, 2
      %p321 = scmp.ne.s32.totalorder %s316, %s318
      %p322 = scmp.eq.s32.totalorder %s35, 0
      %p323 = por %p321, %p322
      %p324 = scmp.ne.s32.totalorder %s316, %s318
      %p325 = scmp.eq.s32.totalorder %s40, 2
      %p326 = por %p324, %p325
      %p327 = scmp.ne.s32.totalorder %s318, %s319
      %p328 = scmp.eq.s32.totalorder %s40, 0
      %p329 = por %p327, %p328
      %p330 = scmp.ne.s32.totalorder %s318, %s319
      %p331 = scmp.eq.s32.totalorder %s41, 2
      %p332 = por %p330, %p331
      %p334 = scmp.ne.s32.totalorder %s319, %s333
      %p335 = scmp.eq.s32.totalorder %s41, 0
      %p336 = por %p334, %p335
      %s338 = sadd.s32 %s337, 1
      %p341 = scmp.eq.s32.totalorder %s35, 2
      %p342 = scmp.ne.s32.totalorder %s337, %s339
      %p343 = scmp.eq.s32.totalorder %s35, 0
      %p344 = por %p342, %p343
      %p345 = scmp.ne.s32.totalorder %s337, %s339
      %p346 = scmp.eq.s32.totalorder %s40, 2
      %p347 = por %p345, %p346
      %p348 = scmp.ne.s32.totalorder %s339, %s340
      %p349 = scmp.eq.s32.totalorder %s40, 0
      %p350 = por %p348, %p349
      %p351 = scmp.ne.s32.totalorder %s339, %s340
      %p352 = scmp.eq.s32.totalorder %s41, 2
      %p353 = por %p351, %p352
      %p355 = scmp.ne.s32.totalorder %s340, %s354
      %p356 = scmp.eq.s32.totalorder %s41, 0
      %p357 = por %p355, %p356
      %s359 = sadd.s32 %s358, 1
      %p362 = scmp.eq.s32.totalorder %s35, 2
      %p363 = scmp.ne.s32.totalorder %s358, %s360
      %p364 = scmp.eq.s32.totalorder %s35, 0
      %p365 = por %p363, %p364
      %p366 = scmp.ne.s32.totalorder %s358, %s360
      %p367 = scmp.eq.s32.totalorder %s40, 2
      %p368 = por %p366, %p367
      %p369 = scmp.ne.s32.totalorder %s360, %s361
      %p370 = scmp.eq.s32.totalorder %s40, 0
      %p371 = por %p369, %p370
      %p372 = scmp.ne.s32.totalorder %s360, %s361
      %p373 = scmp.eq.s32.totalorder %s41, 2
      %p374 = por %p372, %p373
      %p376 = scmp.ne.s32.totalorder %s361, %s375
      %p377 = scmp.eq.s32.totalorder %s41, 0
      %p378 = por %p376, %p377
      %s380 = sadd.s32 %s379, 1
      %p383 = scmp.eq.s32.totalorder %s35, 2
      %p384 = scmp.ne.s32.totalorder %s379, %s381
      %p385 = scmp.eq.s32.totalorder %s35, 0
      %p386 = por %p384, %p385
      %p387 = scmp.ne.s32.totalorder %s379, %s381
      %p388 = scmp.eq.s32.totalorder %s40, 2
      %p389 = por %p387, %p388
      %p390 = scmp.ne.s32.totalorder %s381, %s382
      %p391 = scmp.eq.s32.totalorder %s40, 0
      %p392 = por %p390, %p391
      %p393 = scmp.ne.s32.totalorder %s381, %s382
      %p394 = scmp.eq.s32.totalorder %s41, 2
      %p395 = por %p393, %p394
      %p397 = scmp.ne.s32.totalorder %s382, %s396
      %p398 = scmp.eq.s32.totalorder %s41, 0
      %p399 = por %p397, %p398
      %s401 = sadd.s32 %s400, 1
      %p404 = scmp.eq.s32.totalorder %s35, 2
      %p405 = scmp.ne.s32.totalorder %s400, %s402
      %p406 = scmp.eq.s32.totalorder %s35, 0
      %p407 = por %p405, %p406
      %p408 = scmp.ne.s32.totalorder %s400, %s402
      %p409 = scmp.eq.s32.totalorder %s40, 2
      %p410 = por %p408, %p409
      %p411 = scmp.ne.s32.totalorder %s402, %s403
      %p412 = scmp.eq.s32.totalorder %s40, 0
      %p413 = por %p411, %p412
      %p414 = scmp.ne.s32.totalorder %s402, %s403
      %p415 = scmp.eq.s32.totalorder %s41, 2
      %p416 = por %p414, %p415
      %p418 = scmp.ne.s32.totalorder %s403, %s417
      %p419 = scmp.eq.s32.totalorder %s41, 0
      %p420 = por %p418, %p419
      %s422 = sadd.s32 %s421, 1
      %p425 = scmp.eq.s32.totalorder %s35, 2
      %p426 = scmp.ne.s32.totalorder %s421, %s423
      %p427 = scmp.eq.s32.totalorder %s35, 0
      %p428 = por %p426, %p427
      %p429 = scmp.ne.s32.totalorder %s421, %s423
      %p430 = scmp.eq.s32.totalorder %s40, 2
      %p431 = por %p429, %p430
      %p432 = scmp.ne.s32.totalorder %s423, %s424
      %p433 = scmp.eq.s32.totalorder %s40, 0
      %p434 = por %p432, %p433
      %p435 = scmp.ne.s32.totalorder %s423, %s424
      %p436 = scmp.eq.s32.totalorder %s41, 2
      %p437 = por %p435, %p436
      %p439 = scmp.ne.s32.totalorder %s424, %s438
      %p440 = scmp.eq.s32.totalorder %s41, 0
      %p441 = por %p439, %p440
      %s443 = sadd.s32 %s442, 1
      %p446 = scmp.eq.s32.totalorder %s35, 2
      %p447 = scmp.ne.s32.totalorder %s442, %s444
      %p448 = scmp.eq.s32.totalorder %s35, 0
      %p449 = por %p447, %p448
      %p450 = scmp.ne.s32.totalorder %s442, %s444
      %p451 = scmp.eq.s32.totalorder %s40, 2
      %p452 = por %p450, %p451
      %p453 = scmp.ne.s32.totalorder %s444, %s445
      %p454 = scmp.eq.s32.totalorder %s40, 0
      %p455 = por %p453, %p454
      %p456 = scmp.ne.s32.totalorder %s444, %s445
      %p457 = scmp.eq.s32.totalorder %s41, 2
      %p458 = por %p456, %p457
      %p460 = scmp.ne.s32.totalorder %s445, %s459
      %p461 = scmp.eq.s32.totalorder %s41, 0
      %p462 = por %p460, %p461
      %s464 = sadd.s32 %s463, 1
      %p467 = scmp.eq.s32.totalorder %s35, 2
      %p468 = scmp.ne.s32.totalorder %s463, %s465
      %p469 = scmp.eq.s32.totalorder %s35, 0
      %p470 = por %p468, %p469
      %p471 = scmp.ne.s32.totalorder %s463, %s465
      %p472 = scmp.eq.s32.totalorder %s40, 2
      %p473 = por %p471, %p472
      %p474 = scmp.ne.s32.totalorder %s465, %s466
      %p475 = scmp.eq.s32.totalorder %s40, 0
      %p476 = por %p474, %p475
      %p477 = scmp.ne.s32.totalorder %s465, %s466
      %p478 = scmp.eq.s32.totalorder %s41, 2
      %p479 = por %p477, %p478
      %p481 = scmp.ne.s32.totalorder %s466, %s480
      %p482 = scmp.eq.s32.totalorder %s41, 0
      %p483 = por %p481, %p482
      %s485 = sadd.s32 %s484, 1
      %p488 = scmp.eq.s32.totalorder %s35, 2
      %p489 = scmp.ne.s32.totalorder %s484, %s486
      %p490 = scmp.eq.s32.totalorder %s35, 0
      %p491 = por %p489, %p490
      %p492 = scmp.ne.s32.totalorder %s484, %s486
      %p493 = scmp.eq.s32.totalorder %s40, 2
      %p494 = por %p492, %p493
      %p495 = scmp.ne.s32.totalorder %s486, %s487
      %p496 = scmp.eq.s32.totalorder %s40, 0
      %p497 = por %p495, %p496
      %p498 = scmp.ne.s32.totalorder %s486, %s487
      %p499 = scmp.eq.s32.totalorder %s41, 2
      %p500 = por %p498, %p499
      %p502 = scmp.ne.s32.totalorder %s487, %s501
      %p503 = scmp.eq.s32.totalorder %s41, 0
      %p504 = por %p502, %p503
      %s506 = sadd.s32 %s505, 1
      %p509 = scmp.eq.s32.totalorder %s35, 2
      %p510 = scmp.ne.s32.totalorder %s505, %s507
      %p511 = scmp.eq.s32.totalorder %s35, 0
      %p512 = por %p510, %p511
      %p513 = scmp.ne.s32.totalorder %s505, %s507
      %p514 = scmp.eq.s32.totalorder %s40, 2
      %p515 = por %p513, %p514
      %p516 = scmp.ne.s32.totalorder %s507, %s508
      %p517 = scmp.eq.s32.totalorder %s40, 0
      %p518 = por %p516, %p517
      %p519 = scmp.ne.s32.totalorder %s507, %s508
      %p520 = scmp.eq.s32.totalorder %s41, 2
      %p521 = por %p519, %p520
      %p523 = scmp.ne.s32.totalorder %s508, %s522
      %p524 = scmp.eq.s32.totalorder %s41, 0
      %p525 = por %p523, %p524
      %s527 = sadd.s32 %s526, 1
      %p530 = scmp.eq.s32.totalorder %s35, 2
      %p531 = scmp.ne.s32.totalorder %s526, %s528
      %p532 = scmp.eq.s32.totalorder %s35, 0
      %p533 = por %p531, %p532
      %p534 = scmp.ne.s32.totalorder %s526, %s528
      %p535 = scmp.eq.s32.totalorder %s40, 2
      %p536 = por %p534, %p535
      %p537 = scmp.ne.s32.totalorder %s528, %s529
      %p538 = scmp.eq.s32.totalorder %s40, 0
      %p539 = por %p537, %p538
      %p540 = scmp.ne.s32.totalorder %s528, %s529
      %p541 = scmp.eq.s32.totalorder %s41, 2
      %p542 = por %p540, %p541
      %p544 = scmp.ne.s32.totalorder %s529, %s543
      %p545 = scmp.eq.s32.totalorder %s41, 0
      %p546 = por %p544, %p545
      %s548 = sadd.s32 %s547, 1
      %p551 = scmp.eq.s32.totalorder %s35, 2
      %p552 = scmp.ne.s32.totalorder %s547, %s549
      %p553 = scmp.eq.s32.totalorder %s35, 0
      %p554 = por %p552, %p553
      %p555 = scmp.ne.s32.totalorder %s547, %s549
      %p556 = scmp.eq.s32.totalorder %s40, 2
      %p557 = por %p555, %p556
      %p558 = scmp.ne.s32.totalorder %s549, %s550
      %p559 = scmp.eq.s32.totalorder %s40, 0
      %p560 = por %p558, %p559
      %p561 = scmp.ne.s32.totalorder %s549, %s550
      %p562 = scmp.eq.s32.totalorder %s41, 2
      %p563 = por %p561, %p562
      %p565 = scmp.ne.s32.totalorder %s550, %s564
      %p566 = scmp.eq.s32.totalorder %s41, 0
      %p567 = por %p565, %p566
      %s569 = sadd.s32 %s568, 1
      %p572 = scmp.eq.s32.totalorder %s35, 2
      %p573 = scmp.ne.s32.totalorder %s568, %s570
      %p574 = scmp.eq.s32.totalorder %s35, 0
      %p575 = por %p573, %p574
      %p576 = scmp.ne.s32.totalorder %s568, %s570
      %p577 = scmp.eq.s32.totalorder %s40, 2
      %p578 = por %p576, %p577
      %p579 = scmp.ne.s32.totalorder %s570, %s571
      %p580 = scmp.eq.s32.totalorder %s40, 0
      %p581 = por %p579, %p580
      %p582 = scmp.ne.s32.totalorder %s570, %s571
      %p583 = scmp.eq.s32.totalorder %s41, 2
      %p584 = por %p582, %p583
      %p586 = scmp.ne.s32.totalorder %s571, %s585
      %p587 = scmp.eq.s32.totalorder %s41, 0
      %p588 = por %p586, %p587
      %p589 = scmp.le.s32.totalorder 1, %s35
      %p590 = scmp.lt.s32.totalorder %s35, 4
      %p591 = pnand %p589, %p590
      %p592 = pneg %p591
      // Predicated region
      $region9: #{tpu_custom_call.1} parent=5 // pred_check
        _
      $region10: #{tpu_custom_call.1} parent=5 // pred_check_branch
        %594 = sbr.rel (%p591) target = $region12
      $region11: #{tpu_custom_call.1} parent=5 // pred_region
        %s595 = ssub.s32 %s35, 1
        // Predicated region
        $region13: #{tpu_custom_call.1} parent=11 // pred_check
          %p596 = pneg %p56
        $region14: #{tpu_custom_call.1} parent=11 // pred_check_branch
          %598 = sbr.rel (%p596) target = $region16
        $region15: #{tpu_custom_call.1} parent=11 // pred_region
          _
        $region16: #{tpu_custom_call.1} parent=11 // pred_fallthru
          _
        // Predicated region
        $region17: #{tpu_custom_call.1} parent=11 // pred_check
          %p599 = pneg %p77
        $region18: #{tpu_custom_call.1} parent=11 // pred_check_branch
          %601 = sbr.rel (%p599) target = $region20
        $region19: #{tpu_custom_call.1} parent=11 // pred_region
          _
        $region20: #{tpu_custom_call.1} parent=11 // pred_fallthru
          _
        // Predicated region
        $region21: #{tpu_custom_call.1} parent=11 // pred_check
          %p602 = pneg %p98
        $region22: #{tpu_custom_call.1} parent=11 // pred_check_branch
          %604 = sbr.rel (%p602) target = $region24
        $region23: #{tpu_custom_call.1} parent=11 // pred_region
          _
        $region24: #{tpu_custom_call.1} parent=11 // pred_fallthru
          _
        // Predicated region
        $region25: #{tpu_custom_call.1} parent=11 // pred_check
          %p605 = pneg %p119
        $region26: #{tpu_custom_call.1} parent=11 // pred_check_branch
          %607 = sbr.rel (%p605) target = $region28
        $region27: #{tpu_custom_call.1} parent=11 // pred_region
          _
        $region28: #{tpu_custom_call.1} parent=11 // pred_fallthru
          _
        // Predicated region
        $region29: #{tpu_custom_call.1} parent=11 // pred_check
          %p608 = pneg %p140
        $region30: #{tpu_custom_call.1} parent=11 // pred_check_branch
          %610 = sbr.rel (%p608) target = $region32
        $region31: #{tpu_custom_call.1} parent=11 // pred_region
          _
        $region32: #{tpu_custom_call.1} parent=11 // pred_fallthru
          _
        // Predicated region
        $region33: #{tpu_custom_call.1} parent=11 // pred_check
          %p611 = pneg %p161
        $region34: #{tpu_custom_call.1} parent=11 // pred_check_branch
          %613 = sbr.rel (%p611) target = $region36
        $region35: #{tpu_custom_call.1} parent=11 // pred_region
          _
        $region36: #{tpu_custom_call.1} parent=11 // pred_fallthru
          _
        // Predicated region
        $region37: #{tpu_custom_call.1} parent=11 // pred_check
          %p614 = pneg %p182
        $region38: #{tpu_custom_call.1} parent=11 // pred_check_branch
          %616 = sbr.rel (%p614) target = $region40
        $region39: #{tpu_custom_call.1} parent=11 // pred_region
          _
        $region40: #{tpu_custom_call.1} parent=11 // pred_fallthru
          _
        // Predicated region
        $region41: #{tpu_custom_call.1} parent=11 // pred_check
          %p617 = pneg %p203
        $region42: #{tpu_custom_call.1} parent=11 // pred_check_branch
          %619 = sbr.rel (%p617) target = $region44
        $region43: #{tpu_custom_call.1} parent=11 // pred_region
          _
        $region44: #{tpu_custom_call.1} parent=11 // pred_fallthru
          _
        // Predicated region
        $region45: #{tpu_custom_call.1} parent=11 // pred_check
          %p620 = pneg %p224
        $region46: #{tpu_custom_call.1} parent=11 // pred_check_branch
          %622 = sbr.rel (%p620) target = $region48
        $region47: #{tpu_custom_call.1} parent=11 // pred_region
          _
        $region48: #{tpu_custom_call.1} parent=11 // pred_fallthru
          _
        // Predicated region
        $region49: #{tpu_custom_call.1} parent=11 // pred_check
          %p623 = pneg %p245
        $region50: #{tpu_custom_call.1} parent=11 // pred_check_branch
          %625 = sbr.rel (%p623) target = $region52
        $region51: #{tpu_custom_call.1} parent=11 // pred_region
          %s627 = ssub.s32 8192, 8192
          %628 = vsyncadd [#allocation6], %s627
          %s629 = sshll.u32 [#allocation5], 4
          %s630 = int_to_ptr.vmem [resolvable:$true] %s629
          %635 = dma.hbm_to_vmem [thread:$0]  %s9, 8192, %s630, [#allocation6], 64, 64, 4
        $region52: #{tpu_custom_call.1} parent=11 // pred_fallthru
          _
        // Predicated region
        $region53: #{tpu_custom_call.1} parent=11 // pred_check
          %p636 = pneg %p266
        $region54: #{tpu_custom_call.1} parent=11 // pred_check_branch
          %638 = sbr.rel (%p636) target = $region56
        $region55: #{tpu_custom_call.1} parent=11 // pred_region
          _
        $region56: #{tpu_custom_call.1} parent=11 // pred_fallthru
          _
        // Predicated region
        $region57: #{tpu_custom_call.1} parent=11 // pred_check
          %p639 = pneg %p287
        $region58: #{tpu_custom_call.1} parent=11 // pred_check_branch
          %641 = sbr.rel (%p639) target = $region60
        $region59: #{tpu_custom_call.1} parent=11 // pred_region
          _
        $region60: #{tpu_custom_call.1} parent=11 // pred_fallthru
          _
        // Predicated region
        $region61: #{tpu_custom_call.1} parent=11 // pred_check
          %p642 = pneg %p308
        $region62: #{tpu_custom_call.1} parent=11 // pred_check_branch
          %644 = sbr.rel (%p642) target = $region64
        $region63: #{tpu_custom_call.1} parent=11 // pred_region
          _
        $region64: #{tpu_custom_call.1} parent=11 // pred_fallthru
          _
        // Predicated region
        $region65: #{tpu_custom_call.1} parent=11 // pred_check
          %p645 = pneg %p329
        $region66: #{tpu_custom_call.1} parent=11 // pred_check_branch
          %647 = sbr.rel (%p645) target = $region68
        $region67: #{tpu_custom_call.1} parent=11 // pred_region
          _
        $region68: #{tpu_custom_call.1} parent=11 // pred_fallthru
          _
        // Predicated region
        $region69: #{tpu_custom_call.1} parent=11 // pred_check
          %p648 = pneg %p350
        $region70: #{tpu_custom_call.1} parent=11 // pred_check_branch
          %650 = sbr.rel (%p648) target = $region72
        $region71: #{tpu_custom_call.1} parent=11 // pred_region
          _
        $region72: #{tpu_custom_call.1} parent=11 // pred_fallthru
          _
        // Predicated region
        $region73: #{tpu_custom_call.1} parent=11 // pred_check
          %p651 = pneg %p371
        $region74: #{tpu_custom_call.1} parent=11 // pred_check_branch
          %653 = sbr.rel (%p651) target = $region76
        $region75: #{tpu_custom_call.1} parent=11 // pred_region
          _
        $region76: #{tpu_custom_call.1} parent=11 // pred_fallthru
          _
        // Predicated region
        $region77: #{tpu_custom_call.1} parent=11 // pred_check
          %p654 = pneg %p392
        $region78: #{tpu_custom_call.1} parent=11 // pred_check_branch
          %656 = sbr.rel (%p654) target = $region80
        $region79: #{tpu_custom_call.1} parent=11 // pred_region
          _
        $region80: #{tpu_custom_call.1} parent=11 // pred_fallthru
          _
        // Predicated region
        $region81: #{tpu_custom_call.1} parent=11 // pred_check
          %p657 = pneg %p413
        $region82: #{tpu_custom_call.1} parent=11 // pred_check_branch
          %659 = sbr.rel (%p657) target = $region84
        $region83: #{tpu_custom_call.1} parent=11 // pred_region
          _
        $region84: #{tpu_custom_call.1} parent=11 // pred_fallthru
          _
        // Predicated region
        $region85: #{tpu_custom_call.1} parent=11 // pred_check
          %p660 = pneg %p434
        $region86: #{tpu_custom_call.1} parent=11 // pred_check_branch
          %662 = sbr.rel (%p660) target = $region88
        $region87: #{tpu_custom_call.1} parent=11 // pred_region
          %s664 = ssub.s32 16384, 16384
          %665 = vsyncadd [#allocation9], %s664
          %s666 = sshll.u32 [#allocation8], 4
          %s667 = int_to_ptr.vmem [resolvable:$true] %s666
          %672 = dma.hbm_to_vmem [thread:$0]  %s18, 16384, %s667, [#allocation9], 256, 256, 16
        $region88: #{tpu_custom_call.1} parent=11 // pred_fallthru
          _
        // Predicated region
        $region89: #{tpu_custom_call.1} parent=11 // pred_check
          %p673 = pneg %p455
        $region90: #{tpu_custom_call.1} parent=11 // pred_check_branch
          %675 = sbr.rel (%p673) target = $region92
        $region91: #{tpu_custom_call.1} parent=11 // pred_region
          %s677 = ssub.s32 16384, 16384
          %678 = vsyncadd [#allocation9], %s677
          %s679 = sshll.u32 [#allocation10], 4
          %s680 = int_to_ptr.vmem [resolvable:$true] %s679
          %685 = dma.hbm_to_vmem [thread:$0]  %s19, 16384, %s680, [#allocation9], 256, 256, 16
        $region92: #{tpu_custom_call.1} parent=11 // pred_fallthru
          _
        // Predicated region
        $region93: #{tpu_custom_call.1} parent=11 // pred_check
          %p686 = pneg %p476
        $region94: #{tpu_custom_call.1} parent=11 // pred_check_branch
          %688 = sbr.rel (%p686) target = $region96
        $region95: #{tpu_custom_call.1} parent=11 // pred_region
          _
        $region96: #{tpu_custom_call.1} parent=11 // pred_fallthru
          _
        // Predicated region
        $region97: #{tpu_custom_call.1} parent=11 // pred_check
          %p689 = pneg %p497
        $region98: #{tpu_custom_call.1} parent=11 // pred_check_branch
          %691 = sbr.rel (%p689) target = $region100
        $region99: #{tpu_custom_call.1} parent=11 // pred_region
          %s693 = ssub.s32 4096, 4096
          %694 = vsyncadd [#allocation12], %s693
          %s695 = sshll.u32 [#allocation11], 4
          %s696 = int_to_ptr.vmem [resolvable:$true] %s695
          %701 = dma.hbm_to_vmem [thread:$0]  %s21, 4096, %s696, [#allocation12], 256, 256, 16
        $region100: #{tpu_custom_call.1} parent=11 // pred_fallthru
          _
        // Predicated region
        $region101: #{tpu_custom_call.1} parent=11 // pred_check
          %p702 = pneg %p518
        $region102: #{tpu_custom_call.1} parent=11 // pred_check_branch
          %704 = sbr.rel (%p702) target = $region104
        $region103: #{tpu_custom_call.1} parent=11 // pred_region
          _
        $region104: #{tpu_custom_call.1} parent=11 // pred_fallthru
          _
        // Predicated region
        $region105: #{tpu_custom_call.1} parent=11 // pred_check
          %p705 = pneg %p539
        $region106: #{tpu_custom_call.1} parent=11 // pred_check_branch
          %707 = sbr.rel (%p705) target = $region108
        $region107: #{tpu_custom_call.1} parent=11 // pred_region
          _
        $region108: #{tpu_custom_call.1} parent=11 // pred_fallthru
          _
        // Predicated region
        $region109: #{tpu_custom_call.1} parent=11 // pred_check
          %p708 = pneg %p560
        $region110: #{tpu_custom_call.1} parent=11 // pred_check_branch
          %710 = sbr.rel (%p708) target = $region112
        $region111: #{tpu_custom_call.1} parent=11 // pred_region
          _
        $region112: #{tpu_custom_call.1} parent=11 // pred_fallthru
          _
      $region12: #{tpu_custom_call.1} parent=5 // pred_fallthru
        _
      %p711 = scmp.lt.s32.totalorder %s35, 3
      // Predicated region
      $region113: #{tpu_custom_call.1} parent=5 // pred_check
        %p712 = pneg %p711
      $region114: #{tpu_custom_call.1} parent=5 // pred_check_branch
        %714 = sbr.rel (%p712) target = $region116
      $region115: #{tpu_custom_call.1} parent=5 // pred_region
        _
      $region116: #{tpu_custom_call.1} parent=5 // pred_fallthru
        _
      %p715 = scmp.le.s32.totalorder 1, %s35
      %p716 = scmp.lt.s32.totalorder %s35, 4
      %p717 = pnand %p715, %p716
      %p718 = pneg %p717
      // Predicated region
      $region117: #{tpu_custom_call.1} parent=5 // pred_check
        _
      $region118: #{tpu_custom_call.1} parent=5 // pred_check_branch
        %720 = sbr.rel (%p717) target = $region120
      $region119: #{tpu_custom_call.1} parent=5 // pred_region
        %s721 = ssub.s32 %s35, 1
        // Predicated region
        $region121: #{tpu_custom_call.1} parent=119 // pred_check
          %p722 = pneg %p245
        $region122: #{tpu_custom_call.1} parent=119 // pred_check_branch
          %724 = sbr.rel (%p722) target = $region124
        $region123: #{tpu_custom_call.1} parent=119 // pred_region
          %725 = dma.done [#allocation6], 8192
        $region124: #{tpu_custom_call.1} parent=119 // pred_fallthru
          _
        // Predicated region
        $region125: #{tpu_custom_call.1} parent=119 // pred_check
          %p726 = pneg %p434
        $region126: #{tpu_custom_call.1} parent=119 // pred_check_branch
          %728 = sbr.rel (%p726) target = $region128
        $region127: #{tpu_custom_call.1} parent=119 // pred_region
          %729 = dma.done [#allocation9], 16384
        $region128: #{tpu_custom_call.1} parent=119 // pred_fallthru
          _
        // Predicated region
        $region129: #{tpu_custom_call.1} parent=119 // pred_check
          %p730 = pneg %p455
        $region130: #{tpu_custom_call.1} parent=119 // pred_check_branch
          %732 = sbr.rel (%p730) target = $region132
        $region131: #{tpu_custom_call.1} parent=119 // pred_region
          %733 = dma.done [#allocation9], 16384
        $region132: #{tpu_custom_call.1} parent=119 // pred_fallthru
          _
        // Predicated region
        $region133: #{tpu_custom_call.1} parent=119 // pred_check
          %p734 = pneg %p497
        $region134: #{tpu_custom_call.1} parent=119 // pred_check_branch
          %736 = sbr.rel (%p734) target = $region136
        $region135: #{tpu_custom_call.1} parent=119 // pred_region
          %737 = dma.done [#allocation12], 4096
        $region136: #{tpu_custom_call.1} parent=119 // pred_fallthru
          _
        %p738 = pneg %p56
        %p739 = pneg %p53
        %p740 = pneg %p77
        %p741 = pneg %p74
        %p742 = pneg %p98
        %p743 = pneg %p95
        %p744 = pneg %p119
        %p745 = pneg %p116
        %p746 = pneg %p140
        %p747 = pneg %p137
        %p748 = pneg %p161
        %p749 = pneg %p158
        %p750 = pneg %p182
        %p751 = pneg %p179
        %p752 = pneg %p203
        %p753 = pneg %p200
        %p754 = pneg %p224
        %p755 = pneg %p221
        %p756 = pneg %p245
        %p757 = pneg %p242
        %p758 = pneg %p266
        %p759 = pneg %p263
        %p760 = pneg %p287
        %p761 = pneg %p284
        %p762 = pneg %p308
        %p763 = pneg %p305
        %p764 = pneg %p329
        %p765 = pneg %p326
        %p766 = pneg %p350
        %p767 = pneg %p347
        %p768 = pneg %p371
        %p769 = pneg %p368
        %p770 = pneg %p392
        %p771 = pneg %p389
        %p772 = pneg %p413
        %p773 = pneg %p410
        %p774 = pneg %p434
        %p775 = pneg %p431
        %p776 = pneg %p455
        %p777 = pneg %p452
        %p778 = pneg %p476
        %p779 = pneg %p473
        %p780 = pneg %p497
        %p781 = pneg %p494
        %p782 = pneg %p518
        %p783 = pneg %p515
        %p784 = pneg %p539
        %p785 = pneg %p536
        %p786 = pneg %p560
        %p787 = pneg %p557
        %p788 = pneg %p581
        %p789 = pneg %p578
        %p791 = scmp.eq.s32.totalorder %s40, 0
        // Predicated region
        $region137: #{tpu_custom_call.1} parent=119 // pred_check
          %p792 = pneg %p791
        $region138: #{tpu_custom_call.1} parent=119 // pred_check_branch
          %794 = sbr.rel (%p792) target = $region140
        $region139: #{tpu_custom_call.1} parent=119 // pred_region
          %v795 = vld [vmem:[%s1] sm:$0xf]
          %v796 = vld [vmem:[%s1 + $0x4] sm:$0xf]
          %v797 = vunpack.c.l.bf16 %v795
          %v798 = vunpack.c.l.bf16 %v796
          %v799 = vld [vmem:[%s0] sm:$0xf]
          %v800 = vld [vmem:[%s0 + $0x4] sm:$0xf]
          %v801 = vld [vmem:[%s6] sm:$0xff]
          %v802 = vld [vmem:[%s6 + $0x8] sm:$0xff]
          %v803 = vld [vmem:[%s6 + $0x10] sm:$0xff]
          %v804 = vld [vmem:[%s6 + $0x18] sm:$0xff]
          %v805 = vld [vmem:[%s6 + $0x20] sm:$0xff]
          %v806 = vld [vmem:[%s6 + $0x28] sm:$0xff]
          %v807 = vld [vmem:[%s6 + $0x30] sm:$0xff]
          %v808 = vld [vmem:[%s6 + $0x38] sm:$0xff]
          %v809 = vld [vmem:[%s6 + $0x40] sm:$0xff]
          %v810 = vld [vmem:[%s6 + $0x48] sm:$0xff]
          %v811 = vld [vmem:[%s6 + $0x50] sm:$0xff]
          %v812 = vld [vmem:[%s6 + $0x58] sm:$0xff]
          %v813 = vld [vmem:[%s6 + $0x60] sm:$0xff]
          %v814 = vld [vmem:[%s6 + $0x68] sm:$0xff]
          %v815 = vld [vmem:[%s6 + $0x70] sm:$0xff]
          %v816 = vld [vmem:[%s6 + $0x78] sm:$0xff]
          %v817 = vld [vmem:[%s6 + $0x80] sm:$0xff]
          %v818 = vld [vmem:[%s6 + $0x88] sm:$0xff]
          %v819 = vld [vmem:[%s6 + $0x90] sm:$0xff]
          %v820 = vld [vmem:[%s6 + $0x98] sm:$0xff]
          %v821 = vld [vmem:[%s6 + $0xa0] sm:$0xff]
          %v822 = vld [vmem:[%s6 + $0xa8] sm:$0xff]
          %v823 = vld [vmem:[%s6 + $0xb0] sm:$0xff]
          %v824 = vld [vmem:[%s6 + $0xb8] sm:$0xff]
          %v825 = vld [vmem:[%s6 + $0xc0] sm:$0xff]
          %v826 = vld [vmem:[%s6 + $0xc8] sm:$0xff]
          %v827 = vld [vmem:[%s6 + $0xd0] sm:$0xff]
          %v828 = vld [vmem:[%s6 + $0xd8] sm:$0xff]
          %v829 = vld [vmem:[%s6 + $0xe0] sm:$0xff]
          %v830 = vld [vmem:[%s6 + $0xe8] sm:$0xff]
          %v831 = vld [vmem:[%s6 + $0xf0] sm:$0xff]
          %v832 = vld [vmem:[%s6 + $0xf8] sm:$0xff]
          %v833 = vld [vmem:[%s6 + $0x100] sm:$0xff]
          %v834 = vld [vmem:[%s6 + $0x108] sm:$0xff]
          %v835 = vld [vmem:[%s6 + $0x110] sm:$0xff]
          %v836 = vld [vmem:[%s6 + $0x118] sm:$0xff]
          %v837 = vld [vmem:[%s6 + $0x120] sm:$0xff]
          %v838 = vld [vmem:[%s6 + $0x128] sm:$0xff]
          %v839 = vld [vmem:[%s6 + $0x130] sm:$0xff]
          %v840 = vld [vmem:[%s6 + $0x138] sm:$0xff]
          %v841 = vld [vmem:[%s6 + $0x140] sm:$0xff]
          %v842 = vld [vmem:[%s6 + $0x148] sm:$0xff]
          %v843 = vld [vmem:[%s6 + $0x150] sm:$0xff]
          %v844 = vld [vmem:[%s6 + $0x158] sm:$0xff]
          %v845 = vld [vmem:[%s6 + $0x160] sm:$0xff]
          %v846 = vld [vmem:[%s6 + $0x168] sm:$0xff]
          %v847 = vld [vmem:[%s6 + $0x170] sm:$0xff]
          %v848 = vld [vmem:[%s6 + $0x178] sm:$0xff]
          %v849 = vld [vmem:[%s6 + $0x180] sm:$0xff]
          %v850 = vld [vmem:[%s6 + $0x188] sm:$0xff]
          %v851 = vld [vmem:[%s6 + $0x190] sm:$0xff]
          %v852 = vld [vmem:[%s6 + $0x198] sm:$0xff]
          %v853 = vld [vmem:[%s6 + $0x1a0] sm:$0xff]
          %v854 = vld [vmem:[%s6 + $0x1a8] sm:$0xff]
          %v855 = vld [vmem:[%s6 + $0x1b0] sm:$0xff]
          %v856 = vld [vmem:[%s6 + $0x1b8] sm:$0xff]
          %v857 = vld [vmem:[%s6 + $0x1c0] sm:$0xff]
          %v858 = vld [vmem:[%s6 + $0x1c8] sm:$0xff]
          %v859 = vld [vmem:[%s6 + $0x1d0] sm:$0xff]
          %v860 = vld [vmem:[%s6 + $0x1d8] sm:$0xff]
          %v861 = vld [vmem:[%s6 + $0x1e0] sm:$0xff]
          %v862 = vld [vmem:[%s6 + $0x1e8] sm:$0xff]
          %v863 = vld [vmem:[%s6 + $0x1f0] sm:$0xff]
          %v864 = vld [vmem:[%s6 + $0x1f8] sm:$0xff]
          %v867 = vunpack.c.l.b16 %v799
          %v868 = vunpack.c.l.b16 %v800
          %v869 = vpack.c.b16 %v868, %v867
          %v935 = vunpack.c.l.b16 %v801
          %v936 = vunpack.c.h.b16 %v801
          %v937 = vunpack.c.l.b16 %v802
          %v938 = vunpack.c.h.b16 %v802
          %v939 = vunpack.c.l.b16 %v803
          %v940 = vunpack.c.h.b16 %v803
          %v941 = vunpack.c.l.b16 %v804
          %v942 = vunpack.c.h.b16 %v804
          %v943 = vunpack.c.l.b16 %v805
          %v944 = vunpack.c.h.b16 %v805
          %v945 = vunpack.c.l.b16 %v806
          %v946 = vunpack.c.h.b16 %v806
          %v947 = vunpack.c.l.b16 %v807
          %v948 = vunpack.c.h.b16 %v807
          %v949 = vunpack.c.l.b16 %v808
          %v950 = vunpack.c.h.b16 %v808
          %v951 = vunpack.c.l.b16 %v809
          %v952 = vunpack.c.h.b16 %v809
          %v953 = vunpack.c.l.b16 %v810
          %v954 = vunpack.c.h.b16 %v810
          %v955 = vunpack.c.l.b16 %v811
          %v956 = vunpack.c.h.b16 %v811
          %v957 = vunpack.c.l.b16 %v812
          %v958 = vunpack.c.h.b16 %v812
          %v959 = vunpack.c.l.b16 %v813
          %v960 = vunpack.c.h.b16 %v813
          %v961 = vunpack.c.l.b16 %v814
          %v962 = vunpack.c.h.b16 %v814
          %v963 = vunpack.c.l.b16 %v815
          %v964 = vunpack.c.h.b16 %v815
          %v965 = vunpack.c.l.b16 %v816
          %v966 = vunpack.c.h.b16 %v816
          %v967 = vunpack.c.l.b16 %v817
          %v968 = vunpack.c.h.b16 %v817
          %v969 = vunpack.c.l.b16 %v818
          %v970 = vunpack.c.h.b16 %v818
          %v971 = vunpack.c.l.b16 %v819
          %v972 = vunpack.c.h.b16 %v819
          %v973 = vunpack.c.l.b16 %v820
          %v974 = vunpack.c.h.b16 %v820
          %v975 = vunpack.c.l.b16 %v821
          %v976 = vunpack.c.h.b16 %v821
          %v977 = vunpack.c.l.b16 %v822
          %v978 = vunpack.c.h.b16 %v822
          %v979 = vunpack.c.l.b16 %v823
          %v980 = vunpack.c.h.b16 %v823
          %v981 = vunpack.c.l.b16 %v824
          %v982 = vunpack.c.h.b16 %v824
          %v983 = vunpack.c.l.b16 %v825
          %v984 = vunpack.c.h.b16 %v825
          %v985 = vunpack.c.l.b16 %v826
          %v986 = vunpack.c.h.b16 %v826
          %v987 = vunpack.c.l.b16 %v827
          %v988 = vunpack.c.h.b16 %v827
          %v989 = vunpack.c.l.b16 %v828
          %v990 = vunpack.c.h.b16 %v828
          %v991 = vunpack.c.l.b16 %v829
          %v992 = vunpack.c.h.b16 %v829
          %v993 = vunpack.c.l.b16 %v830
          %v994 = vunpack.c.h.b16 %v830
          %v995 = vunpack.c.l.b16 %v831
          %v996 = vunpack.c.h.b16 %v831
          %v997 = vunpack.c.l.b16 %v832
          %v998 = vunpack.c.h.b16 %v832
          %v999 = vunpack.c.l.b16 %v833
          %v1000 = vunpack.c.h.b16 %v833
          %v1001 = vunpack.c.l.b16 %v834
          %v1002 = vunpack.c.h.b16 %v834
          %v1003 = vunpack.c.l.b16 %v835
          %v1004 = vunpack.c.h.b16 %v835
          %v1005 = vunpack.c.l.b16 %v836
          %v1006 = vunpack.c.h.b16 %v836
          %v1007 = vunpack.c.l.b16 %v837
          %v1008 = vunpack.c.h.b16 %v837
          %v1009 = vunpack.c.l.b16 %v838
          %v1010 = vunpack.c.h.b16 %v838
          %v1011 = vunpack.c.l.b16 %v839
          %v1012 = vunpack.c.h.b16 %v839
          %v1013 = vunpack.c.l.b16 %v840
          %v1014 = vunpack.c.h.b16 %v840
          %v1015 = vunpack.c.l.b16 %v841
          %v1016 = vunpack.c.h.b16 %v841
          %v1017 = vunpack.c.l.b16 %v842
          %v1018 = vunpack.c.h.b16 %v842
          %v1019 = vunpack.c.l.b16 %v843
          %v1020 = vunpack.c.h.b16 %v843
          %v1021 = vunpack.c.l.b16 %v844
          %v1022 = vunpack.c.h.b16 %v844
          %v1023 = vunpack.c.l.b16 %v845
          %v1024 = vunpack.c.h.b16 %v845
          %v1025 = vunpack.c.l.b16 %v846
          %v1026 = vunpack.c.h.b16 %v846
          %v1027 = vunpack.c.l.b16 %v847
          %v1028 = vunpack.c.h.b16 %v847
          %v1029 = vunpack.c.l.b16 %v848
          %v1030 = vunpack.c.h.b16 %v848
          %v1031 = vunpack.c.l.b16 %v849
          %v1032 = vunpack.c.h.b16 %v849
          %v1033 = vunpack.c.l.b16 %v850
          %v1034 = vunpack.c.h.b16 %v850
          %v1035 = vunpack.c.l.b16 %v851
          %v1036 = vunpack.c.h.b16 %v851
          %v1037 = vunpack.c.l.b16 %v852
          %v1038 = vunpack.c.h.b16 %v852
          %v1039 = vunpack.c.l.b16 %v853
          %v1040 = vunpack.c.h.b16 %v853
          %v1041 = vunpack.c.l.b16 %v854
          %v1042 = vunpack.c.h.b16 %v854
          %v1043 = vunpack.c.l.b16 %v855
          %v1044 = vunpack.c.h.b16 %v855
          %v1045 = vunpack.c.l.b16 %v856
          %v1046 = vunpack.c.h.b16 %v856
          %v1047 = vunpack.c.l.b16 %v857
          %v1048 = vunpack.c.h.b16 %v857
          %v1049 = vunpack.c.l.b16 %v858
          %v1050 = vunpack.c.h.b16 %v858
          %v1051 = vunpack.c.l.b16 %v859
          %v1052 = vunpack.c.h.b16 %v859
          %v1053 = vunpack.c.l.b16 %v860
          %v1054 = vunpack.c.h.b16 %v860
          %v1055 = vunpack.c.l.b16 %v861
          %v1056 = vunpack.c.h.b16 %v861
          %v1057 = vunpack.c.l.b16 %v862
          %v1058 = vunpack.c.h.b16 %v862
          %v1059 = vunpack.c.l.b16 %v863
          %v1060 = vunpack.c.h.b16 %v863
          %v1061 = vunpack.c.l.b16 %v864
          %v1062 = vunpack.c.h.b16 %v864
          %v1063 = vpack.c.b16 %v943, %v935
          %v1064 = vpack.c.b16 %v944, %v936
          %v1065 = vpack.c.b16 %v945, %v937
          %v1066 = vpack.c.b16 %v946, %v938
          %v1067 = vpack.c.b16 %v947, %v939
          %v1068 = vpack.c.b16 %v948, %v940
          %v1069 = vpack.c.b16 %v949, %v941
          %v1070 = vpack.c.b16 %v950, %v942
          %v1071 = vpack.c.b16 %v959, %v951
          %v1072 = vpack.c.b16 %v960, %v952
          %v1073 = vpack.c.b16 %v961, %v953
          %v1074 = vpack.c.b16 %v962, %v954
          %v1075 = vpack.c.b16 %v963, %v955
          %v1076 = vpack.c.b16 %v964, %v956
          %v1077 = vpack.c.b16 %v965, %v957
          %v1078 = vpack.c.b16 %v966, %v958
          %v1079 = vpack.c.b16 %v975, %v967
          %v1080 = vpack.c.b16 %v976, %v968
          %v1081 = vpack.c.b16 %v977, %v969
          %v1082 = vpack.c.b16 %v978, %v970
          %v1083 = vpack.c.b16 %v979, %v971
          %v1084 = vpack.c.b16 %v980, %v972
          %v1085 = vpack.c.b16 %v981, %v973
          %v1086 = vpack.c.b16 %v982, %v974
          %v1087 = vpack.c.b16 %v991, %v983
          %v1088 = vpack.c.b16 %v992, %v984
          %v1089 = vpack.c.b16 %v993, %v985
          %v1090 = vpack.c.b16 %v994, %v986
          %v1091 = vpack.c.b16 %v995, %v987
          %v1092 = vpack.c.b16 %v996, %v988
          %v1093 = vpack.c.b16 %v997, %v989
          %v1094 = vpack.c.b16 %v998, %v990
          %v1095 = vpack.c.b16 %v1007, %v999
          %v1096 = vpack.c.b16 %v1008, %v1000
          %v1097 = vpack.c.b16 %v1009, %v1001
          %v1098 = vpack.c.b16 %v1010, %v1002
          %v1099 = vpack.c.b16 %v1011, %v1003
          %v1100 = vpack.c.b16 %v1012, %v1004
          %v1101 = vpack.c.b16 %v1013, %v1005
          %v1102 = vpack.c.b16 %v1014, %v1006
          %v1103 = vpack.c.b16 %v1023, %v1015
          %v1104 = vpack.c.b16 %v1024, %v1016
          %v1105 = vpack.c.b16 %v1025, %v1017
          %v1106 = vpack.c.b16 %v1026, %v1018
          %v1107 = vpack.c.b16 %v1027, %v1019
          %v1108 = vpack.c.b16 %v1028, %v1020
          %v1109 = vpack.c.b16 %v1029, %v1021
          %v1110 = vpack.c.b16 %v1030, %v1022
          %v1111 = vpack.c.b16 %v1039, %v1031
          %v1112 = vpack.c.b16 %v1040, %v1032
          %v1113 = vpack.c.b16 %v1041, %v1033
          %v1114 = vpack.c.b16 %v1042, %v1034
          %v1115 = vpack.c.b16 %v1043, %v1035
          %v1116 = vpack.c.b16 %v1044, %v1036
          %v1117 = vpack.c.b16 %v1045, %v1037
          %v1118 = vpack.c.b16 %v1046, %v1038
          %v1119 = vpack.c.b16 %v1055, %v1047
          %v1120 = vpack.c.b16 %v1056, %v1048
          %v1121 = vpack.c.b16 %v1057, %v1049
          %v1122 = vpack.c.b16 %v1058, %v1050
          %v1123 = vpack.c.b16 %v1059, %v1051
          %v1124 = vpack.c.b16 %v1060, %v1052
          %v1125 = vpack.c.b16 %v1061, %v1053
          %v1126 = vpack.c.b16 %v1062, %v1054
          %1191 = vmatprep.subr.bf16.mxu0 %v1064
          %1192 = vmatpush1.bf16.msra.mxu0 %v1063
          %1193 = vmatprep.subr.bf16.mxu0 %v1072
          %1194 = vmatpush1.bf16.msra.mxu0 %v1071
          %1195 = vmatprep.subr.bf16.mxu0 %v1080
          %1196 = vmatpush1.bf16.msra.mxu0 %v1079
          %1197 = vmatprep.subr.bf16.mxu0 %v1088
          %1198 = vmatpush1.bf16.msra.mxu0 %v1087
          %1199 = vmatprep.subr.bf16.mxu0 %v1096
          %1200 = vmatpush1.bf16.msra.mxu0 %v1095
          %1201 = vmatprep.subr.bf16.mxu0 %v1104
          %1202 = vmatpush1.bf16.msra.mxu0 %v1103
          %1203 = vmatprep.subr.bf16.mxu0 %v1112
          %1204 = vmatpush1.bf16.msra.mxu0 %v1111
          %1205 = vmatprep.subr.bf16.mxu0 %v1120
          %1206 = vmatpush1.bf16.msra.mxu0 %v1119
          %1207 = vmatprep.subr.bf16.mxu0 0
          %1208 = vmatpush1.bf16.msra.mxu0 0
          %1209 = vmatprep.subr.bf16.mxu0 0
          %1210 = vmatpush1.bf16.msra.mxu0 0
          %1211 = vmatprep.subr.bf16.mxu0 0
          %1212 = vmatpush1.bf16.msra.mxu0 0
          %1213 = vmatprep.subr.bf16.mxu0 0
          %1214 = vmatpush1.bf16.msra.mxu0 0
          %1215 = vmatprep.subr.bf16.mxu0 0
          %1216 = vmatpush1.bf16.msra.mxu0 0
          %1217 = vmatprep.subr.bf16.mxu0 0
          %1218 = vmatpush1.bf16.msra.mxu0 0
          %1219 = vmatprep.subr.bf16.mxu0 0
          %1220 = vmatpush1.bf16.msra.mxu0 0
          %1221 = vmatprep.subr.bf16.mxu0 0
          %1222 = vmatpush1.bf16.msra.mxu0 0
          %1223 = vmatprep.mubr.bf16.mxu0 0
          %1224 = vmatmul.mubr.bf16.gmra.mrb[0].mxu0 %v869
          %v1225 = vpop.f32.mrb[0].mxu0
          %v1226 = vadd.f32 0.0, %v1225
          %v1227 = vpop.f32.mrb[0].mxu0
          %v1228 = vadd.f32 0.0, %v1227
          %v1229 = vpop.f32.mrb[0].mxu0
          %v1230 = vadd.f32 0.0, %v1229
          %v1231 = vpop.f32.mrb[0].mxu0
          %v1232 = vadd.f32 0.0, %v1231
          %1233 = vdwg.mxu0
          %1234 = vmatprep.subr.bf16.mxu0 %v1066
          %1235 = vmatpush1.bf16.msra.mxu0 %v1065
          %1236 = vmatprep.subr.bf16.mxu0 %v1074
          %1237 = vmatpush1.bf16.msra.mxu0 %v1073
          %1238 = vmatprep.subr.bf16.mxu0 %v1082
          %1239 = vmatpush1.bf16.msra.mxu0 %v1081
          %1240 = vmatprep.subr.bf16.mxu0 %v1090
          %1241 = vmatpush1.bf16.msra.mxu0 %v1089
          %1242 = vmatprep.subr.bf16.mxu0 %v1098
          %1243 = vmatpush1.bf16.msra.mxu0 %v1097
          %1244 = vmatprep.subr.bf16.mxu0 %v1106
          %1245 = vmatpush1.bf16.msra.mxu0 %v1105
          %1246 = vmatprep.subr.bf16.mxu0 %v1114
          %1247 = vmatpush1.bf16.msra.mxu0 %v1113
          %1248 = vmatprep.subr.bf16.mxu0 %v1122
          %1249 = vmatpush1.bf16.msra.mxu0 %v1121
          %1250 = vmatprep.subr.bf16.mxu0 0
          %1251 = vmatpush1.bf16.msra.mxu0 0
          %1252 = vmatprep.subr.bf16.mxu0 0
          %1253 = vmatpush1.bf16.msra.mxu0 0
          %1254 = vmatprep.subr.bf16.mxu0 0
          %1255 = vmatpush1.bf16.msra.mxu0 0
          %1256 = vmatprep.subr.bf16.mxu0 0
          %1257 = vmatpush1.bf16.msra.mxu0 0
          %1258 = vmatprep.subr.bf16.mxu0 0
          %1259 = vmatpush1.bf16.msra.mxu0 0
          %1260 = vmatprep.subr.bf16.mxu0 0
          %1261 = vmatpush1.bf16.msra.mxu0 0
          %1262 = vmatprep.subr.bf16.mxu0 0
          %1263 = vmatpush1.bf16.msra.mxu0 0
          %1264 = vmatprep.subr.bf16.mxu0 0
          %1265 = vmatpush1.bf16.msra.mxu0 0
          %1266 = vmatprep.mubr.bf16.mxu0 0
          %1267 = vmatmul.mubr.bf16.gmra.mrb[0].mxu0 %v869
          %v1268 = vpop.f32.mrb[0].mxu0
          %v1269 = vadd.f32 0.0, %v1268
          %v1270 = vpop.f32.mrb[0].mxu0
          %v1271 = vadd.f32 0.0, %v1270
          %v1272 = vpop.f32.mrb[0].mxu0
          %v1273 = vadd.f32 0.0, %v1272
          %v1274 = vpop.f32.mrb[0].mxu0
          %v1275 = vadd.f32 0.0, %v1274
          %1276 = vdwg.mxu0
          %1277 = vmatprep.subr.bf16.mxu0 %v1068
          %1278 = vmatpush1.bf16.msra.mxu0 %v1067
          %1279 = vmatprep.subr.bf16.mxu0 %v1076
          %1280 = vmatpush1.bf16.msra.mxu0 %v1075
          %1281 = vmatprep.subr.bf16.mxu0 %v1084
          %1282 = vmatpush1.bf16.msra.mxu0 %v1083
          %1283 = vmatprep.subr.bf16.mxu0 %v1092
          %1284 = vmatpush1.bf16.msra.mxu0 %v1091
          %1285 = vmatprep.subr.bf16.mxu0 %v1100
          %1286 = vmatpush1.bf16.msra.mxu0 %v1099
          %1287 = vmatprep.subr.bf16.mxu0 %v1108
          %1288 = vmatpush1.bf16.msra.mxu0 %v1107
          %1289 = vmatprep.subr.bf16.mxu0 %v1116
          %1290 = vmatpush1.bf16.msra.mxu0 %v1115
          %1291 = vmatprep.subr.bf16.mxu0 %v1124
          %1292 = vmatpush1.bf16.msra.mxu0 %v1123
          %1293 = vmatprep.subr.bf16.mxu0 0
          %1294 = vmatpush1.bf16.msra.mxu0 0
          %1295 = vmatprep.subr.bf16.mxu0 0
          %1296 = vmatpush1.bf16.msra.mxu0 0
          %1297 = vmatprep.subr.bf16.mxu0 0
          %1298 = vmatpush1.bf16.msra.mxu0 0
          %1299 = vmatprep.subr.bf16.mxu0 0
          %1300 = vmatpush1.bf16.msra.mxu0 0
          %1301 = vmatprep.subr.bf16.mxu0 0
          %1302 = vmatpush1.bf16.msra.mxu0 0
          %1303 = vmatprep.subr.bf16.mxu0 0
          %1304 = vmatpush1.bf16.msra.mxu0 0
          %1305 = vmatprep.subr.bf16.mxu0 0
          %1306 = vmatpush1.bf16.msra.mxu0 0
          %1307 = vmatprep.subr.bf16.mxu0 0
          %1308 = vmatpush1.bf16.msra.mxu0 0
          %1309 = vmatprep.mubr.bf16.mxu0 0
          %1310 = vmatmul.mubr.bf16.gmra.mrb[0].mxu0 %v869
          %v1311 = vpop.f32.mrb[0].mxu0
          %v1312 = vadd.f32 0.0, %v1311
          %v1313 = vpop.f32.mrb[0].mxu0
          %v1314 = vadd.f32 0.0, %v1313
          %v1315 = vpop.f32.mrb[0].mxu0
          %v1316 = vadd.f32 0.0, %v1315
          %v1317 = vpop.f32.mrb[0].mxu0
          %v1318 = vadd.f32 0.0, %v1317
          %1319 = vdwg.mxu0
          %1320 = vmatprep.subr.bf16.mxu0 %v1070
          %1321 = vmatpush1.bf16.msra.mxu0 %v1069
          %1322 = vmatprep.subr.bf16.mxu0 %v1078
          %1323 = vmatpush1.bf16.msra.mxu0 %v1077
          %1324 = vmatprep.subr.bf16.mxu0 %v1086
          %1325 = vmatpush1.bf16.msra.mxu0 %v1085
          %1326 = vmatprep.subr.bf16.mxu0 %v1094
          %1327 = vmatpush1.bf16.msra.mxu0 %v1093
          %1328 = vmatprep.subr.bf16.mxu0 %v1102
          %1329 = vmatpush1.bf16.msra.mxu0 %v1101
          %1330 = vmatprep.subr.bf16.mxu0 %v1110
          %1331 = vmatpush1.bf16.msra.mxu0 %v1109
          %1332 = vmatprep.subr.bf16.mxu0 %v1118
          %1333 = vmatpush1.bf16.msra.mxu0 %v1117
          %1334 = vmatprep.subr.bf16.mxu0 %v1126
          %1335 = vmatpush1.bf16.msra.mxu0 %v1125
          %1336 = vmatprep.subr.bf16.mxu0 0
          %1337 = vmatpush1.bf16.msra.mxu0 0
          %1338 = vmatprep.subr.bf16.mxu0 0
          %1339 = vmatpush1.bf16.msra.mxu0 0
          %1340 = vmatprep.subr.bf16.mxu0 0
          %1341 = vmatpush1.bf16.msra.mxu0 0
          %1342 = vmatprep.subr.bf16.mxu0 0
          %1343 = vmatpush1.bf16.msra.mxu0 0
          %1344 = vmatprep.subr.bf16.mxu0 0
          %1345 = vmatpush1.bf16.msra.mxu0 0
          %1346 = vmatprep.subr.bf16.mxu0 0
          %1347 = vmatpush1.bf16.msra.mxu0 0
          %1348 = vmatprep.subr.bf16.mxu0 0
          %1349 = vmatpush1.bf16.msra.mxu0 0
          %1350 = vmatprep.subr.bf16.mxu0 0
          %1351 = vmatpush1.bf16.msra.mxu0 0
          %1352 = vmatprep.mubr.bf16.mxu0 0
          %1353 = vmatmul.mubr.bf16.gmra.mrb[0].mxu0 %v869
          %v1354 = vpop.f32.mrb[0].mxu0
          %v1355 = vadd.f32 0.0, %v1354
          %v1356 = vpop.f32.mrb[0].mxu0
          %v1357 = vadd.f32 0.0, %v1356
          %v1358 = vpop.f32.mrb[0].mxu0
          %v1359 = vadd.f32 0.0, %v1358
          %v1360 = vpop.f32.mrb[0].mxu0
          %v1361 = vadd.f32 0.0, %v1360
          %1362 = vdwg.mxu0
          %v1363 = vpack.c.bf16 %v1230, %v1226
          %v1364 = vpack.c.bf16 %v1232, %v1228
          %v1365 = vpack.c.bf16 %v1273, %v1269
          %v1366 = vpack.c.bf16 %v1275, %v1271
          %v1367 = vpack.c.bf16 %v1316, %v1312
          %v1368 = vpack.c.bf16 %v1318, %v1314
          %v1369 = vpack.c.bf16 %v1359, %v1355
          %v1370 = vpack.c.bf16 %v1361, %v1357
          %1371 = vst [vmem:[#allocation3] sm:$0xff] %v1363
          %1372 = vst [vmem:[#allocation3 + $0x8] sm:$0xff] %v1364
          %1373 = vst [vmem:[#allocation3 + $0x10] sm:$0xff] %v1365
          %1374 = vst [vmem:[#allocation3 + $0x18] sm:$0xff] %v1366
          %1375 = vst [vmem:[#allocation3 + $0x20] sm:$0xff] %v1367
          %1376 = vst [vmem:[#allocation3 + $0x28] sm:$0xff] %v1368
          %1377 = vst [vmem:[#allocation3 + $0x30] sm:$0xff] %v1369
          %1378 = vst [vmem:[#allocation3 + $0x38] sm:$0xff] %v1370
          %v1379 = vld [vmem:[%s7] sm:$0xf]
          %v1380 = vld [vmem:[%s7 + $0x4] sm:$0xf]
          %v1381 = vld [vmem:[%s7 + $0x8] sm:$0xf]
          %v1382 = vld [vmem:[%s7 + $0xc] sm:$0xf]
          %v1383 = vld [vmem:[%s7 + $0x10] sm:$0xf]
          %v1384 = vld [vmem:[%s7 + $0x14] sm:$0xf]
          %v1385 = vld [vmem:[%s7 + $0x18] sm:$0xf]
          %v1386 = vld [vmem:[%s7 + $0x1c] sm:$0xf]
          %v1387 = vld [vmem:[%s7 + $0x20] sm:$0xf]
          %v1388 = vld [vmem:[%s7 + $0x24] sm:$0xf]
          %v1389 = vld [vmem:[%s7 + $0x28] sm:$0xf]
          %v1390 = vld [vmem:[%s7 + $0x2c] sm:$0xf]
          %v1391 = vld [vmem:[%s7 + $0x30] sm:$0xf]
          %v1392 = vld [vmem:[%s7 + $0x34] sm:$0xf]
          %v1393 = vld [vmem:[%s7 + $0x38] sm:$0xf]
          %v1394 = vld [vmem:[%s7 + $0x3c] sm:$0xf]
          %v1395 = vld [vmem:[%s7 + $0x40] sm:$0xf]
          %v1396 = vld [vmem:[%s7 + $0x44] sm:$0xf]
          %v1397 = vld [vmem:[%s7 + $0x48] sm:$0xf]
          %v1398 = vld [vmem:[%s7 + $0x4c] sm:$0xf]
          %v1399 = vld [vmem:[%s7 + $0x50] sm:$0xf]
          %v1400 = vld [vmem:[%s7 + $0x54] sm:$0xf]
          %v1401 = vld [vmem:[%s7 + $0x58] sm:$0xf]
          %v1402 = vld [vmem:[%s7 + $0x5c] sm:$0xf]
          %v1403 = vld [vmem:[%s7 + $0x60] sm:$0xf]
          %v1404 = vld [vmem:[%s7 + $0x64] sm:$0xf]
          %v1405 = vld [vmem:[%s7 + $0x68] sm:$0xf]
          %v1406 = vld [vmem:[%s7 + $0x6c] sm:$0xf]
          %v1407 = vld [vmem:[%s7 + $0x70] sm:$0xf]
          %v1408 = vld [vmem:[%s7 + $0x74] sm:$0xf]
          %v1409 = vld [vmem:[%s7 + $0x78] sm:$0xf]
          %v1410 = vld [vmem:[%s7 + $0x7c] sm:$0xf]
          %v1411 = vld [vmem:[%s7 + $0x80] sm:$0xf]
          %v1412 = vld [vmem:[%s7 + $0x84] sm:$0xf]
          %v1413 = vld [vmem:[%s7 + $0x88] sm:$0xf]
          %v1414 = vld [vmem:[%s7 + $0x8c] sm:$0xf]
          %v1415 = vld [vmem:[%s7 + $0x90] sm:$0xf]
          %v1416 = vld [vmem:[%s7 + $0x94] sm:$0xf]
          %v1417 = vld [vmem:[%s7 + $0x98] sm:$0xf]
          %v1418 = vld [vmem:[%s7 + $0x9c] sm:$0xf]
          %v1419 = vld [vmem:[%s7 + $0xa0] sm:$0xf]
          %v1420 = vld [vmem:[%s7 + $0xa4] sm:$0xf]
          %v1421 = vld [vmem:[%s7 + $0xa8] sm:$0xf]
          %v1422 = vld [vmem:[%s7 + $0xac] sm:$0xf]
          %v1423 = vld [vmem:[%s7 + $0xb0] sm:$0xf]
          %v1424 = vld [vmem:[%s7 + $0xb4] sm:$0xf]
          %v1425 = vld [vmem:[%s7 + $0xb8] sm:$0xf]
          %v1426 = vld [vmem:[%s7 + $0xbc] sm:$0xf]
          %v1427 = vld [vmem:[%s7 + $0xc0] sm:$0xf]
          %v1428 = vld [vmem:[%s7 + $0xc4] sm:$0xf]
          %v1429 = vld [vmem:[%s7 + $0xc8] sm:$0xf]
          %v1430 = vld [vmem:[%s7 + $0xcc] sm:$0xf]
          %v1431 = vld [vmem:[%s7 + $0xd0] sm:$0xf]
          %v1432 = vld [vmem:[%s7 + $0xd4] sm:$0xf]
          %v1433 = vld [vmem:[%s7 + $0xd8] sm:$0xf]
          %v1434 = vld [vmem:[%s7 + $0xdc] sm:$0xf]
          %v1435 = vld [vmem:[%s7 + $0xe0] sm:$0xf]
          %v1436 = vld [vmem:[%s7 + $0xe4] sm:$0xf]
          %v1437 = vld [vmem:[%s7 + $0xe8] sm:$0xf]
          %v1438 = vld [vmem:[%s7 + $0xec] sm:$0xf]
          %v1439 = vld [vmem:[%s7 + $0xf0] sm:$0xf]
          %v1440 = vld [vmem:[%s7 + $0xf4] sm:$0xf]
          %v1441 = vld [vmem:[%s7 + $0xf8] sm:$0xf]
          %v1442 = vld [vmem:[%s7 + $0xfc] sm:$0xf]
          %v1443 = vld [vmem:[%s7 + $0x100] sm:$0xf]
          %v1444 = vld [vmem:[%s7 + $0x104] sm:$0xf]
          %v1445 = vld [vmem:[%s7 + $0x108] sm:$0xf]
          %v1446 = vld [vmem:[%s7 + $0x10c] sm:$0xf]
          %v1447 = vld [vmem:[%s7 + $0x110] sm:$0xf]
          %v1448 = vld [vmem:[%s7 + $0x114] sm:$0xf]
          %v1449 = vld [vmem:[%s7 + $0x118] sm:$0xf]
          %v1450 = vld [vmem:[%s7 + $0x11c] sm:$0xf]
          %v1451 = vld [vmem:[%s7 + $0x120] sm:$0xf]
          %v1452 = vld [vmem:[%s7 + $0x124] sm:$0xf]
          %v1453 = vld [vmem:[%s7 + $0x128] sm:$0xf]
          %v1454 = vld [vmem:[%s7 + $0x12c] sm:$0xf]
          %v1455 = vld [vmem:[%s7 + $0x130] sm:$0xf]
          %v1456 = vld [vmem:[%s7 + $0x134] sm:$0xf]
          %v1457 = vld [vmem:[%s7 + $0x138] sm:$0xf]
          %v1458 = vld [vmem:[%s7 + $0x13c] sm:$0xf]
          %v1459 = vld [vmem:[%s7 + $0x140] sm:$0xf]
          %v1460 = vld [vmem:[%s7 + $0x144] sm:$0xf]
          %v1461 = vld [vmem:[%s7 + $0x148] sm:$0xf]
          %v1462 = vld [vmem:[%s7 + $0x14c] sm:$0xf]
          %v1463 = vld [vmem:[%s7 + $0x150] sm:$0xf]
          %v1464 = vld [vmem:[%s7 + $0x154] sm:$0xf]
          %v1465 = vld [vmem:[%s7 + $0x158] sm:$0xf]
          %v1466 = vld [vmem:[%s7 + $0x15c] sm:$0xf]
          %v1467 = vld [vmem:[%s7 + $0x160] sm:$0xf]
          %v1468 = vld [vmem:[%s7 + $0x164] sm:$0xf]
          %v1469 = vld [vmem:[%s7 + $0x168] sm:$0xf]
          %v1470 = vld [vmem:[%s7 + $0x16c] sm:$0xf]
          %v1471 = vld [vmem:[%s7 + $0x170] sm:$0xf]
          %v1472 = vld [vmem:[%s7 + $0x174] sm:$0xf]
          %v1473 = vld [vmem:[%s7 + $0x178] sm:$0xf]
          %v1474 = vld [vmem:[%s7 + $0x17c] sm:$0xf]
          %v1475 = vld [vmem:[%s7 + $0x180] sm:$0xf]
          %v1476 = vld [vmem:[%s7 + $0x184] sm:$0xf]
          %v1477 = vld [vmem:[%s7 + $0x188] sm:$0xf]
          %v1478 = vld [vmem:[%s7 + $0x18c] sm:$0xf]
          %v1479 = vld [vmem:[%s7 + $0x190] sm:$0xf]
          %v1480 = vld [vmem:[%s7 + $0x194] sm:$0xf]
          %v1481 = vld [vmem:[%s7 + $0x198] sm:$0xf]
          %v1482 = vld [vmem:[%s7 + $0x19c] sm:$0xf]
          %v1483 = vld [vmem:[%s7 + $0x1a0] sm:$0xf]
          %v1484 = vld [vmem:[%s7 + $0x1a4] sm:$0xf]
          %v1485 = vld [vmem:[%s7 + $0x1a8] sm:$0xf]
          %v1486 = vld [vmem:[%s7 + $0x1ac] sm:$0xf]
          %v1487 = vld [vmem:[%s7 + $0x1b0] sm:$0xf]
          %v1488 = vld [vmem:[%s7 + $0x1b4] sm:$0xf]
          %v1489 = vld [vmem:[%s7 + $0x1b8] sm:$0xf]
          %v1490 = vld [vmem:[%s7 + $0x1bc] sm:$0xf]
          %v1491 = vld [vmem:[%s7 + $0x1c0] sm:$0xf]
          %v1492 = vld [vmem:[%s7 + $0x1c4] sm:$0xf]
          %v1493 = vld [vmem:[%s7 + $0x1c8] sm:$0xf]
          %v1494 = vld [vmem:[%s7 + $0x1cc] sm:$0xf]
          %v1495 = vld [vmem:[%s7 + $0x1d0] sm:$0xf]
          %v1496 = vld [vmem:[%s7 + $0x1d4] sm:$0xf]
          %v1497 = vld [vmem:[%s7 + $0x1d8] sm:$0xf]
          %v1498 = vld [vmem:[%s7 + $0x1dc] sm:$0xf]
          %v1499 = vld [vmem:[%s7 + $0x1e0] sm:$0xf]
          %v1500 = vld [vmem:[%s7 + $0x1e4] sm:$0xf]
          %v1501 = vld [vmem:[%s7 + $0x1e8] sm:$0xf]
          %v1502 = vld [vmem:[%s7 + $0x1ec] sm:$0xf]
          %v1503 = vld [vmem:[%s7 + $0x1f0] sm:$0xf]
          %v1504 = vld [vmem:[%s7 + $0x1f4] sm:$0xf]
          %v1505 = vld [vmem:[%s7 + $0x1f8] sm:$0xf]
          %v1506 = vld [vmem:[%s7 + $0x1fc] sm:$0xf]
          %v1635 = vunpack.c.l.b16 %v1379
          %v1636 = vunpack.c.l.b16 %v1380
          %v1637 = vunpack.c.l.b16 %v1381
          %v1638 = vunpack.c.l.b16 %v1382
          %v1639 = vunpack.c.l.b16 %v1383
          %v1640 = vunpack.c.l.b16 %v1384
          %v1641 = vunpack.c.l.b16 %v1385
          %v1642 = vunpack.c.l.b16 %v1386
          %v1643 = vunpack.c.l.b16 %v1387
          %v1644 = vunpack.c.l.b16 %v1388
          %v1645 = vunpack.c.l.b16 %v1389
          %v1646 = vunpack.c.l.b16 %v1390
          %v1647 = vunpack.c.l.b16 %v1391
          %v1648 = vunpack.c.l.b16 %v1392
          %v1649 = vunpack.c.l.b16 %v1393
          %v1650 = vunpack.c.l.b16 %v1394
          %v1651 = vunpack.c.l.b16 %v1395
          %v1652 = vunpack.c.l.b16 %v1396
          %v1653 = vunpack.c.l.b16 %v1397
          %v1654 = vunpack.c.l.b16 %v1398
          %v1655 = vunpack.c.l.b16 %v1399
          %v1656 = vunpack.c.l.b16 %v1400
          %v1657 = vunpack.c.l.b16 %v1401
          %v1658 = vunpack.c.l.b16 %v1402
          %v1659 = vunpack.c.l.b16 %v1403
          %v1660 = vunpack.c.l.b16 %v1404
          %v1661 = vunpack.c.l.b16 %v1405
          %v1662 = vunpack.c.l.b16 %v1406
          %v1663 = vunpack.c.l.b16 %v1407
          %v1664 = vunpack.c.l.b16 %v1408
          %v1665 = vunpack.c.l.b16 %v1409
          %v1666 = vunpack.c.l.b16 %v1410
          %v1667 = vunpack.c.l.b16 %v1411
          %v1668 = vunpack.c.l.b16 %v1412
          %v1669 = vunpack.c.l.b16 %v1413
          %v1670 = vunpack.c.l.b16 %v1414
          %v1671 = vunpack.c.l.b16 %v1415
          %v1672 = vunpack.c.l.b16 %v1416
          %v1673 = vunpack.c.l.b16 %v1417
          %v1674 = vunpack.c.l.b16 %v1418
          %v1675 = vunpack.c.l.b16 %v1419
          %v1676 = vunpack.c.l.b16 %v1420
          %v1677 = vunpack.c.l.b16 %v1421
          %v1678 = vunpack.c.l.b16 %v1422
          %v1679 = vunpack.c.l.b16 %v1423
          %v1680 = vunpack.c.l.b16 %v1424
          %v1681 = vunpack.c.l.b16 %v1425
          %v1682 = vunpack.c.l.b16 %v1426
          %v1683 = vunpack.c.l.b16 %v1427
          %v1684 = vunpack.c.l.b16 %v1428
          %v1685 = vunpack.c.l.b16 %v1429
          %v1686 = vunpack.c.l.b16 %v1430
          %v1687 = vunpack.c.l.b16 %v1431
          %v1688 = vunpack.c.l.b16 %v1432
          %v1689 = vunpack.c.l.b16 %v1433
          %v1690 = vunpack.c.l.b16 %v1434
          %v1691 = vunpack.c.l.b16 %v1435
          %v1692 = vunpack.c.l.b16 %v1436
          %v1693 = vunpack.c.l.b16 %v1437
          %v1694 = vunpack.c.l.b16 %v1438
          %v1695 = vunpack.c.l.b16 %v1439
          %v1696 = vunpack.c.l.b16 %v1440
          %v1697 = vunpack.c.l.b16 %v1441
          %v1698 = vunpack.c.l.b16 %v1442
          %v1699 = vunpack.c.l.b16 %v1443
          %v1700 = vunpack.c.l.b16 %v1444
          %v1701 = vunpack.c.l.b16 %v1445
          %v1702 = vunpack.c.l.b16 %v1446
          %v1703 = vunpack.c.l.b16 %v1447
          %v1704 = vunpack.c.l.b16 %v1448
          %v1705 = vunpack.c.l.b16 %v1449
          %v1706 = vunpack.c.l.b16 %v1450
          %v1707 = vunpack.c.l.b16 %v1451
          %v1708 = vunpack.c.l.b16 %v1452
          %v1709 = vunpack.c.l.b16 %v1453
          %v1710 = vunpack.c.l.b16 %v1454
          %v1711 = vunpack.c.l.b16 %v1455
          %v1712 = vunpack.c.l.b16 %v1456
          %v1713 = vunpack.c.l.b16 %v1457
          %v1714 = vunpack.c.l.b16 %v1458
          %v1715 = vunpack.c.l.b16 %v1459
          %v1716 = vunpack.c.l.b16 %v1460
          %v1717 = vunpack.c.l.b16 %v1461
          %v1718 = vunpack.c.l.b16 %v1462
          %v1719 = vunpack.c.l.b16 %v1463
          %v1720 = vunpack.c.l.b16 %v1464
          %v1721 = vunpack.c.l.b16 %v1465
          %v1722 = vunpack.c.l.b16 %v1466
          %v1723 = vunpack.c.l.b16 %v1467
          %v1724 = vunpack.c.l.b16 %v1468
          %v1725 = vunpack.c.l.b16 %v1469
          %v1726 = vunpack.c.l.b16 %v1470
          %v1727 = vunpack.c.l.b16 %v1471
          %v1728 = vunpack.c.l.b16 %v1472
          %v1729 = vunpack.c.l.b16 %v1473
          %v1730 = vunpack.c.l.b16 %v1474
          %v1731 = vunpack.c.l.b16 %v1475
          %v1732 = vunpack.c.l.b16 %v1476
          %v1733 = vunpack.c.l.b16 %v1477
          %v1734 = vunpack.c.l.b16 %v1478
          %v1735 = vunpack.c.l.b16 %v1479
          %v1736 = vunpack.c.l.b16 %v1480
          %v1737 = vunpack.c.l.b16 %v1481
          %v1738 = vunpack.c.l.b16 %v1482
          %v1739 = vunpack.c.l.b16 %v1483
          %v1740 = vunpack.c.l.b16 %v1484
          %v1741 = vunpack.c.l.b16 %v1485
          %v1742 = vunpack.c.l.b16 %v1486
          %v1743 = vunpack.c.l.b16 %v1487
          %v1744 = vunpack.c.l.b16 %v1488
          %v1745 = vunpack.c.l.b16 %v1489
          %v1746 = vunpack.c.l.b16 %v1490
          %v1747 = vunpack.c.l.b16 %v1491
          %v1748 = vunpack.c.l.b16 %v1492
          %v1749 = vunpack.c.l.b16 %v1493
          %v1750 = vunpack.c.l.b16 %v1494
          %v1751 = vunpack.c.l.b16 %v1495
          %v1752 = vunpack.c.l.b16 %v1496
          %v1753 = vunpack.c.l.b16 %v1497
          %v1754 = vunpack.c.l.b16 %v1498
          %v1755 = vunpack.c.l.b16 %v1499
          %v1756 = vunpack.c.l.b16 %v1500
          %v1757 = vunpack.c.l.b16 %v1501
          %v1758 = vunpack.c.l.b16 %v1502
          %v1759 = vunpack.c.l.b16 %v1503
          %v1760 = vunpack.c.l.b16 %v1504
          %v1761 = vunpack.c.l.b16 %v1505
          %v1762 = vunpack.c.l.b16 %v1506
          %v1763 = vpack.c.b16 %v1636, %v1635
          %v1764 = vpack.c.b16 %v1638, %v1637
          %v1765 = vpack.c.b16 %v1640, %v1639
          %v1766 = vpack.c.b16 %v1642, %v1641
          %v1767 = vpack.c.b16 %v1644, %v1643
          %v1768 = vpack.c.b16 %v1646, %v1645
          %v1769 = vpack.c.b16 %v1648, %v1647
          %v1770 = vpack.c.b16 %v1650, %v1649
          %v1771 = vpack.c.b16 %v1652, %v1651
          %v1772 = vpack.c.b16 %v1654, %v1653
          %v1773 = vpack.c.b16 %v1656, %v1655
          %v1774 = vpack.c.b16 %v1658, %v1657
          %v1775 = vpack.c.b16 %v1660, %v1659
          %v1776 = vpack.c.b16 %v1662, %v1661
          %v1777 = vpack.c.b16 %v1664, %v1663
          %v1778 = vpack.c.b16 %v1666, %v1665
          %v1779 = vpack.c.b16 %v1668, %v1667
          %v1780 = vpack.c.b16 %v1670, %v1669
          %v1781 = vpack.c.b16 %v1672, %v1671
          %v1782 = vpack.c.b16 %v1674, %v1673
          %v1783 = vpack.c.b16 %v1676, %v1675
          %v1784 = vpack.c.b16 %v1678, %v1677
          %v1785 = vpack.c.b16 %v1680, %v1679
          %v1786 = vpack.c.b16 %v1682, %v1681
          %v1787 = vpack.c.b16 %v1684, %v1683
          %v1788 = vpack.c.b16 %v1686, %v1685
          %v1789 = vpack.c.b16 %v1688, %v1687
          %v1790 = vpack.c.b16 %v1690, %v1689
          %v1791 = vpack.c.b16 %v1692, %v1691
          %v1792 = vpack.c.b16 %v1694, %v1693
          %v1793 = vpack.c.b16 %v1696, %v1695
          %v1794 = vpack.c.b16 %v1698, %v1697
          %v1795 = vpack.c.b16 %v1700, %v1699
          %v1796 = vpack.c.b16 %v1702, %v1701
          %v1797 = vpack.c.b16 %v1704, %v1703
          %v1798 = vpack.c.b16 %v1706, %v1705
          %v1799 = vpack.c.b16 %v1708, %v1707
          %v1800 = vpack.c.b16 %v1710, %v1709
          %v1801 = vpack.c.b16 %v1712, %v1711
          %v1802 = vpack.c.b16 %v1714, %v1713
          %v1803 = vpack.c.b16 %v1716, %v1715
          %v1804 = vpack.c.b16 %v1718, %v1717
          %v1805 = vpack.c.b16 %v1720, %v1719
          %v1806 = vpack.c.b16 %v1722, %v1721
          %v1807 = vpack.c.b16 %v1724, %v1723
          %v1808 = vpack.c.b16 %v1726, %v1725
          %v1809 = vpack.c.b16 %v1728, %v1727
          %v1810 = vpack.c.b16 %v1730, %v1729
          %v1811 = vpack.c.b16 %v1732, %v1731
          %v1812 = vpack.c.b16 %v1734, %v1733
          %v1813 = vpack.c.b16 %v1736, %v1735
          %v1814 = vpack.c.b16 %v1738, %v1737
          %v1815 = vpack.c.b16 %v1740, %v1739
          %v1816 = vpack.c.b16 %v1742, %v1741
          %v1817 = vpack.c.b16 %v1744, %v1743
          %v1818 = vpack.c.b16 %v1746, %v1745
          %v1819 = vpack.c.b16 %v1748, %v1747
          %v1820 = vpack.c.b16 %v1750, %v1749
          %v1821 = vpack.c.b16 %v1752, %v1751
          %v1822 = vpack.c.b16 %v1754, %v1753
          %v1823 = vpack.c.b16 %v1756, %v1755
          %v1824 = vpack.c.b16 %v1758, %v1757
          %v1825 = vpack.c.b16 %v1760, %v1759
          %v1826 = vpack.c.b16 %v1762, %v1761
          %1891 = vmatprep.subr.bf16.mxu0 0
          %1892 = vmatpush1.bf16.msra.mxu0 %v1763
          %1893 = vmatprep.subr.bf16.mxu0 0
          %1894 = vmatpush1.bf16.msra.mxu0 %v1764
          %1895 = vmatprep.subr.bf16.mxu0 0
          %1896 = vmatpush1.bf16.msra.mxu0 %v1765
          %1897 = vmatprep.subr.bf16.mxu0 0
          %1898 = vmatpush1.bf16.msra.mxu0 %v1766
          %1899 = vmatprep.subr.bf16.mxu0 0
          %1900 = vmatpush1.bf16.msra.mxu0 %v1767
          %1901 = vmatprep.subr.bf16.mxu0 0
          %1902 = vmatpush1.bf16.msra.mxu0 %v1768
          %1903 = vmatprep.subr.bf16.mxu0 0
          %1904 = vmatpush1.bf16.msra.mxu0 %v1769
          %1905 = vmatprep.subr.bf16.mxu0 0
          %1906 = vmatpush1.bf16.msra.mxu0 %v1770
          %1907 = vmatprep.subr.bf16.mxu0 0
          %1908 = vmatpush1.bf16.msra.mxu0 %v1771
          %1909 = vmatprep.subr.bf16.mxu0 0
          %1910 = vmatpush1.bf16.msra.mxu0 %v1772
          %1911 = vmatprep.subr.bf16.mxu0 0
          %1912 = vmatpush1.bf16.msra.mxu0 %v1773
          %1913 = vmatprep.subr.bf16.mxu0 0
          %1914 = vmatpush1.bf16.msra.mxu0 %v1774
          %1915 = vmatprep.subr.bf16.mxu0 0
          %1916 = vmatpush1.bf16.msra.mxu0 %v1775
          %1917 = vmatprep.subr.bf16.mxu0 0
          %1918 = vmatpush1.bf16.msra.mxu0 %v1776
          %1919 = vmatprep.subr.bf16.mxu0 0
          %1920 = vmatpush1.bf16.msra.mxu0 %v1777
          %1921 = vmatprep.subr.bf16.mxu0 0
          %1922 = vmatpush1.bf16.msra.mxu0 %v1778
          %1923 = vmatprep.mubr.bf16.mxu0 %v1364
          %1924 = vmatmul.mubr.bf16.gmra.mrb[0].mxu0 %v1363
          %v1925 = vpop.f32.mrb[0].mxu0
          %v1926 = vadd.f32 0.0, %v1925
          %v1927 = vpop.f32.mrb[0].mxu0
          %v1928 = vpop.f32.mrb[0].mxu0
          %v1929 = vadd.f32 0.0, %v1928
          %v1930 = vpop.f32.mrb[0].mxu0
          %1931 = vdwg.mxu0
          %1932 = vmatprep.subr.bf16.mxu0 0
          %1933 = vmatpush1.bf16.msra.mxu0 %v1779
          %1934 = vmatprep.subr.bf16.mxu0 0
          %1935 = vmatpush1.bf16.msra.mxu0 %v1780
          %1936 = vmatprep.subr.bf16.mxu0 0
          %1937 = vmatpush1.bf16.msra.mxu0 %v1781
          %1938 = vmatprep.subr.bf16.mxu0 0
          %1939 = vmatpush1.bf16.msra.mxu0 %v1782
          %1940 = vmatprep.subr.bf16.mxu0 0
          %1941 = vmatpush1.bf16.msra.mxu0 %v1783
          %1942 = vmatprep.subr.bf16.mxu0 0
          %1943 = vmatpush1.bf16.msra.mxu0 %v1784
          %1944 = vmatprep.subr.bf16.mxu0 0
          %1945 = vmatpush1.bf16.msra.mxu0 %v1785
          %1946 = vmatprep.subr.bf16.mxu0 0
          %1947 = vmatpush1.bf16.msra.mxu0 %v1786
          %1948 = vmatprep.subr.bf16.mxu0 0
          %1949 = vmatpush1.bf16.msra.mxu0 %v1787
          %1950 = vmatprep.subr.bf16.mxu0 0
          %1951 = vmatpush1.bf16.msra.mxu0 %v1788
          %1952 = vmatprep.subr.bf16.mxu0 0
          %1953 = vmatpush1.bf16.msra.mxu0 %v1789
          %1954 = vmatprep.subr.bf16.mxu0 0
          %1955 = vmatpush1.bf16.msra.mxu0 %v1790
          %1956 = vmatprep.subr.bf16.mxu0 0
          %1957 = vmatpush1.bf16.msra.mxu0 %v1791
          %1958 = vmatprep.subr.bf16.mxu0 0
          %1959 = vmatpush1.bf16.msra.mxu0 %v1792
          %1960 = vmatprep.subr.bf16.mxu0 0
          %1961 = vmatpush1.bf16.msra.mxu0 %v1793
          %1962 = vmatprep.subr.bf16.mxu0 0
          %1963 = vmatpush1.bf16.msra.mxu0 %v1794
          %1964 = vmatprep.mubr.bf16.mxu0 %v1366
          %1965 = vmatmul.mubr.bf16.gmra.mrb[0].mxu0 %v1365
          %v1966 = vpop.f32.mrb[0].mxu0
          %v1967 = vadd.f32 %v1926, %v1966
          %v1968 = vpop.f32.mrb[0].mxu0
          %v1969 = vpop.f32.mrb[0].mxu0
          %v1970 = vadd.f32 %v1929, %v1969
          %v1971 = vpop.f32.mrb[0].mxu0
          %1972 = vdwg.mxu0
          %1973 = vmatprep.subr.bf16.mxu0 0
          %1974 = vmatpush1.bf16.msra.mxu0 %v1795
          %1975 = vmatprep.subr.bf16.mxu0 0
          %1976 = vmatpush1.bf16.msra.mxu0 %v1796
          %1977 = vmatprep.subr.bf16.mxu0 0
          %1978 = vmatpush1.bf16.msra.mxu0 %v1797
          %1979 = vmatprep.subr.bf16.mxu0 0
          %1980 = vmatpush1.bf16.msra.mxu0 %v1798
          %1981 = vmatprep.subr.bf16.mxu0 0
          %1982 = vmatpush1.bf16.msra.mxu0 %v1799
          %1983 = vmatprep.subr.bf16.mxu0 0
          %1984 = vmatpush1.bf16.msra.mxu0 %v1800
          %1985 = vmatprep.subr.bf16.mxu0 0
          %1986 = vmatpush1.bf16.msra.mxu0 %v1801
          %1987 = vmatprep.subr.bf16.mxu0 0
          %1988 = vmatpush1.bf16.msra.mxu0 %v1802
          %1989 = vmatprep.subr.bf16.mxu0 0
          %1990 = vmatpush1.bf16.msra.mxu0 %v1803
          %1991 = vmatprep.subr.bf16.mxu0 0
          %1992 = vmatpush1.bf16.msra.mxu0 %v1804
          %1993 = vmatprep.subr.bf16.mxu0 0
          %1994 = vmatpush1.bf16.msra.mxu0 %v1805
          %1995 = vmatprep.subr.bf16.mxu0 0
          %1996 = vmatpush1.bf16.msra.mxu0 %v1806
          %1997 = vmatprep.subr.bf16.mxu0 0
          %1998 = vmatpush1.bf16.msra.mxu0 %v1807
          %1999 = vmatprep.subr.bf16.mxu0 0
          %2000 = vmatpush1.bf16.msra.mxu0 %v1808
          %2001 = vmatprep.subr.bf16.mxu0 0
          %2002 = vmatpush1.bf16.msra.mxu0 %v1809
          %2003 = vmatprep.subr.bf16.mxu0 0
          %2004 = vmatpush1.bf16.msra.mxu0 %v1810
          %2005 = vmatprep.mubr.bf16.mxu0 %v1368
          %2006 = vmatmul.mubr.bf16.gmra.mrb[0].mxu0 %v1367
          %v2007 = vpop.f32.mrb[0].mxu0
          %v2008 = vadd.f32 %v1967, %v2007
          %v2009 = vpop.f32.mrb[0].mxu0
          %v2010 = vpop.f32.mrb[0].mxu0
          %v2011 = vadd.f32 %v1970, %v2010
          %v2012 = vpop.f32.mrb[0].mxu0
          %2013 = vdwg.mxu0
          %2014 = vmatprep.subr.bf16.mxu0 0
          %2015 = vmatpush1.bf16.msra.mxu0 %v1811
          %2016 = vmatprep.subr.bf16.mxu0 0
          %2017 = vmatpush1.bf16.msra.mxu0 %v1812
          %2018 = vmatprep.subr.bf16.mxu0 0
          %2019 = vmatpush1.bf16.msra.mxu0 %v1813
          %2020 = vmatprep.subr.bf16.mxu0 0
          %2021 = vmatpush1.bf16.msra.mxu0 %v1814
          %2022 = vmatprep.subr.bf16.mxu0 0
          %2023 = vmatpush1.bf16.msra.mxu0 %v1815
          %2024 = vmatprep.subr.bf16.mxu0 0
          %2025 = vmatpush1.bf16.msra.mxu0 %v1816
          %2026 = vmatprep.subr.bf16.mxu0 0
          %2027 = vmatpush1.bf16.msra.mxu0 %v1817
          %2028 = vmatprep.subr.bf16.mxu0 0
          %2029 = vmatpush1.bf16.msra.mxu0 %v1818
          %2030 = vmatprep.subr.bf16.mxu0 0
          %2031 = vmatpush1.bf16.msra.mxu0 %v1819
          %2032 = vmatprep.subr.bf16.mxu0 0
          %2033 = vmatpush1.bf16.msra.mxu0 %v1820
          %2034 = vmatprep.subr.bf16.mxu0 0
          %2035 = vmatpush1.bf16.msra.mxu0 %v1821
          %2036 = vmatprep.subr.bf16.mxu0 0
          %2037 = vmatpush1.bf16.msra.mxu0 %v1822
          %2038 = vmatprep.subr.bf16.mxu0 0
          %2039 = vmatpush1.bf16.msra.mxu0 %v1823
          %2040 = vmatprep.subr.bf16.mxu0 0
          %2041 = vmatpush1.bf16.msra.mxu0 %v1824
          %2042 = vmatprep.subr.bf16.mxu0 0
          %2043 = vmatpush1.bf16.msra.mxu0 %v1825
          %2044 = vmatprep.subr.bf16.mxu0 0
          %2045 = vmatpush1.bf16.msra.mxu0 %v1826
          %2046 = vmatprep.mubr.bf16.mxu0 %v1370
          %2047 = vmatmul.mubr.bf16.gmra.mrb[0].mxu0 %v1369
          %v2048 = vpop.f32.mrb[0].mxu0
          %v2049 = vadd.f32 %v2008, %v2048
          %v2050 = vpop.f32.mrb[0].mxu0
          %v2051 = vpop.f32.mrb[0].mxu0
          %v2052 = vadd.f32 %v2011, %v2051
          %v2053 = vpop.f32.mrb[0].mxu0
          %2054 = vdwg.mxu0
          %2055 = vxpose.xlu0.b32.start [1/16] %v2049, 128
          %2056 = vxpose.xlu0.b32.cont [2/16] %v2052, 128
          %2057 = vxpose.xlu0.b32.cont [3/16] 0.0, 128
          %2058 = vxpose.xlu0.b32.cont [4/16] 0.0, 128
          %2059 = vxpose.xlu0.b32.cont [5/16] 0.0, 128
          %2060 = vxpose.xlu0.b32.cont [6/16] 0.0, 128
          %2061 = vxpose.xlu0.b32.cont [7/16] 0.0, 128
          %2062 = vxpose.xlu0.b32.cont [8/16] 0.0, 128
          %2063 = vxpose.xlu0.b32.cont [9/16] 0.0, 128
          %2064 = vxpose.xlu0.b32.cont [10/16] 0.0, 128
          %2065 = vxpose.xlu0.b32.cont [11/16] 0.0, 128
          %2066 = vxpose.xlu0.b32.cont [12/16] 0.0, 128
          %2067 = vxpose.xlu0.b32.cont [13/16] 0.0, 128
          %2068 = vxpose.xlu0.b32.cont [14/16] 0.0, 128
          %2069 = vxpose.xlu0.b32.cont [15/16] 0.0, 128
          %2070 = vxpose.xlu0.b32.end [16/16] 0.0, 128
          %v2071 = vpop.trf.xlu0
          %v2072 = vpop.trf.xlu0
          %v2073 = vpop.trf.xlu0
          %v2074 = vpop.trf.xlu0
          %v2075 = vpop.trf.xlu0
          %v2076 = vpop.trf.xlu0
          %v2077 = vpop.trf.xlu0
          %v2078 = vpop.trf.xlu0
          %v2079 = vpop.trf.xlu0
          %v2080 = vpop.trf.xlu0
          %v2081 = vpop.trf.xlu0
          %v2082 = vpop.trf.xlu0
          %v2083 = vpop.trf.xlu0
          %v2084 = vpop.trf.xlu0
          %v2085 = vpop.trf.xlu0
          %v2086 = vpop.trf.xlu0
          %2088 = vset.pattern.permute.xlu0 8
          %2089 = vperm.xlu0 %2088, %v2049
          %v2090 = vpop.permute.xlu0 %2089
          %2093 = vset.pattern.permute.xlu0 8
          %2094 = vperm.xlu0 %2093, %v2052
          %v2095 = vpop.permute.xlu0 %2094
          %v2097 = vlaneseq
          %v2098 = vshrl.u32 %v2097, 7
          %v2099 = vsub.s32 0, %v2098
          %v2100 = vrot.slane %v2071, %v2099
          %v2101 = vadd.f32 %v2090, %v2100
          %v2102 = vadd.f32 %v2095, %v2100
          %vm2103 = vcmp.gt.f32.partialorder %v2101, 0.0
          %vm2104 = vcmp.gt.f32.partialorder %v2102, 0.0
          %v2105 = vmul.f32 %v2101, 0.2
          %v2106 = vmul.f32 %v2102, 0.2
          %v2107 = vsel %vm2103, %v2101, %v2105
          %v2108 = vsel %vm2104, %v2102, %v2106
          %v2109 = vadd.f32 %v2107, %v797
          %v2110 = vadd.f32 %v2108, %v798
          %vm2111 = vcmask 130048
          %v2112 = vsel %vm2111, %v2109, -inf
          %2113 = vmax.xlane.f32.xlu0 %v2112
          %v2114 = vpop.xlane.xlu0 %2113
          %v2115 = vsel %vm2111, %v2110, -inf
          %2116 = vmax.xlane.f32.xlu0 %v2115
          %v2117 = vpop.xlane.xlu0 %2116
          %v2118 = vsub.f32 %v2109, %v2114
          %v2119 = vsub.f32 %v2110, %v2117
          %v2120 = vmul.f32 %v2118, 1.442695
          %v2121 = vpow.pop %v2120
          %v2122 = vmul.f32 %v2119, 1.442695
          %v2123 = vpow.pop %v2122
          %v2124 = vsel %vm2111, %v2121, 0.0
          %2125 = vadd.xlane.f32.xlu0 %v2124
          %v2126 = vpop.xlane.xlu0 %2125
          %v2127 = vsel %vm2111, %v2123, 0.0
          %2128 = vadd.xlane.f32.xlu0 %v2127
          %v2129 = vpop.xlane.xlu0 %2128
          %v2130 = vmax.f32 %v2126, 1e-20
          %v2131 = vmax.f32 %v2129, 1e-20
          %v2132 = vrcp.pop %v2130
          %v2133 = vrcp.pop %v2131
          %v2134 = vmul.f32 %v2121, %v2132
          %v2135 = vmul.f32 %v2123, %v2133
          %v2136 = vpack.c.bf16 %v2135, %v2134
          %v2137 = vld [vmem:[#allocation3] sm:$0xff]
          %v2138 = vld [vmem:[%s8] sm:$0x1]
          %v2140 = vlaneseq
          %v2141 = vshrl.u32 %v2140, 7
          %v2142 = vsub.s32 0, %v2141
          %v2143 = vrot.slane %v2138, %v2142
          %v2146 = vsel %vm2111, %v2136, 0
          %2148 = vmatprep.subr.bf16.mxu0 0
          %2149 = vmatpush1.bf16.msra.mxu0 %v2137
          %2150 = vmatprep.subr.bf16.mxu0 0
          %2151 = vmatpush1.bf16.msra.mxu0 0
          %2152 = vmatprep.subr.bf16.mxu0 0
          %2153 = vmatpush1.bf16.msra.mxu0 0
          %2154 = vmatprep.subr.bf16.mxu0 0
          %2155 = vmatpush1.bf16.msra.mxu0 0
          %2156 = vmatprep.subr.bf16.mxu0 0
          %2157 = vmatpush1.bf16.msra.mxu0 0
          %2158 = vmatprep.subr.bf16.mxu0 0
          %2159 = vmatpush1.bf16.msra.mxu0 0
          %2160 = vmatprep.subr.bf16.mxu0 0
          %2161 = vmatpush1.bf16.msra.mxu0 0
          %2162 = vmatprep.subr.bf16.mxu0 0
          %2163 = vmatpush1.bf16.msra.mxu0 0
          %2164 = vmatprep.subr.bf16.mxu0 0
          %2165 = vmatpush1.bf16.msra.mxu0 0
          %2166 = vmatprep.subr.bf16.mxu0 0
          %2167 = vmatpush1.bf16.msra.mxu0 0
          %2168 = vmatprep.subr.bf16.mxu0 0
          %2169 = vmatpush1.bf16.msra.mxu0 0
          %2170 = vmatprep.subr.bf16.mxu0 0
          %2171 = vmatpush1.bf16.msra.mxu0 0
          %2172 = vmatprep.subr.bf16.mxu0 0
          %2173 = vmatpush1.bf16.msra.mxu0 0
          %2174 = vmatprep.subr.bf16.mxu0 0
          %2175 = vmatpush1.bf16.msra.mxu0 0
          %2176 = vmatprep.subr.bf16.mxu0 0
          %2177 = vmatpush1.bf16.msra.mxu0 0
          %2178 = vmatprep.subr.bf16.mxu0 0
          %2179 = vmatpush1.bf16.msra.mxu0 0
          %2180 = vmatprep.mubr.bf16.mxu0 0
          %2181 = vmatmul.mubr.bf16.gmra.mrb[0].mxu0 %v2146
          %v2182 = vpop.f32.mrb[0].mxu0
          %v2183 = vadd.f32 %v2143, %v2182
          %v2184 = vpop.f32.mrb[0].mxu0
          %v2185 = vpop.f32.mrb[0].mxu0
          %v2186 = vadd.f32 %v2143, %v2185
          %v2187 = vpop.f32.mrb[0].mxu0
          %2188 = vdwg.mxu0
          %vm2189 = vcmp.gt.f32.partialorder %v2183, 0.0
          %vm2190 = vcmp.gt.f32.partialorder %v2186, 0.0
          %v2191 = vmin.f32 %v2183, 0.0
          %v2192 = vmin.f32 %v2186, 0.0
          %v2193 = vmul.f32 %v2191, 1.442695
          %v2194 = vpow.pop %v2193
          %v2195 = vmul.f32 %v2192, 1.442695
          %v2196 = vpow.pop %v2195
          %v2197 = vsub.f32 %v2194, 1.0
          %v2198 = vsub.f32 %v2196, 1.0
          %v2199 = vsel %vm2189, %v2183, %v2197
          %v2200 = vsel %vm2190, %v2186, %v2198
          %v2201 = vpack.c.bf16 %v2200, %v2199
          %2202 = vst [vmem:[#allocation4] sm:$0xff] %v2201
          %2203 = vset.pattern.permute.xlu0 9
          %2204 = vperm.xlu0 %2203, %v2049
          %v2205 = vpop.permute.xlu0 %2204
          %2207 = vset.pattern.permute.xlu0 9
          %2208 = vperm.xlu0 %2207, %v2052
          %v2209 = vpop.permute.xlu0 %2208
          %v2211 = vlaneseq
          %v2212 = vshrl.u32 %v2211, 7
          %v2213 = vsub.s32 1, %v2212
          %v2214 = vrot.slane %v2071, %v2213
          %v2215 = vadd.f32 %v2205, %v2214
          %v2216 = vadd.f32 %v2209, %v2214
          %vm2217 = vcmp.gt.f32.partialorder %v2215, 0.0
          %vm2218 = vcmp.gt.f32.partialorder %v2216, 0.0
          %v2219 = vmul.f32 %v2215, 0.2
          %v2220 = vmul.f32 %v2216, 0.2
          %v2221 = vsel %vm2217, %v2215, %v2219
          %v2222 = vsel %vm2218, %v2216, %v2220
          %v2223 = vadd.f32 %v2221, %v797
          %v2224 = vadd.f32 %v2222, %v798
          %v2225 = vsel %vm2111, %v2223, -inf
          %2226 = vmax.xlane.f32.xlu0 %v2225
          %v2227 = vpop.xlane.xlu0 %2226
          %v2228 = vsel %vm2111, %v2224, -inf
          %2229 = vmax.xlane.f32.xlu0 %v2228
          %v2230 = vpop.xlane.xlu0 %2229
          %v2231 = vsub.f32 %v2223, %v2227
          %v2232 = vsub.f32 %v2224, %v2230
          %v2233 = vmul.f32 %v2231, 1.442695
          %v2234 = vpow.pop %v2233
          %v2235 = vmul.f32 %v2232, 1.442695
          %v2236 = vpow.pop %v2235
          %v2237 = vsel %vm2111, %v2234, 0.0
          %2238 = vadd.xlane.f32.xlu0 %v2237
          %v2239 = vpop.xlane.xlu0 %2238
          %v2240 = vsel %vm2111, %v2236, 0.0
          %2241 = vadd.xlane.f32.xlu0 %v2240
          %v2242 = vpop.xlane.xlu0 %2241
          %v2243 = vmax.f32 %v2239, 1e-20
          %v2244 = vmax.f32 %v2242, 1e-20
          %v2245 = vrcp.pop %v2243
          %v2246 = vrcp.pop %v2244
          %v2247 = vmul.f32 %v2234, %v2245
          %v2248 = vmul.f32 %v2236, %v2246
          %v2249 = vpack.c.bf16 %v2248, %v2247
          %v2250 = vld [vmem:[#allocation3 + $0x8] sm:$0xff]
          %v2251 = vld [vmem:[%s8 + $0x1] sm:$0x1]
          %v2253 = vlaneseq
          %v2254 = vshrl.u32 %v2253, 7
          %v2255 = vsub.s32 0, %v2254
          %v2256 = vrot.slane %v2251, %v2255
          %v2259 = vsel %vm2111, %v2249, 0
          %2261 = vmatprep.subr.bf16.mxu0 0
          %2262 = vmatpush1.bf16.msra.mxu0 %v2250
          %2263 = vmatprep.subr.bf16.mxu0 0
          %2264 = vmatpush1.bf16.msra.mxu0 0
          %2265 = vmatprep.subr.bf16.mxu0 0
          %2266 = vmatpush1.bf16.msra.mxu0 0
          %2267 = vmatprep.subr.bf16.mxu0 0
          %2268 = vmatpush1.bf16.msra.mxu0 0
          %2269 = vmatprep.subr.bf16.mxu0 0
          %2270 = vmatpush1.bf16.msra.mxu0 0
          %2271 = vmatprep.subr.bf16.mxu0 0
          %2272 = vmatpush1.bf16.msra.mxu0 0
          %2273 = vmatprep.subr.bf16.mxu0 0
          %2274 = vmatpush1.bf16.msra.mxu0 0
          %2275 = vmatprep.subr.bf16.mxu0 0
          %2276 = vmatpush1.bf16.msra.mxu0 0
          %2277 = vmatprep.subr.bf16.mxu0 0
          %2278 = vmatpush1.bf16.msra.mxu0 0
          %2279 = vmatprep.subr.bf16.mxu0 0
          %2280 = vmatpush1.bf16.msra.mxu0 0
          %2281 = vmatprep.subr.bf16.mxu0 0
          %2282 = vmatpush1.bf16.msra.mxu0 0
          %2283 = vmatprep.subr.bf16.mxu0 0
          %2284 = vmatpush1.bf16.msra.mxu0 0
          %2285 = vmatprep.subr.bf16.mxu0 0
          %2286 = vmatpush1.bf16.msra.mxu0 0
          %2287 = vmatprep.subr.bf16.mxu0 0
          %2288 = vmatpush1.bf16.msra.mxu0 0
          %2289 = vmatprep.subr.bf16.mxu0 0
          %2290 = vmatpush1.bf16.msra.mxu0 0
          %2291 = vmatprep.subr.bf16.mxu0 0
          %2292 = vmatpush1.bf16.msra.mxu0 0
          %2293 = vmatprep.mubr.bf16.mxu0 0
          %2294 = vmatmul.mubr.bf16.gmra.mrb[0].mxu0 %v2259
          %v2295 = vpop.f32.mrb[0].mxu0
          %v2296 = vadd.f32 %v2256, %v2295
          %v2297 = vpop.f32.mrb[0].mxu0
          %v2298 = vpop.f32.mrb[0].mxu0
          %v2299 = vadd.f32 %v2256, %v2298
          %v2300 = vpop.f32.mrb[0].mxu0
          %2301 = vdwg.mxu0
          %vm2302 = vcmp.gt.f32.partialorder %v2296, 0.0
          %vm2303 = vcmp.gt.f32.partialorder %v2299, 0.0
          %v2304 = vmin.f32 %v2296, 0.0
          %v2305 = vmin.f32 %v2299, 0.0
          %v2306 = vmul.f32 %v2304, 1.442695
          %v2307 = vpow.pop %v2306
          %v2308 = vmul.f32 %v2305, 1.442695
          %v2309 = vpow.pop %v2308
          %v2310 = vsub.f32 %v2307, 1.0
          %v2311 = vsub.f32 %v2309, 1.0
          %v2312 = vsel %vm2302, %v2296, %v2310
          %v2313 = vsel %vm2303, %v2299, %v2311
          %v2314 = vpack.c.bf16 %v2313, %v2312
          %2315 = vst [vmem:[#allocation4 + $0x8] sm:$0xff] %v2314
          %2316 = vset.pattern.permute.xlu0 10
          %2317 = vperm.xlu0 %2316, %v2049
          %v2318 = vpop.permute.xlu0 %2317
          %2320 = vset.pattern.permute.xlu0 10
          %2321 = vperm.xlu0 %2320, %v2052
          %v2322 = vpop.permute.xlu0 %2321
          %v2324 = vlaneseq
          %v2325 = vshrl.u32 %v2324, 7
          %v2326 = vsub.s32 2, %v2325
          %v2327 = vrot.slane %v2071, %v2326
          %v2328 = vadd.f32 %v2318, %v2327
          %v2329 = vadd.f32 %v2322, %v2327
          %vm2330 = vcmp.gt.f32.partialorder %v2328, 0.0
          %vm2331 = vcmp.gt.f32.partialorder %v2329, 0.0
          %v2332 = vmul.f32 %v2328, 0.2
          %v2333 = vmul.f32 %v2329, 0.2
          %v2334 = vsel %vm2330, %v2328, %v2332
          %v2335 = vsel %vm2331, %v2329, %v2333
          %v2336 = vadd.f32 %v2334, %v797
          %v2337 = vadd.f32 %v2335, %v798
          %v2338 = vsel %vm2111, %v2336, -inf
          %2339 = vmax.xlane.f32.xlu0 %v2338
          %v2340 = vpop.xlane.xlu0 %2339
          %v2341 = vsel %vm2111, %v2337, -inf
          %2342 = vmax.xlane.f32.xlu0 %v2341
          %v2343 = vpop.xlane.xlu0 %2342
          %v2344 = vsub.f32 %v2336, %v2340
          %v2345 = vsub.f32 %v2337, %v2343
          %v2346 = vmul.f32 %v2344, 1.442695
          %v2347 = vpow.pop %v2346
          %v2348 = vmul.f32 %v2345, 1.442695
          %v2349 = vpow.pop %v2348
          %v2350 = vsel %vm2111, %v2347, 0.0
          %2351 = vadd.xlane.f32.xlu0 %v2350
          %v2352 = vpop.xlane.xlu0 %2351
          %v2353 = vsel %vm2111, %v2349, 0.0
          %2354 = vadd.xlane.f32.xlu0 %v2353
          %v2355 = vpop.xlane.xlu0 %2354
          %v2356 = vmax.f32 %v2352, 1e-20
          %v2357 = vmax.f32 %v2355, 1e-20
          %v2358 = vrcp.pop %v2356
          %v2359 = vrcp.pop %v2357
          %v2360 = vmul.f32 %v2347, %v2358
          %v2361 = vmul.f32 %v2349, %v2359
          %v2362 = vpack.c.bf16 %v2361, %v2360
          %v2363 = vld [vmem:[#allocation3 + $0x10] sm:$0xff]
          %v2364 = vld [vmem:[%s8 + $0x2] sm:$0x1]
          %v2366 = vlaneseq
          %v2367 = vshrl.u32 %v2366, 7
          %v2368 = vsub.s32 0, %v2367
          %v2369 = vrot.slane %v2364, %v2368
          %v2372 = vsel %vm2111, %v2362, 0
          %2374 = vmatprep.subr.bf16.mxu0 0
          %2375 = vmatpush1.bf16.msra.mxu0 %v2363
          %2376 = vmatprep.subr.bf16.mxu0 0
          %2377 = vmatpush1.bf16.msra.mxu0 0
          %2378 = vmatprep.subr.bf16.mxu0 0
          %2379 = vmatpush1.bf16.msra.mxu0 0
          %2380 = vmatprep.subr.bf16.mxu0 0
          %2381 = vmatpush1.bf16.msra.mxu0 0
          %2382 = vmatprep.subr.bf16.mxu0 0
          %2383 = vmatpush1.bf16.msra.mxu0 0
          %2384 = vmatprep.subr.bf16.mxu0 0
          %2385 = vmatpush1.bf16.msra.mxu0 0
          %2386 = vmatprep.subr.bf16.mxu0 0
          %2387 = vmatpush1.bf16.msra.mxu0 0
          %2388 = vmatprep.subr.bf16.mxu0 0
          %2389 = vmatpush1.bf16.msra.mxu0 0
          %2390 = vmatprep.subr.bf16.mxu0 0
          %2391 = vmatpush1.bf16.msra.mxu0 0
          %2392 = vmatprep.subr.bf16.mxu0 0
          %2393 = vmatpush1.bf16.msra.mxu0 0
          %2394 = vmatprep.subr.bf16.mxu0 0
          %2395 = vmatpush1.bf16.msra.mxu0 0
          %2396 = vmatprep.subr.bf16.mxu0 0
          %2397 = vmatpush1.bf16.msra.mxu0 0
          %2398 = vmatprep.subr.bf16.mxu0 0
          %2399 = vmatpush1.bf16.msra.mxu0 0
          %2400 = vmatprep.subr.bf16.mxu0 0
          %2401 = vmatpush1.bf16.msra.mxu0 0
          %2402 = vmatprep.subr.bf16.mxu0 0
          %2403 = vmatpush1.bf16.msra.mxu0 0
          %2404 = vmatprep.subr.bf16.mxu0 0
          %2405 = vmatpush1.bf16.msra.mxu0 0
          %2406 = vmatprep.mubr.bf16.mxu0 0
          %2407 = vmatmul.mubr.bf16.gmra.mrb[0].mxu0 %v2372
          %v2408 = vpop.f32.mrb[0].mxu0
          %v2409 = vadd.f32 %v2369, %v2408
          %v2410 = vpop.f32.mrb[0].mxu0
          %v2411 = vpop.f32.mrb[0].mxu0
          %v2412 = vadd.f32 %v2369, %v2411
          %v2413 = vpop.f32.mrb[0].mxu0
          %2414 = vdwg.mxu0
          %vm2415 = vcmp.gt.f32.partialorder %v2409, 0.0
          %vm2416 = vcmp.gt.f32.partialorder %v2412, 0.0
          %v2417 = vmin.f32 %v2409, 0.0
          %v2418 = vmin.f32 %v2412, 0.0
          %v2419 = vmul.f32 %v2417, 1.442695
          %v2420 = vpow.pop %v2419
          %v2421 = vmul.f32 %v2418, 1.442695
          %v2422 = vpow.pop %v2421
          %v2423 = vsub.f32 %v2420, 1.0
          %v2424 = vsub.f32 %v2422, 1.0
          %v2425 = vsel %vm2415, %v2409, %v2423
          %v2426 = vsel %vm2416, %v2412, %v2424
          %v2427 = vpack.c.bf16 %v2426, %v2425
          %2428 = vst [vmem:[#allocation4 + $0x10] sm:$0xff] %v2427
          %2429 = vset.pattern.permute.xlu0 11
          %2430 = vperm.xlu0 %2429, %v2049
          %v2431 = vpop.permute.xlu0 %2430
          %2433 = vset.pattern.permute.xlu0 11
          %2434 = vperm.xlu0 %2433, %v2052
          %v2435 = vpop.permute.xlu0 %2434
          %v2437 = vlaneseq
          %v2438 = vshrl.u32 %v2437, 7
          %v2439 = vsub.s32 3, %v2438
          %v2440 = vrot.slane %v2071, %v2439
          %v2441 = vadd.f32 %v2431, %v2440
          %v2442 = vadd.f32 %v2435, %v2440
          %vm2443 = vcmp.gt.f32.partialorder %v2441, 0.0
          %vm2444 = vcmp.gt.f32.partialorder %v2442, 0.0
          %v2445 = vmul.f32 %v2441, 0.2
          %v2446 = vmul.f32 %v2442, 0.2
          %v2447 = vsel %vm2443, %v2441, %v2445
          %v2448 = vsel %vm2444, %v2442, %v2446
          %v2449 = vadd.f32 %v2447, %v797
          %v2450 = vadd.f32 %v2448, %v798
          %v2451 = vsel %vm2111, %v2449, -inf
          %2452 = vmax.xlane.f32.xlu0 %v2451
          %v2453 = vpop.xlane.xlu0 %2452
          %v2454 = vsel %vm2111, %v2450, -inf
          %2455 = vmax.xlane.f32.xlu0 %v2454
          %v2456 = vpop.xlane.xlu0 %2455
          %v2457 = vsub.f32 %v2449, %v2453
          %v2458 = vsub.f32 %v2450, %v2456
          %v2459 = vmul.f32 %v2457, 1.442695
          %v2460 = vpow.pop %v2459
          %v2461 = vmul.f32 %v2458, 1.442695
          %v2462 = vpow.pop %v2461
          %v2463 = vsel %vm2111, %v2460, 0.0
          %2464 = vadd.xlane.f32.xlu0 %v2463
          %v2465 = vpop.xlane.xlu0 %2464
          %v2466 = vsel %vm2111, %v2462, 0.0
          %2467 = vadd.xlane.f32.xlu0 %v2466
          %v2468 = vpop.xlane.xlu0 %2467
          %v2469 = vmax.f32 %v2465, 1e-20
          %v2470 = vmax.f32 %v2468, 1e-20
          %v2471 = vrcp.pop %v2469
          %v2472 = vrcp.pop %v2470
          %v2473 = vmul.f32 %v2460, %v2471
          %v2474 = vmul.f32 %v2462, %v2472
          %v2475 = vpack.c.bf16 %v2474, %v2473
          %v2476 = vld [vmem:[#allocation3 + $0x18] sm:$0xff]
          %v2477 = vld [vmem:[%s8 + $0x3] sm:$0x1]
          %v2479 = vlaneseq
          %v2480 = vshrl.u32 %v2479, 7
          %v2481 = vsub.s32 0, %v2480
          %v2482 = vrot.slane %v2477, %v2481
          %v2485 = vsel %vm2111, %v2475, 0
          %2487 = vmatprep.subr.bf16.mxu0 0
          %2488 = vmatpush1.bf16.msra.mxu0 %v2476
          %2489 = vmatprep.subr.bf16.mxu0 0
          %2490 = vmatpush1.bf16.msra.mxu0 0
          %2491 = vmatprep.subr.bf16.mxu0 0
          %2492 = vmatpush1.bf16.msra.mxu0 0
          %2493 = vmatprep.subr.bf16.mxu0 0
          %2494 = vmatpush1.bf16.msra.mxu0 0
          %2495 = vmatprep.subr.bf16.mxu0 0
          %2496 = vmatpush1.bf16.msra.mxu0 0
          %2497 = vmatprep.subr.bf16.mxu0 0
          %2498 = vmatpush1.bf16.msra.mxu0 0
          %2499 = vmatprep.subr.bf16.mxu0 0
          %2500 = vmatpush1.bf16.msra.mxu0 0
          %2501 = vmatprep.subr.bf16.mxu0 0
          %2502 = vmatpush1.bf16.msra.mxu0 0
          %2503 = vmatprep.subr.bf16.mxu0 0
          %2504 = vmatpush1.bf16.msra.mxu0 0
          %2505 = vmatprep.subr.bf16.mxu0 0
          %2506 = vmatpush1.bf16.msra.mxu0 0
          %2507 = vmatprep.subr.bf16.mxu0 0
          %2508 = vmatpush1.bf16.msra.mxu0 0
          %2509 = vmatprep.subr.bf16.mxu0 0
          %2510 = vmatpush1.bf16.msra.mxu0 0
          %2511 = vmatprep.subr.bf16.mxu0 0
          %2512 = vmatpush1.bf16.msra.mxu0 0
          %2513 = vmatprep.subr.bf16.mxu0 0
          %2514 = vmatpush1.bf16.msra.mxu0 0
          %2515 = vmatprep.subr.bf16.mxu0 0
          %2516 = vmatpush1.bf16.msra.mxu0 0
          %2517 = vmatprep.subr.bf16.mxu0 0
          %2518 = vmatpush1.bf16.msra.mxu0 0
          %2519 = vmatprep.mubr.bf16.mxu0 0
          %2520 = vmatmul.mubr.bf16.gmra.mrb[0].mxu0 %v2485
          %v2521 = vpop.f32.mrb[0].mxu0
          %v2522 = vadd.f32 %v2482, %v2521
          %v2523 = vpop.f32.mrb[0].mxu0
          %v2524 = vpop.f32.mrb[0].mxu0
          %v2525 = vadd.f32 %v2482, %v2524
          %v2526 = vpop.f32.mrb[0].mxu0
          %2527 = vdwg.mxu0
          %vm2528 = vcmp.gt.f32.partialorder %v2522, 0.0
          %vm2529 = vcmp.gt.f32.partialorder %v2525, 0.0
          %v2530 = vmin.f32 %v2522, 0.0
          %v2531 = vmin.f32 %v2525, 0.0
          %v2532 = vmul.f32 %v2530, 1.442695
          %v2533 = vpow.pop %v2532
          %v2534 = vmul.f32 %v2531, 1.442695
          %v2535 = vpow.pop %v2534
          %v2536 = vsub.f32 %v2533, 1.0
          %v2537 = vsub.f32 %v2535, 1.0
          %v2538 = vsel %vm2528, %v2522, %v2536
          %v2539 = vsel %vm2529, %v2525, %v2537
          %v2540 = vpack.c.bf16 %v2539, %v2538
          %2541 = vst [vmem:[#allocation4 + $0x18] sm:$0xff] %v2540
          %2542 = vset.pattern.permute.xlu0 12
          %2543 = vperm.xlu0 %2542, %v2049
          %v2544 = vpop.permute.xlu0 %2543
          %2546 = vset.pattern.permute.xlu0 12
          %2547 = vperm.xlu0 %2546, %v2052
          %v2548 = vpop.permute.xlu0 %2547
          %v2550 = vlaneseq
          %v2551 = vshrl.u32 %v2550, 7
          %v2552 = vsub.s32 4, %v2551
          %v2553 = vrot.slane %v2071, %v2552
          %v2554 = vadd.f32 %v2544, %v2553
          %v2555 = vadd.f32 %v2548, %v2553
          %vm2556 = vcmp.gt.f32.partialorder %v2554, 0.0
          %vm2557 = vcmp.gt.f32.partialorder %v2555, 0.0
          %v2558 = vmul.f32 %v2554, 0.2
          %v2559 = vmul.f32 %v2555, 0.2
          %v2560 = vsel %vm2556, %v2554, %v2558
          %v2561 = vsel %vm2557, %v2555, %v2559
          %v2562 = vadd.f32 %v2560, %v797
          %v2563 = vadd.f32 %v2561, %v798
          %v2564 = vsel %vm2111, %v2562, -inf
          %2565 = vmax.xlane.f32.xlu0 %v2564
          %v2566 = vpop.xlane.xlu0 %2565
          %v2567 = vsel %vm2111, %v2563, -inf
          %2568 = vmax.xlane.f32.xlu0 %v2567
          %v2569 = vpop.xlane.xlu0 %2568
          %v2570 = vsub.f32 %v2562, %v2566
          %v2571 = vsub.f32 %v2563, %v2569
          %v2572 = vmul.f32 %v2570, 1.442695
          %v2573 = vpow.pop %v2572
          %v2574 = vmul.f32 %v2571, 1.442695
          %v2575 = vpow.pop %v2574
          %v2576 = vsel %vm2111, %v2573, 0.0
          %2577 = vadd.xlane.f32.xlu0 %v2576
          %v2578 = vpop.xlane.xlu0 %2577
          %v2579 = vsel %vm2111, %v2575, 0.0
          %2580 = vadd.xlane.f32.xlu0 %v2579
          %v2581 = vpop.xlane.xlu0 %2580
          %v2582 = vmax.f32 %v2578, 1e-20
          %v2583 = vmax.f32 %v2581, 1e-20
          %v2584 = vrcp.pop %v2582
          %v2585 = vrcp.pop %v2583
          %v2586 = vmul.f32 %v2573, %v2584
          %v2587 = vmul.f32 %v2575, %v2585
          %v2588 = vpack.c.bf16 %v2587, %v2586
          %v2589 = vld [vmem:[#allocation3 + $0x20] sm:$0xff]
          %v2590 = vld [vmem:[%s8 + $0x4] sm:$0x1]
          %v2592 = vlaneseq
          %v2593 = vshrl.u32 %v2592, 7
          %v2594 = vsub.s32 0, %v2593
          %v2595 = vrot.slane %v2590, %v2594
          %v2598 = vsel %vm2111, %v2588, 0
          %2600 = vmatprep.subr.bf16.mxu0 0
          %2601 = vmatpush1.bf16.msra.mxu0 %v2589
          %2602 = vmatprep.subr.bf16.mxu0 0
          %2603 = vmatpush1.bf16.msra.mxu0 0
          %2604 = vmatprep.subr.bf16.mxu0 0
          %2605 = vmatpush1.bf16.msra.mxu0 0
          %2606 = vmatprep.subr.bf16.mxu0 0
          %2607 = vmatpush1.bf16.msra.mxu0 0
          %2608 = vmatprep.subr.bf16.mxu0 0
          %2609 = vmatpush1.bf16.msra.mxu0 0
          %2610 = vmatprep.subr.bf16.mxu0 0
          %2611 = vmatpush1.bf16.msra.mxu0 0
          %2612 = vmatprep.subr.bf16.mxu0 0
          %2613 = vmatpush1.bf16.msra.mxu0 0
          %2614 = vmatprep.subr.bf16.mxu0 0
          %2615 = vmatpush1.bf16.msra.mxu0 0
          %2616 = vmatprep.subr.bf16.mxu0 0
          %2617 = vmatpush1.bf16.msra.mxu0 0
          %2618 = vmatprep.subr.bf16.mxu0 0
          %2619 = vmatpush1.bf16.msra.mxu0 0
          %2620 = vmatprep.subr.bf16.mxu0 0
          %2621 = vmatpush1.bf16.msra.mxu0 0
          %2622 = vmatprep.subr.bf16.mxu0 0
          %2623 = vmatpush1.bf16.msra.mxu0 0
          %2624 = vmatprep.subr.bf16.mxu0 0
          %2625 = vmatpush1.bf16.msra.mxu0 0
          %2626 = vmatprep.subr.bf16.mxu0 0
          %2627 = vmatpush1.bf16.msra.mxu0 0
          %2628 = vmatprep.subr.bf16.mxu0 0
          %2629 = vmatpush1.bf16.msra.mxu0 0
          %2630 = vmatprep.subr.bf16.mxu0 0
          %2631 = vmatpush1.bf16.msra.mxu0 0
          %2632 = vmatprep.mubr.bf16.mxu0 0
          %2633 = vmatmul.mubr.bf16.gmra.mrb[0].mxu0 %v2598
          %v2634 = vpop.f32.mrb[0].mxu0
          %v2635 = vadd.f32 %v2595, %v2634
          %v2636 = vpop.f32.mrb[0].mxu0
          %v2637 = vpop.f32.mrb[0].mxu0
          %v2638 = vadd.f32 %v2595, %v2637
          %v2639 = vpop.f32.mrb[0].mxu0
          %2640 = vdwg.mxu0
          %vm2641 = vcmp.gt.f32.partialorder %v2635, 0.0
          %vm2642 = vcmp.gt.f32.partialorder %v2638, 0.0
          %v2643 = vmin.f32 %v2635, 0.0
          %v2644 = vmin.f32 %v2638, 0.0
          %v2645 = vmul.f32 %v2643, 1.442695
          %v2646 = vpow.pop %v2645
          %v2647 = vmul.f32 %v2644, 1.442695
          %v2648 = vpow.pop %v2647
          %v2649 = vsub.f32 %v2646, 1.0
          %v2650 = vsub.f32 %v2648, 1.0
          %v2651 = vsel %vm2641, %v2635, %v2649
          %v2652 = vsel %vm2642, %v2638, %v2650
          %v2653 = vpack.c.bf16 %v2652, %v2651
          %2654 = vst [vmem:[#allocation4 + $0x20] sm:$0xff] %v2653
          %2655 = vset.pattern.permute.xlu0 13
          %2656 = vperm.xlu0 %2655, %v2049
          %v2657 = vpop.permute.xlu0 %2656
          %2659 = vset.pattern.permute.xlu0 13
          %2660 = vperm.xlu0 %2659, %v2052
          %v2661 = vpop.permute.xlu0 %2660
          %v2663 = vlaneseq
          %v2664 = vshrl.u32 %v2663, 7
          %v2665 = vsub.s32 5, %v2664
          %v2666 = vrot.slane %v2071, %v2665
          %v2667 = vadd.f32 %v2657, %v2666
          %v2668 = vadd.f32 %v2661, %v2666
          %vm2669 = vcmp.gt.f32.partialorder %v2667, 0.0
          %vm2670 = vcmp.gt.f32.partialorder %v2668, 0.0
          %v2671 = vmul.f32 %v2667, 0.2
          %v2672 = vmul.f32 %v2668, 0.2
          %v2673 = vsel %vm2669, %v2667, %v2671
          %v2674 = vsel %vm2670, %v2668, %v2672
          %v2675 = vadd.f32 %v2673, %v797
          %v2676 = vadd.f32 %v2674, %v798
          %v2677 = vsel %vm2111, %v2675, -inf
          %2678 = vmax.xlane.f32.xlu0 %v2677
          %v2679 = vpop.xlane.xlu0 %2678
          %v2680 = vsel %vm2111, %v2676, -inf
          %2681 = vmax.xlane.f32.xlu0 %v2680
          %v2682 = vpop.xlane.xlu0 %2681
          %v2683 = vsub.f32 %v2675, %v2679
          %v2684 = vsub.f32 %v2676, %v2682
          %v2685 = vmul.f32 %v2683, 1.442695
          %v2686 = vpow.pop %v2685
          %v2687 = vmul.f32 %v2684, 1.442695
          %v2688 = vpow.pop %v2687
          %v2689 = vsel %vm2111, %v2686, 0.0
          %2690 = vadd.xlane.f32.xlu0 %v2689
          %v2691 = vpop.xlane.xlu0 %2690
          %v2692 = vsel %vm2111, %v2688, 0.0
          %2693 = vadd.xlane.f32.xlu0 %v2692
          %v2694 = vpop.xlane.xlu0 %2693
          %v2695 = vmax.f32 %v2691, 1e-20
          %v2696 = vmax.f32 %v2694, 1e-20
          %v2697 = vrcp.pop %v2695
          %v2698 = vrcp.pop %v2696
          %v2699 = vmul.f32 %v2686, %v2697
          %v2700 = vmul.f32 %v2688, %v2698
          %v2701 = vpack.c.bf16 %v2700, %v2699
          %v2702 = vld [vmem:[#allocation3 + $0x28] sm:$0xff]
          %v2703 = vld [vmem:[%s8 + $0x5] sm:$0x1]
          %v2705 = vlaneseq
          %v2706 = vshrl.u32 %v2705, 7
          %v2707 = vsub.s32 0, %v2706
          %v2708 = vrot.slane %v2703, %v2707
          %v2711 = vsel %vm2111, %v2701, 0
          %2713 = vmatprep.subr.bf16.mxu0 0
          %2714 = vmatpush1.bf16.msra.mxu0 %v2702
          %2715 = vmatprep.subr.bf16.mxu0 0
          %2716 = vmatpush1.bf16.msra.mxu0 0
          %2717 = vmatprep.subr.bf16.mxu0 0
          %2718 = vmatpush1.bf16.msra.mxu0 0
          %2719 = vmatprep.subr.bf16.mxu0 0
          %2720 = vmatpush1.bf16.msra.mxu0 0
          %2721 = vmatprep.subr.bf16.mxu0 0
          %2722 = vmatpush1.bf16.msra.mxu0 0
          %2723 = vmatprep.subr.bf16.mxu0 0
          %2724 = vmatpush1.bf16.msra.mxu0 0
          %2725 = vmatprep.subr.bf16.mxu0 0
          %2726 = vmatpush1.bf16.msra.mxu0 0
          %2727 = vmatprep.subr.bf16.mxu0 0
          %2728 = vmatpush1.bf16.msra.mxu0 0
          %2729 = vmatprep.subr.bf16.mxu0 0
          %2730 = vmatpush1.bf16.msra.mxu0 0
          %2731 = vmatprep.subr.bf16.mxu0 0
          %2732 = vmatpush1.bf16.msra.mxu0 0
          %2733 = vmatprep.subr.bf16.mxu0 0
          %2734 = vmatpush1.bf16.msra.mxu0 0
          %2735 = vmatprep.subr.bf16.mxu0 0
          %2736 = vmatpush1.bf16.msra.mxu0 0
          %2737 = vmatprep.subr.bf16.mxu0 0
          %2738 = vmatpush1.bf16.msra.mxu0 0
          %2739 = vmatprep.subr.bf16.mxu0 0
          %2740 = vmatpush1.bf16.msra.mxu0 0
          %2741 = vmatprep.subr.bf16.mxu0 0
          %2742 = vmatpush1.bf16.msra.mxu0 0
          %2743 = vmatprep.subr.bf16.mxu0 0
          %2744 = vmatpush1.bf16.msra.mxu0 0
          %2745 = vmatprep.mubr.bf16.mxu0 0
          %2746 = vmatmul.mubr.bf16.gmra.mrb[0].mxu0 %v2711
          %v2747 = vpop.f32.mrb[0].mxu0
          %v2748 = vadd.f32 %v2708, %v2747
          %v2749 = vpop.f32.mrb[0].mxu0
          %v2750 = vpop.f32.mrb[0].mxu0
          %v2751 = vadd.f32 %v2708, %v2750
          %v2752 = vpop.f32.mrb[0].mxu0
          %2753 = vdwg.mxu0
          %vm2754 = vcmp.gt.f32.partialorder %v2748, 0.0
          %vm2755 = vcmp.gt.f32.partialorder %v2751, 0.0
          %v2756 = vmin.f32 %v2748, 0.0
          %v2757 = vmin.f32 %v2751, 0.0
          %v2758 = vmul.f32 %v2756, 1.442695
          %v2759 = vpow.pop %v2758
          %v2760 = vmul.f32 %v2757, 1.442695
          %v2761 = vpow.pop %v2760
          %v2762 = vsub.f32 %v2759, 1.0
          %v2763 = vsub.f32 %v2761, 1.0
          %v2764 = vsel %vm2754, %v2748, %v2762
          %v2765 = vsel %vm2755, %v2751, %v2763
          %v2766 = vpack.c.bf16 %v2765, %v2764
          %2767 = vst [vmem:[#allocation4 + $0x28] sm:$0xff] %v2766
          %2768 = vset.pattern.permute.xlu0 14
          %2769 = vperm.xlu0 %2768, %v2049
          %v2770 = vpop.permute.xlu0 %2769
          %2772 = vset.pattern.permute.xlu0 14
          %2773 = vperm.xlu0 %2772, %v2052
          %v2774 = vpop.permute.xlu0 %2773
          %v2776 = vlaneseq
          %v2777 = vshrl.u32 %v2776, 7
          %v2778 = vsub.s32 6, %v2777
          %v2779 = vrot.slane %v2071, %v2778
          %v2780 = vadd.f32 %v2770, %v2779
          %v2781 = vadd.f32 %v2774, %v2779
          %vm2782 = vcmp.gt.f32.partialorder %v2780, 0.0
          %vm2783 = vcmp.gt.f32.partialorder %v2781, 0.0
          %v2784 = vmul.f32 %v2780, 0.2
          %v2785 = vmul.f32 %v2781, 0.2
          %v2786 = vsel %vm2782, %v2780, %v2784
          %v2787 = vsel %vm2783, %v2781, %v2785
          %v2788 = vadd.f32 %v2786, %v797
          %v2789 = vadd.f32 %v2787, %v798
          %v2790 = vsel %vm2111, %v2788, -inf
          %2791 = vmax.xlane.f32.xlu0 %v2790
          %v2792 = vpop.xlane.xlu0 %2791
          %v2793 = vsel %vm2111, %v2789, -inf
          %2794 = vmax.xlane.f32.xlu0 %v2793
          %v2795 = vpop.xlane.xlu0 %2794
          %v2796 = vsub.f32 %v2788, %v2792
          %v2797 = vsub.f32 %v2789, %v2795
          %v2798 = vmul.f32 %v2796, 1.442695
          %v2799 = vpow.pop %v2798
          %v2800 = vmul.f32 %v2797, 1.442695
          %v2801 = vpow.pop %v2800
          %v2802 = vsel %vm2111, %v2799, 0.0
          %2803 = vadd.xlane.f32.xlu0 %v2802
          %v2804 = vpop.xlane.xlu0 %2803
          %v2805 = vsel %vm2111, %v2801, 0.0
          %2806 = vadd.xlane.f32.xlu0 %v2805
          %v2807 = vpop.xlane.xlu0 %2806
          %v2808 = vmax.f32 %v2804, 1e-20
          %v2809 = vmax.f32 %v2807, 1e-20
          %v2810 = vrcp.pop %v2808
          %v2811 = vrcp.pop %v2809
          %v2812 = vmul.f32 %v2799, %v2810
          %v2813 = vmul.f32 %v2801, %v2811
          %v2814 = vpack.c.bf16 %v2813, %v2812
          %v2815 = vld [vmem:[#allocation3 + $0x30] sm:$0xff]
          %v2816 = vld [vmem:[%s8 + $0x6] sm:$0x1]
          %v2818 = vlaneseq
          %v2819 = vshrl.u32 %v2818, 7
          %v2820 = vsub.s32 0, %v2819
          %v2821 = vrot.slane %v2816, %v2820
          %v2824 = vsel %vm2111, %v2814, 0
          %2826 = vmatprep.subr.bf16.mxu0 0
          %2827 = vmatpush1.bf16.msra.mxu0 %v2815
          %2828 = vmatprep.subr.bf16.mxu0 0
          %2829 = vmatpush1.bf16.msra.mxu0 0
          %2830 = vmatprep.subr.bf16.mxu0 0
          %2831 = vmatpush1.bf16.msra.mxu0 0
          %2832 = vmatprep.subr.bf16.mxu0 0
          %2833 = vmatpush1.bf16.msra.mxu0 0
          %2834 = vmatprep.subr.bf16.mxu0 0
          %2835 = vmatpush1.bf16.msra.mxu0 0
          %2836 = vmatprep.subr.bf16.mxu0 0
          %2837 = vmatpush1.bf16.msra.mxu0 0
          %2838 = vmatprep.subr.bf16.mxu0 0
          %2839 = vmatpush1.bf16.msra.mxu0 0
          %2840 = vmatprep.subr.bf16.mxu0 0
          %2841 = vmatpush1.bf16.msra.mxu0 0
          %2842 = vmatprep.subr.bf16.mxu0 0
          %2843 = vmatpush1.bf16.msra.mxu0 0
          %2844 = vmatprep.subr.bf16.mxu0 0
          %2845 = vmatpush1.bf16.msra.mxu0 0
          %2846 = vmatprep.subr.bf16.mxu0 0
          %2847 = vmatpush1.bf16.msra.mxu0 0
          %2848 = vmatprep.subr.bf16.mxu0 0
          %2849 = vmatpush1.bf16.msra.mxu0 0
          %2850 = vmatprep.subr.bf16.mxu0 0
          %2851 = vmatpush1.bf16.msra.mxu0 0
          %2852 = vmatprep.subr.bf16.mxu0 0
          %2853 = vmatpush1.bf16.msra.mxu0 0
          %2854 = vmatprep.subr.bf16.mxu0 0
          %2855 = vmatpush1.bf16.msra.mxu0 0
          %2856 = vmatprep.subr.bf16.mxu0 0
          %2857 = vmatpush1.bf16.msra.mxu0 0
          %2858 = vmatprep.mubr.bf16.mxu0 0
          %2859 = vmatmul.mubr.bf16.gmra.mrb[0].mxu0 %v2824
          %v2860 = vpop.f32.mrb[0].mxu0
          %v2861 = vadd.f32 %v2821, %v2860
          %v2862 = vpop.f32.mrb[0].mxu0
          %v2863 = vpop.f32.mrb[0].mxu0
          %v2864 = vadd.f32 %v2821, %v2863
          %v2865 = vpop.f32.mrb[0].mxu0
          %2866 = vdwg.mxu0
          %vm2867 = vcmp.gt.f32.partialorder %v2861, 0.0
          %vm2868 = vcmp.gt.f32.partialorder %v2864, 0.0
          %v2869 = vmin.f32 %v2861, 0.0
          %v2870 = vmin.f32 %v2864, 0.0
          %v2871 = vmul.f32 %v2869, 1.442695
          %v2872 = vpow.pop %v2871
          %v2873 = vmul.f32 %v2870, 1.442695
          %v2874 = vpow.pop %v2873
          %v2875 = vsub.f32 %v2872, 1.0
          %v2876 = vsub.f32 %v2874, 1.0
          %v2877 = vsel %vm2867, %v2861, %v2875
          %v2878 = vsel %vm2868, %v2864, %v2876
          %v2879 = vpack.c.bf16 %v2878, %v2877
          %2880 = vst [vmem:[#allocation4 + $0x30] sm:$0xff] %v2879
          %2881 = vset.pattern.permute.xlu0 15
          %2882 = vperm.xlu0 %2881, %v2049
          %v2883 = vpop.permute.xlu0 %2882
          %2885 = vset.pattern.permute.xlu0 15
          %2886 = vperm.xlu0 %2885, %v2052
          %v2887 = vpop.permute.xlu0 %2886
          %v2889 = vlaneseq
          %v2890 = vshrl.u32 %v2889, 7
          %v2891 = vsub.s32 7, %v2890
          %v2892 = vrot.slane %v2071, %v2891
          %v2893 = vadd.f32 %v2883, %v2892
          %v2894 = vadd.f32 %v2887, %v2892
          %vm2895 = vcmp.gt.f32.partialorder %v2893, 0.0
          %vm2896 = vcmp.gt.f32.partialorder %v2894, 0.0
          %v2897 = vmul.f32 %v2893, 0.2
          %v2898 = vmul.f32 %v2894, 0.2
          %v2899 = vsel %vm2895, %v2893, %v2897
          %v2900 = vsel %vm2896, %v2894, %v2898
          %v2901 = vadd.f32 %v2899, %v797
          %v2902 = vadd.f32 %v2900, %v798
          %v2903 = vsel %vm2111, %v2901, -inf
          %2904 = vmax.xlane.f32.xlu0 %v2903
          %v2905 = vpop.xlane.xlu0 %2904
          %v2906 = vsel %vm2111, %v2902, -inf
          %2907 = vmax.xlane.f32.xlu0 %v2906
          %v2908 = vpop.xlane.xlu0 %2907
          %v2909 = vsub.f32 %v2901, %v2905
          %v2910 = vsub.f32 %v2902, %v2908
          %v2911 = vmul.f32 %v2909, 1.442695
          %v2912 = vpow.pop %v2911
          %v2913 = vmul.f32 %v2910, 1.442695
          %v2914 = vpow.pop %v2913
          %v2915 = vsel %vm2111, %v2912, 0.0
          %2916 = vadd.xlane.f32.xlu0 %v2915
          %v2917 = vpop.xlane.xlu0 %2916
          %v2918 = vsel %vm2111, %v2914, 0.0
          %2919 = vadd.xlane.f32.xlu0 %v2918
          %v2920 = vpop.xlane.xlu0 %2919
          %v2921 = vmax.f32 %v2917, 1e-20
          %v2922 = vmax.f32 %v2920, 1e-20
          %v2923 = vrcp.pop %v2921
          %v2924 = vrcp.pop %v2922
          %v2925 = vmul.f32 %v2912, %v2923
          %v2926 = vmul.f32 %v2914, %v2924
          %v2927 = vpack.c.bf16 %v2926, %v2925
          %v2928 = vld [vmem:[#allocation3 + $0x38] sm:$0xff]
          %v2929 = vld [vmem:[%s8 + $0x7] sm:$0x1]
          %v2931 = vlaneseq
          %v2932 = vshrl.u32 %v2931, 7
          %v2933 = vsub.s32 0, %v2932
          %v2934 = vrot.slane %v2929, %v2933
          %v2937 = vsel %vm2111, %v2927, 0
          %2939 = vmatprep.subr.bf16.mxu0 0
          %2940 = vmatpush1.bf16.msra.mxu0 %v2928
          %2941 = vmatprep.subr.bf16.mxu0 0
          %2942 = vmatpush1.bf16.msra.mxu0 0
          %2943 = vmatprep.subr.bf16.mxu0 0
          %2944 = vmatpush1.bf16.msra.mxu0 0
          %2945 = vmatprep.subr.bf16.mxu0 0
          %2946 = vmatpush1.bf16.msra.mxu0 0
          %2947 = vmatprep.subr.bf16.mxu0 0
          %2948 = vmatpush1.bf16.msra.mxu0 0
          %2949 = vmatprep.subr.bf16.mxu0 0
          %2950 = vmatpush1.bf16.msra.mxu0 0
          %2951 = vmatprep.subr.bf16.mxu0 0
          %2952 = vmatpush1.bf16.msra.mxu0 0
          %2953 = vmatprep.subr.bf16.mxu0 0
          %2954 = vmatpush1.bf16.msra.mxu0 0
          %2955 = vmatprep.subr.bf16.mxu0 0
          %2956 = vmatpush1.bf16.msra.mxu0 0
          %2957 = vmatprep.subr.bf16.mxu0 0
          %2958 = vmatpush1.bf16.msra.mxu0 0
          %2959 = vmatprep.subr.bf16.mxu0 0
          %2960 = vmatpush1.bf16.msra.mxu0 0
          %2961 = vmatprep.subr.bf16.mxu0 0
          %2962 = vmatpush1.bf16.msra.mxu0 0
          %2963 = vmatprep.subr.bf16.mxu0 0
          %2964 = vmatpush1.bf16.msra.mxu0 0
          %2965 = vmatprep.subr.bf16.mxu0 0
          %2966 = vmatpush1.bf16.msra.mxu0 0
          %2967 = vmatprep.subr.bf16.mxu0 0
          %2968 = vmatpush1.bf16.msra.mxu0 0
          %2969 = vmatprep.subr.bf16.mxu0 0
          %2970 = vmatpush1.bf16.msra.mxu0 0
          %2971 = vmatprep.mubr.bf16.mxu0 0
          %2972 = vmatmul.mubr.bf16.gmra.mrb[0].mxu0 %v2937
          %v2973 = vpop.f32.mrb[0].mxu0
          %v2974 = vadd.f32 %v2934, %v2973
          %v2975 = vpop.f32.mrb[0].mxu0
          %v2976 = vpop.f32.mrb[0].mxu0
          %v2977 = vadd.f32 %v2934, %v2976
          %v2978 = vpop.f32.mrb[0].mxu0
          %2979 = vdwg.mxu0
          %vm2980 = vcmp.gt.f32.partialorder %v2974, 0.0
          %vm2981 = vcmp.gt.f32.partialorder %v2977, 0.0
          %v2982 = vmin.f32 %v2974, 0.0
          %v2983 = vmin.f32 %v2977, 0.0
          %v2984 = vmul.f32 %v2982, 1.442695
          %v2985 = vpow.pop %v2984
          %v2986 = vmul.f32 %v2983, 1.442695
          %v2987 = vpow.pop %v2986
          %v2988 = vsub.f32 %v2985, 1.0
          %v2989 = vsub.f32 %v2987, 1.0
          %v2990 = vsel %vm2980, %v2974, %v2988
          %v2991 = vsel %vm2981, %v2977, %v2989
          %v2992 = vpack.c.bf16 %v2991, %v2990
          %2993 = vst [vmem:[#allocation4 + $0x38] sm:$0xff] %v2992
          %v2994 = vld [vmem:[#allocation4] sm:$0xff]
          %v2995 = vld [vmem:[#allocation4 + $0x8] sm:$0xff]
          %v2996 = vld [vmem:[#allocation4 + $0x10] sm:$0xff]
          %v2997 = vld [vmem:[#allocation4 + $0x18] sm:$0xff]
          %v2998 = vld [vmem:[#allocation4 + $0x20] sm:$0xff]
          %v2999 = vld [vmem:[#allocation4 + $0x28] sm:$0xff]
          %v3000 = vld [vmem:[#allocation4 + $0x30] sm:$0xff]
          %v3001 = vld [vmem:[#allocation4 + $0x38] sm:$0xff]
          %v3002 = vld [vmem:[#allocation5] sm:$0xf]
          %v3003 = vld [vmem:[#allocation5 + $0x4] sm:$0xf]
          %v3004 = vld [vmem:[#allocation5 + $0x8] sm:$0xf]
          %v3005 = vld [vmem:[#allocation5 + $0xc] sm:$0xf]
          %v3006 = vld [vmem:[#allocation5 + $0x10] sm:$0xf]
          %v3007 = vld [vmem:[#allocation5 + $0x14] sm:$0xf]
          %v3008 = vld [vmem:[#allocation5 + $0x18] sm:$0xf]
          %v3009 = vld [vmem:[#allocation5 + $0x1c] sm:$0xf]
          %v3010 = vld [vmem:[#allocation5 + $0x20] sm:$0xf]
          %v3011 = vld [vmem:[#allocation5 + $0x24] sm:$0xf]
          %v3012 = vld [vmem:[#allocation5 + $0x28] sm:$0xf]
          %v3013 = vld [vmem:[#allocation5 + $0x2c] sm:$0xf]
          %v3014 = vld [vmem:[#allocation5 + $0x30] sm:$0xf]
          %v3015 = vld [vmem:[#allocation5 + $0x34] sm:$0xf]
          %v3016 = vld [vmem:[#allocation5 + $0x38] sm:$0xf]
          %v3017 = vld [vmem:[#allocation5 + $0x3c] sm:$0xf]
          %v3018 = vld [vmem:[#allocation5 + $0x40] sm:$0xf]
          %v3019 = vld [vmem:[#allocation5 + $0x44] sm:$0xf]
          %v3020 = vld [vmem:[#allocation5 + $0x48] sm:$0xf]
          %v3021 = vld [vmem:[#allocation5 + $0x4c] sm:$0xf]
          %v3022 = vld [vmem:[#allocation5 + $0x50] sm:$0xf]
          %v3023 = vld [vmem:[#allocation5 + $0x54] sm:$0xf]
          %v3024 = vld [vmem:[#allocation5 + $0x58] sm:$0xf]
          %v3025 = vld [vmem:[#allocation5 + $0x5c] sm:$0xf]
          %v3026 = vld [vmem:[#allocation5 + $0x60] sm:$0xf]
          %v3027 = vld [vmem:[#allocation5 + $0x64] sm:$0xf]
          %v3028 = vld [vmem:[#allocation5 + $0x68] sm:$0xf]
          %v3029 = vld [vmem:[#allocation5 + $0x6c] sm:$0xf]
          %v3030 = vld [vmem:[#allocation5 + $0x70] sm:$0xf]
          %v3031 = vld [vmem:[#allocation5 + $0x74] sm:$0xf]
          %v3032 = vld [vmem:[#allocation5 + $0x78] sm:$0xf]
          %v3033 = vld [vmem:[#allocation5 + $0x7c] sm:$0xf]
          %v3034 = vld [vmem:[#allocation5 + $0x80] sm:$0xf]
          %v3035 = vld [vmem:[#allocation5 + $0x84] sm:$0xf]
          %v3036 = vld [vmem:[#allocation5 + $0x88] sm:$0xf]
          %v3037 = vld [vmem:[#allocation5 + $0x8c] sm:$0xf]
          %v3038 = vld [vmem:[#allocation5 + $0x90] sm:$0xf]
          %v3039 = vld [vmem:[#allocation5 + $0x94] sm:$0xf]
          %v3040 = vld [vmem:[#allocation5 + $0x98] sm:$0xf]
          %v3041 = vld [vmem:[#allocation5 + $0x9c] sm:$0xf]
          %v3042 = vld [vmem:[#allocation5 + $0xa0] sm:$0xf]
          %v3043 = vld [vmem:[#allocation5 + $0xa4] sm:$0xf]
          %v3044 = vld [vmem:[#allocation5 + $0xa8] sm:$0xf]
          %v3045 = vld [vmem:[#allocation5 + $0xac] sm:$0xf]
          %v3046 = vld [vmem:[#allocation5 + $0xb0] sm:$0xf]
          %v3047 = vld [vmem:[#allocation5 + $0xb4] sm:$0xf]
          %v3048 = vld [vmem:[#allocation5 + $0xb8] sm:$0xf]
          %v3049 = vld [vmem:[#allocation5 + $0xbc] sm:$0xf]
          %v3050 = vld [vmem:[#allocation5 + $0xc0] sm:$0xf]
          %v3051 = vld [vmem:[#allocation5 + $0xc4] sm:$0xf]
          %v3052 = vld [vmem:[#allocation5 + $0xc8] sm:$0xf]
          %v3053 = vld [vmem:[#allocation5 + $0xcc] sm:$0xf]
          %v3054 = vld [vmem:[#allocation5 + $0xd0] sm:$0xf]
          %v3055 = vld [vmem:[#allocation5 + $0xd4] sm:$0xf]
          %v3056 = vld [vmem:[#allocation5 + $0xd8] sm:$0xf]
          %v3057 = vld [vmem:[#allocation5 + $0xdc] sm:$0xf]
          %v3058 = vld [vmem:[#allocation5 + $0xe0] sm:$0xf]
          %v3059 = vld [vmem:[#allocation5 + $0xe4] sm:$0xf]
          %v3060 = vld [vmem:[#allocation5 + $0xe8] sm:$0xf]
          %v3061 = vld [vmem:[#allocation5 + $0xec] sm:$0xf]
          %v3062 = vld [vmem:[#allocation5 + $0xf0] sm:$0xf]
          %v3063 = vld [vmem:[#allocation5 + $0xf4] sm:$0xf]
          %v3064 = vld [vmem:[#allocation5 + $0xf8] sm:$0xf]
          %v3065 = vld [vmem:[#allocation5 + $0xfc] sm:$0xf]
          %v3066 = vld [vmem:[#allocation5 + $0x100] sm:$0xf]
          %v3067 = vld [vmem:[#allocation5 + $0x104] sm:$0xf]
          %v3068 = vld [vmem:[#allocation5 + $0x108] sm:$0xf]
          %v3069 = vld [vmem:[#allocation5 + $0x10c] sm:$0xf]
          %v3070 = vld [vmem:[#allocation5 + $0x110] sm:$0xf]
          %v3071 = vld [vmem:[#allocation5 + $0x114] sm:$0xf]
          %v3072 = vld [vmem:[#allocation5 + $0x118] sm:$0xf]
          %v3073 = vld [vmem:[#allocation5 + $0x11c] sm:$0xf]
          %v3074 = vld [vmem:[#allocation5 + $0x120] sm:$0xf]
          %v3075 = vld [vmem:[#allocation5 + $0x124] sm:$0xf]
          %v3076 = vld [vmem:[#allocation5 + $0x128] sm:$0xf]
          %v3077 = vld [vmem:[#allocation5 + $0x12c] sm:$0xf]
          %v3078 = vld [vmem:[#allocation5 + $0x130] sm:$0xf]
          %v3079 = vld [vmem:[#allocation5 + $0x134] sm:$0xf]
          %v3080 = vld [vmem:[#allocation5 + $0x138] sm:$0xf]
          %v3081 = vld [vmem:[#allocation5 + $0x13c] sm:$0xf]
          %v3082 = vld [vmem:[#allocation5 + $0x140] sm:$0xf]
          %v3083 = vld [vmem:[#allocation5 + $0x144] sm:$0xf]
          %v3084 = vld [vmem:[#allocation5 + $0x148] sm:$0xf]
          %v3085 = vld [vmem:[#allocation5 + $0x14c] sm:$0xf]
          %v3086 = vld [vmem:[#allocation5 + $0x150] sm:$0xf]
          %v3087 = vld [vmem:[#allocation5 + $0x154] sm:$0xf]
          %v3088 = vld [vmem:[#allocation5 + $0x158] sm:$0xf]
          %v3089 = vld [vmem:[#allocation5 + $0x15c] sm:$0xf]
          %v3090 = vld [vmem:[#allocation5 + $0x160] sm:$0xf]
          %v3091 = vld [vmem:[#allocation5 + $0x164] sm:$0xf]
          %v3092 = vld [vmem:[#allocation5 + $0x168] sm:$0xf]
          %v3093 = vld [vmem:[#allocation5 + $0x16c] sm:$0xf]
          %v3094 = vld [vmem:[#allocation5 + $0x170] sm:$0xf]
          %v3095 = vld [vmem:[#allocation5 + $0x174] sm:$0xf]
          %v3096 = vld [vmem:[#allocation5 + $0x178] sm:$0xf]
          %v3097 = vld [vmem:[#allocation5 + $0x17c] sm:$0xf]
          %v3098 = vld [vmem:[#allocation5 + $0x180] sm:$0xf]
          %v3099 = vld [vmem:[#allocation5 + $0x184] sm:$0xf]
          %v3100 = vld [vmem:[#allocation5 + $0x188] sm:$0xf]
          %v3101 = vld [vmem:[#allocation5 + $0x18c] sm:$0xf]
          %v3102 = vld [vmem:[#allocation5 + $0x190] sm:$0xf]
          %v3103 = vld [vmem:[#allocation5 + $0x194] sm:$0xf]
          %v3104 = vld [vmem:[#allocation5 + $0x198] sm:$0xf]
          %v3105 = vld [vmem:[#allocation5 + $0x19c] sm:$0xf]
          %v3106 = vld [vmem:[#allocation5 + $0x1a0] sm:$0xf]
          %v3107 = vld [vmem:[#allocation5 + $0x1a4] sm:$0xf]
          %v3108 = vld [vmem:[#allocation5 + $0x1a8] sm:$0xf]
          %v3109 = vld [vmem:[#allocation5 + $0x1ac] sm:$0xf]
          %v3110 = vld [vmem:[#allocation5 + $0x1b0] sm:$0xf]
          %v3111 = vld [vmem:[#allocation5 + $0x1b4] sm:$0xf]
          %v3112 = vld [vmem:[#allocation5 + $0x1b8] sm:$0xf]
          %v3113 = vld [vmem:[#allocation5 + $0x1bc] sm:$0xf]
          %v3114 = vld [vmem:[#allocation5 + $0x1c0] sm:$0xf]
          %v3115 = vld [vmem:[#allocation5 + $0x1c4] sm:$0xf]
          %v3116 = vld [vmem:[#allocation5 + $0x1c8] sm:$0xf]
          %v3117 = vld [vmem:[#allocation5 + $0x1cc] sm:$0xf]
          %v3118 = vld [vmem:[#allocation5 + $0x1d0] sm:$0xf]
          %v3119 = vld [vmem:[#allocation5 + $0x1d4] sm:$0xf]
          %v3120 = vld [vmem:[#allocation5 + $0x1d8] sm:$0xf]
          %v3121 = vld [vmem:[#allocation5 + $0x1dc] sm:$0xf]
          %v3122 = vld [vmem:[#allocation5 + $0x1e0] sm:$0xf]
          %v3123 = vld [vmem:[#allocation5 + $0x1e4] sm:$0xf]
          %v3124 = vld [vmem:[#allocation5 + $0x1e8] sm:$0xf]
          %v3125 = vld [vmem:[#allocation5 + $0x1ec] sm:$0xf]
          %v3126 = vld [vmem:[#allocation5 + $0x1f0] sm:$0xf]
          %v3127 = vld [vmem:[#allocation5 + $0x1f4] sm:$0xf]
          %v3128 = vld [vmem:[#allocation5 + $0x1f8] sm:$0xf]
          %v3129 = vld [vmem:[#allocation5 + $0x1fc] sm:$0xf]
          %v3258 = vunpack.c.l.b16 %v3002
          %v3259 = vunpack.c.l.b16 %v3003
          %v3260 = vunpack.c.l.b16 %v3004
          %v3261 = vunpack.c.l.b16 %v3005
          %v3262 = vunpack.c.l.b16 %v3006
          %v3263 = vunpack.c.l.b16 %v3007
          %v3264 = vunpack.c.l.b16 %v3008
          %v3265 = vunpack.c.l.b16 %v3009
          %v3266 = vunpack.c.l.b16 %v3010
          %v3267 = vunpack.c.l.b16 %v3011
          %v3268 = vunpack.c.l.b16 %v3012
          %v3269 = vunpack.c.l.b16 %v3013
          %v3270 = vunpack.c.l.b16 %v3014
          %v3271 = vunpack.c.l.b16 %v3015
          %v3272 = vunpack.c.l.b16 %v3016
          %v3273 = vunpack.c.l.b16 %v3017
          %v3274 = vunpack.c.l.b16 %v3018
          %v3275 = vunpack.c.l.b16 %v3019
          %v3276 = vunpack.c.l.b16 %v3020
          %v3277 = vunpack.c.l.b16 %v3021
          %v3278 = vunpack.c.l.b16 %v3022
          %v3279 = vunpack.c.l.b16 %v3023
          %v3280 = vunpack.c.l.b16 %v3024
          %v3281 = vunpack.c.l.b16 %v3025
          %v3282 = vunpack.c.l.b16 %v3026
          %v3283 = vunpack.c.l.b16 %v3027
          %v3284 = vunpack.c.l.b16 %v3028
          %v3285 = vunpack.c.l.b16 %v3029
          %v3286 = vunpack.c.l.b16 %v3030
          %v3287 = vunpack.c.l.b16 %v3031
          %v3288 = vunpack.c.l.b16 %v3032
          %v3289 = vunpack.c.l.b16 %v3033
          %v3290 = vunpack.c.l.b16 %v3034
          %v3291 = vunpack.c.l.b16 %v3035
          %v3292 = vunpack.c.l.b16 %v3036
          %v3293 = vunpack.c.l.b16 %v3037
          %v3294 = vunpack.c.l.b16 %v3038
          %v3295 = vunpack.c.l.b16 %v3039
          %v3296 = vunpack.c.l.b16 %v3040
          %v3297 = vunpack.c.l.b16 %v3041
          %v3298 = vunpack.c.l.b16 %v3042
          %v3299 = vunpack.c.l.b16 %v3043
          %v3300 = vunpack.c.l.b16 %v3044
          %v3301 = vunpack.c.l.b16 %v3045
          %v3302 = vunpack.c.l.b16 %v3046
          %v3303 = vunpack.c.l.b16 %v3047
          %v3304 = vunpack.c.l.b16 %v3048
          %v3305 = vunpack.c.l.b16 %v3049
          %v3306 = vunpack.c.l.b16 %v3050
          %v3307 = vunpack.c.l.b16 %v3051
          %v3308 = vunpack.c.l.b16 %v3052
          %v3309 = vunpack.c.l.b16 %v3053
          %v3310 = vunpack.c.l.b16 %v3054
          %v3311 = vunpack.c.l.b16 %v3055
          %v3312 = vunpack.c.l.b16 %v3056
          %v3313 = vunpack.c.l.b16 %v3057
          %v3314 = vunpack.c.l.b16 %v3058
          %v3315 = vunpack.c.l.b16 %v3059
          %v3316 = vunpack.c.l.b16 %v3060
          %v3317 = vunpack.c.l.b16 %v3061
          %v3318 = vunpack.c.l.b16 %v3062
          %v3319 = vunpack.c.l.b16 %v3063
          %v3320 = vunpack.c.l.b16 %v3064
          %v3321 = vunpack.c.l.b16 %v3065
          %v3322 = vunpack.c.l.b16 %v3066
          %v3323 = vunpack.c.l.b16 %v3067
          %v3324 = vunpack.c.l.b16 %v3068
          %v3325 = vunpack.c.l.b16 %v3069
          %v3326 = vunpack.c.l.b16 %v3070
          %v3327 = vunpack.c.l.b16 %v3071
          %v3328 = vunpack.c.l.b16 %v3072
          %v3329 = vunpack.c.l.b16 %v3073
          %v3330 = vunpack.c.l.b16 %v3074
          %v3331 = vunpack.c.l.b16 %v3075
          %v3332 = vunpack.c.l.b16 %v3076
          %v3333 = vunpack.c.l.b16 %v3077
          %v3334 = vunpack.c.l.b16 %v3078
          %v3335 = vunpack.c.l.b16 %v3079
          %v3336 = vunpack.c.l.b16 %v3080
          %v3337 = vunpack.c.l.b16 %v3081
          %v3338 = vunpack.c.l.b16 %v3082
          %v3339 = vunpack.c.l.b16 %v3083
          %v3340 = vunpack.c.l.b16 %v3084
          %v3341 = vunpack.c.l.b16 %v3085
          %v3342 = vunpack.c.l.b16 %v3086
          %v3343 = vunpack.c.l.b16 %v3087
          %v3344 = vunpack.c.l.b16 %v3088
          %v3345 = vunpack.c.l.b16 %v3089
          %v3346 = vunpack.c.l.b16 %v3090
          %v3347 = vunpack.c.l.b16 %v3091
          %v3348 = vunpack.c.l.b16 %v3092
          %v3349 = vunpack.c.l.b16 %v3093
          %v3350 = vunpack.c.l.b16 %v3094
          %v3351 = vunpack.c.l.b16 %v3095
          %v3352 = vunpack.c.l.b16 %v3096
          %v3353 = vunpack.c.l.b16 %v3097
          %v3354 = vunpack.c.l.b16 %v3098
          %v3355 = vunpack.c.l.b16 %v3099
          %v3356 = vunpack.c.l.b16 %v3100
          %v3357 = vunpack.c.l.b16 %v3101
          %v3358 = vunpack.c.l.b16 %v3102
          %v3359 = vunpack.c.l.b16 %v3103
          %v3360 = vunpack.c.l.b16 %v3104
          %v3361 = vunpack.c.l.b16 %v3105
          %v3362 = vunpack.c.l.b16 %v3106
          %v3363 = vunpack.c.l.b16 %v3107
          %v3364 = vunpack.c.l.b16 %v3108
          %v3365 = vunpack.c.l.b16 %v3109
          %v3366 = vunpack.c.l.b16 %v3110
          %v3367 = vunpack.c.l.b16 %v3111
          %v3368 = vunpack.c.l.b16 %v3112
          %v3369 = vunpack.c.l.b16 %v3113
          %v3370 = vunpack.c.l.b16 %v3114
          %v3371 = vunpack.c.l.b16 %v3115
          %v3372 = vunpack.c.l.b16 %v3116
          %v3373 = vunpack.c.l.b16 %v3117
          %v3374 = vunpack.c.l.b16 %v3118
          %v3375 = vunpack.c.l.b16 %v3119
          %v3376 = vunpack.c.l.b16 %v3120
          %v3377 = vunpack.c.l.b16 %v3121
          %v3378 = vunpack.c.l.b16 %v3122
          %v3379 = vunpack.c.l.b16 %v3123
          %v3380 = vunpack.c.l.b16 %v3124
          %v3381 = vunpack.c.l.b16 %v3125
          %v3382 = vunpack.c.l.b16 %v3126
          %v3383 = vunpack.c.l.b16 %v3127
          %v3384 = vunpack.c.l.b16 %v3128
          %v3385 = vunpack.c.l.b16 %v3129
          %v3386 = vpack.c.b16 %v3259, %v3258
          %v3387 = vpack.c.b16 %v3261, %v3260
          %v3388 = vpack.c.b16 %v3263, %v3262
          %v3389 = vpack.c.b16 %v3265, %v3264
          %v3390 = vpack.c.b16 %v3267, %v3266
          %v3391 = vpack.c.b16 %v3269, %v3268
          %v3392 = vpack.c.b16 %v3271, %v3270
          %v3393 = vpack.c.b16 %v3273, %v3272
          %v3394 = vpack.c.b16 %v3275, %v3274
          %v3395 = vpack.c.b16 %v3277, %v3276
          %v3396 = vpack.c.b16 %v3279, %v3278
          %v3397 = vpack.c.b16 %v3281, %v3280
          %v3398 = vpack.c.b16 %v3283, %v3282
          %v3399 = vpack.c.b16 %v3285, %v3284
          %v3400 = vpack.c.b16 %v3287, %v3286
          %v3401 = vpack.c.b16 %v3289, %v3288
          %v3402 = vpack.c.b16 %v3291, %v3290
          %v3403 = vpack.c.b16 %v3293, %v3292
          %v3404 = vpack.c.b16 %v3295, %v3294
          %v3405 = vpack.c.b16 %v3297, %v3296
          %v3406 = vpack.c.b16 %v3299, %v3298
          %v3407 = vpack.c.b16 %v3301, %v3300
          %v3408 = vpack.c.b16 %v3303, %v3302
          %v3409 = vpack.c.b16 %v3305, %v3304
          %v3410 = vpack.c.b16 %v3307, %v3306
          %v3411 = vpack.c.b16 %v3309, %v3308
          %v3412 = vpack.c.b16 %v3311, %v3310
          %v3413 = vpack.c.b16 %v3313, %v3312
          %v3414 = vpack.c.b16 %v3315, %v3314
          %v3415 = vpack.c.b16 %v3317, %v3316
          %v3416 = vpack.c.b16 %v3319, %v3318
          %v3417 = vpack.c.b16 %v3321, %v3320
          %v3418 = vpack.c.b16 %v3323, %v3322
          %v3419 = vpack.c.b16 %v3325, %v3324
          %v3420 = vpack.c.b16 %v3327, %v3326
          %v3421 = vpack.c.b16 %v3329, %v3328
          %v3422 = vpack.c.b16 %v3331, %v3330
          %v3423 = vpack.c.b16 %v3333, %v3332
          %v3424 = vpack.c.b16 %v3335, %v3334
          %v3425 = vpack.c.b16 %v3337, %v3336
          %v3426 = vpack.c.b16 %v3339, %v3338
          %v3427 = vpack.c.b16 %v3341, %v3340
          %v3428 = vpack.c.b16 %v3343, %v3342
          %v3429 = vpack.c.b16 %v3345, %v3344
          %v3430 = vpack.c.b16 %v3347, %v3346
          %v3431 = vpack.c.b16 %v3349, %v3348
          %v3432 = vpack.c.b16 %v3351, %v3350
          %v3433 = vpack.c.b16 %v3353, %v3352
          %v3434 = vpack.c.b16 %v3355, %v3354
          %v3435 = vpack.c.b16 %v3357, %v3356
          %v3436 = vpack.c.b16 %v3359, %v3358
          %v3437 = vpack.c.b16 %v3361, %v3360
          %v3438 = vpack.c.b16 %v3363, %v3362
          %v3439 = vpack.c.b16 %v3365, %v3364
          %v3440 = vpack.c.b16 %v3367, %v3366
          %v3441 = vpack.c.b16 %v3369, %v3368
          %v3442 = vpack.c.b16 %v3371, %v3370
          %v3443 = vpack.c.b16 %v3373, %v3372
          %v3444 = vpack.c.b16 %v3375, %v3374
          %v3445 = vpack.c.b16 %v3377, %v3376
          %v3446 = vpack.c.b16 %v3379, %v3378
          %v3447 = vpack.c.b16 %v3381, %v3380
          %v3448 = vpack.c.b16 %v3383, %v3382
          %v3449 = vpack.c.b16 %v3385, %v3384
          %3514 = vmatprep.subr.bf16.mxu0 0
          %3515 = vmatpush1.bf16.msra.mxu0 %v3386
          %3516 = vmatprep.subr.bf16.mxu0 0
          %3517 = vmatpush1.bf16.msra.mxu0 %v3387
          %3518 = vmatprep.subr.bf16.mxu0 0
          %3519 = vmatpush1.bf16.msra.mxu0 %v3388
          %3520 = vmatprep.subr.bf16.mxu0 0
          %3521 = vmatpush1.bf16.msra.mxu0 %v3389
          %3522 = vmatprep.subr.bf16.mxu0 0
          %3523 = vmatpush1.bf16.msra.mxu0 %v3390
          %3524 = vmatprep.subr.bf16.mxu0 0
          %3525 = vmatpush1.bf16.msra.mxu0 %v3391
          %3526 = vmatprep.subr.bf16.mxu0 0
          %3527 = vmatpush1.bf16.msra.mxu0 %v3392
          %3528 = vmatprep.subr.bf16.mxu0 0
          %3529 = vmatpush1.bf16.msra.mxu0 %v3393
          %3530 = vmatprep.subr.bf16.mxu0 0
          %3531 = vmatpush1.bf16.msra.mxu0 %v3394
          %3532 = vmatprep.subr.bf16.mxu0 0
          %3533 = vmatpush1.bf16.msra.mxu0 %v3395
          %3534 = vmatprep.subr.bf16.mxu0 0
          %3535 = vmatpush1.bf16.msra.mxu0 %v3396
          %3536 = vmatprep.subr.bf16.mxu0 0
          %3537 = vmatpush1.bf16.msra.mxu0 %v3397
          %3538 = vmatprep.subr.bf16.mxu0 0
          %3539 = vmatpush1.bf16.msra.mxu0 %v3398
          %3540 = vmatprep.subr.bf16.mxu0 0
          %3541 = vmatpush1.bf16.msra.mxu0 %v3399
          %3542 = vmatprep.subr.bf16.mxu0 0
          %3543 = vmatpush1.bf16.msra.mxu0 %v3400
          %3544 = vmatprep.subr.bf16.mxu0 0
          %3545 = vmatpush1.bf16.msra.mxu0 %v3401
          %3546 = vmatprep.mubr.bf16.mxu0 %v2995
          %3547 = vmatmul.mubr.bf16.gmra.mrb[0].mxu0 %v2994
          %v3548 = vpop.f32.mrb[0].mxu0
          %v3549 = vadd.f32 0.0, %v3548
          %v3550 = vpop.f32.mrb[0].mxu0
          %v3551 = vpop.f32.mrb[0].mxu0
          %v3552 = vadd.f32 0.0, %v3551
          %v3553 = vpop.f32.mrb[0].mxu0
          %3554 = vdwg.mxu0
          %3555 = vmatprep.subr.bf16.mxu0 0
          %3556 = vmatpush1.bf16.msra.mxu0 %v3402
          %3557 = vmatprep.subr.bf16.mxu0 0
          %3558 = vmatpush1.bf16.msra.mxu0 %v3403
          %3559 = vmatprep.subr.bf16.mxu0 0
          %3560 = vmatpush1.bf16.msra.mxu0 %v3404
          %3561 = vmatprep.subr.bf16.mxu0 0
          %3562 = vmatpush1.bf16.msra.mxu0 %v3405
          %3563 = vmatprep.subr.bf16.mxu0 0
          %3564 = vmatpush1.bf16.msra.mxu0 %v3406
          %3565 = vmatprep.subr.bf16.mxu0 0
          %3566 = vmatpush1.bf16.msra.mxu0 %v3407
          %3567 = vmatprep.subr.bf16.mxu0 0
          %3568 = vmatpush1.bf16.msra.mxu0 %v3408
          %3569 = vmatprep.subr.bf16.mxu0 0
          %3570 = vmatpush1.bf16.msra.mxu0 %v3409
          %3571 = vmatprep.subr.bf16.mxu0 0
          %3572 = vmatpush1.bf16.msra.mxu0 %v3410
          %3573 = vmatprep.subr.bf16.mxu0 0
          %3574 = vmatpush1.bf16.msra.mxu0 %v3411
          %3575 = vmatprep.subr.bf16.mxu0 0
          %3576 = vmatpush1.bf16.msra.mxu0 %v3412
          %3577 = vmatprep.subr.bf16.mxu0 0
          %3578 = vmatpush1.bf16.msra.mxu0 %v3413
          %3579 = vmatprep.subr.bf16.mxu0 0
          %3580 = vmatpush1.bf16.msra.mxu0 %v3414
          %3581 = vmatprep.subr.bf16.mxu0 0
          %3582 = vmatpush1.bf16.msra.mxu0 %v3415
          %3583 = vmatprep.subr.bf16.mxu0 0
          %3584 = vmatpush1.bf16.msra.mxu0 %v3416
          %3585 = vmatprep.subr.bf16.mxu0 0
          %3586 = vmatpush1.bf16.msra.mxu0 %v3417
          %3587 = vmatprep.mubr.bf16.mxu0 %v2997
          %3588 = vmatmul.mubr.bf16.gmra.mrb[0].mxu0 %v2996
          %v3589 = vpop.f32.mrb[0].mxu0
          %v3590 = vadd.f32 %v3549, %v3589
          %v3591 = vpop.f32.mrb[0].mxu0
          %v3592 = vpop.f32.mrb[0].mxu0
          %v3593 = vadd.f32 %v3552, %v3592
          %v3594 = vpop.f32.mrb[0].mxu0
          %3595 = vdwg.mxu0
          %3596 = vmatprep.subr.bf16.mxu0 0
          %3597 = vmatpush1.bf16.msra.mxu0 %v3418
          %3598 = vmatprep.subr.bf16.mxu0 0
          %3599 = vmatpush1.bf16.msra.mxu0 %v3419
          %3600 = vmatprep.subr.bf16.mxu0 0
          %3601 = vmatpush1.bf16.msra.mxu0 %v3420
          %3602 = vmatprep.subr.bf16.mxu0 0
          %3603 = vmatpush1.bf16.msra.mxu0 %v3421
          %3604 = vmatprep.subr.bf16.mxu0 0
          %3605 = vmatpush1.bf16.msra.mxu0 %v3422
          %3606 = vmatprep.subr.bf16.mxu0 0
          %3607 = vmatpush1.bf16.msra.mxu0 %v3423
          %3608 = vmatprep.subr.bf16.mxu0 0
          %3609 = vmatpush1.bf16.msra.mxu0 %v3424
          %3610 = vmatprep.subr.bf16.mxu0 0
          %3611 = vmatpush1.bf16.msra.mxu0 %v3425
          %3612 = vmatprep.subr.bf16.mxu0 0
          %3613 = vmatpush1.bf16.msra.mxu0 %v3426
          %3614 = vmatprep.subr.bf16.mxu0 0
          %3615 = vmatpush1.bf16.msra.mxu0 %v3427
          %3616 = vmatprep.subr.bf16.mxu0 0
          %3617 = vmatpush1.bf16.msra.mxu0 %v3428
          %3618 = vmatprep.subr.bf16.mxu0 0
          %3619 = vmatpush1.bf16.msra.mxu0 %v3429
          %3620 = vmatprep.subr.bf16.mxu0 0
          %3621 = vmatpush1.bf16.msra.mxu0 %v3430
          %3622 = vmatprep.subr.bf16.mxu0 0
          %3623 = vmatpush1.bf16.msra.mxu0 %v3431
          %3624 = vmatprep.subr.bf16.mxu0 0
          %3625 = vmatpush1.bf16.msra.mxu0 %v3432
          %3626 = vmatprep.subr.bf16.mxu0 0
          %3627 = vmatpush1.bf16.msra.mxu0 %v3433
          %3628 = vmatprep.mubr.bf16.mxu0 %v2999
          %3629 = vmatmul.mubr.bf16.gmra.mrb[0].mxu0 %v2998
          %v3630 = vpop.f32.mrb[0].mxu0
          %v3631 = vadd.f32 %v3590, %v3630
          %v3632 = vpop.f32.mrb[0].mxu0
          %v3633 = vpop.f32.mrb[0].mxu0
          %v3634 = vadd.f32 %v3593, %v3633
          %v3635 = vpop.f32.mrb[0].mxu0
          %3636 = vdwg.mxu0
          %3637 = vmatprep.subr.bf16.mxu0 0
          %3638 = vmatpush1.bf16.msra.mxu0 %v3434
          %3639 = vmatprep.subr.bf16.mxu0 0
          %3640 = vmatpush1.bf16.msra.mxu0 %v3435
          %3641 = vmatprep.subr.bf16.mxu0 0
          %3642 = vmatpush1.bf16.msra.mxu0 %v3436
          %3643 = vmatprep.subr.bf16.mxu0 0
          %3644 = vmatpush1.bf16.msra.mxu0 %v3437
          %3645 = vmatprep.subr.bf16.mxu0 0
          %3646 = vmatpush1.bf16.msra.mxu0 %v3438
          %3647 = vmatprep.subr.bf16.mxu0 0
          %3648 = vmatpush1.bf16.msra.mxu0 %v3439
          %3649 = vmatprep.subr.bf16.mxu0 0
          %3650 = vmatpush1.bf16.msra.mxu0 %v3440
          %3651 = vmatprep.subr.bf16.mxu0 0
          %3652 = vmatpush1.bf16.msra.mxu0 %v3441
          %3653 = vmatprep.subr.bf16.mxu0 0
          %3654 = vmatpush1.bf16.msra.mxu0 %v3442
          %3655 = vmatprep.subr.bf16.mxu0 0
          %3656 = vmatpush1.bf16.msra.mxu0 %v3443
          %3657 = vmatprep.subr.bf16.mxu0 0
          %3658 = vmatpush1.bf16.msra.mxu0 %v3444
          %3659 = vmatprep.subr.bf16.mxu0 0
          %3660 = vmatpush1.bf16.msra.mxu0 %v3445
          %3661 = vmatprep.subr.bf16.mxu0 0
          %3662 = vmatpush1.bf16.msra.mxu0 %v3446
          %3663 = vmatprep.subr.bf16.mxu0 0
          %3664 = vmatpush1.bf16.msra.mxu0 %v3447
          %3665 = vmatprep.subr.bf16.mxu0 0
          %3666 = vmatpush1.bf16.msra.mxu0 %v3448
          %3667 = vmatprep.subr.bf16.mxu0 0
          %3668 = vmatpush1.bf16.msra.mxu0 %v3449
          %3669 = vmatprep.mubr.bf16.mxu0 %v3001
          %3670 = vmatmul.mubr.bf16.gmra.mrb[0].mxu0 %v3000
          %v3671 = vpop.f32.mrb[0].mxu0
          %v3672 = vadd.f32 %v3631, %v3671
          %v3673 = vpop.f32.mrb[0].mxu0
          %v3674 = vpop.f32.mrb[0].mxu0
          %v3675 = vadd.f32 %v3634, %v3674
          %v3676 = vpop.f32.mrb[0].mxu0
          %3677 = vdwg.mxu0
          %v3678 = vpack.c.bf16 %v3675, %v3672
          %v3679 = vld [vmem:[%s10] sm:$0xf]
          %v3680 = vld [vmem:[%s10 + $0x4] sm:$0xf]
          %v3681 = vld [vmem:[%s10 + $0x8] sm:$0xf]
          %v3682 = vld [vmem:[%s10 + $0xc] sm:$0xf]
          %v3683 = vld [vmem:[%s10 + $0x10] sm:$0xf]
          %v3684 = vld [vmem:[%s10 + $0x14] sm:$0xf]
          %v3685 = vld [vmem:[%s10 + $0x18] sm:$0xf]
          %v3686 = vld [vmem:[%s10 + $0x1c] sm:$0xf]
          %v3687 = vld [vmem:[%s10 + $0x20] sm:$0xf]
          %v3688 = vld [vmem:[%s10 + $0x24] sm:$0xf]
          %v3689 = vld [vmem:[%s10 + $0x28] sm:$0xf]
          %v3690 = vld [vmem:[%s10 + $0x2c] sm:$0xf]
          %v3691 = vld [vmem:[%s10 + $0x30] sm:$0xf]
          %v3692 = vld [vmem:[%s10 + $0x34] sm:$0xf]
          %v3693 = vld [vmem:[%s10 + $0x38] sm:$0xf]
          %v3694 = vld [vmem:[%s10 + $0x3c] sm:$0xf]
          %v3711 = vunpack.c.l.b16 %v3679
          %v3712 = vunpack.c.l.b16 %v3680
          %v3713 = vunpack.c.l.b16 %v3681
          %v3714 = vunpack.c.l.b16 %v3682
          %v3715 = vunpack.c.l.b16 %v3683
          %v3716 = vunpack.c.l.b16 %v3684
          %v3717 = vunpack.c.l.b16 %v3685
          %v3718 = vunpack.c.l.b16 %v3686
          %v3719 = vunpack.c.l.b16 %v3687
          %v3720 = vunpack.c.l.b16 %v3688
          %v3721 = vunpack.c.l.b16 %v3689
          %v3722 = vunpack.c.l.b16 %v3690
          %v3723 = vunpack.c.l.b16 %v3691
          %v3724 = vunpack.c.l.b16 %v3692
          %v3725 = vunpack.c.l.b16 %v3693
          %v3726 = vunpack.c.l.b16 %v3694
          %v3727 = vpack.c.b16 %v3712, %v3711
          %v3728 = vpack.c.b16 %v3714, %v3713
          %v3729 = vpack.c.b16 %v3716, %v3715
          %v3730 = vpack.c.b16 %v3718, %v3717
          %v3731 = vpack.c.b16 %v3720, %v3719
          %v3732 = vpack.c.b16 %v3722, %v3721
          %v3733 = vpack.c.b16 %v3724, %v3723
          %v3734 = vpack.c.b16 %v3726, %v3725
          %3743 = vmatprep.subr.bf16.mxu0 0
          %3744 = vmatpush1.bf16.msra.mxu0 %v3727
          %3745 = vmatprep.subr.bf16.mxu0 0
          %3746 = vmatpush1.bf16.msra.mxu0 %v3728
          %3747 = vmatprep.subr.bf16.mxu0 0
          %3748 = vmatpush1.bf16.msra.mxu0 %v3729
          %3749 = vmatprep.subr.bf16.mxu0 0
          %3750 = vmatpush1.bf16.msra.mxu0 %v3730
          %3751 = vmatprep.subr.bf16.mxu0 0
          %3752 = vmatpush1.bf16.msra.mxu0 %v3731
          %3753 = vmatprep.subr.bf16.mxu0 0
          %3754 = vmatpush1.bf16.msra.mxu0 %v3732
          %3755 = vmatprep.subr.bf16.mxu0 0
          %3756 = vmatpush1.bf16.msra.mxu0 %v3733
          %3757 = vmatprep.subr.bf16.mxu0 0
          %3758 = vmatpush1.bf16.msra.mxu0 %v3734
          %3759 = vmatprep.subr.bf16.mxu0 0
          %3760 = vmatpush1.bf16.msra.mxu0 0
          %3761 = vmatprep.subr.bf16.mxu0 0
          %3762 = vmatpush1.bf16.msra.mxu0 0
          %3763 = vmatprep.subr.bf16.mxu0 0
          %3764 = vmatpush1.bf16.msra.mxu0 0
          %3765 = vmatprep.subr.bf16.mxu0 0
          %3766 = vmatpush1.bf16.msra.mxu0 0
          %3767 = vmatprep.subr.bf16.mxu0 0
          %3768 = vmatpush1.bf16.msra.mxu0 0
          %3769 = vmatprep.subr.bf16.mxu0 0
          %3770 = vmatpush1.bf16.msra.mxu0 0
          %3771 = vmatprep.subr.bf16.mxu0 0
          %3772 = vmatpush1.bf16.msra.mxu0 0
          %3773 = vmatprep.subr.bf16.mxu0 0
          %3774 = vmatpush1.bf16.msra.mxu0 0
          %3775 = vmatprep.mubr.bf16.mxu0 0
          %3776 = vmatmul.mubr.bf16.gmra.mrb[0].mxu0 %v3678
          %v3777 = vpop.f32.mrb[0].mxu0
          %v3778 = vadd.f32 0.0, %v3777
          %v3779 = vpop.f32.mrb[0].mxu0
          %v3780 = vpop.f32.mrb[0].mxu0
          %v3781 = vadd.f32 0.0, %v3780
          %v3782 = vpop.f32.mrb[0].mxu0
          %3783 = vdwg.mxu0
          %3784 = vxpose.xlu0.b32.start [1/16] %v3778, 128
          %3785 = vxpose.xlu0.b32.cont [2/16] %v3781, 128
          %3786 = vxpose.xlu0.b32.cont [3/16] 0.0, 128
          %3787 = vxpose.xlu0.b32.cont [4/16] 0.0, 128
          %3788 = vxpose.xlu0.b32.cont [5/16] 0.0, 128
          %3789 = vxpose.xlu0.b32.cont [6/16] 0.0, 128
          %3790 = vxpose.xlu0.b32.cont [7/16] 0.0, 128
          %3791 = vxpose.xlu0.b32.cont [8/16] 0.0, 128
          %3792 = vxpose.xlu0.b32.cont [9/16] 0.0, 128
          %3793 = vxpose.xlu0.b32.cont [10/16] 0.0, 128
          %3794 = vxpose.xlu0.b32.cont [11/16] 0.0, 128
          %3795 = vxpose.xlu0.b32.cont [12/16] 0.0, 128
          %3796 = vxpose.xlu0.b32.cont [13/16] 0.0, 128
          %3797 = vxpose.xlu0.b32.cont [14/16] 0.0, 128
          %3798 = vxpose.xlu0.b32.cont [15/16] 0.0, 128
          %3799 = vxpose.xlu0.b32.end [16/16] 0.0, 128
          %v3800 = vpop.trf.xlu0
          %v3801 = vpop.trf.xlu0
          %v3802 = vpop.trf.xlu0
          %v3803 = vpop.trf.xlu0
          %v3804 = vpop.trf.xlu0
          %v3805 = vpop.trf.xlu0
          %v3806 = vpop.trf.xlu0
          %v3807 = vpop.trf.xlu0
          %v3808 = vpop.trf.xlu0
          %v3809 = vpop.trf.xlu0
          %v3810 = vpop.trf.xlu0
          %v3811 = vpop.trf.xlu0
          %v3812 = vpop.trf.xlu0
          %v3813 = vpop.trf.xlu0
          %v3814 = vpop.trf.xlu0
          %v3815 = vpop.trf.xlu0
          %3817 = vset.pattern.permute.xlu0 1
          %3818 = vperm.xlu0 %3817, %v3778
          %v3819 = vpop.permute.xlu0 %3818
          %3822 = vset.pattern.permute.xlu0 1
          %3823 = vperm.xlu0 %3822, %v3781
          %v3824 = vpop.permute.xlu0 %3823
          %v3826 = vlaneseq
          %v3827 = vshrl.u32 %v3826, 7
          %v3828 = vsub.s32 0, %v3827
          %v3829 = vrot.slane %v3800, %v3828
          %v3830 = vadd.f32 %v3819, %v3829
          %v3831 = vadd.f32 %v3824, %v3829
          %vm3832 = vcmp.gt.f32.partialorder %v3830, 0.0
          %vm3833 = vcmp.gt.f32.partialorder %v3831, 0.0
          %v3834 = vmul.f32 %v3830, 0.2
          %v3835 = vmul.f32 %v3831, 0.2
          %v3836 = vsel %vm3832, %v3830, %v3834
          %v3837 = vsel %vm3833, %v3831, %v3835
          %v3838 = vadd.f32 %v3836, %v797
          %v3839 = vadd.f32 %v3837, %v798
          %v3840 = vsel %vm2111, %v3838, -inf
          %3841 = vmax.xlane.f32.xlu0 %v3840
          %v3842 = vpop.xlane.xlu0 %3841
          %v3843 = vsel %vm2111, %v3839, -inf
          %3844 = vmax.xlane.f32.xlu0 %v3843
          %v3845 = vpop.xlane.xlu0 %3844
          %v3846 = vsub.f32 %v3838, %v3842
          %v3847 = vsub.f32 %v3839, %v3845
          %v3848 = vmul.f32 %v3846, 1.442695
          %v3849 = vpow.pop %v3848
          %v3850 = vmul.f32 %v3847, 1.442695
          %v3851 = vpow.pop %v3850
          %v3852 = vsel %vm2111, %v3849, 0.0
          %3853 = vadd.xlane.f32.xlu0 %v3852
          %v3854 = vpop.xlane.xlu0 %3853
          %v3855 = vsel %vm2111, %v3851, 0.0
          %3856 = vadd.xlane.f32.xlu0 %v3855
          %v3857 = vpop.xlane.xlu0 %3856
          %v3858 = vmax.f32 %v3854, 1e-20
          %v3859 = vmax.f32 %v3857, 1e-20
          %v3860 = vrcp.pop %v3858
          %v3861 = vrcp.pop %v3859
          %v3862 = vmul.f32 %v3849, %v3860
          %v3863 = vmul.f32 %v3851, %v3861
          %v3864 = vpack.c.bf16 %v3863, %v3862
          %v3865 = vld [vmem:[%s11] sm:$0x1]
          %v3867 = vlaneseq
          %v3868 = vshrl.u32 %v3867, 7
          %v3869 = vsub.s32 0, %v3868
          %v3870 = vrot.slane %v3865, %v3869
          %v3873 = vsel %vm2111, %v3864, 0
          %3875 = vmatprep.subr.bf16.mxu0 0
          %3876 = vmatpush1.bf16.msra.mxu0 %v3678
          %3877 = vmatprep.subr.bf16.mxu0 0
          %3878 = vmatpush1.bf16.msra.mxu0 0
          %3879 = vmatprep.subr.bf16.mxu0 0
          %3880 = vmatpush1.bf16.msra.mxu0 0
          %3881 = vmatprep.subr.bf16.mxu0 0
          %3882 = vmatpush1.bf16.msra.mxu0 0
          %3883 = vmatprep.subr.bf16.mxu0 0
          %3884 = vmatpush1.bf16.msra.mxu0 0
          %3885 = vmatprep.subr.bf16.mxu0 0
          %3886 = vmatpush1.bf16.msra.mxu0 0
          %3887 = vmatprep.subr.bf16.mxu0 0
          %3888 = vmatpush1.bf16.msra.mxu0 0
          %3889 = vmatprep.subr.bf16.mxu0 0
          %3890 = vmatpush1.bf16.msra.mxu0 0
          %3891 = vmatprep.subr.bf16.mxu0 0
          %3892 = vmatpush1.bf16.msra.mxu0 0
          %3893 = vmatprep.subr.bf16.mxu0 0
          %3894 = vmatpush1.bf16.msra.mxu0 0
          %3895 = vmatprep.subr.bf16.mxu0 0
          %3896 = vmatpush1.bf16.msra.mxu0 0
          %3897 = vmatprep.subr.bf16.mxu0 0
          %3898 = vmatpush1.bf16.msra.mxu0 0
          %3899 = vmatprep.subr.bf16.mxu0 0
          %3900 = vmatpush1.bf16.msra.mxu0 0
          %3901 = vmatprep.subr.bf16.mxu0 0
          %3902 = vmatpush1.bf16.msra.mxu0 0
          %3903 = vmatprep.subr.bf16.mxu0 0
          %3904 = vmatpush1.bf16.msra.mxu0 0
          %3905 = vmatprep.subr.bf16.mxu0 0
          %3906 = vmatpush1.bf16.msra.mxu0 0
          %3907 = vmatprep.mubr.bf16.mxu0 0
          %3908 = vmatmul.mubr.bf16.gmra.mrb[0].mxu0 %v3873
          %v3909 = vpop.f32.mrb[0].mxu0
          %v3910 = vadd.f32 %v3870, %v3909
          %v3911 = vpop.f32.mrb[0].mxu0
          %v3912 = vpop.f32.mrb[0].mxu0
          %v3913 = vadd.f32 %v3870, %v3912
          %v3914 = vpop.f32.mrb[0].mxu0
          %3915 = vdwg.mxu0
          %v3916 = vld [vmem:[%s2] sm:$0x1]
          %v3917 = vpack.c.bf16 %v3913, %v3910
          %v3919 = vsel %vm2111, %v3916, 0
          %3921 = vmatprep.subr.bf16.mxu0 0
          %3922 = vmatpush1.bf16.msra.mxu0 %v3917
          %3923 = vmatprep.subr.bf16.mxu0 0
          %3924 = vmatpush1.bf16.msra.mxu0 0
          %3925 = vmatprep.subr.bf16.mxu0 0
          %3926 = vmatpush1.bf16.msra.mxu0 0
          %3927 = vmatprep.subr.bf16.mxu0 0
          %3928 = vmatpush1.bf16.msra.mxu0 0
          %3929 = vmatprep.subr.bf16.mxu0 0
          %3930 = vmatpush1.bf16.msra.mxu0 0
          %3931 = vmatprep.subr.bf16.mxu0 0
          %3932 = vmatpush1.bf16.msra.mxu0 0
          %3933 = vmatprep.subr.bf16.mxu0 0
          %3934 = vmatpush1.bf16.msra.mxu0 0
          %3935 = vmatprep.subr.bf16.mxu0 0
          %3936 = vmatpush1.bf16.msra.mxu0 0
          %3937 = vmatprep.subr.bf16.mxu0 0
          %3938 = vmatpush1.bf16.msra.mxu0 0
          %3939 = vmatprep.subr.bf16.mxu0 0
          %3940 = vmatpush1.bf16.msra.mxu0 0
          %3941 = vmatprep.subr.bf16.mxu0 0
          %3942 = vmatpush1.bf16.msra.mxu0 0
          %3943 = vmatprep.subr.bf16.mxu0 0
          %3944 = vmatpush1.bf16.msra.mxu0 0
          %3945 = vmatprep.subr.bf16.mxu0 0
          %3946 = vmatpush1.bf16.msra.mxu0 0
          %3947 = vmatprep.subr.bf16.mxu0 0
          %3948 = vmatpush1.bf16.msra.mxu0 0
          %3949 = vmatprep.subr.bf16.mxu0 0
          %3950 = vmatpush1.bf16.msra.mxu0 0
          %3951 = vmatprep.subr.bf16.mxu0 0
          %3952 = vmatpush1.bf16.msra.mxu0 0
          %3953 = vmatprep.mubr.bf16.mxu0 0
          %3954 = vmatmul.mubr.bf16.gmra.mrb[0].mxu0 %v3919
          %v3955 = vpop.f32.mrb[0].mxu0
          %v3956 = vadd.f32 0.0, %v3955
          %v3957 = vpop.f32.mrb[0].mxu0
          %v3958 = vpop.f32.mrb[0].mxu0
          %v3959 = vpop.f32.mrb[0].mxu0
          %3960 = vdwg.mxu0
          %3961 = vst [vmem:[#allocation2] sm:$0x3] %v3956
        $region140: #{tpu_custom_call.1} parent=119 // pred_fallthru
          _
        %p3962 = scmp.eq.s32.totalorder %s40, 1
        // Predicated region
        $region141: #{tpu_custom_call.1} parent=119 // pred_check
          %p3963 = pneg %p3962
        $region142: #{tpu_custom_call.1} parent=119 // pred_check_branch
          %3965 = sbr.rel (%p3963) target = $region144
        $region143: #{tpu_custom_call.1} parent=119 // pred_region
          %v3966 = vld [vmem:[%s3] sm:$0xf]
          %v3967 = vld [vmem:[%s3 + $0x4] sm:$0xf]
          %v3968 = vld [vmem:[%s4] sm:$0xff]
          %v3969 = vld [vmem:[%s4 + $0x8] sm:$0xff]
          %v3970 = vld [vmem:[%s5] sm:$0xf]
          %v3971 = vld [vmem:[%s0] sm:$0xf]
          %v3972 = vld [vmem:[%s0 + $0x4] sm:$0xf]
          %v3973 = vld [vmem:[%s12] sm:$0xf]
          %v3974 = vld [vmem:[%s12 + $0x4] sm:$0xf]
          %v3975 = vld [vmem:[%s12 + $0x8] sm:$0xf]
          %v3976 = vld [vmem:[%s12 + $0xc] sm:$0xf]
          %v3977 = vld [vmem:[%s12 + $0x10] sm:$0xf]
          %v3978 = vld [vmem:[%s12 + $0x14] sm:$0xf]
          %v3979 = vld [vmem:[%s12 + $0x18] sm:$0xf]
          %v3980 = vld [vmem:[%s12 + $0x1c] sm:$0xf]
          %v3981 = vld [vmem:[%s12 + $0x20] sm:$0xf]
          %v3982 = vld [vmem:[%s12 + $0x24] sm:$0xf]
          %v3983 = vld [vmem:[%s12 + $0x28] sm:$0xf]
          %v3984 = vld [vmem:[%s12 + $0x2c] sm:$0xf]
          %v3985 = vld [vmem:[%s12 + $0x30] sm:$0xf]
          %v3986 = vld [vmem:[%s12 + $0x34] sm:$0xf]
          %v3987 = vld [vmem:[%s12 + $0x38] sm:$0xf]
          %v3988 = vld [vmem:[%s12 + $0x3c] sm:$0xf]
          %v3991 = vunpack.c.l.b16 %v3971
          %v3992 = vunpack.c.l.b16 %v3972
          %v3993 = vpack.c.b16 %v3992, %v3991
          %v4011 = vunpack.c.l.b16 %v3973
          %v4012 = vunpack.c.l.b16 %v3974
          %v4013 = vunpack.c.l.b16 %v3975
          %v4014 = vunpack.c.l.b16 %v3976
          %v4015 = vunpack.c.l.b16 %v3977
          %v4016 = vunpack.c.l.b16 %v3978
          %v4017 = vunpack.c.l.b16 %v3979
          %v4018 = vunpack.c.l.b16 %v3980
          %v4019 = vunpack.c.l.b16 %v3981
          %v4020 = vunpack.c.l.b16 %v3982
          %v4021 = vunpack.c.l.b16 %v3983
          %v4022 = vunpack.c.l.b16 %v3984
          %v4023 = vunpack.c.l.b16 %v3985
          %v4024 = vunpack.c.l.b16 %v3986
          %v4025 = vunpack.c.l.b16 %v3987
          %v4026 = vunpack.c.l.b16 %v3988
          %v4027 = vpack.c.b16 %v4012, %v4011
          %v4028 = vpack.c.b16 %v4014, %v4013
          %v4029 = vpack.c.b16 %v4016, %v4015
          %v4030 = vpack.c.b16 %v4018, %v4017
          %v4031 = vpack.c.b16 %v4020, %v4019
          %v4032 = vpack.c.b16 %v4022, %v4021
          %v4033 = vpack.c.b16 %v4024, %v4023
          %v4034 = vpack.c.b16 %v4026, %v4025
          %4043 = vmatprep.subr.bf16.mxu0 0
          %4044 = vmatpush1.bf16.msra.mxu0 %v4027
          %4045 = vmatprep.subr.bf16.mxu0 0
          %4046 = vmatpush1.bf16.msra.mxu0 %v4028
          %4047 = vmatprep.subr.bf16.mxu0 0
          %4048 = vmatpush1.bf16.msra.mxu0 %v4029
          %4049 = vmatprep.subr.bf16.mxu0 0
          %4050 = vmatpush1.bf16.msra.mxu0 %v4030
          %4051 = vmatprep.subr.bf16.mxu0 0
          %4052 = vmatpush1.bf16.msra.mxu0 %v4031
          %4053 = vmatprep.subr.bf16.mxu0 0
          %4054 = vmatpush1.bf16.msra.mxu0 %v4032
          %4055 = vmatprep.subr.bf16.mxu0 0
          %4056 = vmatpush1.bf16.msra.mxu0 %v4033
          %4057 = vmatprep.subr.bf16.mxu0 0
          %4058 = vmatpush1.bf16.msra.mxu0 %v4034
          %4059 = vmatprep.subr.bf16.mxu0 0
          %4060 = vmatpush1.bf16.msra.mxu0 0
          %4061 = vmatprep.subr.bf16.mxu0 0
          %4062 = vmatpush1.bf16.msra.mxu0 0
          %4063 = vmatprep.subr.bf16.mxu0 0
          %4064 = vmatpush1.bf16.msra.mxu0 0
          %4065 = vmatprep.subr.bf16.mxu0 0
          %4066 = vmatpush1.bf16.msra.mxu0 0
          %4067 = vmatprep.subr.bf16.mxu0 0
          %4068 = vmatpush1.bf16.msra.mxu0 0
          %4069 = vmatprep.subr.bf16.mxu0 0
          %4070 = vmatpush1.bf16.msra.mxu0 0
          %4071 = vmatprep.subr.bf16.mxu0 0
          %4072 = vmatpush1.bf16.msra.mxu0 0
          %4073 = vmatprep.subr.bf16.mxu0 0
          %4074 = vmatpush1.bf16.msra.mxu0 0
          %4075 = vmatprep.mubr.bf16.mxu0 0
          %4076 = vmatmul.mubr.bf16.gmra.mrb[0].mxu0 %v3993
          %v4077 = vpop.f32.mrb[0].mxu0
          %v4078 = vadd.f32 0.0, %v4077
          %v4079 = vpop.f32.mrb[0].mxu0
          %v4080 = vpop.f32.mrb[0].mxu0
          %v4081 = vadd.f32 0.0, %v4080
          %v4082 = vpop.f32.mrb[0].mxu0
          %4083 = vdwg.mxu0
          %v4084 = vpack.c.bf16 %v4081, %v4078
          %v4087 = vunpack.c.l.b16 %v3966
          %v4088 = vunpack.c.l.b16 %v3967
          %v4089 = vpack.c.b16 %v4088, %v4087
          %4091 = vxpose.xlu0.c.b16.start [1/8] %v4089, 128
          %4092 = vxpose.xlu0.c.b16.cont [2/8] 0, 128
          %4093 = vxpose.xlu0.c.b16.cont [3/8] 0, 128
          %4094 = vxpose.xlu0.c.b16.cont [4/8] 0, 128
          %4095 = vxpose.xlu0.c.b16.cont [5/8] 0, 128
          %4096 = vxpose.xlu0.c.b16.cont [6/8] 0, 128
          %4097 = vxpose.xlu0.c.b16.cont [7/8] 0, 128
          %4098 = vxpose.xlu0.c.b16.end [8/8] 0, 128
          %v4099 = vpop.trf.xlu0
          %v4100 = vpop.trf.xlu0
          %v4101 = vpop.trf.xlu0
          %v4102 = vpop.trf.xlu0
          %v4103 = vpop.trf.xlu0
          %v4104 = vpop.trf.xlu0
          %v4105 = vpop.trf.xlu0
          %v4106 = vpop.trf.xlu0
          %vm4107 = vcmask 130048
          %v4109 = vsel %vm4107, %v4099, 0
          %4111 = vmatprep.subr.bf16.mxu0 0
          %4112 = vmatpush1.bf16.msra.mxu0 %v4084
          %4113 = vmatprep.subr.bf16.mxu0 0
          %4114 = vmatpush1.bf16.msra.mxu0 0
          %4115 = vmatprep.subr.bf16.mxu0 0
          %4116 = vmatpush1.bf16.msra.mxu0 0
          %4117 = vmatprep.subr.bf16.mxu0 0
          %4118 = vmatpush1.bf16.msra.mxu0 0
          %4119 = vmatprep.subr.bf16.mxu0 0
          %4120 = vmatpush1.bf16.msra.mxu0 0
          %4121 = vmatprep.subr.bf16.mxu0 0
          %4122 = vmatpush1.bf16.msra.mxu0 0
          %4123 = vmatprep.subr.bf16.mxu0 0
          %4124 = vmatpush1.bf16.msra.mxu0 0
          %4125 = vmatprep.subr.bf16.mxu0 0
          %4126 = vmatpush1.bf16.msra.mxu0 0
          %4127 = vmatprep.subr.bf16.mxu0 0
          %4128 = vmatpush1.bf16.msra.mxu0 0
          %4129 = vmatprep.subr.bf16.mxu0 0
          %4130 = vmatpush1.bf16.msra.mxu0 0
          %4131 = vmatprep.subr.bf16.mxu0 0
          %4132 = vmatpush1.bf16.msra.mxu0 0
          %4133 = vmatprep.subr.bf16.mxu0 0
          %4134 = vmatpush1.bf16.msra.mxu0 0
          %4135 = vmatprep.subr.bf16.mxu0 0
          %4136 = vmatpush1.bf16.msra.mxu0 0
          %4137 = vmatprep.subr.bf16.mxu0 0
          %4138 = vmatpush1.bf16.msra.mxu0 0
          %4139 = vmatprep.subr.bf16.mxu0 0
          %4140 = vmatpush1.bf16.msra.mxu0 0
          %4141 = vmatprep.subr.bf16.mxu0 0
          %4142 = vmatpush1.bf16.msra.mxu0 0
          %4143 = vmatprep.mubr.bf16.mxu0 0
          %4144 = vmatmul.mubr.bf16.gmra.mrb[0].mxu0 %v4109
          %v4145 = vpop.f32.mrb[0].mxu0
          %v4146 = vadd.f32 0.0, %v4145
          %v4147 = vpop.f32.mrb[0].mxu0
          %v4148 = vpop.f32.mrb[0].mxu0
          %v4149 = vpop.f32.mrb[0].mxu0
          %4150 = vdwg.mxu0
          %4152 = vset.pattern.permute.xlu0 0
          %4153 = vperm.xlu0 %4152, %v3970
          %v4154 = vpop.permute.xlu0 %4153
          %v4156 = vmul.f32 %v4154, %v4146
          %v4157 = vpack.c.bf16 %v4156, %v4156
          %vm4158 = vcmask 31744
          %v4160 = vsel %vm4158, %v4089, 0
          %vm4162 = vcmask 1041408
          %v4164 = vsel %vm4162, %v4157, 0
          %4166 = vmatprep.subr.bf16.mxu0 0
          %4167 = vmatpush1.bf16.msra.mxu0 %v4164
          %4168 = vmatprep.subr.bf16.mxu0 0
          %4169 = vmatpush1.bf16.msra.mxu0 0
          %4170 = vmatprep.subr.bf16.mxu0 0
          %4171 = vmatpush1.bf16.msra.mxu0 0
          %4172 = vmatprep.subr.bf16.mxu0 0
          %4173 = vmatpush1.bf16.msra.mxu0 0
          %4174 = vmatprep.subr.bf16.mxu0 0
          %4175 = vmatpush1.bf16.msra.mxu0 0
          %4176 = vmatprep.subr.bf16.mxu0 0
          %4177 = vmatpush1.bf16.msra.mxu0 0
          %4178 = vmatprep.subr.bf16.mxu0 0
          %4179 = vmatpush1.bf16.msra.mxu0 0
          %4180 = vmatprep.subr.bf16.mxu0 0
          %4181 = vmatpush1.bf16.msra.mxu0 0
          %4182 = vmatprep.subr.bf16.mxu0 0
          %4183 = vmatpush1.bf16.msra.mxu0 0
          %4184 = vmatprep.subr.bf16.mxu0 0
          %4185 = vmatpush1.bf16.msra.mxu0 0
          %4186 = vmatprep.subr.bf16.mxu0 0
          %4187 = vmatpush1.bf16.msra.mxu0 0
          %4188 = vmatprep.subr.bf16.mxu0 0
          %4189 = vmatpush1.bf16.msra.mxu0 0
          %4190 = vmatprep.subr.bf16.mxu0 0
          %4191 = vmatpush1.bf16.msra.mxu0 0
          %4192 = vmatprep.subr.bf16.mxu0 0
          %4193 = vmatpush1.bf16.msra.mxu0 0
          %4194 = vmatprep.subr.bf16.mxu0 0
          %4195 = vmatpush1.bf16.msra.mxu0 0
          %4196 = vmatprep.subr.bf16.mxu0 0
          %4197 = vmatpush1.bf16.msra.mxu0 0
          %4198 = vmatprep.mubr.bf16.mxu0 0
          %4199 = vmatmul.mubr.bf16.gmra.mrb[0].mxu0 %v4160
          %v4200 = vpop.f32.mrb[0].mxu0
          %v4201 = vadd.f32 0.0, %v4200
          %v4202 = vpop.f32.mrb[0].mxu0
          %v4203 = vpop.f32.mrb[0].mxu0
          %v4204 = vadd.f32 0.0, %v4203
          %v4205 = vpop.f32.mrb[0].mxu0
          %4206 = vdwg.mxu0
          %4208 = vset.pattern.permute.xlu0 0
          %4209 = vperm.xlu0 %4208, %v3968
          %v4210 = vpop.permute.xlu0 %4209
          %4213 = vset.pattern.permute.xlu0 0
          %4214 = vperm.xlu0 %4213, %v3969
          %v4215 = vpop.permute.xlu0 %4214
          %v4217 = vmul.f32 %v4210, %v4201
          %v4218 = vmul.f32 %v4215, %v4204
          %v4219 = vld [vmem:[%s13] sm:$0x1]
          %v4221 = vlaneseq
          %v4222 = vshrl.u32 %v4221, 7
          %v4223 = vsub.s32 0, %v4222
          %v4224 = vrot.slane %v4219, %v4223
          %v4226 = vadd.f32 %v4217, %v4224
          %v4227 = vadd.f32 %v4218, %v4224
          %v4228 = vmax.f32 %v4226, 0.0
          %v4229 = vmax.f32 %v4227, 0.0
          %v4230 = vpack.c.bf16 %v4229, %v4228
          %v4231 = vld [vmem:[%s14] sm:$0xf]
          %v4232 = vld [vmem:[%s14 + $0x4] sm:$0xf]
          %v4233 = vld [vmem:[%s14 + $0x8] sm:$0xf]
          %v4234 = vld [vmem:[%s14 + $0xc] sm:$0xf]
          %v4235 = vld [vmem:[%s14 + $0x10] sm:$0xf]
          %v4236 = vld [vmem:[%s14 + $0x14] sm:$0xf]
          %v4237 = vld [vmem:[%s14 + $0x18] sm:$0xf]
          %v4238 = vld [vmem:[%s14 + $0x1c] sm:$0xf]
          %v4239 = vld [vmem:[%s14 + $0x20] sm:$0xf]
          %v4240 = vld [vmem:[%s14 + $0x24] sm:$0xf]
          %v4241 = vld [vmem:[%s14 + $0x28] sm:$0xf]
          %v4242 = vld [vmem:[%s14 + $0x2c] sm:$0xf]
          %v4243 = vld [vmem:[%s14 + $0x30] sm:$0xf]
          %v4244 = vld [vmem:[%s14 + $0x34] sm:$0xf]
          %v4245 = vld [vmem:[%s14 + $0x38] sm:$0xf]
          %v4246 = vld [vmem:[%s14 + $0x3c] sm:$0xf]
          %v4263 = vunpack.c.l.b16 %v4231
          %v4264 = vunpack.c.l.b16 %v4232
          %v4265 = vunpack.c.l.b16 %v4233
          %v4266 = vunpack.c.l.b16 %v4234
          %v4267 = vunpack.c.l.b16 %v4235
          %v4268 = vunpack.c.l.b16 %v4236
          %v4269 = vunpack.c.l.b16 %v4237
          %v4270 = vunpack.c.l.b16 %v4238
          %v4271 = vunpack.c.l.b16 %v4239
          %v4272 = vunpack.c.l.b16 %v4240
          %v4273 = vunpack.c.l.b16 %v4241
          %v4274 = vunpack.c.l.b16 %v4242
          %v4275 = vunpack.c.l.b16 %v4243
          %v4276 = vunpack.c.l.b16 %v4244
          %v4277 = vunpack.c.l.b16 %v4245
          %v4278 = vunpack.c.l.b16 %v4246
          %v4279 = vpack.c.b16 %v4264, %v4263
          %v4280 = vpack.c.b16 %v4266, %v4265
          %v4281 = vpack.c.b16 %v4268, %v4267
          %v4282 = vpack.c.b16 %v4270, %v4269
          %v4283 = vpack.c.b16 %v4272, %v4271
          %v4284 = vpack.c.b16 %v4274, %v4273
          %v4285 = vpack.c.b16 %v4276, %v4275
          %v4286 = vpack.c.b16 %v4278, %v4277
          %4295 = vmatprep.subr.bf16.mxu0 0
          %4296 = vmatpush1.bf16.msra.mxu0 %v4279
          %4297 = vmatprep.subr.bf16.mxu0 0
          %4298 = vmatpush1.bf16.msra.mxu0 %v4280
          %4299 = vmatprep.subr.bf16.mxu0 0
          %4300 = vmatpush1.bf16.msra.mxu0 %v4281
          %4301 = vmatprep.subr.bf16.mxu0 0
          %4302 = vmatpush1.bf16.msra.mxu0 %v4282
          %4303 = vmatprep.subr.bf16.mxu0 0
          %4304 = vmatpush1.bf16.msra.mxu0 %v4283
          %4305 = vmatprep.subr.bf16.mxu0 0
          %4306 = vmatpush1.bf16.msra.mxu0 %v4284
          %4307 = vmatprep.subr.bf16.mxu0 0
          %4308 = vmatpush1.bf16.msra.mxu0 %v4285
          %4309 = vmatprep.subr.bf16.mxu0 0
          %4310 = vmatpush1.bf16.msra.mxu0 %v4286
          %4311 = vmatprep.subr.bf16.mxu0 0
          %4312 = vmatpush1.bf16.msra.mxu0 0
          %4313 = vmatprep.subr.bf16.mxu0 0
          %4314 = vmatpush1.bf16.msra.mxu0 0
          %4315 = vmatprep.subr.bf16.mxu0 0
          %4316 = vmatpush1.bf16.msra.mxu0 0
          %4317 = vmatprep.subr.bf16.mxu0 0
          %4318 = vmatpush1.bf16.msra.mxu0 0
          %4319 = vmatprep.subr.bf16.mxu0 0
          %4320 = vmatpush1.bf16.msra.mxu0 0
          %4321 = vmatprep.subr.bf16.mxu0 0
          %4322 = vmatpush1.bf16.msra.mxu0 0
          %4323 = vmatprep.subr.bf16.mxu0 0
          %4324 = vmatpush1.bf16.msra.mxu0 0
          %4325 = vmatprep.subr.bf16.mxu0 0
          %4326 = vmatpush1.bf16.msra.mxu0 0
          %4327 = vmatprep.mubr.bf16.mxu0 0
          %4328 = vmatmul.mubr.bf16.gmra.mrb[0].mxu0 %v4230
          %v4329 = vpop.f32.mrb[0].mxu0
          %v4330 = vadd.f32 0.0, %v4329
          %v4331 = vpop.f32.mrb[0].mxu0
          %v4332 = vpop.f32.mrb[0].mxu0
          %v4333 = vadd.f32 0.0, %v4332
          %v4334 = vpop.f32.mrb[0].mxu0
          %4335 = vdwg.mxu0
          %v4336 = vpack.c.bf16 %v4333, %v4330
          %4337 = vmatprep.subr.bf16.mxu0 0
          %4338 = vmatpush1.bf16.msra.mxu0 %v4336
          %4339 = vmatprep.subr.bf16.mxu0 0
          %4340 = vmatpush1.bf16.msra.mxu0 0
          %4341 = vmatprep.subr.bf16.mxu0 0
          %4342 = vmatpush1.bf16.msra.mxu0 0
          %4343 = vmatprep.subr.bf16.mxu0 0
          %4344 = vmatpush1.bf16.msra.mxu0 0
          %4345 = vmatprep.subr.bf16.mxu0 0
          %4346 = vmatpush1.bf16.msra.mxu0 0
          %4347 = vmatprep.subr.bf16.mxu0 0
          %4348 = vmatpush1.bf16.msra.mxu0 0
          %4349 = vmatprep.subr.bf16.mxu0 0
          %4350 = vmatpush1.bf16.msra.mxu0 0
          %4351 = vmatprep.subr.bf16.mxu0 0
          %4352 = vmatpush1.bf16.msra.mxu0 0
          %4353 = vmatprep.subr.bf16.mxu0 0
          %4354 = vmatpush1.bf16.msra.mxu0 0
          %4355 = vmatprep.subr.bf16.mxu0 0
          %4356 = vmatpush1.bf16.msra.mxu0 0
          %4357 = vmatprep.subr.bf16.mxu0 0
          %4358 = vmatpush1.bf16.msra.mxu0 0
          %4359 = vmatprep.subr.bf16.mxu0 0
          %4360 = vmatpush1.bf16.msra.mxu0 0
          %4361 = vmatprep.subr.bf16.mxu0 0
          %4362 = vmatpush1.bf16.msra.mxu0 0
          %4363 = vmatprep.subr.bf16.mxu0 0
          %4364 = vmatpush1.bf16.msra.mxu0 0
          %4365 = vmatprep.subr.bf16.mxu0 0
          %4366 = vmatpush1.bf16.msra.mxu0 0
          %4367 = vmatprep.subr.bf16.mxu0 0
          %4368 = vmatpush1.bf16.msra.mxu0 0
          %4369 = vmatprep.mubr.bf16.mxu0 0
          %4370 = vmatmul.mubr.bf16.gmra.mrb[0].mxu0 %v4109
          %v4371 = vpop.f32.mrb[0].mxu0
          %v4372 = vadd.f32 0.0, %v4371
          %v4373 = vpop.f32.mrb[0].mxu0
          %v4374 = vpop.f32.mrb[0].mxu0
          %v4375 = vpop.f32.mrb[0].mxu0
          %4376 = vdwg.mxu0
          %v4377 = vmul.f32 %v4154, %v4372
          %v4378 = vpack.c.bf16 %v4377, %v4377
          %v4380 = vsel %vm4162, %v4378, 0
          %4382 = vmatprep.subr.bf16.mxu0 0
          %4383 = vmatpush1.bf16.msra.mxu0 %v4380
          %4384 = vmatprep.subr.bf16.mxu0 0
          %4385 = vmatpush1.bf16.msra.mxu0 0
          %4386 = vmatprep.subr.bf16.mxu0 0
          %4387 = vmatpush1.bf16.msra.mxu0 0
          %4388 = vmatprep.subr.bf16.mxu0 0
          %4389 = vmatpush1.bf16.msra.mxu0 0
          %4390 = vmatprep.subr.bf16.mxu0 0
          %4391 = vmatpush1.bf16.msra.mxu0 0
          %4392 = vmatprep.subr.bf16.mxu0 0
          %4393 = vmatpush1.bf16.msra.mxu0 0
          %4394 = vmatprep.subr.bf16.mxu0 0
          %4395 = vmatpush1.bf16.msra.mxu0 0
          %4396 = vmatprep.subr.bf16.mxu0 0
          %4397 = vmatpush1.bf16.msra.mxu0 0
          %4398 = vmatprep.subr.bf16.mxu0 0
          %4399 = vmatpush1.bf16.msra.mxu0 0
          %4400 = vmatprep.subr.bf16.mxu0 0
          %4401 = vmatpush1.bf16.msra.mxu0 0
          %4402 = vmatprep.subr.bf16.mxu0 0
          %4403 = vmatpush1.bf16.msra.mxu0 0
          %4404 = vmatprep.subr.bf16.mxu0 0
          %4405 = vmatpush1.bf16.msra.mxu0 0
          %4406 = vmatprep.subr.bf16.mxu0 0
          %4407 = vmatpush1.bf16.msra.mxu0 0
          %4408 = vmatprep.subr.bf16.mxu0 0
          %4409 = vmatpush1.bf16.msra.mxu0 0
          %4410 = vmatprep.subr.bf16.mxu0 0
          %4411 = vmatpush1.bf16.msra.mxu0 0
          %4412 = vmatprep.subr.bf16.mxu0 0
          %4413 = vmatpush1.bf16.msra.mxu0 0
          %4414 = vmatprep.mubr.bf16.mxu0 0
          %4415 = vmatmul.mubr.bf16.gmra.mrb[0].mxu0 %v4160
          %v4416 = vpop.f32.mrb[0].mxu0
          %v4417 = vadd.f32 0.0, %v4416
          %v4418 = vpop.f32.mrb[0].mxu0
          %v4419 = vpop.f32.mrb[0].mxu0
          %v4420 = vadd.f32 0.0, %v4419
          %v4421 = vpop.f32.mrb[0].mxu0
          %4422 = vdwg.mxu0
          %v4423 = vmul.f32 %v4210, %v4417
          %v4424 = vmul.f32 %v4215, %v4420
          %v4425 = vld [vmem:[%s15] sm:$0x1]
          %v4427 = vlaneseq
          %v4428 = vshrl.u32 %v4427, 7
          %v4429 = vsub.s32 0, %v4428
          %v4430 = vrot.slane %v4425, %v4429
          %v4432 = vadd.f32 %v4423, %v4430
          %v4433 = vadd.f32 %v4424, %v4430
          %v4434 = vld [vmem:[%s2] sm:$0x1]
          %v4435 = vpack.c.bf16 %v4433, %v4432
          %v4437 = vsel %vm4107, %v4434, 0
          %4439 = vmatprep.subr.bf16.mxu0 0
          %4440 = vmatpush1.bf16.msra.mxu0 %v4435
          %4441 = vmatprep.subr.bf16.mxu0 0
          %4442 = vmatpush1.bf16.msra.mxu0 0
          %4443 = vmatprep.subr.bf16.mxu0 0
          %4444 = vmatpush1.bf16.msra.mxu0 0
          %4445 = vmatprep.subr.bf16.mxu0 0
          %4446 = vmatpush1.bf16.msra.mxu0 0
          %4447 = vmatprep.subr.bf16.mxu0 0
          %4448 = vmatpush1.bf16.msra.mxu0 0
          %4449 = vmatprep.subr.bf16.mxu0 0
          %4450 = vmatpush1.bf16.msra.mxu0 0
          %4451 = vmatprep.subr.bf16.mxu0 0
          %4452 = vmatpush1.bf16.msra.mxu0 0
          %4453 = vmatprep.subr.bf16.mxu0 0
          %4454 = vmatpush1.bf16.msra.mxu0 0
          %4455 = vmatprep.subr.bf16.mxu0 0
          %4456 = vmatpush1.bf16.msra.mxu0 0
          %4457 = vmatprep.subr.bf16.mxu0 0
          %4458 = vmatpush1.bf16.msra.mxu0 0
          %4459 = vmatprep.subr.bf16.mxu0 0
          %4460 = vmatpush1.bf16.msra.mxu0 0
          %4461 = vmatprep.subr.bf16.mxu0 0
          %4462 = vmatpush1.bf16.msra.mxu0 0
          %4463 = vmatprep.subr.bf16.mxu0 0
          %4464 = vmatpush1.bf16.msra.mxu0 0
          %4465 = vmatprep.subr.bf16.mxu0 0
          %4466 = vmatpush1.bf16.msra.mxu0 0
          %4467 = vmatprep.subr.bf16.mxu0 0
          %4468 = vmatpush1.bf16.msra.mxu0 0
          %4469 = vmatprep.subr.bf16.mxu0 0
          %4470 = vmatpush1.bf16.msra.mxu0 0
          %4471 = vmatprep.mubr.bf16.mxu0 0
          %4472 = vmatmul.mubr.bf16.gmra.mrb[0].mxu0 %v4437
          %v4473 = vpop.f32.mrb[0].mxu0
          %v4474 = vadd.f32 0.0, %v4473
          %v4475 = vpop.f32.mrb[0].mxu0
          %v4476 = vpop.f32.mrb[0].mxu0
          %v4477 = vpop.f32.mrb[0].mxu0
          %4478 = vdwg.mxu0
          %s4479 = scalar_lea.vmem [#allocation2], 2
          %4480 = vst [vmem:[%s4479] sm:$0x3] %v4474
        $region144: #{tpu_custom_call.1} parent=119 // pred_fallthru
          _
        %p4481 = scmp.eq.s32.totalorder %s40, 2
        // Predicated region
        $region145: #{tpu_custom_call.1} parent=119 // pred_check
          %p4482 = pneg %p4481
        $region146: #{tpu_custom_call.1} parent=119 // pred_check_branch
          %4484 = sbr.rel (%p4482) target = $region148
        $region147: #{tpu_custom_call.1} parent=119 // pred_region
          %v4485 = vld [vmem:[#allocation2] sm:$0x3]
          %v4486 = vpack.c.bf16 %v4485, %v4485
          %s4487 = scalar_lea.vmem [#allocation2], 2
          %v4488 = vld [vmem:[%s4487] sm:$0x3]
          %v4489 = vpack.c.bf16 %v4488, %v4488
          %v4490 = vld [vmem:[%s16] sm:$0xf]
          %v4491 = vld [vmem:[#allocation8] sm:$0xff]
          %v4492 = vld [vmem:[#allocation8 + $0x8] sm:$0xff]
          %v4493 = vld [vmem:[#allocation8 + $0x10] sm:$0xff]
          %v4494 = vld [vmem:[#allocation8 + $0x18] sm:$0xff]
          %v4495 = vld [vmem:[#allocation8 + $0x20] sm:$0xff]
          %v4496 = vld [vmem:[#allocation8 + $0x28] sm:$0xff]
          %v4497 = vld [vmem:[#allocation8 + $0x30] sm:$0xff]
          %v4498 = vld [vmem:[#allocation8 + $0x38] sm:$0xff]
          %v4499 = vld [vmem:[#allocation8 + $0x40] sm:$0xff]
          %v4500 = vld [vmem:[#allocation8 + $0x48] sm:$0xff]
          %v4501 = vld [vmem:[#allocation8 + $0x50] sm:$0xff]
          %v4502 = vld [vmem:[#allocation8 + $0x58] sm:$0xff]
          %v4503 = vld [vmem:[#allocation8 + $0x60] sm:$0xff]
          %v4504 = vld [vmem:[#allocation8 + $0x68] sm:$0xff]
          %v4505 = vld [vmem:[#allocation8 + $0x70] sm:$0xff]
          %v4506 = vld [vmem:[#allocation8 + $0x78] sm:$0xff]
          %v4507 = vld [vmem:[#allocation8 + $0x80] sm:$0xff]
          %v4508 = vld [vmem:[#allocation8 + $0x88] sm:$0xff]
          %v4509 = vld [vmem:[#allocation8 + $0x90] sm:$0xff]
          %v4510 = vld [vmem:[#allocation8 + $0x98] sm:$0xff]
          %v4511 = vld [vmem:[#allocation8 + $0xa0] sm:$0xff]
          %v4512 = vld [vmem:[#allocation8 + $0xa8] sm:$0xff]
          %v4513 = vld [vmem:[#allocation8 + $0xb0] sm:$0xff]
          %v4514 = vld [vmem:[#allocation8 + $0xb8] sm:$0xff]
          %v4515 = vld [vmem:[#allocation8 + $0xc0] sm:$0xff]
          %v4516 = vld [vmem:[#allocation8 + $0xc8] sm:$0xff]
          %v4517 = vld [vmem:[#allocation8 + $0xd0] sm:$0xff]
          %v4518 = vld [vmem:[#allocation8 + $0xd8] sm:$0xff]
          %v4519 = vld [vmem:[#allocation8 + $0xe0] sm:$0xff]
          %v4520 = vld [vmem:[#allocation8 + $0xe8] sm:$0xff]
          %v4521 = vld [vmem:[#allocation8 + $0xf0] sm:$0xff]
          %v4522 = vld [vmem:[#allocation8 + $0xf8] sm:$0xff]
          %v4523 = vld [vmem:[#allocation8 + $0x100] sm:$0xff]
          %v4524 = vld [vmem:[#allocation8 + $0x108] sm:$0xff]
          %v4525 = vld [vmem:[#allocation8 + $0x110] sm:$0xff]
          %v4526 = vld [vmem:[#allocation8 + $0x118] sm:$0xff]
          %v4527 = vld [vmem:[#allocation8 + $0x120] sm:$0xff]
          %v4528 = vld [vmem:[#allocation8 + $0x128] sm:$0xff]
          %v4529 = vld [vmem:[#allocation8 + $0x130] sm:$0xff]
          %v4530 = vld [vmem:[#allocation8 + $0x138] sm:$0xff]
          %v4531 = vld [vmem:[#allocation8 + $0x140] sm:$0xff]
          %v4532 = vld [vmem:[#allocation8 + $0x148] sm:$0xff]
          %v4533 = vld [vmem:[#allocation8 + $0x150] sm:$0xff]
          %v4534 = vld [vmem:[#allocation8 + $0x158] sm:$0xff]
          %v4535 = vld [vmem:[#allocation8 + $0x160] sm:$0xff]
          %v4536 = vld [vmem:[#allocation8 + $0x168] sm:$0xff]
          %v4537 = vld [vmem:[#allocation8 + $0x170] sm:$0xff]
          %v4538 = vld [vmem:[#allocation8 + $0x178] sm:$0xff]
          %v4539 = vld [vmem:[#allocation8 + $0x180] sm:$0xff]
          %v4540 = vld [vmem:[#allocation8 + $0x188] sm:$0xff]
          %v4541 = vld [vmem:[#allocation8 + $0x190] sm:$0xff]
          %v4542 = vld [vmem:[#allocation8 + $0x198] sm:$0xff]
          %v4543 = vld [vmem:[#allocation8 + $0x1a0] sm:$0xff]
          %v4544 = vld [vmem:[#allocation8 + $0x1a8] sm:$0xff]
          %v4545 = vld [vmem:[#allocation8 + $0x1b0] sm:$0xff]
          %v4546 = vld [vmem:[#allocation8 + $0x1b8] sm:$0xff]
          %v4547 = vld [vmem:[#allocation8 + $0x1c0] sm:$0xff]
          %v4548 = vld [vmem:[#allocation8 + $0x1c8] sm:$0xff]
          %v4549 = vld [vmem:[#allocation8 + $0x1d0] sm:$0xff]
          %v4550 = vld [vmem:[#allocation8 + $0x1d8] sm:$0xff]
          %v4551 = vld [vmem:[#allocation8 + $0x1e0] sm:$0xff]
          %v4552 = vld [vmem:[#allocation8 + $0x1e8] sm:$0xff]
          %v4553 = vld [vmem:[#allocation8 + $0x1f0] sm:$0xff]
          %v4554 = vld [vmem:[#allocation8 + $0x1f8] sm:$0xff]
          %v4555 = vld [vmem:[#allocation8 + $0x200] sm:$0xff]
          %v4556 = vld [vmem:[#allocation8 + $0x208] sm:$0xff]
          %v4557 = vld [vmem:[#allocation8 + $0x210] sm:$0xff]
          %v4558 = vld [vmem:[#allocation8 + $0x218] sm:$0xff]
          %v4559 = vld [vmem:[#allocation8 + $0x220] sm:$0xff]
          %v4560 = vld [vmem:[#allocation8 + $0x228] sm:$0xff]
          %v4561 = vld [vmem:[#allocation8 + $0x230] sm:$0xff]
          %v4562 = vld [vmem:[#allocation8 + $0x238] sm:$0xff]
          %v4563 = vld [vmem:[#allocation8 + $0x240] sm:$0xff]
          %v4564 = vld [vmem:[#allocation8 + $0x248] sm:$0xff]
          %v4565 = vld [vmem:[#allocation8 + $0x250] sm:$0xff]
          %v4566 = vld [vmem:[#allocation8 + $0x258] sm:$0xff]
          %v4567 = vld [vmem:[#allocation8 + $0x260] sm:$0xff]
          %v4568 = vld [vmem:[#allocation8 + $0x268] sm:$0xff]
          %v4569 = vld [vmem:[#allocation8 + $0x270] sm:$0xff]
          %v4570 = vld [vmem:[#allocation8 + $0x278] sm:$0xff]
          %v4571 = vld [vmem:[#allocation8 + $0x280] sm:$0xff]
          %v4572 = vld [vmem:[#allocation8 + $0x288] sm:$0xff]
          %v4573 = vld [vmem:[#allocation8 + $0x290] sm:$0xff]
          %v4574 = vld [vmem:[#allocation8 + $0x298] sm:$0xff]
          %v4575 = vld [vmem:[#allocation8 + $0x2a0] sm:$0xff]
          %v4576 = vld [vmem:[#allocation8 + $0x2a8] sm:$0xff]
          %v4577 = vld [vmem:[#allocation8 + $0x2b0] sm:$0xff]
          %v4578 = vld [vmem:[#allocation8 + $0x2b8] sm:$0xff]
          %v4579 = vld [vmem:[#allocation8 + $0x2c0] sm:$0xff]
          %v4580 = vld [vmem:[#allocation8 + $0x2c8] sm:$0xff]
          %v4581 = vld [vmem:[#allocation8 + $0x2d0] sm:$0xff]
          %v4582 = vld [vmem:[#allocation8 + $0x2d8] sm:$0xff]
          %v4583 = vld [vmem:[#allocation8 + $0x2e0] sm:$0xff]
          %v4584 = vld [vmem:[#allocation8 + $0x2e8] sm:$0xff]
          %v4585 = vld [vmem:[#allocation8 + $0x2f0] sm:$0xff]
          %v4586 = vld [vmem:[#allocation8 + $0x2f8] sm:$0xff]
          %v4587 = vld [vmem:[#allocation8 + $0x300] sm:$0xff]
          %v4588 = vld [vmem:[#allocation8 + $0x308] sm:$0xff]
          %v4589 = vld [vmem:[#allocation8 + $0x310] sm:$0xff]
          %v4590 = vld [vmem:[#allocation8 + $0x318] sm:$0xff]
          %v4591 = vld [vmem:[#allocation8 + $0x320] sm:$0xff]
          %v4592 = vld [vmem:[#allocation8 + $0x328] sm:$0xff]
          %v4593 = vld [vmem:[#allocation8 + $0x330] sm:$0xff]
          %v4594 = vld [vmem:[#allocation8 + $0x338] sm:$0xff]
          %v4595 = vld [vmem:[#allocation8 + $0x340] sm:$0xff]
          %v4596 = vld [vmem:[#allocation8 + $0x348] sm:$0xff]
          %v4597 = vld [vmem:[#allocation8 + $0x350] sm:$0xff]
          %v4598 = vld [vmem:[#allocation8 + $0x358] sm:$0xff]
          %v4599 = vld [vmem:[#allocation8 + $0x360] sm:$0xff]
          %v4600 = vld [vmem:[#allocation8 + $0x368] sm:$0xff]
          %v4601 = vld [vmem:[#allocation8 + $0x370] sm:$0xff]
          %v4602 = vld [vmem:[#allocation8 + $0x378] sm:$0xff]
          %v4603 = vld [vmem:[#allocation8 + $0x380] sm:$0xff]
          %v4604 = vld [vmem:[#allocation8 + $0x388] sm:$0xff]
          %v4605 = vld [vmem:[#allocation8 + $0x390] sm:$0xff]
          %v4606 = vld [vmem:[#allocation8 + $0x398] sm:$0xff]
          %v4607 = vld [vmem:[#allocation8 + $0x3a0] sm:$0xff]
          %v4608 = vld [vmem:[#allocation8 + $0x3a8] sm:$0xff]
          %v4609 = vld [vmem:[#allocation8 + $0x3b0] sm:$0xff]
          %v4610 = vld [vmem:[#allocation8 + $0x3b8] sm:$0xff]
          %v4611 = vld [vmem:[#allocation8 + $0x3c0] sm:$0xff]
          %v4612 = vld [vmem:[#allocation8 + $0x3c8] sm:$0xff]
          %v4613 = vld [vmem:[#allocation8 + $0x3d0] sm:$0xff]
          %v4614 = vld [vmem:[#allocation8 + $0x3d8] sm:$0xff]
          %v4615 = vld [vmem:[#allocation8 + $0x3e0] sm:$0xff]
          %v4616 = vld [vmem:[#allocation8 + $0x3e8] sm:$0xff]
          %v4617 = vld [vmem:[#allocation8 + $0x3f0] sm:$0xff]
          %v4618 = vld [vmem:[#allocation8 + $0x3f8] sm:$0xff]
          %v4619 = vld [vmem:[%s17] sm:$0xf]
          %v4620 = vld [vmem:[#allocation10] sm:$0xff]
          %v4621 = vld [vmem:[#allocation10 + $0x8] sm:$0xff]
          %v4622 = vld [vmem:[#allocation10 + $0x10] sm:$0xff]
          %v4623 = vld [vmem:[#allocation10 + $0x18] sm:$0xff]
          %v4624 = vld [vmem:[#allocation10 + $0x20] sm:$0xff]
          %v4625 = vld [vmem:[#allocation10 + $0x28] sm:$0xff]
          %v4626 = vld [vmem:[#allocation10 + $0x30] sm:$0xff]
          %v4627 = vld [vmem:[#allocation10 + $0x38] sm:$0xff]
          %v4628 = vld [vmem:[#allocation10 + $0x40] sm:$0xff]
          %v4629 = vld [vmem:[#allocation10 + $0x48] sm:$0xff]
          %v4630 = vld [vmem:[#allocation10 + $0x50] sm:$0xff]
          %v4631 = vld [vmem:[#allocation10 + $0x58] sm:$0xff]
          %v4632 = vld [vmem:[#allocation10 + $0x60] sm:$0xff]
          %v4633 = vld [vmem:[#allocation10 + $0x68] sm:$0xff]
          %v4634 = vld [vmem:[#allocation10 + $0x70] sm:$0xff]
          %v4635 = vld [vmem:[#allocation10 + $0x78] sm:$0xff]
          %v4636 = vld [vmem:[#allocation10 + $0x80] sm:$0xff]
          %v4637 = vld [vmem:[#allocation10 + $0x88] sm:$0xff]
          %v4638 = vld [vmem:[#allocation10 + $0x90] sm:$0xff]
          %v4639 = vld [vmem:[#allocation10 + $0x98] sm:$0xff]
          %v4640 = vld [vmem:[#allocation10 + $0xa0] sm:$0xff]
          %v4641 = vld [vmem:[#allocation10 + $0xa8] sm:$0xff]
          %v4642 = vld [vmem:[#allocation10 + $0xb0] sm:$0xff]
          %v4643 = vld [vmem:[#allocation10 + $0xb8] sm:$0xff]
          %v4644 = vld [vmem:[#allocation10 + $0xc0] sm:$0xff]
          %v4645 = vld [vmem:[#allocation10 + $0xc8] sm:$0xff]
          %v4646 = vld [vmem:[#allocation10 + $0xd0] sm:$0xff]
          %v4647 = vld [vmem:[#allocation10 + $0xd8] sm:$0xff]
          %v4648 = vld [vmem:[#allocation10 + $0xe0] sm:$0xff]
          %v4649 = vld [vmem:[#allocation10 + $0xe8] sm:$0xff]
          %v4650 = vld [vmem:[#allocation10 + $0xf0] sm:$0xff]
          %v4651 = vld [vmem:[#allocation10 + $0xf8] sm:$0xff]
          %v4652 = vld [vmem:[#allocation10 + $0x100] sm:$0xff]
          %v4653 = vld [vmem:[#allocation10 + $0x108] sm:$0xff]
          %v4654 = vld [vmem:[#allocation10 + $0x110] sm:$0xff]
          %v4655 = vld [vmem:[#allocation10 + $0x118] sm:$0xff]
          %v4656 = vld [vmem:[#allocation10 + $0x120] sm:$0xff]
          %v4657 = vld [vmem:[#allocation10 + $0x128] sm:$0xff]
          %v4658 = vld [vmem:[#allocation10 + $0x130] sm:$0xff]
          %v4659 = vld [vmem:[#allocation10 + $0x138] sm:$0xff]
          %v4660 = vld [vmem:[#allocation10 + $0x140] sm:$0xff]
          %v4661 = vld [vmem:[#allocation10 + $0x148] sm:$0xff]
          %v4662 = vld [vmem:[#allocation10 + $0x150] sm:$0xff]
          %v4663 = vld [vmem:[#allocation10 + $0x158] sm:$0xff]
          %v4664 = vld [vmem:[#allocation10 + $0x160] sm:$0xff]
          %v4665 = vld [vmem:[#allocation10 + $0x168] sm:$0xff]
          %v4666 = vld [vmem:[#allocation10 + $0x170] sm:$0xff]
          %v4667 = vld [vmem:[#allocation10 + $0x178] sm:$0xff]
          %v4668 = vld [vmem:[#allocation10 + $0x180] sm:$0xff]
          %v4669 = vld [vmem:[#allocation10 + $0x188] sm:$0xff]
          %v4670 = vld [vmem:[#allocation10 + $0x190] sm:$0xff]
          %v4671 = vld [vmem:[#allocation10 + $0x198] sm:$0xff]
          %v4672 = vld [vmem:[#allocation10 + $0x1a0] sm:$0xff]
          %v4673 = vld [vmem:[#allocation10 + $0x1a8] sm:$0xff]
          %v4674 = vld [vmem:[#allocation10 + $0x1b0] sm:$0xff]
          %v4675 = vld [vmem:[#allocation10 + $0x1b8] sm:$0xff]
          %v4676 = vld [vmem:[#allocation10 + $0x1c0] sm:$0xff]
          %v4677 = vld [vmem:[#allocation10 + $0x1c8] sm:$0xff]
          %v4678 = vld [vmem:[#allocation10 + $0x1d0] sm:$0xff]
          %v4679 = vld [vmem:[#allocation10 + $0x1d8] sm:$0xff]
          %v4680 = vld [vmem:[#allocation10 + $0x1e0] sm:$0xff]
          %v4681 = vld [vmem:[#allocation10 + $0x1e8] sm:$0xff]
          %v4682 = vld [vmem:[#allocation10 + $0x1f0] sm:$0xff]
          %v4683 = vld [vmem:[#allocation10 + $0x1f8] sm:$0xff]
          %v4684 = vld [vmem:[#allocation10 + $0x200] sm:$0xff]
          %v4685 = vld [vmem:[#allocation10 + $0x208] sm:$0xff]
          %v4686 = vld [vmem:[#allocation10 + $0x210] sm:$0xff]
          %v4687 = vld [vmem:[#allocation10 + $0x218] sm:$0xff]
          %v4688 = vld [vmem:[#allocation10 + $0x220] sm:$0xff]
          %v4689 = vld [vmem:[#allocation10 + $0x228] sm:$0xff]
          %v4690 = vld [vmem:[#allocation10 + $0x230] sm:$0xff]
          %v4691 = vld [vmem:[#allocation10 + $0x238] sm:$0xff]
          %v4692 = vld [vmem:[#allocation10 + $0x240] sm:$0xff]
          %v4693 = vld [vmem:[#allocation10 + $0x248] sm:$0xff]
          %v4694 = vld [vmem:[#allocation10 + $0x250] sm:$0xff]
          %v4695 = vld [vmem:[#allocation10 + $0x258] sm:$0xff]
          %v4696 = vld [vmem:[#allocation10 + $0x260] sm:$0xff]
          %v4697 = vld [vmem:[#allocation10 + $0x268] sm:$0xff]
          %v4698 = vld [vmem:[#allocation10 + $0x270] sm:$0xff]
          %v4699 = vld [vmem:[#allocation10 + $0x278] sm:$0xff]
          %v4700 = vld [vmem:[#allocation10 + $0x280] sm:$0xff]
          %v4701 = vld [vmem:[#allocation10 + $0x288] sm:$0xff]
          %v4702 = vld [vmem:[#allocation10 + $0x290] sm:$0xff]
          %v4703 = vld [vmem:[#allocation10 + $0x298] sm:$0xff]
          %v4704 = vld [vmem:[#allocation10 + $0x2a0] sm:$0xff]
          %v4705 = vld [vmem:[#allocation10 + $0x2a8] sm:$0xff]
          %v4706 = vld [vmem:[#allocation10 + $0x2b0] sm:$0xff]
          %v4707 = vld [vmem:[#allocation10 + $0x2b8] sm:$0xff]
          %v4708 = vld [vmem:[#allocation10 + $0x2c0] sm:$0xff]
          %v4709 = vld [vmem:[#allocation10 + $0x2c8] sm:$0xff]
          %v4710 = vld [vmem:[#allocation10 + $0x2d0] sm:$0xff]
          %v4711 = vld [vmem:[#allocation10 + $0x2d8] sm:$0xff]
          %v4712 = vld [vmem:[#allocation10 + $0x2e0] sm:$0xff]
          %v4713 = vld [vmem:[#allocation10 + $0x2e8] sm:$0xff]
          %v4714 = vld [vmem:[#allocation10 + $0x2f0] sm:$0xff]
          %v4715 = vld [vmem:[#allocation10 + $0x2f8] sm:$0xff]
          %v4716 = vld [vmem:[#allocation10 + $0x300] sm:$0xff]
          %v4717 = vld [vmem:[#allocation10 + $0x308] sm:$0xff]
          %v4718 = vld [vmem:[#allocation10 + $0x310] sm:$0xff]
          %v4719 = vld [vmem:[#allocation10 + $0x318] sm:$0xff]
          %v4720 = vld [vmem:[#allocation10 + $0x320] sm:$0xff]
          %v4721 = vld [vmem:[#allocation10 + $0x328] sm:$0xff]
          %v4722 = vld [vmem:[#allocation10 + $0x330] sm:$0xff]
          %v4723 = vld [vmem:[#allocation10 + $0x338] sm:$0xff]
          %v4724 = vld [vmem:[#allocation10 + $0x340] sm:$0xff]
          %v4725 = vld [vmem:[#allocation10 + $0x348] sm:$0xff]
          %v4726 = vld [vmem:[#allocation10 + $0x350] sm:$0xff]
          %v4727 = vld [vmem:[#allocation10 + $0x358] sm:$0xff]
          %v4728 = vld [vmem:[#allocation10 + $0x360] sm:$0xff]
          %v4729 = vld [vmem:[#allocation10 + $0x368] sm:$0xff]
          %v4730 = vld [vmem:[#allocation10 + $0x370] sm:$0xff]
          %v4731 = vld [vmem:[#allocation10 + $0x378] sm:$0xff]
          %v4732 = vld [vmem:[#allocation10 + $0x380] sm:$0xff]
          %v4733 = vld [vmem:[#allocation10 + $0x388] sm:$0xff]
          %v4734 = vld [vmem:[#allocation10 + $0x390] sm:$0xff]
          %v4735 = vld [vmem:[#allocation10 + $0x398] sm:$0xff]
          %v4736 = vld [vmem:[#allocation10 + $0x3a0] sm:$0xff]
          %v4737 = vld [vmem:[#allocation10 + $0x3a8] sm:$0xff]
          %v4738 = vld [vmem:[#allocation10 + $0x3b0] sm:$0xff]
          %v4739 = vld [vmem:[#allocation10 + $0x3b8] sm:$0xff]
          %v4740 = vld [vmem:[#allocation10 + $0x3c0] sm:$0xff]
          %v4741 = vld [vmem:[#allocation10 + $0x3c8] sm:$0xff]
          %v4742 = vld [vmem:[#allocation10 + $0x3d0] sm:$0xff]
          %v4743 = vld [vmem:[#allocation10 + $0x3d8] sm:$0xff]
          %v4744 = vld [vmem:[#allocation10 + $0x3e0] sm:$0xff]
          %v4745 = vld [vmem:[#allocation10 + $0x3e8] sm:$0xff]
          %v4746 = vld [vmem:[#allocation10 + $0x3f0] sm:$0xff]
          %v4747 = vld [vmem:[#allocation10 + $0x3f8] sm:$0xff]
          %v4750 = vunpack.c.l.s4 1966171168
          %v4751 = vunpack.c.0.s8 %v4750
          %v4752 = vlaneseq
          %v4753 = vshrl.u32 %v4752, 7
          %v4754 = vsub.s32 %v4751, %v4753
          %v4755 = vrot.slane %v4619, %v4754
          %v4756 = vcombine.high %v4755, %v4755
          %v4758 = vunpack.c.l.s4 1966171168
          %v4759 = vunpack.c.0.s8 %v4758
          %v4760 = vlaneseq
          %v4761 = vshrl.u32 %v4760, 7
          %v4762 = vsub.s32 %v4759, %v4761
          %v4763 = vrot.slane %v4755, %v4762
          %v4765 = vunpack.c.l.s4 1966171168
          %v4766 = vunpack.c.0.s8 %v4765
          %v4767 = vlaneseq
          %v4768 = vshrl.u32 %v4767, 7
          %v4769 = vsub.s32 %v4766, %v4768
          %v4770 = vrot.slane %v4756, %v4769
          %v4771 = vcombine.high %v4763, %v4763
          %v4772 = vcombine.high %v4770, %v4770
          %v4905 = vunpack.c.l.b16 %v4620
          %v4906 = vunpack.c.h.b16 %v4620
          %v4907 = vunpack.c.l.b16 %v4621
          %v4908 = vunpack.c.h.b16 %v4621
          %v4909 = vunpack.c.l.b16 %v4622
          %v4910 = vunpack.c.h.b16 %v4622
          %v4911 = vunpack.c.l.b16 %v4623
          %v4912 = vunpack.c.h.b16 %v4623
          %v4913 = vunpack.c.l.b16 %v4624
          %v4914 = vunpack.c.h.b16 %v4624
          %v4915 = vunpack.c.l.b16 %v4625
          %v4916 = vunpack.c.h.b16 %v4625
          %v4917 = vunpack.c.l.b16 %v4626
          %v4918 = vunpack.c.h.b16 %v4626
          %v4919 = vunpack.c.l.b16 %v4627
          %v4920 = vunpack.c.h.b16 %v4627
          %v4921 = vunpack.c.l.b16 %v4628
          %v4922 = vunpack.c.h.b16 %v4628
          %v4923 = vunpack.c.l.b16 %v4629
          %v4924 = vunpack.c.h.b16 %v4629
          %v4925 = vunpack.c.l.b16 %v4630
          %v4926 = vunpack.c.h.b16 %v4630
          %v4927 = vunpack.c.l.b16 %v4631
          %v4928 = vunpack.c.h.b16 %v4631
          %v4929 = vunpack.c.l.b16 %v4632
          %v4930 = vunpack.c.h.b16 %v4632
          %v4931 = vunpack.c.l.b16 %v4633
          %v4932 = vunpack.c.h.b16 %v4633
          %v4933 = vunpack.c.l.b16 %v4634
          %v4934 = vunpack.c.h.b16 %v4634
          %v4935 = vunpack.c.l.b16 %v4635
          %v4936 = vunpack.c.h.b16 %v4635
          %v4937 = vunpack.c.l.b16 %v4636
          %v4938 = vunpack.c.h.b16 %v4636
          %v4939 = vunpack.c.l.b16 %v4637
          %v4940 = vunpack.c.h.b16 %v4637
          %v4941 = vunpack.c.l.b16 %v4638
          %v4942 = vunpack.c.h.b16 %v4638
          %v4943 = vunpack.c.l.b16 %v4639
          %v4944 = vunpack.c.h.b16 %v4639
          %v4945 = vunpack.c.l.b16 %v4640
          %v4946 = vunpack.c.h.b16 %v4640
          %v4947 = vunpack.c.l.b16 %v4641
          %v4948 = vunpack.c.h.b16 %v4641
          %v4949 = vunpack.c.l.b16 %v4642
          %v4950 = vunpack.c.h.b16 %v4642
          %v4951 = vunpack.c.l.b16 %v4643
          %v4952 = vunpack.c.h.b16 %v4643
          %v4953 = vunpack.c.l.b16 %v4644
          %v4954 = vunpack.c.h.b16 %v4644
          %v4955 = vunpack.c.l.b16 %v4645
          %v4956 = vunpack.c.h.b16 %v4645
          %v4957 = vunpack.c.l.b16 %v4646
          %v4958 = vunpack.c.h.b16 %v4646
          %v4959 = vunpack.c.l.b16 %v4647
          %v4960 = vunpack.c.h.b16 %v4647
          %v4961 = vunpack.c.l.b16 %v4648
          %v4962 = vunpack.c.h.b16 %v4648
          %v4963 = vunpack.c.l.b16 %v4649
          %v4964 = vunpack.c.h.b16 %v4649
          %v4965 = vunpack.c.l.b16 %v4650
          %v4966 = vunpack.c.h.b16 %v4650
          %v4967 = vunpack.c.l.b16 %v4651
          %v4968 = vunpack.c.h.b16 %v4651
          %v4969 = vunpack.c.l.b16 %v4652
          %v4970 = vunpack.c.h.b16 %v4652
          %v4971 = vunpack.c.l.b16 %v4653
          %v4972 = vunpack.c.h.b16 %v4653
          %v4973 = vunpack.c.l.b16 %v4654
          %v4974 = vunpack.c.h.b16 %v4654
          %v4975 = vunpack.c.l.b16 %v4655
          %v4976 = vunpack.c.h.b16 %v4655
          %v4977 = vunpack.c.l.b16 %v4656
          %v4978 = vunpack.c.h.b16 %v4656
          %v4979 = vunpack.c.l.b16 %v4657
          %v4980 = vunpack.c.h.b16 %v4657
          %v4981 = vunpack.c.l.b16 %v4658
          %v4982 = vunpack.c.h.b16 %v4658
          %v4983 = vunpack.c.l.b16 %v4659
          %v4984 = vunpack.c.h.b16 %v4659
          %v4985 = vunpack.c.l.b16 %v4660
          %v4986 = vunpack.c.h.b16 %v4660
          %v4987 = vunpack.c.l.b16 %v4661
          %v4988 = vunpack.c.h.b16 %v4661
          %v4989 = vunpack.c.l.b16 %v4662
          %v4990 = vunpack.c.h.b16 %v4662
          %v4991 = vunpack.c.l.b16 %v4663
          %v4992 = vunpack.c.h.b16 %v4663
          %v4993 = vunpack.c.l.b16 %v4664
          %v4994 = vunpack.c.h.b16 %v4664
          %v4995 = vunpack.c.l.b16 %v4665
          %v4996 = vunpack.c.h.b16 %v4665
          %v4997 = vunpack.c.l.b16 %v4666
          %v4998 = vunpack.c.h.b16 %v4666
          %v4999 = vunpack.c.l.b16 %v4667
          %v5000 = vunpack.c.h.b16 %v4667
          %v5001 = vunpack.c.l.b16 %v4668
          %v5002 = vunpack.c.h.b16 %v4668
          %v5003 = vunpack.c.l.b16 %v4669
          %v5004 = vunpack.c.h.b16 %v4669
          %v5005 = vunpack.c.l.b16 %v4670
          %v5006 = vunpack.c.h.b16 %v4670
          %v5007 = vunpack.c.l.b16 %v4671
          %v5008 = vunpack.c.h.b16 %v4671
          %v5009 = vunpack.c.l.b16 %v4672
          %v5010 = vunpack.c.h.b16 %v4672
          %v5011 = vunpack.c.l.b16 %v4673
          %v5012 = vunpack.c.h.b16 %v4673
          %v5013 = vunpack.c.l.b16 %v4674
          %v5014 = vunpack.c.h.b16 %v4674
          %v5015 = vunpack.c.l.b16 %v4675
          %v5016 = vunpack.c.h.b16 %v4675
          %v5017 = vunpack.c.l.b16 %v4676
          %v5018 = vunpack.c.h.b16 %v4676
          %v5019 = vunpack.c.l.b16 %v4677
          %v5020 = vunpack.c.h.b16 %v4677
          %v5021 = vunpack.c.l.b16 %v4678
          %v5022 = vunpack.c.h.b16 %v4678
          %v5023 = vunpack.c.l.b16 %v4679
          %v5024 = vunpack.c.h.b16 %v4679
          %v5025 = vunpack.c.l.b16 %v4680
          %v5026 = vunpack.c.h.b16 %v4680
          %v5027 = vunpack.c.l.b16 %v4681
          %v5028 = vunpack.c.h.b16 %v4681
          %v5029 = vunpack.c.l.b16 %v4682
          %v5030 = vunpack.c.h.b16 %v4682
          %v5031 = vunpack.c.l.b16 %v4683
          %v5032 = vunpack.c.h.b16 %v4683
          %v5033 = vunpack.c.l.b16 %v4684
          %v5034 = vunpack.c.h.b16 %v4684
          %v5035 = vunpack.c.l.b16 %v4685
          %v5036 = vunpack.c.h.b16 %v4685
          %v5037 = vunpack.c.l.b16 %v4686
          %v5038 = vunpack.c.h.b16 %v4686
          %v5039 = vunpack.c.l.b16 %v4687
          %v5040 = vunpack.c.h.b16 %v4687
          %v5041 = vunpack.c.l.b16 %v4688
          %v5042 = vunpack.c.h.b16 %v4688
          %v5043 = vunpack.c.l.b16 %v4689
          %v5044 = vunpack.c.h.b16 %v4689
          %v5045 = vunpack.c.l.b16 %v4690
          %v5046 = vunpack.c.h.b16 %v4690
          %v5047 = vunpack.c.l.b16 %v4691
          %v5048 = vunpack.c.h.b16 %v4691
          %v5049 = vunpack.c.l.b16 %v4692
          %v5050 = vunpack.c.h.b16 %v4692
          %v5051 = vunpack.c.l.b16 %v4693
          %v5052 = vunpack.c.h.b16 %v4693
          %v5053 = vunpack.c.l.b16 %v4694
          %v5054 = vunpack.c.h.b16 %v4694
          %v5055 = vunpack.c.l.b16 %v4695
          %v5056 = vunpack.c.h.b16 %v4695
          %v5057 = vunpack.c.l.b16 %v4696
          %v5058 = vunpack.c.h.b16 %v4696
          %v5059 = vunpack.c.l.b16 %v4697
          %v5060 = vunpack.c.h.b16 %v4697
          %v5061 = vunpack.c.l.b16 %v4698
          %v5062 = vunpack.c.h.b16 %v4698
          %v5063 = vunpack.c.l.b16 %v4699
          %v5064 = vunpack.c.h.b16 %v4699
          %v5065 = vunpack.c.l.b16 %v4700
          %v5066 = vunpack.c.h.b16 %v4700
          %v5067 = vunpack.c.l.b16 %v4701
          %v5068 = vunpack.c.h.b16 %v4701
          %v5069 = vunpack.c.l.b16 %v4702
          %v5070 = vunpack.c.h.b16 %v4702
          %v5071 = vunpack.c.l.b16 %v4703
          %v5072 = vunpack.c.h.b16 %v4703
          %v5073 = vunpack.c.l.b16 %v4704
          %v5074 = vunpack.c.h.b16 %v4704
          %v5075 = vunpack.c.l.b16 %v4705
          %v5076 = vunpack.c.h.b16 %v4705
          %v5077 = vunpack.c.l.b16 %v4706
          %v5078 = vunpack.c.h.b16 %v4706
          %v5079 = vunpack.c.l.b16 %v4707
          %v5080 = vunpack.c.h.b16 %v4707
          %v5081 = vunpack.c.l.b16 %v4708
          %v5082 = vunpack.c.h.b16 %v4708
          %v5083 = vunpack.c.l.b16 %v4709
          %v5084 = vunpack.c.h.b16 %v4709
          %v5085 = vunpack.c.l.b16 %v4710
          %v5086 = vunpack.c.h.b16 %v4710
          %v5087 = vunpack.c.l.b16 %v4711
          %v5088 = vunpack.c.h.b16 %v4711
          %v5089 = vunpack.c.l.b16 %v4712
          %v5090 = vunpack.c.h.b16 %v4712
          %v5091 = vunpack.c.l.b16 %v4713
          %v5092 = vunpack.c.h.b16 %v4713
          %v5093 = vunpack.c.l.b16 %v4714
          %v5094 = vunpack.c.h.b16 %v4714
          %v5095 = vunpack.c.l.b16 %v4715
          %v5096 = vunpack.c.h.b16 %v4715
          %v5097 = vunpack.c.l.b16 %v4716
          %v5098 = vunpack.c.h.b16 %v4716
          %v5099 = vunpack.c.l.b16 %v4717
          %v5100 = vunpack.c.h.b16 %v4717
          %v5101 = vunpack.c.l.b16 %v4718
          %v5102 = vunpack.c.h.b16 %v4718
          %v5103 = vunpack.c.l.b16 %v4719
          %v5104 = vunpack.c.h.b16 %v4719
          %v5105 = vunpack.c.l.b16 %v4720
          %v5106 = vunpack.c.h.b16 %v4720
          %v5107 = vunpack.c.l.b16 %v4721
          %v5108 = vunpack.c.h.b16 %v4721
          %v5109 = vunpack.c.l.b16 %v4722
          %v5110 = vunpack.c.h.b16 %v4722
          %v5111 = vunpack.c.l.b16 %v4723
          %v5112 = vunpack.c.h.b16 %v4723
          %v5113 = vunpack.c.l.b16 %v4724
          %v5114 = vunpack.c.h.b16 %v4724
          %v5115 = vunpack.c.l.b16 %v4725
          %v5116 = vunpack.c.h.b16 %v4725
          %v5117 = vunpack.c.l.b16 %v4726
          %v5118 = vunpack.c.h.b16 %v4726
          %v5119 = vunpack.c.l.b16 %v4727
          %v5120 = vunpack.c.h.b16 %v4727
          %v5121 = vunpack.c.l.b16 %v4728
          %v5122 = vunpack.c.h.b16 %v4728
          %v5123 = vunpack.c.l.b16 %v4729
          %v5124 = vunpack.c.h.b16 %v4729
          %v5125 = vunpack.c.l.b16 %v4730
          %v5126 = vunpack.c.h.b16 %v4730
          %v5127 = vunpack.c.l.b16 %v4731
          %v5128 = vunpack.c.h.b16 %v4731
          %v5129 = vunpack.c.l.b16 %v4732
          %v5130 = vunpack.c.h.b16 %v4732
          %v5131 = vunpack.c.l.b16 %v4733
          %v5132 = vunpack.c.h.b16 %v4733
          %v5133 = vunpack.c.l.b16 %v4734
          %v5134 = vunpack.c.h.b16 %v4734
          %v5135 = vunpack.c.l.b16 %v4735
          %v5136 = vunpack.c.h.b16 %v4735
          %v5137 = vunpack.c.l.b16 %v4736
          %v5138 = vunpack.c.h.b16 %v4736
          %v5139 = vunpack.c.l.b16 %v4737
          %v5140 = vunpack.c.h.b16 %v4737
          %v5141 = vunpack.c.l.b16 %v4738
          %v5142 = vunpack.c.h.b16 %v4738
          %v5143 = vunpack.c.l.b16 %v4739
          %v5144 = vunpack.c.h.b16 %v4739
          %v5145 = vunpack.c.l.b16 %v4740
          %v5146 = vunpack.c.h.b16 %v4740
          %v5147 = vunpack.c.l.b16 %v4741
          %v5148 = vunpack.c.h.b16 %v4741
          %v5149 = vunpack.c.l.b16 %v4742
          %v5150 = vunpack.c.h.b16 %v4742
          %v5151 = vunpack.c.l.b16 %v4743
          %v5152 = vunpack.c.h.b16 %v4743
          %v5153 = vunpack.c.l.b16 %v4744
          %v5154 = vunpack.c.h.b16 %v4744
          %v5155 = vunpack.c.l.b16 %v4745
          %v5156 = vunpack.c.h.b16 %v4745
          %v5157 = vunpack.c.l.b16 %v4746
          %v5158 = vunpack.c.h.b16 %v4746
          %v5159 = vunpack.c.l.b16 %v4747
          %v5160 = vunpack.c.h.b16 %v4747
          %v5161 = vpack.c.b16 %v4909, %v4905
          %v5162 = vpack.c.b16 %v4910, %v4906
          %v5163 = vpack.c.b16 %v4911, %v4907
          %v5164 = vpack.c.b16 %v4912, %v4908
          %v5165 = vpack.c.b16 %v4917, %v4913
          %v5166 = vpack.c.b16 %v4918, %v4914
          %v5167 = vpack.c.b16 %v4919, %v4915
          %v5168 = vpack.c.b16 %v4920, %v4916
          %v5169 = vpack.c.b16 %v4925, %v4921
          %v5170 = vpack.c.b16 %v4926, %v4922
          %v5171 = vpack.c.b16 %v4927, %v4923
          %v5172 = vpack.c.b16 %v4928, %v4924
          %v5173 = vpack.c.b16 %v4933, %v4929
          %v5174 = vpack.c.b16 %v4934, %v4930
          %v5175 = vpack.c.b16 %v4935, %v4931
          %v5176 = vpack.c.b16 %v4936, %v4932
          %v5177 = vpack.c.b16 %v4941, %v4937
          %v5178 = vpack.c.b16 %v4942, %v4938
          %v5179 = vpack.c.b16 %v4943, %v4939
          %v5180 = vpack.c.b16 %v4944, %v4940
          %v5181 = vpack.c.b16 %v4949, %v4945
          %v5182 = vpack.c.b16 %v4950, %v4946
          %v5183 = vpack.c.b16 %v4951, %v4947
          %v5184 = vpack.c.b16 %v4952, %v4948
          %v5185 = vpack.c.b16 %v4957, %v4953
          %v5186 = vpack.c.b16 %v4958, %v4954
          %v5187 = vpack.c.b16 %v4959, %v4955
          %v5188 = vpack.c.b16 %v4960, %v4956
          %v5189 = vpack.c.b16 %v4965, %v4961
          %v5190 = vpack.c.b16 %v4966, %v4962
          %v5191 = vpack.c.b16 %v4967, %v4963
          %v5192 = vpack.c.b16 %v4968, %v4964
          %v5193 = vpack.c.b16 %v4973, %v4969
          %v5194 = vpack.c.b16 %v4974, %v4970
          %v5195 = vpack.c.b16 %v4975, %v4971
          %v5196 = vpack.c.b16 %v4976, %v4972
          %v5197 = vpack.c.b16 %v4981, %v4977
          %v5198 = vpack.c.b16 %v4982, %v4978
          %v5199 = vpack.c.b16 %v4983, %v4979
          %v5200 = vpack.c.b16 %v4984, %v4980
          %v5201 = vpack.c.b16 %v4989, %v4985
          %v5202 = vpack.c.b16 %v4990, %v4986
          %v5203 = vpack.c.b16 %v4991, %v4987
          %v5204 = vpack.c.b16 %v4992, %v4988
          %v5205 = vpack.c.b16 %v4997, %v4993
          %v5206 = vpack.c.b16 %v4998, %v4994
          %v5207 = vpack.c.b16 %v4999, %v4995
          %v5208 = vpack.c.b16 %v5000, %v4996
          %v5209 = vpack.c.b16 %v5005, %v5001
          %v5210 = vpack.c.b16 %v5006, %v5002
          %v5211 = vpack.c.b16 %v5007, %v5003
          %v5212 = vpack.c.b16 %v5008, %v5004
          %v5213 = vpack.c.b16 %v5013, %v5009
          %v5214 = vpack.c.b16 %v5014, %v5010
          %v5215 = vpack.c.b16 %v5015, %v5011
          %v5216 = vpack.c.b16 %v5016, %v5012
          %v5217 = vpack.c.b16 %v5021, %v5017
          %v5218 = vpack.c.b16 %v5022, %v5018
          %v5219 = vpack.c.b16 %v5023, %v5019
          %v5220 = vpack.c.b16 %v5024, %v5020
          %v5221 = vpack.c.b16 %v5029, %v5025
          %v5222 = vpack.c.b16 %v5030, %v5026
          %v5223 = vpack.c.b16 %v5031, %v5027
          %v5224 = vpack.c.b16 %v5032, %v5028
          %v5225 = vpack.c.b16 %v5037, %v5033
          %v5226 = vpack.c.b16 %v5038, %v5034
          %v5227 = vpack.c.b16 %v5039, %v5035
          %v5228 = vpack.c.b16 %v5040, %v5036
          %v5229 = vpack.c.b16 %v5045, %v5041
          %v5230 = vpack.c.b16 %v5046, %v5042
          %v5231 = vpack.c.b16 %v5047, %v5043
          %v5232 = vpack.c.b16 %v5048, %v5044
          %v5233 = vpack.c.b16 %v5053, %v5049
          %v5234 = vpack.c.b16 %v5054, %v5050
          %v5235 = vpack.c.b16 %v5055, %v5051
          %v5236 = vpack.c.b16 %v5056, %v5052
          %v5237 = vpack.c.b16 %v5061, %v5057
          %v5238 = vpack.c.b16 %v5062, %v5058
          %v5239 = vpack.c.b16 %v5063, %v5059
          %v5240 = vpack.c.b16 %v5064, %v5060
          %v5241 = vpack.c.b16 %v5069, %v5065
          %v5242 = vpack.c.b16 %v5070, %v5066
          %v5243 = vpack.c.b16 %v5071, %v5067
          %v5244 = vpack.c.b16 %v5072, %v5068
          %v5245 = vpack.c.b16 %v5077, %v5073
          %v5246 = vpack.c.b16 %v5078, %v5074
          %v5247 = vpack.c.b16 %v5079, %v5075
          %v5248 = vpack.c.b16 %v5080, %v5076
          %v5249 = vpack.c.b16 %v5085, %v5081
          %v5250 = vpack.c.b16 %v5086, %v5082
          %v5251 = vpack.c.b16 %v5087, %v5083
          %v5252 = vpack.c.b16 %v5088, %v5084
          %v5253 = vpack.c.b16 %v5093, %v5089
          %v5254 = vpack.c.b16 %v5094, %v5090
          %v5255 = vpack.c.b16 %v5095, %v5091
          %v5256 = vpack.c.b16 %v5096, %v5092
          %v5257 = vpack.c.b16 %v5101, %v5097
          %v5258 = vpack.c.b16 %v5102, %v5098
          %v5259 = vpack.c.b16 %v5103, %v5099
          %v5260 = vpack.c.b16 %v5104, %v5100
          %v5261 = vpack.c.b16 %v5109, %v5105
          %v5262 = vpack.c.b16 %v5110, %v5106
          %v5263 = vpack.c.b16 %v5111, %v5107
          %v5264 = vpack.c.b16 %v5112, %v5108
          %v5265 = vpack.c.b16 %v5117, %v5113
          %v5266 = vpack.c.b16 %v5118, %v5114
          %v5267 = vpack.c.b16 %v5119, %v5115
          %v5268 = vpack.c.b16 %v5120, %v5116
          %v5269 = vpack.c.b16 %v5125, %v5121
          %v5270 = vpack.c.b16 %v5126, %v5122
          %v5271 = vpack.c.b16 %v5127, %v5123
          %v5272 = vpack.c.b16 %v5128, %v5124
          %v5273 = vpack.c.b16 %v5133, %v5129
          %v5274 = vpack.c.b16 %v5134, %v5130
          %v5275 = vpack.c.b16 %v5135, %v5131
          %v5276 = vpack.c.b16 %v5136, %v5132
          %v5277 = vpack.c.b16 %v5141, %v5137
          %v5278 = vpack.c.b16 %v5142, %v5138
          %v5279 = vpack.c.b16 %v5143, %v5139
          %v5280 = vpack.c.b16 %v5144, %v5140
          %v5281 = vpack.c.b16 %v5149, %v5145
          %v5282 = vpack.c.b16 %v5150, %v5146
          %v5283 = vpack.c.b16 %v5151, %v5147
          %v5284 = vpack.c.b16 %v5152, %v5148
          %v5285 = vpack.c.b16 %v5157, %v5153
          %v5286 = vpack.c.b16 %v5158, %v5154
          %v5287 = vpack.c.b16 %v5159, %v5155
          %v5288 = vpack.c.b16 %v5160, %v5156
          %5417 = vmatprep.subr.bf16.mxu0 %v5162
          %5418 = vmatpush1.bf16.msra.mxu0 %v5161
          %5419 = vmatprep.subr.bf16.mxu0 %v5166
          %5420 = vmatpush1.bf16.msra.mxu0 %v5165
          %5421 = vmatprep.subr.bf16.mxu0 %v5170
          %5422 = vmatpush1.bf16.msra.mxu0 %v5169
          %5423 = vmatprep.subr.bf16.mxu0 %v5174
          %5424 = vmatpush1.bf16.msra.mxu0 %v5173
          %5425 = vmatprep.subr.bf16.mxu0 %v5178
          %5426 = vmatpush1.bf16.msra.mxu0 %v5177
          %5427 = vmatprep.subr.bf16.mxu0 %v5182
          %5428 = vmatpush1.bf16.msra.mxu0 %v5181
          %5429 = vmatprep.subr.bf16.mxu0 %v5186
          %5430 = vmatpush1.bf16.msra.mxu0 %v5185
          %5431 = vmatprep.subr.bf16.mxu0 %v5190
          %5432 = vmatpush1.bf16.msra.mxu0 %v5189
          %5433 = vmatprep.subr.bf16.mxu0 %v5194
          %5434 = vmatpush1.bf16.msra.mxu0 %v5193
          %5435 = vmatprep.subr.bf16.mxu0 %v5198
          %5436 = vmatpush1.bf16.msra.mxu0 %v5197
          %5437 = vmatprep.subr.bf16.mxu0 %v5202
          %5438 = vmatpush1.bf16.msra.mxu0 %v5201
          %5439 = vmatprep.subr.bf16.mxu0 %v5206
          %5440 = vmatpush1.bf16.msra.mxu0 %v5205
          %5441 = vmatprep.subr.bf16.mxu0 %v5210
          %5442 = vmatpush1.bf16.msra.mxu0 %v5209
          %5443 = vmatprep.subr.bf16.mxu0 %v5214
          %5444 = vmatpush1.bf16.msra.mxu0 %v5213
          %5445 = vmatprep.subr.bf16.mxu0 %v5218
          %5446 = vmatpush1.bf16.msra.mxu0 %v5217
          %5447 = vmatprep.subr.bf16.mxu0 %v5222
          %5448 = vmatpush1.bf16.msra.mxu0 %v5221
          %5449 = vmatprep.mubr.bf16.mxu0 %v4770
          %5450 = vmatmul.mubr.bf16.gmra.mrb[0].mxu0 %v4763
          %v5451 = vpop.f32.mrb[0].mxu0
          %v5452 = vadd.f32 0.0, %v5451
          %v5453 = vpop.f32.mrb[0].mxu0
          %v5454 = vadd.f32 0.0, %v5453
          %v5455 = vpop.f32.mrb[0].mxu0
          %v5456 = vpop.f32.mrb[0].mxu0
          %5457 = vdwg.mxu0
          %5458 = vmatprep.subr.bf16.mxu0 %v5226
          %5459 = vmatpush1.bf16.msra.mxu0 %v5225
          %5460 = vmatprep.subr.bf16.mxu0 %v5230
          %5461 = vmatpush1.bf16.msra.mxu0 %v5229
          %5462 = vmatprep.subr.bf16.mxu0 %v5234
          %5463 = vmatpush1.bf16.msra.mxu0 %v5233
          %5464 = vmatprep.subr.bf16.mxu0 %v5238
          %5465 = vmatpush1.bf16.msra.mxu0 %v5237
          %5466 = vmatprep.subr.bf16.mxu0 %v5242
          %5467 = vmatpush1.bf16.msra.mxu0 %v5241
          %5468 = vmatprep.subr.bf16.mxu0 %v5246
          %5469 = vmatpush1.bf16.msra.mxu0 %v5245
          %5470 = vmatprep.subr.bf16.mxu0 %v5250
          %5471 = vmatpush1.bf16.msra.mxu0 %v5249
          %5472 = vmatprep.subr.bf16.mxu0 %v5254
          %5473 = vmatpush1.bf16.msra.mxu0 %v5253
          %5474 = vmatprep.subr.bf16.mxu0 %v5258
          %5475 = vmatpush1.bf16.msra.mxu0 %v5257
          %5476 = vmatprep.subr.bf16.mxu0 %v5262
          %5477 = vmatpush1.bf16.msra.mxu0 %v5261
          %5478 = vmatprep.subr.bf16.mxu0 %v5266
          %5479 = vmatpush1.bf16.msra.mxu0 %v5265
          %5480 = vmatprep.subr.bf16.mxu0 %v5270
          %5481 = vmatpush1.bf16.msra.mxu0 %v5269
          %5482 = vmatprep.subr.bf16.mxu0 %v5274
          %5483 = vmatpush1.bf16.msra.mxu0 %v5273
          %5484 = vmatprep.subr.bf16.mxu0 %v5278
          %5485 = vmatpush1.bf16.msra.mxu0 %v5277
          %5486 = vmatprep.subr.bf16.mxu0 %v5282
          %5487 = vmatpush1.bf16.msra.mxu0 %v5281
          %5488 = vmatprep.subr.bf16.mxu0 %v5286
          %5489 = vmatpush1.bf16.msra.mxu0 %v5285
          %5490 = vmatprep.mubr.bf16.mxu0 %v4772
          %5491 = vmatmul.mubr.bf16.gmra.mrb[0].mxu0 %v4771
          %v5492 = vpop.f32.mrb[0].mxu0
          %v5493 = vadd.f32 %v5452, %v5492
          %v5494 = vpop.f32.mrb[0].mxu0
          %v5495 = vadd.f32 %v5454, %v5494
          %v5496 = vpop.f32.mrb[0].mxu0
          %v5497 = vpop.f32.mrb[0].mxu0
          %5498 = vdwg.mxu0
          %5499 = vmatprep.subr.bf16.mxu0 %v5164
          %5500 = vmatpush1.bf16.msra.mxu0 %v5163
          %5501 = vmatprep.subr.bf16.mxu0 %v5168
          %5502 = vmatpush1.bf16.msra.mxu0 %v5167
          %5503 = vmatprep.subr.bf16.mxu0 %v5172
          %5504 = vmatpush1.bf16.msra.mxu0 %v5171
          %5505 = vmatprep.subr.bf16.mxu0 %v5176
          %5506 = vmatpush1.bf16.msra.mxu0 %v5175
          %5507 = vmatprep.subr.bf16.mxu0 %v5180
          %5508 = vmatpush1.bf16.msra.mxu0 %v5179
          %5509 = vmatprep.subr.bf16.mxu0 %v5184
          %5510 = vmatpush1.bf16.msra.mxu0 %v5183
          %5511 = vmatprep.subr.bf16.mxu0 %v5188
          %5512 = vmatpush1.bf16.msra.mxu0 %v5187
          %5513 = vmatprep.subr.bf16.mxu0 %v5192
          %5514 = vmatpush1.bf16.msra.mxu0 %v5191
          %5515 = vmatprep.subr.bf16.mxu0 %v5196
          %5516 = vmatpush1.bf16.msra.mxu0 %v5195
          %5517 = vmatprep.subr.bf16.mxu0 %v5200
          %5518 = vmatpush1.bf16.msra.mxu0 %v5199
          %5519 = vmatprep.subr.bf16.mxu0 %v5204
          %5520 = vmatpush1.bf16.msra.mxu0 %v5203
          %5521 = vmatprep.subr.bf16.mxu0 %v5208
          %5522 = vmatpush1.bf16.msra.mxu0 %v5207
          %5523 = vmatprep.subr.bf16.mxu0 %v5212
          %5524 = vmatpush1.bf16.msra.mxu0 %v5211
          %5525 = vmatprep.subr.bf16.mxu0 %v5216
          %5526 = vmatpush1.bf16.msra.mxu0 %v5215
          %5527 = vmatprep.subr.bf16.mxu0 %v5220
          %5528 = vmatpush1.bf16.msra.mxu0 %v5219
          %5529 = vmatprep.subr.bf16.mxu0 %v5224
          %5530 = vmatpush1.bf16.msra.mxu0 %v5223
          %5531 = vmatprep.mubr.bf16.mxu0 %v4770
          %5532 = vmatmul.mubr.bf16.gmra.mrb[0].mxu0 %v4763
          %v5533 = vpop.f32.mrb[0].mxu0
          %v5534 = vadd.f32 0.0, %v5533
          %v5535 = vpop.f32.mrb[0].mxu0
          %v5536 = vadd.f32 0.0, %v5535
          %v5537 = vpop.f32.mrb[0].mxu0
          %v5538 = vpop.f32.mrb[0].mxu0
          %5539 = vdwg.mxu0
          %5540 = vmatprep.subr.bf16.mxu0 %v5228
          %5541 = vmatpush1.bf16.msra.mxu0 %v5227
          %5542 = vmatprep.subr.bf16.mxu0 %v5232
          %5543 = vmatpush1.bf16.msra.mxu0 %v5231
          %5544 = vmatprep.subr.bf16.mxu0 %v5236
          %5545 = vmatpush1.bf16.msra.mxu0 %v5235
          %5546 = vmatprep.subr.bf16.mxu0 %v5240
          %5547 = vmatpush1.bf16.msra.mxu0 %v5239
          %5548 = vmatprep.subr.bf16.mxu0 %v5244
          %5549 = vmatpush1.bf16.msra.mxu0 %v5243
          %5550 = vmatprep.subr.bf16.mxu0 %v5248
          %5551 = vmatpush1.bf16.msra.mxu0 %v5247
          %5552 = vmatprep.subr.bf16.mxu0 %v5252
          %5553 = vmatpush1.bf16.msra.mxu0 %v5251
          %5554 = vmatprep.subr.bf16.mxu0 %v5256
          %5555 = vmatpush1.bf16.msra.mxu0 %v5255
          %5556 = vmatprep.subr.bf16.mxu0 %v5260
          %5557 = vmatpush1.bf16.msra.mxu0 %v5259
          %5558 = vmatprep.subr.bf16.mxu0 %v5264
          %5559 = vmatpush1.bf16.msra.mxu0 %v5263
          %5560 = vmatprep.subr.bf16.mxu0 %v5268
          %5561 = vmatpush1.bf16.msra.mxu0 %v5267
          %5562 = vmatprep.subr.bf16.mxu0 %v5272
          %5563 = vmatpush1.bf16.msra.mxu0 %v5271
          %5564 = vmatprep.subr.bf16.mxu0 %v5276
          %5565 = vmatpush1.bf16.msra.mxu0 %v5275
          %5566 = vmatprep.subr.bf16.mxu0 %v5280
          %5567 = vmatpush1.bf16.msra.mxu0 %v5279
          %5568 = vmatprep.subr.bf16.mxu0 %v5284
          %5569 = vmatpush1.bf16.msra.mxu0 %v5283
          %5570 = vmatprep.subr.bf16.mxu0 %v5288
          %5571 = vmatpush1.bf16.msra.mxu0 %v5287
          %5572 = vmatprep.mubr.bf16.mxu0 %v4772
          %5573 = vmatmul.mubr.bf16.gmra.mrb[0].mxu0 %v4771
          %v5574 = vpop.f32.mrb[0].mxu0
          %v5575 = vadd.f32 %v5534, %v5574
          %v5576 = vpop.f32.mrb[0].mxu0
          %v5577 = vadd.f32 %v5536, %v5576
          %v5578 = vpop.f32.mrb[0].mxu0
          %v5579 = vpop.f32.mrb[0].mxu0
          %5580 = vdwg.mxu0
          %v5583 = vunpack.c.l.s4 1966171168
          %v5584 = vunpack.c.0.s8 %v5583
          %v5585 = vlaneseq
          %v5586 = vshrl.u32 %v5585, 7
          %v5587 = vsub.s32 %v5584, %v5586
          %v5588 = vrot.slane %v4490, %v5587
          %v5589 = vcombine.high %v5588, %v5588
          %v5591 = vunpack.c.l.s4 1966171168
          %v5592 = vunpack.c.0.s8 %v5591
          %v5593 = vlaneseq
          %v5594 = vshrl.u32 %v5593, 7
          %v5595 = vsub.s32 %v5592, %v5594
          %v5596 = vrot.slane %v5588, %v5595
          %v5598 = vunpack.c.l.s4 1966171168
          %v5599 = vunpack.c.0.s8 %v5598
          %v5600 = vlaneseq
          %v5601 = vshrl.u32 %v5600, 7
          %v5602 = vsub.s32 %v5599, %v5601
          %v5603 = vrot.slane %v5589, %v5602
          %v5604 = vcombine.high %v5596, %v5596
          %v5605 = vcombine.high %v5603, %v5603
          %v5738 = vunpack.c.l.b16 %v4491
          %v5739 = vunpack.c.h.b16 %v4491
          %v5740 = vunpack.c.l.b16 %v4492
          %v5741 = vunpack.c.h.b16 %v4492
          %v5742 = vunpack.c.l.b16 %v4493
          %v5743 = vunpack.c.h.b16 %v4493
          %v5744 = vunpack.c.l.b16 %v4494
          %v5745 = vunpack.c.h.b16 %v4494
          %v5746 = vunpack.c.l.b16 %v4495
          %v5747 = vunpack.c.h.b16 %v4495
          %v5748 = vunpack.c.l.b16 %v4496
          %v5749 = vunpack.c.h.b16 %v4496
          %v5750 = vunpack.c.l.b16 %v4497
          %v5751 = vunpack.c.h.b16 %v4497
          %v5752 = vunpack.c.l.b16 %v4498
          %v5753 = vunpack.c.h.b16 %v4498
          %v5754 = vunpack.c.l.b16 %v4499
          %v5755 = vunpack.c.h.b16 %v4499
          %v5756 = vunpack.c.l.b16 %v4500
          %v5757 = vunpack.c.h.b16 %v4500
          %v5758 = vunpack.c.l.b16 %v4501
          %v5759 = vunpack.c.h.b16 %v4501
          %v5760 = vunpack.c.l.b16 %v4502
          %v5761 = vunpack.c.h.b16 %v4502
          %v5762 = vunpack.c.l.b16 %v4503
          %v5763 = vunpack.c.h.b16 %v4503
          %v5764 = vunpack.c.l.b16 %v4504
          %v5765 = vunpack.c.h.b16 %v4504
          %v5766 = vunpack.c.l.b16 %v4505
          %v5767 = vunpack.c.h.b16 %v4505
          %v5768 = vunpack.c.l.b16 %v4506
          %v5769 = vunpack.c.h.b16 %v4506
          %v5770 = vunpack.c.l.b16 %v4507
          %v5771 = vunpack.c.h.b16 %v4507
          %v5772 = vunpack.c.l.b16 %v4508
          %v5773 = vunpack.c.h.b16 %v4508
          %v5774 = vunpack.c.l.b16 %v4509
          %v5775 = vunpack.c.h.b16 %v4509
          %v5776 = vunpack.c.l.b16 %v4510
          %v5777 = vunpack.c.h.b16 %v4510
          %v5778 = vunpack.c.l.b16 %v4511
          %v5779 = vunpack.c.h.b16 %v4511
          %v5780 = vunpack.c.l.b16 %v4512
          %v5781 = vunpack.c.h.b16 %v4512
          %v5782 = vunpack.c.l.b16 %v4513
          %v5783 = vunpack.c.h.b16 %v4513
          %v5784 = vunpack.c.l.b16 %v4514
          %v5785 = vunpack.c.h.b16 %v4514
          %v5786 = vunpack.c.l.b16 %v4515
          %v5787 = vunpack.c.h.b16 %v4515
          %v5788 = vunpack.c.l.b16 %v4516
          %v5789 = vunpack.c.h.b16 %v4516
          %v5790 = vunpack.c.l.b16 %v4517
          %v5791 = vunpack.c.h.b16 %v4517
          %v5792 = vunpack.c.l.b16 %v4518
          %v5793 = vunpack.c.h.b16 %v4518
          %v5794 = vunpack.c.l.b16 %v4519
          %v5795 = vunpack.c.h.b16 %v4519
          %v5796 = vunpack.c.l.b16 %v4520
          %v5797 = vunpack.c.h.b16 %v4520
          %v5798 = vunpack.c.l.b16 %v4521
          %v5799 = vunpack.c.h.b16 %v4521
          %v5800 = vunpack.c.l.b16 %v4522
          %v5801 = vunpack.c.h.b16 %v4522
          %v5802 = vunpack.c.l.b16 %v4523
          %v5803 = vunpack.c.h.b16 %v4523
          %v5804 = vunpack.c.l.b16 %v4524
          %v5805 = vunpack.c.h.b16 %v4524
          %v5806 = vunpack.c.l.b16 %v4525
          %v5807 = vunpack.c.h.b16 %v4525
          %v5808 = vunpack.c.l.b16 %v4526
          %v5809 = vunpack.c.h.b16 %v4526
          %v5810 = vunpack.c.l.b16 %v4527
          %v5811 = vunpack.c.h.b16 %v4527
          %v5812 = vunpack.c.l.b16 %v4528
          %v5813 = vunpack.c.h.b16 %v4528
          %v5814 = vunpack.c.l.b16 %v4529
          %v5815 = vunpack.c.h.b16 %v4529
          %v5816 = vunpack.c.l.b16 %v4530
          %v5817 = vunpack.c.h.b16 %v4530
          %v5818 = vunpack.c.l.b16 %v4531
          %v5819 = vunpack.c.h.b16 %v4531
          %v5820 = vunpack.c.l.b16 %v4532
          %v5821 = vunpack.c.h.b16 %v4532
          %v5822 = vunpack.c.l.b16 %v4533
          %v5823 = vunpack.c.h.b16 %v4533
          %v5824 = vunpack.c.l.b16 %v4534
          %v5825 = vunpack.c.h.b16 %v4534
          %v5826 = vunpack.c.l.b16 %v4535
          %v5827 = vunpack.c.h.b16 %v4535
          %v5828 = vunpack.c.l.b16 %v4536
          %v5829 = vunpack.c.h.b16 %v4536
          %v5830 = vunpack.c.l.b16 %v4537
          %v5831 = vunpack.c.h.b16 %v4537
          %v5832 = vunpack.c.l.b16 %v4538
          %v5833 = vunpack.c.h.b16 %v4538
          %v5834 = vunpack.c.l.b16 %v4539
          %v5835 = vunpack.c.h.b16 %v4539
          %v5836 = vunpack.c.l.b16 %v4540
          %v5837 = vunpack.c.h.b16 %v4540
          %v5838 = vunpack.c.l.b16 %v4541
          %v5839 = vunpack.c.h.b16 %v4541
          %v5840 = vunpack.c.l.b16 %v4542
          %v5841 = vunpack.c.h.b16 %v4542
          %v5842 = vunpack.c.l.b16 %v4543
          %v5843 = vunpack.c.h.b16 %v4543
          %v5844 = vunpack.c.l.b16 %v4544
          %v5845 = vunpack.c.h.b16 %v4544
          %v5846 = vunpack.c.l.b16 %v4545
          %v5847 = vunpack.c.h.b16 %v4545
          %v5848 = vunpack.c.l.b16 %v4546
          %v5849 = vunpack.c.h.b16 %v4546
          %v5850 = vunpack.c.l.b16 %v4547
          %v5851 = vunpack.c.h.b16 %v4547
          %v5852 = vunpack.c.l.b16 %v4548
          %v5853 = vunpack.c.h.b16 %v4548
          %v5854 = vunpack.c.l.b16 %v4549
          %v5855 = vunpack.c.h.b16 %v4549
          %v5856 = vunpack.c.l.b16 %v4550
          %v5857 = vunpack.c.h.b16 %v4550
          %v5858 = vunpack.c.l.b16 %v4551
          %v5859 = vunpack.c.h.b16 %v4551
          %v5860 = vunpack.c.l.b16 %v4552
          %v5861 = vunpack.c.h.b16 %v4552
          %v5862 = vunpack.c.l.b16 %v4553
          %v5863 = vunpack.c.h.b16 %v4553
          %v5864 = vunpack.c.l.b16 %v4554
          %v5865 = vunpack.c.h.b16 %v4554
          %v5866 = vunpack.c.l.b16 %v4555
          %v5867 = vunpack.c.h.b16 %v4555
          %v5868 = vunpack.c.l.b16 %v4556
          %v5869 = vunpack.c.h.b16 %v4556
          %v5870 = vunpack.c.l.b16 %v4557
          %v5871 = vunpack.c.h.b16 %v4557
          %v5872 = vunpack.c.l.b16 %v4558
          %v5873 = vunpack.c.h.b16 %v4558
          %v5874 = vunpack.c.l.b16 %v4559
          %v5875 = vunpack.c.h.b16 %v4559
          %v5876 = vunpack.c.l.b16 %v4560
          %v5877 = vunpack.c.h.b16 %v4560
          %v5878 = vunpack.c.l.b16 %v4561
          %v5879 = vunpack.c.h.b16 %v4561
          %v5880 = vunpack.c.l.b16 %v4562
          %v5881 = vunpack.c.h.b16 %v4562
          %v5882 = vunpack.c.l.b16 %v4563
          %v5883 = vunpack.c.h.b16 %v4563
          %v5884 = vunpack.c.l.b16 %v4564
          %v5885 = vunpack.c.h.b16 %v4564
          %v5886 = vunpack.c.l.b16 %v4565
          %v5887 = vunpack.c.h.b16 %v4565
          %v5888 = vunpack.c.l.b16 %v4566
          %v5889 = vunpack.c.h.b16 %v4566
          %v5890 = vunpack.c.l.b16 %v4567
          %v5891 = vunpack.c.h.b16 %v4567
          %v5892 = vunpack.c.l.b16 %v4568
          %v5893 = vunpack.c.h.b16 %v4568
          %v5894 = vunpack.c.l.b16 %v4569
          %v5895 = vunpack.c.h.b16 %v4569
          %v5896 = vunpack.c.l.b16 %v4570
          %v5897 = vunpack.c.h.b16 %v4570
          %v5898 = vunpack.c.l.b16 %v4571
          %v5899 = vunpack.c.h.b16 %v4571
          %v5900 = vunpack.c.l.b16 %v4572
          %v5901 = vunpack.c.h.b16 %v4572
          %v5902 = vunpack.c.l.b16 %v4573
          %v5903 = vunpack.c.h.b16 %v4573
          %v5904 = vunpack.c.l.b16 %v4574
          %v5905 = vunpack.c.h.b16 %v4574
          %v5906 = vunpack.c.l.b16 %v4575
          %v5907 = vunpack.c.h.b16 %v4575
          %v5908 = vunpack.c.l.b16 %v4576
          %v5909 = vunpack.c.h.b16 %v4576
          %v5910 = vunpack.c.l.b16 %v4577
          %v5911 = vunpack.c.h.b16 %v4577
          %v5912 = vunpack.c.l.b16 %v4578
          %v5913 = vunpack.c.h.b16 %v4578
          %v5914 = vunpack.c.l.b16 %v4579
          %v5915 = vunpack.c.h.b16 %v4579
          %v5916 = vunpack.c.l.b16 %v4580
          %v5917 = vunpack.c.h.b16 %v4580
          %v5918 = vunpack.c.l.b16 %v4581
          %v5919 = vunpack.c.h.b16 %v4581
          %v5920 = vunpack.c.l.b16 %v4582
          %v5921 = vunpack.c.h.b16 %v4582
          %v5922 = vunpack.c.l.b16 %v4583
          %v5923 = vunpack.c.h.b16 %v4583
          %v5924 = vunpack.c.l.b16 %v4584
          %v5925 = vunpack.c.h.b16 %v4584
          %v5926 = vunpack.c.l.b16 %v4585
          %v5927 = vunpack.c.h.b16 %v4585
          %v5928 = vunpack.c.l.b16 %v4586
          %v5929 = vunpack.c.h.b16 %v4586
          %v5930 = vunpack.c.l.b16 %v4587
          %v5931 = vunpack.c.h.b16 %v4587
          %v5932 = vunpack.c.l.b16 %v4588
          %v5933 = vunpack.c.h.b16 %v4588
          %v5934 = vunpack.c.l.b16 %v4589
          %v5935 = vunpack.c.h.b16 %v4589
          %v5936 = vunpack.c.l.b16 %v4590
          %v5937 = vunpack.c.h.b16 %v4590
          %v5938 = vunpack.c.l.b16 %v4591
          %v5939 = vunpack.c.h.b16 %v4591
          %v5940 = vunpack.c.l.b16 %v4592
          %v5941 = vunpack.c.h.b16 %v4592
          %v5942 = vunpack.c.l.b16 %v4593
          %v5943 = vunpack.c.h.b16 %v4593
          %v5944 = vunpack.c.l.b16 %v4594
          %v5945 = vunpack.c.h.b16 %v4594
          %v5946 = vunpack.c.l.b16 %v4595
          %v5947 = vunpack.c.h.b16 %v4595
          %v5948 = vunpack.c.l.b16 %v4596
          %v5949 = vunpack.c.h.b16 %v4596
          %v5950 = vunpack.c.l.b16 %v4597
          %v5951 = vunpack.c.h.b16 %v4597
          %v5952 = vunpack.c.l.b16 %v4598
          %v5953 = vunpack.c.h.b16 %v4598
          %v5954 = vunpack.c.l.b16 %v4599
          %v5955 = vunpack.c.h.b16 %v4599
          %v5956 = vunpack.c.l.b16 %v4600
          %v5957 = vunpack.c.h.b16 %v4600
          %v5958 = vunpack.c.l.b16 %v4601
          %v5959 = vunpack.c.h.b16 %v4601
          %v5960 = vunpack.c.l.b16 %v4602
          %v5961 = vunpack.c.h.b16 %v4602
          %v5962 = vunpack.c.l.b16 %v4603
          %v5963 = vunpack.c.h.b16 %v4603
          %v5964 = vunpack.c.l.b16 %v4604
          %v5965 = vunpack.c.h.b16 %v4604
          %v5966 = vunpack.c.l.b16 %v4605
          %v5967 = vunpack.c.h.b16 %v4605
          %v5968 = vunpack.c.l.b16 %v4606
          %v5969 = vunpack.c.h.b16 %v4606
          %v5970 = vunpack.c.l.b16 %v4607
          %v5971 = vunpack.c.h.b16 %v4607
          %v5972 = vunpack.c.l.b16 %v4608
          %v5973 = vunpack.c.h.b16 %v4608
          %v5974 = vunpack.c.l.b16 %v4609
          %v5975 = vunpack.c.h.b16 %v4609
          %v5976 = vunpack.c.l.b16 %v4610
          %v5977 = vunpack.c.h.b16 %v4610
          %v5978 = vunpack.c.l.b16 %v4611
          %v5979 = vunpack.c.h.b16 %v4611
          %v5980 = vunpack.c.l.b16 %v4612
          %v5981 = vunpack.c.h.b16 %v4612
          %v5982 = vunpack.c.l.b16 %v4613
          %v5983 = vunpack.c.h.b16 %v4613
          %v5984 = vunpack.c.l.b16 %v4614
          %v5985 = vunpack.c.h.b16 %v4614
          %v5986 = vunpack.c.l.b16 %v4615
          %v5987 = vunpack.c.h.b16 %v4615
          %v5988 = vunpack.c.l.b16 %v4616
          %v5989 = vunpack.c.h.b16 %v4616
          %v5990 = vunpack.c.l.b16 %v4617
          %v5991 = vunpack.c.h.b16 %v4617
          %v5992 = vunpack.c.l.b16 %v4618
          %v5993 = vunpack.c.h.b16 %v4618
          %v5994 = vpack.c.b16 %v5742, %v5738
          %v5995 = vpack.c.b16 %v5743, %v5739
          %v5996 = vpack.c.b16 %v5744, %v5740
          %v5997 = vpack.c.b16 %v5745, %v5741
          %v5998 = vpack.c.b16 %v5750, %v5746
          %v5999 = vpack.c.b16 %v5751, %v5747
          %v6000 = vpack.c.b16 %v5752, %v5748
          %v6001 = vpack.c.b16 %v5753, %v5749
          %v6002 = vpack.c.b16 %v5758, %v5754
          %v6003 = vpack.c.b16 %v5759, %v5755
          %v6004 = vpack.c.b16 %v5760, %v5756
          %v6005 = vpack.c.b16 %v5761, %v5757
          %v6006 = vpack.c.b16 %v5766, %v5762
          %v6007 = vpack.c.b16 %v5767, %v5763
          %v6008 = vpack.c.b16 %v5768, %v5764
          %v6009 = vpack.c.b16 %v5769, %v5765
          %v6010 = vpack.c.b16 %v5774, %v5770
          %v6011 = vpack.c.b16 %v5775, %v5771
          %v6012 = vpack.c.b16 %v5776, %v5772
          %v6013 = vpack.c.b16 %v5777, %v5773
          %v6014 = vpack.c.b16 %v5782, %v5778
          %v6015 = vpack.c.b16 %v5783, %v5779
          %v6016 = vpack.c.b16 %v5784, %v5780
          %v6017 = vpack.c.b16 %v5785, %v5781
          %v6018 = vpack.c.b16 %v5790, %v5786
          %v6019 = vpack.c.b16 %v5791, %v5787
          %v6020 = vpack.c.b16 %v5792, %v5788
          %v6021 = vpack.c.b16 %v5793, %v5789
          %v6022 = vpack.c.b16 %v5798, %v5794
          %v6023 = vpack.c.b16 %v5799, %v5795
          %v6024 = vpack.c.b16 %v5800, %v5796
          %v6025 = vpack.c.b16 %v5801, %v5797
          %v6026 = vpack.c.b16 %v5806, %v5802
          %v6027 = vpack.c.b16 %v5807, %v5803
          %v6028 = vpack.c.b16 %v5808, %v5804
          %v6029 = vpack.c.b16 %v5809, %v5805
          %v6030 = vpack.c.b16 %v5814, %v5810
          %v6031 = vpack.c.b16 %v5815, %v5811
          %v6032 = vpack.c.b16 %v5816, %v5812
          %v6033 = vpack.c.b16 %v5817, %v5813
          %v6034 = vpack.c.b16 %v5822, %v5818
          %v6035 = vpack.c.b16 %v5823, %v5819
          %v6036 = vpack.c.b16 %v5824, %v5820
          %v6037 = vpack.c.b16 %v5825, %v5821
          %v6038 = vpack.c.b16 %v5830, %v5826
          %v6039 = vpack.c.b16 %v5831, %v5827
          %v6040 = vpack.c.b16 %v5832, %v5828
          %v6041 = vpack.c.b16 %v5833, %v5829
          %v6042 = vpack.c.b16 %v5838, %v5834
          %v6043 = vpack.c.b16 %v5839, %v5835
          %v6044 = vpack.c.b16 %v5840, %v5836
          %v6045 = vpack.c.b16 %v5841, %v5837
          %v6046 = vpack.c.b16 %v5846, %v5842
          %v6047 = vpack.c.b16 %v5847, %v5843
          %v6048 = vpack.c.b16 %v5848, %v5844
          %v6049 = vpack.c.b16 %v5849, %v5845
          %v6050 = vpack.c.b16 %v5854, %v5850
          %v6051 = vpack.c.b16 %v5855, %v5851
          %v6052 = vpack.c.b16 %v5856, %v5852
          %v6053 = vpack.c.b16 %v5857, %v5853
          %v6054 = vpack.c.b16 %v5862, %v5858
          %v6055 = vpack.c.b16 %v5863, %v5859
          %v6056 = vpack.c.b16 %v5864, %v5860
          %v6057 = vpack.c.b16 %v5865, %v5861
          %v6058 = vpack.c.b16 %v5870, %v5866
          %v6059 = vpack.c.b16 %v5871, %v5867
          %v6060 = vpack.c.b16 %v5872, %v5868
          %v6061 = vpack.c.b16 %v5873, %v5869
          %v6062 = vpack.c.b16 %v5878, %v5874
          %v6063 = vpack.c.b16 %v5879, %v5875
          %v6064 = vpack.c.b16 %v5880, %v5876
          %v6065 = vpack.c.b16 %v5881, %v5877
          %v6066 = vpack.c.b16 %v5886, %v5882
          %v6067 = vpack.c.b16 %v5887, %v5883
          %v6068 = vpack.c.b16 %v5888, %v5884
          %v6069 = vpack.c.b16 %v5889, %v5885
          %v6070 = vpack.c.b16 %v5894, %v5890
          %v6071 = vpack.c.b16 %v5895, %v5891
          %v6072 = vpack.c.b16 %v5896, %v5892
          %v6073 = vpack.c.b16 %v5897, %v5893
          %v6074 = vpack.c.b16 %v5902, %v5898
          %v6075 = vpack.c.b16 %v5903, %v5899
          %v6076 = vpack.c.b16 %v5904, %v5900
          %v6077 = vpack.c.b16 %v5905, %v5901
          %v6078 = vpack.c.b16 %v5910, %v5906
          %v6079 = vpack.c.b16 %v5911, %v5907
          %v6080 = vpack.c.b16 %v5912, %v5908
          %v6081 = vpack.c.b16 %v5913, %v5909
          %v6082 = vpack.c.b16 %v5918, %v5914
          %v6083 = vpack.c.b16 %v5919, %v5915
          %v6084 = vpack.c.b16 %v5920, %v5916
          %v6085 = vpack.c.b16 %v5921, %v5917
          %v6086 = vpack.c.b16 %v5926, %v5922
          %v6087 = vpack.c.b16 %v5927, %v5923
          %v6088 = vpack.c.b16 %v5928, %v5924
          %v6089 = vpack.c.b16 %v5929, %v5925
          %v6090 = vpack.c.b16 %v5934, %v5930
          %v6091 = vpack.c.b16 %v5935, %v5931
          %v6092 = vpack.c.b16 %v5936, %v5932
          %v6093 = vpack.c.b16 %v5937, %v5933
          %v6094 = vpack.c.b16 %v5942, %v5938
          %v6095 = vpack.c.b16 %v5943, %v5939
          %v6096 = vpack.c.b16 %v5944, %v5940
          %v6097 = vpack.c.b16 %v5945, %v5941
          %v6098 = vpack.c.b16 %v5950, %v5946
          %v6099 = vpack.c.b16 %v5951, %v5947
          %v6100 = vpack.c.b16 %v5952, %v5948
          %v6101 = vpack.c.b16 %v5953, %v5949
          %v6102 = vpack.c.b16 %v5958, %v5954
          %v6103 = vpack.c.b16 %v5959, %v5955
          %v6104 = vpack.c.b16 %v5960, %v5956
          %v6105 = vpack.c.b16 %v5961, %v5957
          %v6106 = vpack.c.b16 %v5966, %v5962
          %v6107 = vpack.c.b16 %v5967, %v5963
          %v6108 = vpack.c.b16 %v5968, %v5964
          %v6109 = vpack.c.b16 %v5969, %v5965
          %v6110 = vpack.c.b16 %v5974, %v5970
          %v6111 = vpack.c.b16 %v5975, %v5971
          %v6112 = vpack.c.b16 %v5976, %v5972
          %v6113 = vpack.c.b16 %v5977, %v5973
          %v6114 = vpack.c.b16 %v5982, %v5978
          %v6115 = vpack.c.b16 %v5983, %v5979
          %v6116 = vpack.c.b16 %v5984, %v5980
          %v6117 = vpack.c.b16 %v5985, %v5981
          %v6118 = vpack.c.b16 %v5990, %v5986
          %v6119 = vpack.c.b16 %v5991, %v5987
          %v6120 = vpack.c.b16 %v5992, %v5988
          %v6121 = vpack.c.b16 %v5993, %v5989
          %6250 = vmatprep.subr.bf16.mxu0 %v5995
          %6251 = vmatpush1.bf16.msra.mxu0 %v5994
          %6252 = vmatprep.subr.bf16.mxu0 %v5999
          %6253 = vmatpush1.bf16.msra.mxu0 %v5998
          %6254 = vmatprep.subr.bf16.mxu0 %v6003
          %6255 = vmatpush1.bf16.msra.mxu0 %v6002
          %6256 = vmatprep.subr.bf16.mxu0 %v6007
          %6257 = vmatpush1.bf16.msra.mxu0 %v6006
          %6258 = vmatprep.subr.bf16.mxu0 %v6011
          %6259 = vmatpush1.bf16.msra.mxu0 %v6010
          %6260 = vmatprep.subr.bf16.mxu0 %v6015
          %6261 = vmatpush1.bf16.msra.mxu0 %v6014
          %6262 = vmatprep.subr.bf16.mxu0 %v6019
          %6263 = vmatpush1.bf16.msra.mxu0 %v6018
          %6264 = vmatprep.subr.bf16.mxu0 %v6023
          %6265 = vmatpush1.bf16.msra.mxu0 %v6022
          %6266 = vmatprep.subr.bf16.mxu0 %v6027
          %6267 = vmatpush1.bf16.msra.mxu0 %v6026
          %6268 = vmatprep.subr.bf16.mxu0 %v6031
          %6269 = vmatpush1.bf16.msra.mxu0 %v6030
          %6270 = vmatprep.subr.bf16.mxu0 %v6035
          %6271 = vmatpush1.bf16.msra.mxu0 %v6034
          %6272 = vmatprep.subr.bf16.mxu0 %v6039
          %6273 = vmatpush1.bf16.msra.mxu0 %v6038
          %6274 = vmatprep.subr.bf16.mxu0 %v6043
          %6275 = vmatpush1.bf16.msra.mxu0 %v6042
          %6276 = vmatprep.subr.bf16.mxu0 %v6047
          %6277 = vmatpush1.bf16.msra.mxu0 %v6046
          %6278 = vmatprep.subr.bf16.mxu0 %v6051
          %6279 = vmatpush1.bf16.msra.mxu0 %v6050
          %6280 = vmatprep.subr.bf16.mxu0 %v6055
          %6281 = vmatpush1.bf16.msra.mxu0 %v6054
          %6282 = vmatprep.mubr.bf16.mxu0 %v5603
          %6283 = vmatmul.mubr.bf16.gmra.mrb[0].mxu0 %v5596
          %v6284 = vpop.f32.mrb[0].mxu0
          %v6285 = vadd.f32 %v5493, %v6284
          %v6286 = vpop.f32.mrb[0].mxu0
          %v6287 = vadd.f32 %v5495, %v6286
          %v6288 = vpop.f32.mrb[0].mxu0
          %v6289 = vpop.f32.mrb[0].mxu0
          %6290 = vdwg.mxu0
          %6291 = vmatprep.subr.bf16.mxu0 %v6059
          %6292 = vmatpush1.bf16.msra.mxu0 %v6058
          %6293 = vmatprep.subr.bf16.mxu0 %v6063
          %6294 = vmatpush1.bf16.msra.mxu0 %v6062
          %6295 = vmatprep.subr.bf16.mxu0 %v6067
          %6296 = vmatpush1.bf16.msra.mxu0 %v6066
          %6297 = vmatprep.subr.bf16.mxu0 %v6071
          %6298 = vmatpush1.bf16.msra.mxu0 %v6070
          %6299 = vmatprep.subr.bf16.mxu0 %v6075
          %6300 = vmatpush1.bf16.msra.mxu0 %v6074
          %6301 = vmatprep.subr.bf16.mxu0 %v6079
          %6302 = vmatpush1.bf16.msra.mxu0 %v6078
          %6303 = vmatprep.subr.bf16.mxu0 %v6083
          %6304 = vmatpush1.bf16.msra.mxu0 %v6082
          %6305 = vmatprep.subr.bf16.mxu0 %v6087
          %6306 = vmatpush1.bf16.msra.mxu0 %v6086
          %6307 = vmatprep.subr.bf16.mxu0 %v6091
          %6308 = vmatpush1.bf16.msra.mxu0 %v6090
          %6309 = vmatprep.subr.bf16.mxu0 %v6095
          %6310 = vmatpush1.bf16.msra.mxu0 %v6094
          %6311 = vmatprep.subr.bf16.mxu0 %v6099
          %6312 = vmatpush1.bf16.msra.mxu0 %v6098
          %6313 = vmatprep.subr.bf16.mxu0 %v6103
          %6314 = vmatpush1.bf16.msra.mxu0 %v6102
          %6315 = vmatprep.subr.bf16.mxu0 %v6107
          %6316 = vmatpush1.bf16.msra.mxu0 %v6106
          %6317 = vmatprep.subr.bf16.mxu0 %v6111
          %6318 = vmatpush1.bf16.msra.mxu0 %v6110
          %6319 = vmatprep.subr.bf16.mxu0 %v6115
          %6320 = vmatpush1.bf16.msra.mxu0 %v6114
          %6321 = vmatprep.subr.bf16.mxu0 %v6119
          %6322 = vmatpush1.bf16.msra.mxu0 %v6118
          %6323 = vmatprep.mubr.bf16.mxu0 %v5605
          %6324 = vmatmul.mubr.bf16.gmra.mrb[0].mxu0 %v5604
          %v6325 = vpop.f32.mrb[0].mxu0
          %v6326 = vadd.f32 %v6285, %v6325
          %v6327 = vpop.f32.mrb[0].mxu0
          %v6328 = vadd.f32 %v6287, %v6327
          %v6329 = vpop.f32.mrb[0].mxu0
          %v6330 = vpop.f32.mrb[0].mxu0
          %6331 = vdwg.mxu0
          %6332 = vmatprep.subr.bf16.mxu0 %v5997
          %6333 = vmatpush1.bf16.msra.mxu0 %v5996
          %6334 = vmatprep.subr.bf16.mxu0 %v6001
          %6335 = vmatpush1.bf16.msra.mxu0 %v6000
          %6336 = vmatprep.subr.bf16.mxu0 %v6005
          %6337 = vmatpush1.bf16.msra.mxu0 %v6004
          %6338 = vmatprep.subr.bf16.mxu0 %v6009
          %6339 = vmatpush1.bf16.msra.mxu0 %v6008
          %6340 = vmatprep.subr.bf16.mxu0 %v6013
          %6341 = vmatpush1.bf16.msra.mxu0 %v6012
          %6342 = vmatprep.subr.bf16.mxu0 %v6017
          %6343 = vmatpush1.bf16.msra.mxu0 %v6016
          %6344 = vmatprep.subr.bf16.mxu0 %v6021
          %6345 = vmatpush1.bf16.msra.mxu0 %v6020
          %6346 = vmatprep.subr.bf16.mxu0 %v6025
          %6347 = vmatpush1.bf16.msra.mxu0 %v6024
          %6348 = vmatprep.subr.bf16.mxu0 %v6029
          %6349 = vmatpush1.bf16.msra.mxu0 %v6028
          %6350 = vmatprep.subr.bf16.mxu0 %v6033
          %6351 = vmatpush1.bf16.msra.mxu0 %v6032
          %6352 = vmatprep.subr.bf16.mxu0 %v6037
          %6353 = vmatpush1.bf16.msra.mxu0 %v6036
          %6354 = vmatprep.subr.bf16.mxu0 %v6041
          %6355 = vmatpush1.bf16.msra.mxu0 %v6040
          %6356 = vmatprep.subr.bf16.mxu0 %v6045
          %6357 = vmatpush1.bf16.msra.mxu0 %v6044
          %6358 = vmatprep.subr.bf16.mxu0 %v6049
          %6359 = vmatpush1.bf16.msra.mxu0 %v6048
          %6360 = vmatprep.subr.bf16.mxu0 %v6053
          %6361 = vmatpush1.bf16.msra.mxu0 %v6052
          %6362 = vmatprep.subr.bf16.mxu0 %v6057
          %6363 = vmatpush1.bf16.msra.mxu0 %v6056
          %6364 = vmatprep.mubr.bf16.mxu0 %v5603
          %6365 = vmatmul.mubr.bf16.gmra.mrb[0].mxu0 %v5596
          %v6366 = vpop.f32.mrb[0].mxu0
          %v6367 = vadd.f32 %v5575, %v6366
          %v6368 = vpop.f32.mrb[0].mxu0
          %v6369 = vadd.f32 %v5577, %v6368
          %v6370 = vpop.f32.mrb[0].mxu0
          %v6371 = vpop.f32.mrb[0].mxu0
          %6372 = vdwg.mxu0
          %6373 = vmatprep.subr.bf16.mxu0 %v6061
          %6374 = vmatpush1.bf16.msra.mxu0 %v6060
          %6375 = vmatprep.subr.bf16.mxu0 %v6065
          %6376 = vmatpush1.bf16.msra.mxu0 %v6064
          %6377 = vmatprep.subr.bf16.mxu0 %v6069
          %6378 = vmatpush1.bf16.msra.mxu0 %v6068
          %6379 = vmatprep.subr.bf16.mxu0 %v6073
          %6380 = vmatpush1.bf16.msra.mxu0 %v6072
          %6381 = vmatprep.subr.bf16.mxu0 %v6077
          %6382 = vmatpush1.bf16.msra.mxu0 %v6076
          %6383 = vmatprep.subr.bf16.mxu0 %v6081
          %6384 = vmatpush1.bf16.msra.mxu0 %v6080
          %6385 = vmatprep.subr.bf16.mxu0 %v6085
          %6386 = vmatpush1.bf16.msra.mxu0 %v6084
          %6387 = vmatprep.subr.bf16.mxu0 %v6089
          %6388 = vmatpush1.bf16.msra.mxu0 %v6088
          %6389 = vmatprep.subr.bf16.mxu0 %v6093
          %6390 = vmatpush1.bf16.msra.mxu0 %v6092
          %6391 = vmatprep.subr.bf16.mxu0 %v6097
          %6392 = vmatpush1.bf16.msra.mxu0 %v6096
          %6393 = vmatprep.subr.bf16.mxu0 %v6101
          %6394 = vmatpush1.bf16.msra.mxu0 %v6100
          %6395 = vmatprep.subr.bf16.mxu0 %v6105
          %6396 = vmatpush1.bf16.msra.mxu0 %v6104
          %6397 = vmatprep.subr.bf16.mxu0 %v6109
          %6398 = vmatpush1.bf16.msra.mxu0 %v6108
          %6399 = vmatprep.subr.bf16.mxu0 %v6113
          %6400 = vmatpush1.bf16.msra.mxu0 %v6112
          %6401 = vmatprep.subr.bf16.mxu0 %v6117
          %6402 = vmatpush1.bf16.msra.mxu0 %v6116
          %6403 = vmatprep.subr.bf16.mxu0 %v6121
          %6404 = vmatpush1.bf16.msra.mxu0 %v6120
          %6405 = vmatprep.mubr.bf16.mxu0 %v5605
          %6406 = vmatmul.mubr.bf16.gmra.mrb[0].mxu0 %v5604
          %v6407 = vpop.f32.mrb[0].mxu0
          %v6408 = vadd.f32 %v6367, %v6407
          %v6409 = vpop.f32.mrb[0].mxu0
          %v6410 = vadd.f32 %v6369, %v6409
          %v6411 = vpop.f32.mrb[0].mxu0
          %v6412 = vpop.f32.mrb[0].mxu0
          %6413 = vdwg.mxu0
          %v6414 = vld [vmem:[%s20] sm:$0xff]
          %v6415 = vld [vmem:[%s20 + $0x8] sm:$0xff]
          %v6416 = vld [vmem:[%s20 + $0x10] sm:$0xff]
          %v6417 = vld [vmem:[%s20 + $0x18] sm:$0xff]
          %v6418 = vld [vmem:[%s20 + $0x20] sm:$0xff]
          %v6419 = vld [vmem:[%s20 + $0x28] sm:$0xff]
          %v6420 = vld [vmem:[%s20 + $0x30] sm:$0xff]
          %v6421 = vld [vmem:[%s20 + $0x38] sm:$0xff]
          %v6422 = vld [vmem:[%s20 + $0x40] sm:$0xff]
          %v6423 = vld [vmem:[%s20 + $0x48] sm:$0xff]
          %v6424 = vld [vmem:[%s20 + $0x50] sm:$0xff]
          %v6425 = vld [vmem:[%s20 + $0x58] sm:$0xff]
          %v6426 = vld [vmem:[%s20 + $0x60] sm:$0xff]
          %v6427 = vld [vmem:[%s20 + $0x68] sm:$0xff]
          %v6428 = vld [vmem:[%s20 + $0x70] sm:$0xff]
          %v6429 = vld [vmem:[%s20 + $0x78] sm:$0xff]
          %v6430 = vld [vmem:[%s20 + $0x80] sm:$0xff]
          %v6431 = vld [vmem:[%s20 + $0x88] sm:$0xff]
          %v6432 = vld [vmem:[%s20 + $0x90] sm:$0xff]
          %v6433 = vld [vmem:[%s20 + $0x98] sm:$0xff]
          %v6434 = vld [vmem:[%s20 + $0xa0] sm:$0xff]
          %v6435 = vld [vmem:[%s20 + $0xa8] sm:$0xff]
          %v6436 = vld [vmem:[%s20 + $0xb0] sm:$0xff]
          %v6437 = vld [vmem:[%s20 + $0xb8] sm:$0xff]
          %v6438 = vld [vmem:[%s20 + $0xc0] sm:$0xff]
          %v6439 = vld [vmem:[%s20 + $0xc8] sm:$0xff]
          %v6440 = vld [vmem:[%s20 + $0xd0] sm:$0xff]
          %v6441 = vld [vmem:[%s20 + $0xd8] sm:$0xff]
          %v6442 = vld [vmem:[%s20 + $0xe0] sm:$0xff]
          %v6443 = vld [vmem:[%s20 + $0xe8] sm:$0xff]
          %v6444 = vld [vmem:[%s20 + $0xf0] sm:$0xff]
          %v6445 = vld [vmem:[%s20 + $0xf8] sm:$0xff]
          %v6478 = vunpack.c.l.b16 %v6414
          %v6479 = vunpack.c.h.b16 %v6414
          %v6480 = vunpack.c.l.b16 %v6415
          %v6481 = vunpack.c.h.b16 %v6415
          %v6482 = vunpack.c.l.b16 %v6416
          %v6483 = vunpack.c.h.b16 %v6416
          %v6484 = vunpack.c.l.b16 %v6417
          %v6485 = vunpack.c.h.b16 %v6417
          %v6486 = vunpack.c.l.b16 %v6418
          %v6487 = vunpack.c.h.b16 %v6418
          %v6488 = vunpack.c.l.b16 %v6419
          %v6489 = vunpack.c.h.b16 %v6419
          %v6490 = vunpack.c.l.b16 %v6420
          %v6491 = vunpack.c.h.b16 %v6420
          %v6492 = vunpack.c.l.b16 %v6421
          %v6493 = vunpack.c.h.b16 %v6421
          %v6494 = vunpack.c.l.b16 %v6422
          %v6495 = vunpack.c.h.b16 %v6422
          %v6496 = vunpack.c.l.b16 %v6423
          %v6497 = vunpack.c.h.b16 %v6423
          %v6498 = vunpack.c.l.b16 %v6424
          %v6499 = vunpack.c.h.b16 %v6424
          %v6500 = vunpack.c.l.b16 %v6425
          %v6501 = vunpack.c.h.b16 %v6425
          %v6502 = vunpack.c.l.b16 %v6426
          %v6503 = vunpack.c.h.b16 %v6426
          %v6504 = vunpack.c.l.b16 %v6427
          %v6505 = vunpack.c.h.b16 %v6427
          %v6506 = vunpack.c.l.b16 %v6428
          %v6507 = vunpack.c.h.b16 %v6428
          %v6508 = vunpack.c.l.b16 %v6429
          %v6509 = vunpack.c.h.b16 %v6429
          %v6510 = vunpack.c.l.b16 %v6430
          %v6511 = vunpack.c.h.b16 %v6430
          %v6512 = vunpack.c.l.b16 %v6431
          %v6513 = vunpack.c.h.b16 %v6431
          %v6514 = vunpack.c.l.b16 %v6432
          %v6515 = vunpack.c.h.b16 %v6432
          %v6516 = vunpack.c.l.b16 %v6433
          %v6517 = vunpack.c.h.b16 %v6433
          %v6518 = vunpack.c.l.b16 %v6434
          %v6519 = vunpack.c.h.b16 %v6434
          %v6520 = vunpack.c.l.b16 %v6435
          %v6521 = vunpack.c.h.b16 %v6435
          %v6522 = vunpack.c.l.b16 %v6436
          %v6523 = vunpack.c.h.b16 %v6436
          %v6524 = vunpack.c.l.b16 %v6437
          %v6525 = vunpack.c.h.b16 %v6437
          %v6526 = vunpack.c.l.b16 %v6438
          %v6527 = vunpack.c.h.b16 %v6438
          %v6528 = vunpack.c.l.b16 %v6439
          %v6529 = vunpack.c.h.b16 %v6439
          %v6530 = vunpack.c.l.b16 %v6440
          %v6531 = vunpack.c.h.b16 %v6440
          %v6532 = vunpack.c.l.b16 %v6441
          %v6533 = vunpack.c.h.b16 %v6441
          %v6534 = vunpack.c.l.b16 %v6442
          %v6535 = vunpack.c.h.b16 %v6442
          %v6536 = vunpack.c.l.b16 %v6443
          %v6537 = vunpack.c.h.b16 %v6443
          %v6538 = vunpack.c.l.b16 %v6444
          %v6539 = vunpack.c.h.b16 %v6444
          %v6540 = vunpack.c.l.b16 %v6445
          %v6541 = vunpack.c.h.b16 %v6445
          %v6542 = vpack.c.b16 %v6482, %v6478
          %v6543 = vpack.c.b16 %v6483, %v6479
          %v6544 = vpack.c.b16 %v6484, %v6480
          %v6545 = vpack.c.b16 %v6485, %v6481
          %v6546 = vpack.c.b16 %v6490, %v6486
          %v6547 = vpack.c.b16 %v6491, %v6487
          %v6548 = vpack.c.b16 %v6492, %v6488
          %v6549 = vpack.c.b16 %v6493, %v6489
          %v6550 = vpack.c.b16 %v6498, %v6494
          %v6551 = vpack.c.b16 %v6499, %v6495
          %v6552 = vpack.c.b16 %v6500, %v6496
          %v6553 = vpack.c.b16 %v6501, %v6497
          %v6554 = vpack.c.b16 %v6506, %v6502
          %v6555 = vpack.c.b16 %v6507, %v6503
          %v6556 = vpack.c.b16 %v6508, %v6504
          %v6557 = vpack.c.b16 %v6509, %v6505
          %v6558 = vpack.c.b16 %v6514, %v6510
          %v6559 = vpack.c.b16 %v6515, %v6511
          %v6560 = vpack.c.b16 %v6516, %v6512
          %v6561 = vpack.c.b16 %v6517, %v6513
          %v6562 = vpack.c.b16 %v6522, %v6518
          %v6563 = vpack.c.b16 %v6523, %v6519
          %v6564 = vpack.c.b16 %v6524, %v6520
          %v6565 = vpack.c.b16 %v6525, %v6521
          %v6566 = vpack.c.b16 %v6530, %v6526
          %v6567 = vpack.c.b16 %v6531, %v6527
          %v6568 = vpack.c.b16 %v6532, %v6528
          %v6569 = vpack.c.b16 %v6533, %v6529
          %v6570 = vpack.c.b16 %v6538, %v6534
          %v6571 = vpack.c.b16 %v6539, %v6535
          %v6572 = vpack.c.b16 %v6540, %v6536
          %v6573 = vpack.c.b16 %v6541, %v6537
          %6606 = vmatprep.subr.bf16.mxu0 %v6543
          %6607 = vmatpush1.bf16.msra.mxu0 %v6542
          %6608 = vmatprep.subr.bf16.mxu0 %v6547
          %6609 = vmatpush1.bf16.msra.mxu0 %v6546
          %6610 = vmatprep.subr.bf16.mxu0 %v6551
          %6611 = vmatpush1.bf16.msra.mxu0 %v6550
          %6612 = vmatprep.subr.bf16.mxu0 %v6555
          %6613 = vmatpush1.bf16.msra.mxu0 %v6554
          %6614 = vmatprep.subr.bf16.mxu0 %v6559
          %6615 = vmatpush1.bf16.msra.mxu0 %v6558
          %6616 = vmatprep.subr.bf16.mxu0 %v6563
          %6617 = vmatpush1.bf16.msra.mxu0 %v6562
          %6618 = vmatprep.subr.bf16.mxu0 %v6567
          %6619 = vmatpush1.bf16.msra.mxu0 %v6566
          %6620 = vmatprep.subr.bf16.mxu0 %v6571
          %6621 = vmatpush1.bf16.msra.mxu0 %v6570
          %6622 = vmatprep.subr.bf16.mxu0 0
          %6623 = vmatpush1.bf16.msra.mxu0 0
          %6624 = vmatprep.subr.bf16.mxu0 0
          %6625 = vmatpush1.bf16.msra.mxu0 0
          %6626 = vmatprep.subr.bf16.mxu0 0
          %6627 = vmatpush1.bf16.msra.mxu0 0
          %6628 = vmatprep.subr.bf16.mxu0 0
          %6629 = vmatpush1.bf16.msra.mxu0 0
          %6630 = vmatprep.subr.bf16.mxu0 0
          %6631 = vmatpush1.bf16.msra.mxu0 0
          %6632 = vmatprep.subr.bf16.mxu0 0
          %6633 = vmatpush1.bf16.msra.mxu0 0
          %6634 = vmatprep.subr.bf16.mxu0 0
          %6635 = vmatpush1.bf16.msra.mxu0 0
          %6636 = vmatprep.subr.bf16.mxu0 0
          %6637 = vmatpush1.bf16.msra.mxu0 0
          %6638 = vmatprep.mubr.bf16.mxu0 0
          %6639 = vmatmul.mubr.bf16.gmra.mrb[0].mxu0 %v4486
          %v6640 = vpop.f32.mrb[0].mxu0
          %v6641 = vadd.f32 0.0, %v6640
          %v6642 = vpop.f32.mrb[0].mxu0
          %v6643 = vadd.f32 0.0, %v6642
          %v6644 = vpop.f32.mrb[0].mxu0
          %v6645 = vpop.f32.mrb[0].mxu0
          %6646 = vdwg.mxu0
          %6647 = vmatprep.subr.bf16.mxu0 %v6545
          %6648 = vmatpush1.bf16.msra.mxu0 %v6544
          %6649 = vmatprep.subr.bf16.mxu0 %v6549
          %6650 = vmatpush1.bf16.msra.mxu0 %v6548
          %6651 = vmatprep.subr.bf16.mxu0 %v6553
          %6652 = vmatpush1.bf16.msra.mxu0 %v6552
          %6653 = vmatprep.subr.bf16.mxu0 %v6557
          %6654 = vmatpush1.bf16.msra.mxu0 %v6556
          %6655 = vmatprep.subr.bf16.mxu0 %v6561
          %6656 = vmatpush1.bf16.msra.mxu0 %v6560
          %6657 = vmatprep.subr.bf16.mxu0 %v6565
          %6658 = vmatpush1.bf16.msra.mxu0 %v6564
          %6659 = vmatprep.subr.bf16.mxu0 %v6569
          %6660 = vmatpush1.bf16.msra.mxu0 %v6568
          %6661 = vmatprep.subr.bf16.mxu0 %v6573
          %6662 = vmatpush1.bf16.msra.mxu0 %v6572
          %6663 = vmatprep.subr.bf16.mxu0 0
          %6664 = vmatpush1.bf16.msra.mxu0 0
          %6665 = vmatprep.subr.bf16.mxu0 0
          %6666 = vmatpush1.bf16.msra.mxu0 0
          %6667 = vmatprep.subr.bf16.mxu0 0
          %6668 = vmatpush1.bf16.msra.mxu0 0
          %6669 = vmatprep.subr.bf16.mxu0 0
          %6670 = vmatpush1.bf16.msra.mxu0 0
          %6671 = vmatprep.subr.bf16.mxu0 0
          %6672 = vmatpush1.bf16.msra.mxu0 0
          %6673 = vmatprep.subr.bf16.mxu0 0
          %6674 = vmatpush1.bf16.msra.mxu0 0
          %6675 = vmatprep.subr.bf16.mxu0 0
          %6676 = vmatpush1.bf16.msra.mxu0 0
          %6677 = vmatprep.subr.bf16.mxu0 0
          %6678 = vmatpush1.bf16.msra.mxu0 0
          %6679 = vmatprep.mubr.bf16.mxu0 0
          %6680 = vmatmul.mubr.bf16.gmra.mrb[0].mxu0 %v4486
          %v6681 = vpop.f32.mrb[0].mxu0
          %v6682 = vadd.f32 0.0, %v6681
          %v6683 = vpop.f32.mrb[0].mxu0
          %v6684 = vadd.f32 0.0, %v6683
          %v6685 = vpop.f32.mrb[0].mxu0
          %v6686 = vpop.f32.mrb[0].mxu0
          %6687 = vdwg.mxu0
          %v6688 = vadd.f32 %v6326, %v6641
          %v6689 = vadd.f32 %v6328, %v6643
          %v6690 = vadd.f32 %v6408, %v6682
          %v6691 = vadd.f32 %v6410, %v6684
          %v6692 = vld [vmem:[#allocation11] sm:$0xff]
          %v6693 = vld [vmem:[#allocation11 + $0x8] sm:$0xff]
          %v6694 = vld [vmem:[#allocation11 + $0x10] sm:$0xff]
          %v6695 = vld [vmem:[#allocation11 + $0x18] sm:$0xff]
          %v6696 = vld [vmem:[#allocation11 + $0x20] sm:$0xff]
          %v6697 = vld [vmem:[#allocation11 + $0x28] sm:$0xff]
          %v6698 = vld [vmem:[#allocation11 + $0x30] sm:$0xff]
          %v6699 = vld [vmem:[#allocation11 + $0x38] sm:$0xff]
          %v6700 = vld [vmem:[#allocation11 + $0x40] sm:$0xff]
          %v6701 = vld [vmem:[#allocation11 + $0x48] sm:$0xff]
          %v6702 = vld [vmem:[#allocation11 + $0x50] sm:$0xff]
          %v6703 = vld [vmem:[#allocation11 + $0x58] sm:$0xff]
          %v6704 = vld [vmem:[#allocation11 + $0x60] sm:$0xff]
          %v6705 = vld [vmem:[#allocation11 + $0x68] sm:$0xff]
          %v6706 = vld [vmem:[#allocation11 + $0x70] sm:$0xff]
          %v6707 = vld [vmem:[#allocation11 + $0x78] sm:$0xff]
          %v6708 = vld [vmem:[#allocation11 + $0x80] sm:$0xff]
          %v6709 = vld [vmem:[#allocation11 + $0x88] sm:$0xff]
          %v6710 = vld [vmem:[#allocation11 + $0x90] sm:$0xff]
          %v6711 = vld [vmem:[#allocation11 + $0x98] sm:$0xff]
          %v6712 = vld [vmem:[#allocation11 + $0xa0] sm:$0xff]
          %v6713 = vld [vmem:[#allocation11 + $0xa8] sm:$0xff]
          %v6714 = vld [vmem:[#allocation11 + $0xb0] sm:$0xff]
          %v6715 = vld [vmem:[#allocation11 + $0xb8] sm:$0xff]
          %v6716 = vld [vmem:[#allocation11 + $0xc0] sm:$0xff]
          %v6717 = vld [vmem:[#allocation11 + $0xc8] sm:$0xff]
          %v6718 = vld [vmem:[#allocation11 + $0xd0] sm:$0xff]
          %v6719 = vld [vmem:[#allocation11 + $0xd8] sm:$0xff]
          %v6720 = vld [vmem:[#allocation11 + $0xe0] sm:$0xff]
          %v6721 = vld [vmem:[#allocation11 + $0xe8] sm:$0xff]
          %v6722 = vld [vmem:[#allocation11 + $0xf0] sm:$0xff]
          %v6723 = vld [vmem:[#allocation11 + $0xf8] sm:$0xff]
          %v6756 = vunpack.c.l.b16 %v6692
          %v6757 = vunpack.c.h.b16 %v6692
          %v6758 = vunpack.c.l.b16 %v6693
          %v6759 = vunpack.c.h.b16 %v6693
          %v6760 = vunpack.c.l.b16 %v6694
          %v6761 = vunpack.c.h.b16 %v6694
          %v6762 = vunpack.c.l.b16 %v6695
          %v6763 = vunpack.c.h.b16 %v6695
          %v6764 = vunpack.c.l.b16 %v6696
          %v6765 = vunpack.c.h.b16 %v6696
          %v6766 = vunpack.c.l.b16 %v6697
          %v6767 = vunpack.c.h.b16 %v6697
          %v6768 = vunpack.c.l.b16 %v6698
          %v6769 = vunpack.c.h.b16 %v6698
          %v6770 = vunpack.c.l.b16 %v6699
          %v6771 = vunpack.c.h.b16 %v6699
          %v6772 = vunpack.c.l.b16 %v6700
          %v6773 = vunpack.c.h.b16 %v6700
          %v6774 = vunpack.c.l.b16 %v6701
          %v6775 = vunpack.c.h.b16 %v6701
          %v6776 = vunpack.c.l.b16 %v6702
          %v6777 = vunpack.c.h.b16 %v6702
          %v6778 = vunpack.c.l.b16 %v6703
          %v6779 = vunpack.c.h.b16 %v6703
          %v6780 = vunpack.c.l.b16 %v6704
          %v6781 = vunpack.c.h.b16 %v6704
          %v6782 = vunpack.c.l.b16 %v6705
          %v6783 = vunpack.c.h.b16 %v6705
          %v6784 = vunpack.c.l.b16 %v6706
          %v6785 = vunpack.c.h.b16 %v6706
          %v6786 = vunpack.c.l.b16 %v6707
          %v6787 = vunpack.c.h.b16 %v6707
          %v6788 = vunpack.c.l.b16 %v6708
          %v6789 = vunpack.c.h.b16 %v6708
          %v6790 = vunpack.c.l.b16 %v6709
          %v6791 = vunpack.c.h.b16 %v6709
          %v6792 = vunpack.c.l.b16 %v6710
          %v6793 = vunpack.c.h.b16 %v6710
          %v6794 = vunpack.c.l.b16 %v6711
          %v6795 = vunpack.c.h.b16 %v6711
          %v6796 = vunpack.c.l.b16 %v6712
          %v6797 = vunpack.c.h.b16 %v6712
          %v6798 = vunpack.c.l.b16 %v6713
          %v6799 = vunpack.c.h.b16 %v6713
          %v6800 = vunpack.c.l.b16 %v6714
          %v6801 = vunpack.c.h.b16 %v6714
          %v6802 = vunpack.c.l.b16 %v6715
          %v6803 = vunpack.c.h.b16 %v6715
          %v6804 = vunpack.c.l.b16 %v6716
          %v6805 = vunpack.c.h.b16 %v6716
          %v6806 = vunpack.c.l.b16 %v6717
          %v6807 = vunpack.c.h.b16 %v6717
          %v6808 = vunpack.c.l.b16 %v6718
          %v6809 = vunpack.c.h.b16 %v6718
          %v6810 = vunpack.c.l.b16 %v6719
          %v6811 = vunpack.c.h.b16 %v6719
          %v6812 = vunpack.c.l.b16 %v6720
          %v6813 = vunpack.c.h.b16 %v6720
          %v6814 = vunpack.c.l.b16 %v6721
          %v6815 = vunpack.c.h.b16 %v6721
          %v6816 = vunpack.c.l.b16 %v6722
          %v6817 = vunpack.c.h.b16 %v6722
          %v6818 = vunpack.c.l.b16 %v6723
          %v6819 = vunpack.c.h.b16 %v6723
          %v6820 = vpack.c.b16 %v6760, %v6756
          %v6821 = vpack.c.b16 %v6761, %v6757
          %v6822 = vpack.c.b16 %v6762, %v6758
          %v6823 = vpack.c.b16 %v6763, %v6759
          %v6824 = vpack.c.b16 %v6768, %v6764
          %v6825 = vpack.c.b16 %v6769, %v6765
          %v6826 = vpack.c.b16 %v6770, %v6766
          %v6827 = vpack.c.b16 %v6771, %v6767
          %v6828 = vpack.c.b16 %v6776, %v6772
          %v6829 = vpack.c.b16 %v6777, %v6773
          %v6830 = vpack.c.b16 %v6778, %v6774
          %v6831 = vpack.c.b16 %v6779, %v6775
          %v6832 = vpack.c.b16 %v6784, %v6780
          %v6833 = vpack.c.b16 %v6785, %v6781
          %v6834 = vpack.c.b16 %v6786, %v6782
          %v6835 = vpack.c.b16 %v6787, %v6783
          %v6836 = vpack.c.b16 %v6792, %v6788
          %v6837 = vpack.c.b16 %v6793, %v6789
          %v6838 = vpack.c.b16 %v6794, %v6790
          %v6839 = vpack.c.b16 %v6795, %v6791
          %v6840 = vpack.c.b16 %v6800, %v6796
          %v6841 = vpack.c.b16 %v6801, %v6797
          %v6842 = vpack.c.b16 %v6802, %v6798
          %v6843 = vpack.c.b16 %v6803, %v6799
          %v6844 = vpack.c.b16 %v6808, %v6804
          %v6845 = vpack.c.b16 %v6809, %v6805
          %v6846 = vpack.c.b16 %v6810, %v6806
          %v6847 = vpack.c.b16 %v6811, %v6807
          %v6848 = vpack.c.b16 %v6816, %v6812
          %v6849 = vpack.c.b16 %v6817, %v6813
          %v6850 = vpack.c.b16 %v6818, %v6814
          %v6851 = vpack.c.b16 %v6819, %v6815
          %6884 = vmatprep.subr.bf16.mxu0 %v6821
          %6885 = vmatpush1.bf16.msra.mxu0 %v6820
          %6886 = vmatprep.subr.bf16.mxu0 %v6825
          %6887 = vmatpush1.bf16.msra.mxu0 %v6824
          %6888 = vmatprep.subr.bf16.mxu0 %v6829
          %6889 = vmatpush1.bf16.msra.mxu0 %v6828
          %6890 = vmatprep.subr.bf16.mxu0 %v6833
          %6891 = vmatpush1.bf16.msra.mxu0 %v6832
          %6892 = vmatprep.subr.bf16.mxu0 %v6837
          %6893 = vmatpush1.bf16.msra.mxu0 %v6836
          %6894 = vmatprep.subr.bf16.mxu0 %v6841
          %6895 = vmatpush1.bf16.msra.mxu0 %v6840
          %6896 = vmatprep.subr.bf16.mxu0 %v6845
          %6897 = vmatpush1.bf16.msra.mxu0 %v6844
          %6898 = vmatprep.subr.bf16.mxu0 %v6849
          %6899 = vmatpush1.bf16.msra.mxu0 %v6848
          %6900 = vmatprep.subr.bf16.mxu0 0
          %6901 = vmatpush1.bf16.msra.mxu0 0
          %6902 = vmatprep.subr.bf16.mxu0 0
          %6903 = vmatpush1.bf16.msra.mxu0 0
          %6904 = vmatprep.subr.bf16.mxu0 0
          %6905 = vmatpush1.bf16.msra.mxu0 0
          %6906 = vmatprep.subr.bf16.mxu0 0
          %6907 = vmatpush1.bf16.msra.mxu0 0
          %6908 = vmatprep.subr.bf16.mxu0 0
          %6909 = vmatpush1.bf16.msra.mxu0 0
          %6910 = vmatprep.subr.bf16.mxu0 0
          %6911 = vmatpush1.bf16.msra.mxu0 0
          %6912 = vmatprep.subr.bf16.mxu0 0
          %6913 = vmatpush1.bf16.msra.mxu0 0
          %6914 = vmatprep.subr.bf16.mxu0 0
          %6915 = vmatpush1.bf16.msra.mxu0 0
          %6916 = vmatprep.mubr.bf16.mxu0 0
          %6917 = vmatmul.mubr.bf16.gmra.mrb[0].mxu0 %v4489
          %v6918 = vpop.f32.mrb[0].mxu0
          %v6919 = vadd.f32 0.0, %v6918
          %v6920 = vpop.f32.mrb[0].mxu0
          %v6921 = vadd.f32 0.0, %v6920
          %v6922 = vpop.f32.mrb[0].mxu0
          %v6923 = vpop.f32.mrb[0].mxu0
          %6924 = vdwg.mxu0
          %6925 = vmatprep.subr.bf16.mxu0 %v6823
          %6926 = vmatpush1.bf16.msra.mxu0 %v6822
          %6927 = vmatprep.subr.bf16.mxu0 %v6827
          %6928 = vmatpush1.bf16.msra.mxu0 %v6826
          %6929 = vmatprep.subr.bf16.mxu0 %v6831
          %6930 = vmatpush1.bf16.msra.mxu0 %v6830
          %6931 = vmatprep.subr.bf16.mxu0 %v6835
          %6932 = vmatpush1.bf16.msra.mxu0 %v6834
          %6933 = vmatprep.subr.bf16.mxu0 %v6839
          %6934 = vmatpush1.bf16.msra.mxu0 %v6838
          %6935 = vmatprep.subr.bf16.mxu0 %v6843
          %6936 = vmatpush1.bf16.msra.mxu0 %v6842
          %6937 = vmatprep.subr.bf16.mxu0 %v6847
          %6938 = vmatpush1.bf16.msra.mxu0 %v6846
          %6939 = vmatprep.subr.bf16.mxu0 %v6851
          %6940 = vmatpush1.bf16.msra.mxu0 %v6850
          %6941 = vmatprep.subr.bf16.mxu0 0
          %6942 = vmatpush1.bf16.msra.mxu0 0
          %6943 = vmatprep.subr.bf16.mxu0 0
          %6944 = vmatpush1.bf16.msra.mxu0 0
          %6945 = vmatprep.subr.bf16.mxu0 0
          %6946 = vmatpush1.bf16.msra.mxu0 0
          %6947 = vmatprep.subr.bf16.mxu0 0
          %6948 = vmatpush1.bf16.msra.mxu0 0
          %6949 = vmatprep.subr.bf16.mxu0 0
          %6950 = vmatpush1.bf16.msra.mxu0 0
          %6951 = vmatprep.subr.bf16.mxu0 0
          %6952 = vmatpush1.bf16.msra.mxu0 0
          %6953 = vmatprep.subr.bf16.mxu0 0
          %6954 = vmatpush1.bf16.msra.mxu0 0
          %6955 = vmatprep.subr.bf16.mxu0 0
          %6956 = vmatpush1.bf16.msra.mxu0 0
          %6957 = vmatprep.mubr.bf16.mxu0 0
          %6958 = vmatmul.mubr.bf16.gmra.mrb[0].mxu0 %v4489
          %v6959 = vpop.f32.mrb[0].mxu0
          %v6960 = vadd.f32 0.0, %v6959
          %v6961 = vpop.f32.mrb[0].mxu0
          %v6962 = vadd.f32 0.0, %v6961
          %v6963 = vpop.f32.mrb[0].mxu0
          %v6964 = vpop.f32.mrb[0].mxu0
          %6965 = vdwg.mxu0
          %v6966 = vadd.f32 %v6688, %v6919
          %v6967 = vadd.f32 %v6689, %v6921
          %v6968 = vadd.f32 %v6690, %v6960
          %v6969 = vadd.f32 %v6691, %v6962
          %v6970 = vld [vmem:[%s22] sm:$0xf]
          %v6972 = vlaneseq
          %v6973 = vshrl.u32 %v6972, 7
          %v6974 = vsub.s32 0, %v6973
          %v6975 = vrot.slane %v6970, %v6974
          %v6976 = vlaneseq
          %v6977 = vshrl.u32 %v6976, 7
          %v6978 = vsub.s32 1, %v6977
          %v6979 = vrot.slane %v6970, %v6978
          %v6980 = vlaneseq
          %v6981 = vshrl.u32 %v6980, 7
          %v6982 = vsub.s32 2, %v6981
          %v6983 = vrot.slane %v6970, %v6982
          %v6984 = vlaneseq
          %v6985 = vshrl.u32 %v6984, 7
          %v6986 = vsub.s32 3, %v6985
          %v6987 = vrot.slane %v6970, %v6986
          %v6992 = vadd.f32 %v6966, %v6975
          %v6993 = vadd.f32 %v6967, %v6979
          %v6994 = vadd.f32 %v6968, %v6983
          %v6995 = vadd.f32 %v6969, %v6987
          %v6996 = vpack.c.bf16 %v6992, %v6992
          %v6997 = vpack.c.bf16 %v6993, %v6993
          %v6998 = vpack.c.bf16 %v6994, %v6994
          %v6999 = vpack.c.bf16 %v6995, %v6995
          %v7000 = vld [vmem:[%s23] sm:$0xf]
          %v7001 = vld [vmem:[%s23 + $0x4] sm:$0xf]
          %v7002 = vld [vmem:[%s23 + $0x8] sm:$0xf]
          %v7003 = vld [vmem:[%s23 + $0xc] sm:$0xf]
          %v7004 = vld [vmem:[%s23 + $0x10] sm:$0xf]
          %v7005 = vld [vmem:[%s23 + $0x14] sm:$0xf]
          %v7006 = vld [vmem:[%s23 + $0x18] sm:$0xf]
          %v7007 = vld [vmem:[%s23 + $0x1c] sm:$0xf]
          %v7008 = vld [vmem:[%s23 + $0x20] sm:$0xf]
          %v7009 = vld [vmem:[%s23 + $0x24] sm:$0xf]
          %v7010 = vld [vmem:[%s23 + $0x28] sm:$0xf]
          %v7011 = vld [vmem:[%s23 + $0x2c] sm:$0xf]
          %v7012 = vld [vmem:[%s23 + $0x30] sm:$0xf]
          %v7013 = vld [vmem:[%s23 + $0x34] sm:$0xf]
          %v7014 = vld [vmem:[%s23 + $0x38] sm:$0xf]
          %v7015 = vld [vmem:[%s23 + $0x3c] sm:$0xf]
          %v7016 = vld [vmem:[%s23 + $0x40] sm:$0xf]
          %v7017 = vld [vmem:[%s23 + $0x44] sm:$0xf]
          %v7018 = vld [vmem:[%s23 + $0x48] sm:$0xf]
          %v7019 = vld [vmem:[%s23 + $0x4c] sm:$0xf]
          %v7020 = vld [vmem:[%s23 + $0x50] sm:$0xf]
          %v7021 = vld [vmem:[%s23 + $0x54] sm:$0xf]
          %v7022 = vld [vmem:[%s23 + $0x58] sm:$0xf]
          %v7023 = vld [vmem:[%s23 + $0x5c] sm:$0xf]
          %v7024 = vld [vmem:[%s23 + $0x60] sm:$0xf]
          %v7025 = vld [vmem:[%s23 + $0x64] sm:$0xf]
          %v7026 = vld [vmem:[%s23 + $0x68] sm:$0xf]
          %v7027 = vld [vmem:[%s23 + $0x6c] sm:$0xf]
          %v7028 = vld [vmem:[%s23 + $0x70] sm:$0xf]
          %v7029 = vld [vmem:[%s23 + $0x74] sm:$0xf]
          %v7030 = vld [vmem:[%s23 + $0x78] sm:$0xf]
          %v7031 = vld [vmem:[%s23 + $0x7c] sm:$0xf]
          %v7032 = vld [vmem:[%s23 + $0x80] sm:$0xf]
          %v7033 = vld [vmem:[%s23 + $0x84] sm:$0xf]
          %v7034 = vld [vmem:[%s23 + $0x88] sm:$0xf]
          %v7035 = vld [vmem:[%s23 + $0x8c] sm:$0xf]
          %v7036 = vld [vmem:[%s23 + $0x90] sm:$0xf]
          %v7037 = vld [vmem:[%s23 + $0x94] sm:$0xf]
          %v7038 = vld [vmem:[%s23 + $0x98] sm:$0xf]
          %v7039 = vld [vmem:[%s23 + $0x9c] sm:$0xf]
          %v7040 = vld [vmem:[%s23 + $0xa0] sm:$0xf]
          %v7041 = vld [vmem:[%s23 + $0xa4] sm:$0xf]
          %v7042 = vld [vmem:[%s23 + $0xa8] sm:$0xf]
          %v7043 = vld [vmem:[%s23 + $0xac] sm:$0xf]
          %v7044 = vld [vmem:[%s23 + $0xb0] sm:$0xf]
          %v7045 = vld [vmem:[%s23 + $0xb4] sm:$0xf]
          %v7046 = vld [vmem:[%s23 + $0xb8] sm:$0xf]
          %v7047 = vld [vmem:[%s23 + $0xbc] sm:$0xf]
          %v7048 = vld [vmem:[%s23 + $0xc0] sm:$0xf]
          %v7049 = vld [vmem:[%s23 + $0xc4] sm:$0xf]
          %v7050 = vld [vmem:[%s23 + $0xc8] sm:$0xf]
          %v7051 = vld [vmem:[%s23 + $0xcc] sm:$0xf]
          %v7052 = vld [vmem:[%s23 + $0xd0] sm:$0xf]
          %v7053 = vld [vmem:[%s23 + $0xd4] sm:$0xf]
          %v7054 = vld [vmem:[%s23 + $0xd8] sm:$0xf]
          %v7055 = vld [vmem:[%s23 + $0xdc] sm:$0xf]
          %v7056 = vld [vmem:[%s23 + $0xe0] sm:$0xf]
          %v7057 = vld [vmem:[%s23 + $0xe4] sm:$0xf]
          %v7058 = vld [vmem:[%s23 + $0xe8] sm:$0xf]
          %v7059 = vld [vmem:[%s23 + $0xec] sm:$0xf]
          %v7060 = vld [vmem:[%s23 + $0xf0] sm:$0xf]
          %v7061 = vld [vmem:[%s23 + $0xf4] sm:$0xf]
          %v7062 = vld [vmem:[%s23 + $0xf8] sm:$0xf]
          %v7063 = vld [vmem:[%s23 + $0xfc] sm:$0xf]
          %v7064 = vld [vmem:[%s24] sm:$0x1]
          %v7066 = vlaneseq
          %v7067 = vshrl.u32 %v7066, 7
          %v7068 = vsub.s32 0, %v7067
          %v7069 = vrot.slane %v7064, %v7068
          %v7135 = vunpack.c.l.b16 %v7000
          %v7136 = vunpack.c.l.b16 %v7001
          %v7137 = vunpack.c.l.b16 %v7002
          %v7138 = vunpack.c.l.b16 %v7003
          %v7139 = vunpack.c.l.b16 %v7004
          %v7140 = vunpack.c.l.b16 %v7005
          %v7141 = vunpack.c.l.b16 %v7006
          %v7142 = vunpack.c.l.b16 %v7007
          %v7143 = vunpack.c.l.b16 %v7008
          %v7144 = vunpack.c.l.b16 %v7009
          %v7145 = vunpack.c.l.b16 %v7010
          %v7146 = vunpack.c.l.b16 %v7011
          %v7147 = vunpack.c.l.b16 %v7012
          %v7148 = vunpack.c.l.b16 %v7013
          %v7149 = vunpack.c.l.b16 %v7014
          %v7150 = vunpack.c.l.b16 %v7015
          %v7151 = vunpack.c.l.b16 %v7016
          %v7152 = vunpack.c.l.b16 %v7017
          %v7153 = vunpack.c.l.b16 %v7018
          %v7154 = vunpack.c.l.b16 %v7019
          %v7155 = vunpack.c.l.b16 %v7020
          %v7156 = vunpack.c.l.b16 %v7021
          %v7157 = vunpack.c.l.b16 %v7022
          %v7158 = vunpack.c.l.b16 %v7023
          %v7159 = vunpack.c.l.b16 %v7024
          %v7160 = vunpack.c.l.b16 %v7025
          %v7161 = vunpack.c.l.b16 %v7026
          %v7162 = vunpack.c.l.b16 %v7027
          %v7163 = vunpack.c.l.b16 %v7028
          %v7164 = vunpack.c.l.b16 %v7029
          %v7165 = vunpack.c.l.b16 %v7030
          %v7166 = vunpack.c.l.b16 %v7031
          %v7167 = vunpack.c.l.b16 %v7032
          %v7168 = vunpack.c.l.b16 %v7033
          %v7169 = vunpack.c.l.b16 %v7034
          %v7170 = vunpack.c.l.b16 %v7035
          %v7171 = vunpack.c.l.b16 %v7036
          %v7172 = vunpack.c.l.b16 %v7037
          %v7173 = vunpack.c.l.b16 %v7038
          %v7174 = vunpack.c.l.b16 %v7039
          %v7175 = vunpack.c.l.b16 %v7040
          %v7176 = vunpack.c.l.b16 %v7041
          %v7177 = vunpack.c.l.b16 %v7042
          %v7178 = vunpack.c.l.b16 %v7043
          %v7179 = vunpack.c.l.b16 %v7044
          %v7180 = vunpack.c.l.b16 %v7045
          %v7181 = vunpack.c.l.b16 %v7046
          %v7182 = vunpack.c.l.b16 %v7047
          %v7183 = vunpack.c.l.b16 %v7048
          %v7184 = vunpack.c.l.b16 %v7049
          %v7185 = vunpack.c.l.b16 %v7050
          %v7186 = vunpack.c.l.b16 %v7051
          %v7187 = vunpack.c.l.b16 %v7052
          %v7188 = vunpack.c.l.b16 %v7053
          %v7189 = vunpack.c.l.b16 %v7054
          %v7190 = vunpack.c.l.b16 %v7055
          %v7191 = vunpack.c.l.b16 %v7056
          %v7192 = vunpack.c.l.b16 %v7057
          %v7193 = vunpack.c.l.b16 %v7058
          %v7194 = vunpack.c.l.b16 %v7059
          %v7195 = vunpack.c.l.b16 %v7060
          %v7196 = vunpack.c.l.b16 %v7061
          %v7197 = vunpack.c.l.b16 %v7062
          %v7198 = vunpack.c.l.b16 %v7063
          %v7199 = vpack.c.b16 %v7136, %v7135
          %v7200 = vpack.c.b16 %v7138, %v7137
          %v7201 = vpack.c.b16 %v7140, %v7139
          %v7202 = vpack.c.b16 %v7142, %v7141
          %v7203 = vpack.c.b16 %v7144, %v7143
          %v7204 = vpack.c.b16 %v7146, %v7145
          %v7205 = vpack.c.b16 %v7148, %v7147
          %v7206 = vpack.c.b16 %v7150, %v7149
          %v7207 = vpack.c.b16 %v7152, %v7151
          %v7208 = vpack.c.b16 %v7154, %v7153
          %v7209 = vpack.c.b16 %v7156, %v7155
          %v7210 = vpack.c.b16 %v7158, %v7157
          %v7211 = vpack.c.b16 %v7160, %v7159
          %v7212 = vpack.c.b16 %v7162, %v7161
          %v7213 = vpack.c.b16 %v7164, %v7163
          %v7214 = vpack.c.b16 %v7166, %v7165
          %v7215 = vpack.c.b16 %v7168, %v7167
          %v7216 = vpack.c.b16 %v7170, %v7169
          %v7217 = vpack.c.b16 %v7172, %v7171
          %v7218 = vpack.c.b16 %v7174, %v7173
          %v7219 = vpack.c.b16 %v7176, %v7175
          %v7220 = vpack.c.b16 %v7178, %v7177
          %v7221 = vpack.c.b16 %v7180, %v7179
          %v7222 = vpack.c.b16 %v7182, %v7181
          %v7223 = vpack.c.b16 %v7184, %v7183
          %v7224 = vpack.c.b16 %v7186, %v7185
          %v7225 = vpack.c.b16 %v7188, %v7187
          %v7226 = vpack.c.b16 %v7190, %v7189
          %v7227 = vpack.c.b16 %v7192, %v7191
          %v7228 = vpack.c.b16 %v7194, %v7193
          %v7229 = vpack.c.b16 %v7196, %v7195
          %v7230 = vpack.c.b16 %v7198, %v7197
          %7263 = vmatprep.subr.bf16.mxu0 0
          %7264 = vmatpush1.bf16.msra.mxu0 %v7199
          %7265 = vmatprep.subr.bf16.mxu0 0
          %7266 = vmatpush1.bf16.msra.mxu0 %v7200
          %7267 = vmatprep.subr.bf16.mxu0 0
          %7268 = vmatpush1.bf16.msra.mxu0 %v7201
          %7269 = vmatprep.subr.bf16.mxu0 0
          %7270 = vmatpush1.bf16.msra.mxu0 %v7202
          %7271 = vmatprep.subr.bf16.mxu0 0
          %7272 = vmatpush1.bf16.msra.mxu0 %v7203
          %7273 = vmatprep.subr.bf16.mxu0 0
          %7274 = vmatpush1.bf16.msra.mxu0 %v7204
          %7275 = vmatprep.subr.bf16.mxu0 0
          %7276 = vmatpush1.bf16.msra.mxu0 %v7205
          %7277 = vmatprep.subr.bf16.mxu0 0
          %7278 = vmatpush1.bf16.msra.mxu0 %v7206
          %7279 = vmatprep.subr.bf16.mxu0 0
          %7280 = vmatpush1.bf16.msra.mxu0 %v7207
          %7281 = vmatprep.subr.bf16.mxu0 0
          %7282 = vmatpush1.bf16.msra.mxu0 %v7208
          %7283 = vmatprep.subr.bf16.mxu0 0
          %7284 = vmatpush1.bf16.msra.mxu0 %v7209
          %7285 = vmatprep.subr.bf16.mxu0 0
          %7286 = vmatpush1.bf16.msra.mxu0 %v7210
          %7287 = vmatprep.subr.bf16.mxu0 0
          %7288 = vmatpush1.bf16.msra.mxu0 %v7211
          %7289 = vmatprep.subr.bf16.mxu0 0
          %7290 = vmatpush1.bf16.msra.mxu0 %v7212
          %7291 = vmatprep.subr.bf16.mxu0 0
          %7292 = vmatpush1.bf16.msra.mxu0 %v7213
          %7293 = vmatprep.subr.bf16.mxu0 0
          %7294 = vmatpush1.bf16.msra.mxu0 %v7214
          %7295 = vmatprep.mubr.bf16.mxu0 %v6997
          %7296 = vmatmul.mubr.bf16.gmra.mrb[0].mxu0 %v6996
          %v7297 = vpop.f32.mrb[0].mxu0
          %v7298 = vadd.f32 %v7069, %v7297
          %v7299 = vpop.f32.mrb[0].mxu0
          %v7300 = vpop.f32.mrb[0].mxu0
          %v7301 = vpop.f32.mrb[0].mxu0
          %7302 = vdwg.mxu0
          %7303 = vmatprep.subr.bf16.mxu0 0
          %7304 = vmatpush1.bf16.msra.mxu0 %v7215
          %7305 = vmatprep.subr.bf16.mxu0 0
          %7306 = vmatpush1.bf16.msra.mxu0 %v7216
          %7307 = vmatprep.subr.bf16.mxu0 0
          %7308 = vmatpush1.bf16.msra.mxu0 %v7217
          %7309 = vmatprep.subr.bf16.mxu0 0
          %7310 = vmatpush1.bf16.msra.mxu0 %v7218
          %7311 = vmatprep.subr.bf16.mxu0 0
          %7312 = vmatpush1.bf16.msra.mxu0 %v7219
          %7313 = vmatprep.subr.bf16.mxu0 0
          %7314 = vmatpush1.bf16.msra.mxu0 %v7220
          %7315 = vmatprep.subr.bf16.mxu0 0
          %7316 = vmatpush1.bf16.msra.mxu0 %v7221
          %7317 = vmatprep.subr.bf16.mxu0 0
          %7318 = vmatpush1.bf16.msra.mxu0 %v7222
          %7319 = vmatprep.subr.bf16.mxu0 0
          %7320 = vmatpush1.bf16.msra.mxu0 %v7223
          %7321 = vmatprep.subr.bf16.mxu0 0
          %7322 = vmatpush1.bf16.msra.mxu0 %v7224
          %7323 = vmatprep.subr.bf16.mxu0 0
          %7324 = vmatpush1.bf16.msra.mxu0 %v7225
          %7325 = vmatprep.subr.bf16.mxu0 0
          %7326 = vmatpush1.bf16.msra.mxu0 %v7226
          %7327 = vmatprep.subr.bf16.mxu0 0
          %7328 = vmatpush1.bf16.msra.mxu0 %v7227
          %7329 = vmatprep.subr.bf16.mxu0 0
          %7330 = vmatpush1.bf16.msra.mxu0 %v7228
          %7331 = vmatprep.subr.bf16.mxu0 0
          %7332 = vmatpush1.bf16.msra.mxu0 %v7229
          %7333 = vmatprep.subr.bf16.mxu0 0
          %7334 = vmatpush1.bf16.msra.mxu0 %v7230
          %7335 = vmatprep.mubr.bf16.mxu0 %v6999
          %7336 = vmatmul.mubr.bf16.gmra.mrb[0].mxu0 %v6998
          %v7337 = vpop.f32.mrb[0].mxu0
          %v7338 = vadd.f32 %v7298, %v7337
          %v7339 = vpop.f32.mrb[0].mxu0
          %v7340 = vpop.f32.mrb[0].mxu0
          %v7341 = vpop.f32.mrb[0].mxu0
          %7342 = vdwg.mxu0
          %v7343 = vsub.f32 0.0, %v7338
          %v7344 = vmul.f32 %v7343, 1.442695
          %v7345 = vpow.pop %v7344
          %v7346 = vadd.f32 %v7345, 1.0
          %v7347 = vrcp.pop %v7346
          %v7348 = vmul.f32 1.0, %v7347
          %v7349 = vsub.f32 0.0, %v7348
          %v7350 = vmul.f32 %v7349, 1.442695
          %v7351 = vpow.pop %v7350
          %v7352 = vadd.f32 %v7351, 1.0
          %v7353 = vrcp.pop %v7352
          %v7354 = vmul.f32 1.0, %v7353
          %vm7355 = vcmask 9216
          %7356 = vst.msk [vmem:[#allocation13] sm:$0x3] %vm7355, %v7354
        $region148: #{tpu_custom_call.1} parent=119 // pred_fallthru
          _
        // Predicated region
        $region149: #{tpu_custom_call.1} parent=119 // pred_check
          %p7357 = pneg %p578
        $region150: #{tpu_custom_call.1} parent=119 // pred_check_branch
          %7359 = sbr.rel (%p7357) target = $region152
        $region151: #{tpu_custom_call.1} parent=119 // pred_region
          %s7361 = ssub.s32 32, 32
          %7362 = vsyncadd [#allocation7], %s7361
          %s7364 = sshll.u32 [#allocation13], 4
          %s7365 = int_to_ptr.vmem [resolvable:$true] %s7364
          %7367 = dma.vmem_to_hbm [thread:$0]  %s7365, 32, %s25, [#allocation7]
        $region152: #{tpu_custom_call.1} parent=119 // pred_fallthru
          _
        // Predicated region
        $region153: #{tpu_custom_call.1} parent=119 // pred_check
          %p7368 = pneg %p578
        $region154: #{tpu_custom_call.1} parent=119 // pred_check_branch
          %7370 = sbr.rel (%p7368) target = $region156
        $region155: #{tpu_custom_call.1} parent=119 // pred_region
          %7371 = dma.done [#allocation7], 32
        $region156: #{tpu_custom_call.1} parent=119 // pred_fallthru
          _
      $region120: #{tpu_custom_call.1} parent=5 // pred_fallthru
        _
      %p7372 = scmp.le.s32.totalorder 2, %s35
      // Predicated region
      $region157: #{tpu_custom_call.1} parent=5 // pred_check
        %p7373 = pneg %p7372
      $region158: #{tpu_custom_call.1} parent=5 // pred_check_branch
        %7375 = sbr.rel (%p7373) target = $region160
      $region159: #{tpu_custom_call.1} parent=5 // pred_region
        %s7376 = ssub.s32 %s35, 2
      $region160: #{tpu_custom_call.1} parent=5 // pred_fallthru
        _
    $region6: #{tpu_custom_call.1} parent=1 // loop_footer
      %s39 = sadd.s32 1, %s35
    $region7: #{tpu_custom_call.1} parent=1 // loop_footer_branch
      %34 = sbr.rel target = $region3
    $region8: #{tpu_custom_call.1} parent=1 // loop_exit
      _
    %7377 = vsyncpa [#allocation6], 1
    %s7378 = scalar_lea.sflag [#allocation6], 1
    %7379 = vsyncpa %s7378, 1
    %7380 = vsyncpa [#allocation9], 1
    %7381 = vsyncpa [#allocation12], 1
    %7382 = vsyncpa [#allocation7], 1
    %s7383 = scalar_lea.sflag [#allocation7], 1
    %7384 = vsyncpa %s7383, 1

</llo_original>
